<compile_context>
chip_gen: v6e
topology: v6e:2x2x1
jax: 0.10.0
libtpu: 0.0.40
codegen_flags: <defaults>
</compile_context>

<pallas_src>
import jax
import jax.numpy as jnp
from jax import lax
from jax.experimental import pallas as pl
from jax.experimental.pallas import tpu as pltpu

EPS = 1e-5
LANE_PAD = 128   # halo width on each side of the line buffer (>= W + 1)


# ----------------------------------------------------------------------------
# Fused kernel
# ----------------------------------------------------------------------------
def _make_fused_kernel(H, W, base, num_blocks, Cv, Cp, fc_dim, pad):
    HW = H * W

    def kernel(x_ref, w1_ref, s1_ref, b1_ref,
               wblk_ref, sblk_ref, bblk_ref,
               wv_ref, sv_ref, bv_ref,
               wp_ref, sp_ref, bp_ref,
               w2_ref, b2_ref, w3_ref, b3_ref,
               value_ref, policy_ref, pad_buf):
        # Zero the haloed line buffer: the halos provide the implicit zero
        # padding of the 3x3 convs (and guarantee no NaN garbage is read).
        pad_buf[...] = jnp.zeros_like(pad_buf)

        # Horizontal-tap validity masks.  Vertical out-of-board taps fall into
        # the zeroed halo, so only the x wrap-around needs masking.
        xpos = lax.broadcasted_iota(jnp.int32, (1, HW), 1) % W
        xmask = [((xpos + (kx - 1) >= 0) & (xpos + (kx - 1) < W))
                 .astype(jnp.float32) for kx in range(3)]

        def conv3x3(act, tap_w, scale, bias, residual=None):
            """act: (cin, HW).  tap_w(ky,kx) -> (cout, cin).  Returns (cout, HW)."""
            cin = act.shape[0]
            cout = scale.shape[0]
            pad_buf[0:cin, pad:pad + HW] = act
            acc = jnp.zeros((cout, HW), jnp.float32)
            for ky in range(3):
                for kx in range(3):
                    off = (ky - 1) * W + (kx - 1)
                    win = pad_buf[0:cin, pad + off:pad + off + HW]
                    if kx != 1:
                        win = win * xmask[kx]
                    acc = acc + jnp.dot(tap_w(ky, kx), win,
                                        preferred_element_type=jnp.float32)
            y = acc * scale + bias            # folded BatchNorm (inference)
            if residual is not None:
                y = y + residual
            return jnp.maximum(y, 0.0)

        # ---- stem ----
        a = conv3x3(x_ref[0], lambda ky, kx: w1_ref[ky, kx],
                    s1_ref[...], b1_ref[...])

        # ---- residual tower ----
        for blk in range(num_blocks):
            l1, l2 = 2 * blk, 2 * blk + 1
            y = conv3x3(a, lambda ky, kx, l=l1: wblk_ref[l, ky, kx],
                        sblk_ref[l1], bblk_ref[l1])
            a = conv3x3(y, lambda ky, kx, l=l2: wblk_ref[l, ky, kx],
                        sblk_ref[l2], bblk_ref[l2], residual=a)

        # ---- value head: 1x1 conv + BN + ReLU + fc2 + ReLU + fc3 + tanh ----
        v = jnp.dot(wv_ref[...], a, preferred_element_type=jnp.float32)
        v = jnp.maximum(v * sv_ref[...] + bv_ref[...], 0.0)          # (Cv, HW)
        # fc2 as one (Cv, HW) x (HW, Cv*fc) matmul; pick the diagonal blocks.
        t = jnp.dot(v, w2_ref[...], preferred_element_type=jnp.float32)
        h = b2_ref[...]                                               # (1, fc)
        for c in range(Cv):
            h = h + t[c:c + 1, c * fc_dim:(c + 1) * fc_dim]
        h = jnp.maximum(h, 0.0)
        out_v = jnp.tanh(jnp.sum(h * w3_ref[...], axis=1, keepdims=True)
                         + b3_ref[...])                               # (1, 1)
        # replicate across a full 128-lane row so the store is unmasked
        value_ref[0] = jnp.broadcast_to(out_v, (1, 128))

        # ---- policy head: 1x1 conv + BN + ReLU ----
        pmv = jnp.dot(wp_ref[...], a, preferred_element_type=jnp.float32)
        policy_ref[0] = jnp.maximum(pmv * sp_ref[...] + bp_ref[...], 0.0)

    return kernel


# ----------------------------------------------------------------------------
# One-time parameter preparation (layout transposes + BN folding, hoisted out
# of the per-forward path)
# ----------------------------------------------------------------------------
def _fold_bn(gamma, beta, mean, var):
    s = gamma * lax.rsqrt(var + EPS)
    return s, beta - mean * s


def prepare_params(p):
    base, cin = p["conv1_w"].shape[0], p["conv1_w"].shape[1]
    rows = max(base, cin)

    def conv3_k(w):                       # (O, I, 3, 3) -> (3, 3, O, I)
        return jnp.transpose(w, (2, 3, 0, 1)).astype(jnp.float32)

    w1 = conv3_k(p["conv1_w"])
    if rows > cin:                        # pad input channels to the buffer size
        w1 = jnp.pad(w1, ((0, 0), (0, 0), (0, 0), (0, rows - cin)))
    s1, b1 = _fold_bn(p["bn1_g"], p["bn1_b"], p["bn1_m"], p["bn1_v"])

    wblk, sblk, bblk = [], [], []
    for blk in p["blocks"]:
        for j in (1, 2):
            wblk.append(conv3_k(blk[f"conv{j}_w"]))
            s, b = _fold_bn(blk[f"bn{j}_g"], blk[f"bn{j}_b"],
                            blk[f"bn{j}_m"], blk[f"bn{j}_v"])
            sblk.append(s[:, None])
            bblk.append(b[:, None])

    sv, bv = _fold_bn(p["value_bn_g"], p["value_bn_b"],
                      p["value_bn_m"], p["value_bn_v"])
    sp, bp = _fold_bn(p["move_bn_g"], p["move_bn_b"],
                      p["move_bn_m"], p["move_bn_v"])

    fc_dim, F = p["value_fc2_w"].shape
    cv = p["value_conv_w"].shape[0]
    hw = F // cv
    # w2big[p, c*fc + j] = W2[j, c*HW + p]  (torch .view() flatten order)
    w2big = jnp.transpose(p["value_fc2_w"].reshape(fc_dim, cv, hw),
                          (2, 1, 0)).reshape(hw, cv * fc_dim)

    return {
        "w1": w1, "s1": s1[:, None], "b1": b1[:, None],
        "wblk": jnp.stack(wblk), "sblk": jnp.stack(sblk), "bblk": jnp.stack(bblk),
        "wv": p["value_conv_w"][:, :, 0, 0], "sv": sv[:, None], "bv": bv[:, None],
        "wp": p["move_conv_w"][:, :, 0, 0], "sp": sp[:, None], "bp": bp[:, None],
        "w2": w2big,
        "b2": p["value_fc2_b"].reshape(1, fc_dim),
        "w3": p["value_fc3_w"].reshape(1, fc_dim),
        "b3": p["value_fc3_b"].reshape(1, 1),
    }


# ----------------------------------------------------------------------------
# Forward pass (single fused pallas_call)
# ----------------------------------------------------------------------------
@jax.jit
def forward_pallas(prep, x_nchw):
    N, cin, H, W = x_nchw.shape
    HW = H * W
    rows = prep["w1"].shape[3]
    base = prep["w1"].shape[2]
    num_blocks = prep["wblk"].shape[0] // 2
    cv = prep["wv"].shape[0]
    cp = prep["wp"].shape[0]
    fc_dim = prep["b2"].shape[1]
    assert LANE_PAD >= W + 1

    x = x_nchw.astype(jnp.float32).reshape(N, cin, HW)
    if rows > cin:
        x = jnp.pad(x, ((0, 0), (0, rows - cin), (0, 0)))

    kernel = _make_fused_kernel(H, W, base, num_blocks, cv, cp, fc_dim, LANE_PAD)

    names = ("w1", "s1", "b1", "wblk", "sblk", "bblk",
             "wv", "sv", "bv", "wp", "sp", "bp", "w2", "b2", "w3", "b3")
    weights = [prep[k] for k in names]

    def full_spec(arr):
        nd = arr.ndim
        return pl.BlockSpec(arr.shape, lambda n, _nd=nd: (0,) * _nd)

    in_specs = ([pl.BlockSpec((1, rows, HW), lambda n: (n, 0, 0))]
                + [full_spec(w) for w in weights])
    out_specs = [pl.BlockSpec((1, 1, 128), lambda n: (n, 0, 0)),
                 pl.BlockSpec((1, cp, HW), lambda n: (n, 0, 0))]

    value, policy = pl.pallas_call(
        kernel,
        out_shape=(jax.ShapeDtypeStruct((N, 1, 128), jnp.float32),
                   jax.ShapeDtypeStruct((N, cp, HW), jnp.float32)),
        grid_spec=pltpu.PrefetchScalarGridSpec(
            num_scalar_prefetch=0,
            grid=(N,),
            in_specs=in_specs,
            out_specs=out_specs,
            scratch_shapes=[pltpu.VMEM((rows, HW + 2 * LANE_PAD), jnp.float32)]),
        compiler_params=pltpu.CompilerParams(
            dimension_semantics=("parallel",)),
    )(x, *weights)

    return value[:, 0, 0], policy.reshape(N, cp * HW)


# ----------------------------------------------------------------------------
# Deterministic init (torch layouts, incl. BN running stats) and reference
# ----------------------------------------------------------------------------
def init_params(key, board_size, input_dim, num_blocks, base, value_chans,
                policy_chans):
    keys = iter(jax.random.split(key, 64))

    def nrm(shape, s=0.1):
        return s * jax.random.normal(next(keys), shape, jnp.float32)

    def bn(chans, prefix, d):
        d[prefix + "_g"] = 1.0 + nrm((chans,))
        d[prefix + "_b"] = nrm((chans,))
        d[prefix + "_m"] = nrm((chans,))                                  # running mean
        d[prefix + "_v"] = 1.0 + 0.1 * jax.random.uniform(next(keys), (chans,))  # running var

    p = {}
    p["conv1_w"] = nrm((base, input_dim, 3, 3))
    bn(base, "bn1", p)
    p["blocks"] = []
    for _ in range(num_blocks):
        blk = {"conv1_w": nrm((base, base, 3, 3)),
               "conv2_w": nrm((base, base, 3, 3))}
        bn(base, "bn1", blk)
        bn(base, "bn2", blk)
        p["blocks"].append(blk)
    F = value_chans * board_size * board_size
    p["value_conv_w"] = nrm((value_chans, base, 1, 1))
    bn(value_chans, "value_bn", p)
    p["value_fc2_w"] = nrm((64, F), 0.05)
    p["value_fc2_b"] = nrm((64,))
    p["value_fc3_w"] = nrm((1, 64), 0.05)
    p["value_fc3_b"] = nrm((1,))
    p["move_conv_w"] = nrm((policy_chans, base, 1, 1))
    bn(policy_chans, "move_bn", p)
    return p


def forward_ref(p, x_nchw):
    """Pure-JAX NCHW reference mirroring the PyTorch forward (eval-mode BN)."""
    def conv(x, w):
        kh, kw = w.shape[2], w.shape[3]
        return lax.conv_general_dilated(
            x, w, (1, 1), [(kh // 2, kh // 2), (kw // 2, kw // 2)],
            dimension_numbers=("NCHW", "OIHW", "NCHW"))

    def bn(x, g, b, m, v):
        s = g * lax.rsqrt(v + EPS)
        return (x - m[None, :, None, None]) * s[None, :, None, None] \
            + b[None, :, None, None]

    relu = lambda t: jnp.maximum(t, 0.0)
    x = x_nchw.astype(jnp.float32)
    x = relu(bn(conv(x, p["conv1_w"]),
                p["bn1_g"], p["bn1_b"], p["bn1_m"], p["bn1_v"]))
    for blk in p["blocks"]:
        y = relu(bn(conv(x, blk["conv1_w"]),
                    blk["bn1_g"], blk["bn1_b"], blk["bn1_m"], blk["bn1_v"]))
        y = bn(conv(y, blk["conv2_w"]),
               blk["bn2_g"], blk["bn2_b"], blk["bn2_m"], blk["bn2_v"])
        x = relu(y + x)
    v = relu(bn(conv(x, p["value_conv_w"]),
                p["value_bn_g"], p["value_bn_b"], p["value_bn_m"], p["value_bn_v"]))
    v = v.reshape(v.shape[0], -1)
    v = relu(v @ p["value_fc2_w"].T + p["value_fc2_b"])
    v = v @ p["value_fc3_w"].T + p["value_fc3_b"]
    value = jnp.tanh(v)[:, 0]
    pm = relu(bn(conv(x, p["move_conv_w"]),
                 p["move_bn_g"], p["move_bn_b"], p["move_bn_m"], p["move_bn_v"]))
    policy = pm.reshape(pm.shape[0], -1)
    return value, policy


if __name__ == "__main__":
    board_size, input_dim, num_blocks = 16, 4, 2
    base_chans, value_chans, policy_chans = 32, 4, 4
    batch = 2

    key = jax.random.PRNGKey(0)
    kp, kx = jax.random.split(key)
    params = init_params(kp, board_size, input_dim, num_blocks,
                         base_chans, value_chans, policy_chans)
    # board planes (module docstring says int32 boards; conv consumes float planes)
    x = jax.random.normal(kx, (batch, input_dim, board_size, board_size),
                          jnp.float32)

    prep = prepare_params(params)          # one-time weight repack / BN fold
    value, policy = forward_pallas(prep, x)
    jax.block_until_ready((value, policy))

    value_ref, policy_ref = forward_ref(params, x)
    assert value.shape == (batch,)
    assert policy.shape == (batch, policy_chans * board_size * board_size)
    assert jnp.max(jnp.abs(value - value_ref)) < 2e-3
    assert jnp.max(jnp.abs(policy - policy_ref)) < 2e-3
    print("KERNEL_OK")
</pallas_src>

<mosaic_0001>
module attributes {stable_mosaic.version = 11 : i64} {
  func.func @kernel(%arg0: i32, %arg1: memref<1x32x256xf32, #tpu.memory_space<vmem>>, %arg2: memref<3x3x32x32xf32, #tpu.memory_space<vmem>>, %arg3: memref<32x1xf32, #tpu.memory_space<vmem>>, %arg4: memref<32x1xf32, #tpu.memory_space<vmem>>, %arg5: memref<4x3x3x32x32xf32, #tpu.memory_space<vmem>>, %arg6: memref<4x32x1xf32, #tpu.memory_space<vmem>>, %arg7: memref<4x32x1xf32, #tpu.memory_space<vmem>>, %arg8: memref<4x32xf32, #tpu.memory_space<vmem>>, %arg9: memref<4x1xf32, #tpu.memory_space<vmem>>, %arg10: memref<4x1xf32, #tpu.memory_space<vmem>>, %arg11: memref<4x32xf32, #tpu.memory_space<vmem>>, %arg12: memref<4x1xf32, #tpu.memory_space<vmem>>, %arg13: memref<4x1xf32, #tpu.memory_space<vmem>>, %arg14: memref<256x256xf32, #tpu.memory_space<vmem>>, %arg15: memref<1x64xf32, #tpu.memory_space<vmem>>, %arg16: memref<1x64xf32, #tpu.memory_space<vmem>>, %arg17: memref<1x1xf32, #tpu.memory_space<vmem>>, %arg18: memref<1x1x128xf32, #tpu.memory_space<vmem>>, %arg19: memref<1x4x256xf32, #tpu.memory_space<vmem>>, %arg20: memref<32x512xf32, #tpu.memory_space<vmem>>) attributes {dimension_semantics = [#tpu.dimension_semantics<parallel>], iteration_bounds = array<i64: 2>, scalar_prefetch = 0 : i64, scratch_operands = 1 : i64, tpu.core_type = #tpu.core_type<tc>, window_params = [{transform_indices = @transform_0, window_bounds = array<i64: 1, 32, 256>}, {pipeline_mode = #tpu.pipeline_mode<synchronous>, transform_indices = @transform_1, window_bounds = array<i64: 3, 3, 32, 32>}, {pipeline_mode = #tpu.pipeline_mode<synchronous>, transform_indices = @transform_2, window_bounds = array<i64: 32, 1>}, {pipeline_mode = #tpu.pipeline_mode<synchronous>, transform_indices = @transform_3, window_bounds = array<i64: 32, 1>}, {pipeline_mode = #tpu.pipeline_mode<synchronous>, transform_indices = @transform_4, window_bounds = array<i64: 4, 3, 3, 32, 32>}, {pipeline_mode = #tpu.pipeline_mode<synchronous>, transform_indices = @transform_5, window_bounds = array<i64: 4, 32, 1>}, {pipeline_mode = #tpu.pipeline_mode<synchronous>, transform_indices = @transform_6, window_bounds = array<i64: 4, 32, 1>}, {pipeline_mode = #tpu.pipeline_mode<synchronous>, transform_indices = @transform_7, window_bounds = array<i64: 4, 32>}, {pipeline_mode = #tpu.pipeline_mode<synchronous>, transform_indices = @transform_8, window_bounds = array<i64: 4, 1>}, {pipeline_mode = #tpu.pipeline_mode<synchronous>, transform_indices = @transform_9, window_bounds = array<i64: 4, 1>}, {pipeline_mode = #tpu.pipeline_mode<synchronous>, transform_indices = @transform_10, window_bounds = array<i64: 4, 32>}, {pipeline_mode = #tpu.pipeline_mode<synchronous>, transform_indices = @transform_11, window_bounds = array<i64: 4, 1>}, {pipeline_mode = #tpu.pipeline_mode<synchronous>, transform_indices = @transform_12, window_bounds = array<i64: 4, 1>}, {pipeline_mode = #tpu.pipeline_mode<synchronous>, transform_indices = @transform_13, window_bounds = array<i64: 256, 256>}, {pipeline_mode = #tpu.pipeline_mode<synchronous>, transform_indices = @transform_14, window_bounds = array<i64: 1, 64>}, {pipeline_mode = #tpu.pipeline_mode<synchronous>, transform_indices = @transform_15, window_bounds = array<i64: 1, 64>}, {pipeline_mode = #tpu.pipeline_mode<synchronous>, transform_indices = @transform_16, window_bounds = array<i64: 1, 1>}, {transform_indices = @transform_17, window_bounds = array<i64: 1, 1, 128>}, {transform_indices = @transform_18, window_bounds = array<i64: 1, 4, 256>}]} {
    %cst = arith.constant 0.000000e+00 : f32
    %0 = vector.broadcast %cst : f32 to vector<32x512xf32>
    %c0 = arith.constant 0 : index
    %c0_0 = arith.constant 0 : index
    %1 = vector.load %arg20[%c0, %c0_0] : memref<32x512xf32, #tpu.memory_space<vmem>>, vector<32x512xf32>
    tpu.vector_store %arg20[%c0, %c0_0], %0 {strides = array<i32>} : memref<32x512xf32, #tpu.memory_space<vmem>>, vector<32x512xf32>,
    %2 = tpu.iota {dimensions = array<i32: 1>} : vector<1x256xi32>
    %c16_i32 = arith.constant 16 : i32
    %c0_i32 = arith.constant 0 : i32
    %3 = arith.cmpi eq, %c16_i32, %c0_i32 : i32
    %c1_i32 = arith.constant 1 : i32
    %4 = arith.select %3, %c1_i32, %c16_i32 : i32
    %5 = vector.broadcast %4 : i32 to vector<1x256xi32>
    %6 = arith.remsi %2, %5 : vector<1x256xi32>
    %c0_i32_1 = arith.constant 0 : i32
    %7 = vector.broadcast %c0_i32_1 : i32 to vector<1x256xi32>
    %8 = arith.cmpi ne, %6, %7 : vector<1x256xi32>
    %c0_i32_2 = arith.constant 0 : i32
    %9 = vector.broadcast %c0_i32_2 : i32 to vector<1x256xi32>
    %10 = arith.cmpi slt, %6, %9 : vector<1x256xi32>
    %c0_i32_3 = arith.constant 0 : i32
    %11 = arith.cmpi slt, %4, %c0_i32_3 : i32
    %12 = vector.broadcast %11 : i1 to vector<1x256xi1>
    %13 = vector.broadcast %12 : vector<1x256xi1> to vector<1x256xi1>
    %14 = arith.xori %10, %13 : vector<1x256xi1>
    %15 = arith.andi %14, %8 : vector<1x256xi1>
    %16 = vector.broadcast %4 : i32 to vector<1x256xi32>
    %17 = arith.addi %6, %16 : vector<1x256xi32>
    %18 = arith.select %15, %17, %6 : vector<1x256xi1>, vector<1x256xi32>
    %c-1_i32 = arith.constant -1 : i32
    %19 = vector.broadcast %c-1_i32 : i32 to vector<1x256xi32>
    %20 = arith.addi %18, %19 : vector<1x256xi32>
    %c0_i32_4 = arith.constant 0 : i32
    %21 = vector.broadcast %c0_i32_4 : i32 to vector<1x256xi32>
    %22 = arith.cmpi sge, %20, %21 : vector<1x256xi32>
    %c-1_i32_5 = arith.constant -1 : i32
    %23 = vector.broadcast %c-1_i32_5 : i32 to vector<1x256xi32>
    %24 = arith.addi %18, %23 : vector<1x256xi32>
    %c16_i32_6 = arith.constant 16 : i32
    %25 = vector.broadcast %c16_i32_6 : i32 to vector<1x256xi32>
    %26 = arith.cmpi slt, %24, %25 : vector<1x256xi32>
    %27 = arith.andi %22, %26 : vector<1x256xi1>
    %28 = arith.extui %27 : vector<1x256xi1> to vector<1x256xi32>
    %29 = arith.sitofp %28 : vector<1x256xi32> to vector<1x256xf32>
    %c1_i32_7 = arith.constant 1 : i32
    %30 = vector.broadcast %c1_i32_7 : i32 to vector<1x256xi32>
    %31 = arith.addi %18, %30 : vector<1x256xi32>
    %c0_i32_8 = arith.constant 0 : i32
    %32 = vector.broadcast %c0_i32_8 : i32 to vector<1x256xi32>
    %33 = arith.cmpi sge, %31, %32 : vector<1x256xi32>
    %c1_i32_9 = arith.constant 1 : i32
    %34 = vector.broadcast %c1_i32_9 : i32 to vector<1x256xi32>
    %35 = arith.addi %18, %34 : vector<1x256xi32>
    %c16_i32_10 = arith.constant 16 : i32
    %36 = vector.broadcast %c16_i32_10 : i32 to vector<1x256xi32>
    %37 = arith.cmpi slt, %35, %36 : vector<1x256xi32>
    %38 = arith.andi %33, %37 : vector<1x256xi1>
    %39 = arith.extui %38 : vector<1x256xi1> to vector<1x256xi32>
    %40 = arith.sitofp %39 : vector<1x256xi32> to vector<1x256xf32>
    %c0_11 = arith.constant 0 : index
    %c0_12 = arith.constant 0 : index
    %c0_13 = arith.constant 0 : index
    %41 = vector.load %arg1[%c0_11, %c0_12, %c0_13] : memref<1x32x256xf32, #tpu.memory_space<vmem>>, vector<1x32x256xf32>
    %42 = vector.shape_cast %41 : vector<1x32x256xf32> to vector<32x256xf32>
    %c0_14 = arith.constant 0 : index
    %c0_15 = arith.constant 0 : index
    %43 = vector.load %arg3[%c0_14, %c0_15] : memref<32x1xf32, #tpu.memory_space<vmem>>, vector<32x1xf32>
    %c0_16 = arith.constant 0 : index
    %c0_17 = arith.constant 0 : index
    %44 = vector.load %arg4[%c0_16, %c0_17] : memref<32x1xf32, #tpu.memory_space<vmem>>, vector<32x1xf32>
    %c0_18 = arith.constant 0 : index
    %c128 = arith.constant 128 : index
    %45 = vector.load %arg20[%c0_18, %c128] : memref<32x512xf32, #tpu.memory_space<vmem>>, vector<32x256xf32>
    tpu.vector_store %arg20[%c0_18, %c128], %42 {strides = array<i32>} : memref<32x512xf32, #tpu.memory_space<vmem>>, vector<32x256xf32>,
    %cst_19 = arith.constant 0.000000e+00 : f32
    %46 = vector.broadcast %cst_19 : f32 to vector<32x256xf32>
    %c0_20 = arith.constant 0 : index
    %c111 = arith.constant 111 : index
    %47 = vector.load %arg20[%c0_20, %c111] : memref<32x512xf32, #tpu.memory_space<vmem>>, vector<32x256xf32>
    %48 = vector.broadcast %29 : vector<1x256xf32> to vector<32x256xf32>
    %49 = arith.mulf %47, %48 : vector<32x256xf32>
    %c0_21 = arith.constant 0 : index
    %c0_22 = arith.constant 0 : index
    %c0_23 = arith.constant 0 : index
    %c0_24 = arith.constant 0 : index
    %50 = vector.load %arg2[%c0_21, %c0_22, %c0_23, %c0_24] : memref<3x3x32x32xf32, #tpu.memory_space<vmem>>, vector<1x1x32x32xf32>
    %51 = vector.shape_cast %50 : vector<1x1x32x32xf32> to vector<32x32xf32>
    %cst_25 = arith.constant dense<0.000000e+00> : vector<32x256xf32>
    %52 = tpu.matmul %51, %49, %cst_25 {dimension_numbers = #tpu.dot_dimension_numbers<[1], [0], [0], [1], [0, 0, 1, 1], [], []>} : vector<32x32xf32>, vector<32x256xf32>, vector<32x256xf32> -> vector<32x256xf32>
    %53 = arith.addf %46, %52 : vector<32x256xf32>
    %c0_26 = arith.constant 0 : index
    %c112 = arith.constant 112 : index
    %54 = vector.load %arg20[%c0_26, %c112] : memref<32x512xf32, #tpu.memory_space<vmem>>, vector<32x256xf32>
    %c0_27 = arith.constant 0 : index
    %c1 = arith.constant 1 : index
    %c0_28 = arith.constant 0 : index
    %c0_29 = arith.constant 0 : index
    %55 = vector.load %arg2[%c0_27, %c1, %c0_28, %c0_29] : memref<3x3x32x32xf32, #tpu.memory_space<vmem>>, vector<1x1x32x32xf32>
    %56 = vector.shape_cast %55 : vector<1x1x32x32xf32> to vector<32x32xf32>
    %cst_30 = arith.constant dense<0.000000e+00> : vector<32x256xf32>
    %57 = tpu.matmul %56, %54, %cst_30 {dimension_numbers = #tpu.dot_dimension_numbers<[1], [0], [0], [1], [0, 0, 1, 1], [], []>} : vector<32x32xf32>, vector<32x256xf32>, vector<32x256xf32> -> vector<32x256xf32>
    %58 = arith.addf %53, %57 : vector<32x256xf32>
    %c0_31 = arith.constant 0 : index
    %c113 = arith.constant 113 : index
    %59 = vector.load %arg20[%c0_31, %c113] : memref<32x512xf32, #tpu.memory_space<vmem>>, vector<32x256xf32>
    %60 = vector.broadcast %40 : vector<1x256xf32> to vector<32x256xf32>
    %61 = arith.mulf %59, %60 : vector<32x256xf32>
    %c0_32 = arith.constant 0 : index
    %c2 = arith.constant 2 : index
    %c0_33 = arith.constant 0 : index
    %c0_34 = arith.constant 0 : index
    %62 = vector.load %arg2[%c0_32, %c2, %c0_33, %c0_34] : memref<3x3x32x32xf32, #tpu.memory_space<vmem>>, vector<1x1x32x32xf32>
    %63 = vector.shape_cast %62 : vector<1x1x32x32xf32> to vector<32x32xf32>
    %cst_35 = arith.constant dense<0.000000e+00> : vector<32x256xf32>
    %64 = tpu.matmul %63, %61, %cst_35 {dimension_numbers = #tpu.dot_dimension_numbers<[1], [0], [0], [1], [0, 0, 1, 1], [], []>} : vector<32x32xf32>, vector<32x256xf32>, vector<32x256xf32> -> vector<32x256xf32>
    %65 = arith.addf %58, %64 : vector<32x256xf32>
    %c0_36 = arith.constant 0 : index
    %c127 = arith.constant 127 : index
    %66 = vector.load %arg20[%c0_36, %c127] : memref<32x512xf32, #tpu.memory_space<vmem>>, vector<32x256xf32>
    %67 = vector.broadcast %29 : vector<1x256xf32> to vector<32x256xf32>
    %68 = arith.mulf %66, %67 : vector<32x256xf32>
    %c1_37 = arith.constant 1 : index
    %c0_38 = arith.constant 0 : index
    %c0_39 = arith.constant 0 : index
    %c0_40 = arith.constant 0 : index
    %69 = vector.load %arg2[%c1_37, %c0_38, %c0_39, %c0_40] : memref<3x3x32x32xf32, #tpu.memory_space<vmem>>, vector<1x1x32x32xf32>
    %70 = vector.shape_cast %69 : vector<1x1x32x32xf32> to vector<32x32xf32>
    %cst_41 = arith.constant dense<0.000000e+00> : vector<32x256xf32>
    %71 = tpu.matmul %70, %68, %cst_41 {dimension_numbers = #tpu.dot_dimension_numbers<[1], [0], [0], [1], [0, 0, 1, 1], [], []>} : vector<32x32xf32>, vector<32x256xf32>, vector<32x256xf32> -> vector<32x256xf32>
    %72 = arith.addf %65, %71 : vector<32x256xf32>
    %c0_42 = arith.constant 0 : index
    %c128_43 = arith.constant 128 : index
    %73 = vector.load %arg20[%c0_42, %c128_43] : memref<32x512xf32, #tpu.memory_space<vmem>>, vector<32x256xf32>
    %c1_44 = arith.constant 1 : index
    %c1_45 = arith.constant 1 : index
    %c0_46 = arith.constant 0 : index
    %c0_47 = arith.constant 0 : index
    %74 = vector.load %arg2[%c1_44, %c1_45, %c0_46, %c0_47] : memref<3x3x32x32xf32, #tpu.memory_space<vmem>>, vector<1x1x32x32xf32>
    %75 = vector.shape_cast %74 : vector<1x1x32x32xf32> to vector<32x32xf32>
    %cst_48 = arith.constant dense<0.000000e+00> : vector<32x256xf32>
    %76 = tpu.matmul %75, %73, %cst_48 {dimension_numbers = #tpu.dot_dimension_numbers<[1], [0], [0], [1], [0, 0, 1, 1], [], []>} : vector<32x32xf32>, vector<32x256xf32>, vector<32x256xf32> -> vector<32x256xf32>
    %77 = arith.addf %72, %76 : vector<32x256xf32>
    %c0_49 = arith.constant 0 : index
    %c129 = arith.constant 129 : index
    %78 = vector.load %arg20[%c0_49, %c129] : memref<32x512xf32, #tpu.memory_space<vmem>>, vector<32x256xf32>
    %79 = vector.broadcast %40 : vector<1x256xf32> to vector<32x256xf32>
    %80 = arith.mulf %78, %79 : vector<32x256xf32>
    %c1_50 = arith.constant 1 : index
    %c2_51 = arith.constant 2 : index
    %c0_52 = arith.constant 0 : index
    %c0_53 = arith.constant 0 : index
    %81 = vector.load %arg2[%c1_50, %c2_51, %c0_52, %c0_53] : memref<3x3x32x32xf32, #tpu.memory_space<vmem>>, vector<1x1x32x32xf32>
    %82 = vector.shape_cast %81 : vector<1x1x32x32xf32> to vector<32x32xf32>
    %cst_54 = arith.constant dense<0.000000e+00> : vector<32x256xf32>
    %83 = tpu.matmul %82, %80, %cst_54 {dimension_numbers = #tpu.dot_dimension_numbers<[1], [0], [0], [1], [0, 0, 1, 1], [], []>} : vector<32x32xf32>, vector<32x256xf32>, vector<32x256xf32> -> vector<32x256xf32>
    %84 = arith.addf %77, %83 : vector<32x256xf32>
    %c0_55 = arith.constant 0 : index
    %c143 = arith.constant 143 : index
    %85 = vector.load %arg20[%c0_55, %c143] : memref<32x512xf32, #tpu.memory_space<vmem>>, vector<32x256xf32>
    %86 = vector.broadcast %29 : vector<1x256xf32> to vector<32x256xf32>
    %87 = arith.mulf %85, %86 : vector<32x256xf32>
    %c2_56 = arith.constant 2 : index
    %c0_57 = arith.constant 0 : index
    %c0_58 = arith.constant 0 : index
    %c0_59 = arith.constant 0 : index
    %88 = vector.load %arg2[%c2_56, %c0_57, %c0_58, %c0_59] : memref<3x3x32x32xf32, #tpu.memory_space<vmem>>, vector<1x1x32x32xf32>
    %89 = vector.shape_cast %88 : vector<1x1x32x32xf32> to vector<32x32xf32>
    %cst_60 = arith.constant dense<0.000000e+00> : vector<32x256xf32>
    %90 = tpu.matmul %89, %87, %cst_60 {dimension_numbers = #tpu.dot_dimension_numbers<[1], [0], [0], [1], [0, 0, 1, 1], [], []>} : vector<32x32xf32>, vector<32x256xf32>, vector<32x256xf32> -> vector<32x256xf32>
    %91 = arith.addf %84, %90 : vector<32x256xf32>
    %c0_61 = arith.constant 0 : index
    %c144 = arith.constant 144 : index
    %92 = vector.load %arg20[%c0_61, %c144] : memref<32x512xf32, #tpu.memory_space<vmem>>, vector<32x256xf32>
    %c2_62 = arith.constant 2 : index
    %c1_63 = arith.constant 1 : index
    %c0_64 = arith.constant 0 : index
    %c0_65 = arith.constant 0 : index
    %93 = vector.load %arg2[%c2_62, %c1_63, %c0_64, %c0_65] : memref<3x3x32x32xf32, #tpu.memory_space<vmem>>, vector<1x1x32x32xf32>
    %94 = vector.shape_cast %93 : vector<1x1x32x32xf32> to vector<32x32xf32>
    %cst_66 = arith.constant dense<0.000000e+00> : vector<32x256xf32>
    %95 = tpu.matmul %94, %92, %cst_66 {dimension_numbers = #tpu.dot_dimension_numbers<[1], [0], [0], [1], [0, 0, 1, 1], [], []>} : vector<32x32xf32>, vector<32x256xf32>, vector<32x256xf32> -> vector<32x256xf32>
    %96 = arith.addf %91, %95 : vector<32x256xf32>
    %c0_67 = arith.constant 0 : index
    %c145 = arith.constant 145 : index
    %97 = vector.load %arg20[%c0_67, %c145] : memref<32x512xf32, #tpu.memory_space<vmem>>, vector<32x256xf32>
    %98 = vector.broadcast %40 : vector<1x256xf32> to vector<32x256xf32>
    %99 = arith.mulf %97, %98 : vector<32x256xf32>
    %c2_68 = arith.constant 2 : index
    %c2_69 = arith.constant 2 : index
    %c0_70 = arith.constant 0 : index
    %c0_71 = arith.constant 0 : index
    %100 = vector.load %arg2[%c2_68, %c2_69, %c0_70, %c0_71] : memref<3x3x32x32xf32, #tpu.memory_space<vmem>>, vector<1x1x32x32xf32>
    %101 = vector.shape_cast %100 : vector<1x1x32x32xf32> to vector<32x32xf32>
    %cst_72 = arith.constant dense<0.000000e+00> : vector<32x256xf32>
    %102 = tpu.matmul %101, %99, %cst_72 {dimension_numbers = #tpu.dot_dimension_numbers<[1], [0], [0], [1], [0, 0, 1, 1], [], []>} : vector<32x32xf32>, vector<32x256xf32>, vector<32x256xf32> -> vector<32x256xf32>
    %103 = arith.addf %96, %102 : vector<32x256xf32>
    %104 = vector.broadcast %43 : vector<32x1xf32> to vector<32x256xf32>
    %105 = arith.mulf %103, %104 : vector<32x256xf32>
    %106 = vector.broadcast %44 : vector<32x1xf32> to vector<32x256xf32>
    %107 = arith.addf %105, %106 : vector<32x256xf32>
    %cst_73 = arith.constant 0.000000e+00 : f32
    %108 = vector.broadcast %cst_73 : f32 to vector<32x256xf32>
    %109 = arith.maximumf %107, %108 : vector<32x256xf32>
    %c0_74 = arith.constant 0 : index
    %c0_75 = arith.constant 0 : index
    %c0_76 = arith.constant 0 : index
    %110 = vector.load %arg6[%c0_74, %c0_75, %c0_76] : memref<4x32x1xf32, #tpu.memory_space<vmem>>, vector<1x32x1xf32>
    %111 = vector.shape_cast %110 : vector<1x32x1xf32> to vector<32x1xf32>
    %c0_77 = arith.constant 0 : index
    %c0_78 = arith.constant 0 : index
    %c0_79 = arith.constant 0 : index
    %112 = vector.load %arg7[%c0_77, %c0_78, %c0_79] : memref<4x32x1xf32, #tpu.memory_space<vmem>>, vector<1x32x1xf32>
    %113 = vector.shape_cast %112 : vector<1x32x1xf32> to vector<32x1xf32>
    %c0_80 = arith.constant 0 : index
    %c128_81 = arith.constant 128 : index
    %114 = vector.load %arg20[%c0_80, %c128_81] : memref<32x512xf32, #tpu.memory_space<vmem>>, vector<32x256xf32>
    tpu.vector_store %arg20[%c0_80, %c128_81], %109 {strides = array<i32>} : memref<32x512xf32, #tpu.memory_space<vmem>>, vector<32x256xf32>,
    %cst_82 = arith.constant 0.000000e+00 : f32
    %115 = vector.broadcast %cst_82 : f32 to vector<32x256xf32>
    %c0_83 = arith.constant 0 : index
    %c111_84 = arith.constant 111 : index
    %116 = vector.load %arg20[%c0_83, %c111_84] : memref<32x512xf32, #tpu.memory_space<vmem>>, vector<32x256xf32>
    %117 = vector.broadcast %29 : vector<1x256xf32> to vector<32x256xf32>
    %118 = arith.mulf %116, %117 : vector<32x256xf32>
    %c0_85 = arith.constant 0 : index
    %c0_86 = arith.constant 0 : index
    %c0_87 = arith.constant 0 : index
    %c0_88 = arith.constant 0 : index
    %c0_89 = arith.constant 0 : index
    %119 = vector.load %arg5[%c0_85, %c0_86, %c0_87, %c0_88, %c0_89] : memref<4x3x3x32x32xf32, #tpu.memory_space<vmem>>, vector<1x1x1x32x32xf32>
    %120 = vector.shape_cast %119 : vector<1x1x1x32x32xf32> to vector<32x32xf32>
    %cst_90 = arith.constant dense<0.000000e+00> : vector<32x256xf32>
    %121 = tpu.matmul %120, %118, %cst_90 {dimension_numbers = #tpu.dot_dimension_numbers<[1], [0], [0], [1], [0, 0, 1, 1], [], []>} : vector<32x32xf32>, vector<32x256xf32>, vector<32x256xf32> -> vector<32x256xf32>
    %122 = arith.addf %115, %121 : vector<32x256xf32>
    %c0_91 = arith.constant 0 : index
    %c112_92 = arith.constant 112 : index
    %123 = vector.load %arg20[%c0_91, %c112_92] : memref<32x512xf32, #tpu.memory_space<vmem>>, vector<32x256xf32>
    %c0_93 = arith.constant 0 : index
    %c0_94 = arith.constant 0 : index
    %c1_95 = arith.constant 1 : index
    %c0_96 = arith.constant 0 : index
    %c0_97 = arith.constant 0 : index
    %124 = vector.load %arg5[%c0_93, %c0_94, %c1_95, %c0_96, %c0_97] : memref<4x3x3x32x32xf32, #tpu.memory_space<vmem>>, vector<1x1x1x32x32xf32>
    %125 = vector.shape_cast %124 : vector<1x1x1x32x32xf32> to vector<32x32xf32>
    %cst_98 = arith.constant dense<0.000000e+00> : vector<32x256xf32>
    %126 = tpu.matmul %125, %123, %cst_98 {dimension_numbers = #tpu.dot_dimension_numbers<[1], [0], [0], [1], [0, 0, 1, 1], [], []>} : vector<32x32xf32>, vector<32x256xf32>, vector<32x256xf32> -> vector<32x256xf32>
    %127 = arith.addf %122, %126 : vector<32x256xf32>
    %c0_99 = arith.constant 0 : index
    %c113_100 = arith.constant 113 : index
    %128 = vector.load %arg20[%c0_99, %c113_100] : memref<32x512xf32, #tpu.memory_space<vmem>>, vector<32x256xf32>
    %129 = vector.broadcast %40 : vector<1x256xf32> to vector<32x256xf32>
    %130 = arith.mulf %128, %129 : vector<32x256xf32>
    %c0_101 = arith.constant 0 : index
    %c0_102 = arith.constant 0 : index
    %c2_103 = arith.constant 2 : index
    %c0_104 = arith.constant 0 : index
    %c0_105 = arith.constant 0 : index
    %131 = vector.load %arg5[%c0_101, %c0_102, %c2_103, %c0_104, %c0_105] : memref<4x3x3x32x32xf32, #tpu.memory_space<vmem>>, vector<1x1x1x32x32xf32>
    %132 = vector.shape_cast %131 : vector<1x1x1x32x32xf32> to vector<32x32xf32>
    %cst_106 = arith.constant dense<0.000000e+00> : vector<32x256xf32>
    %133 = tpu.matmul %132, %130, %cst_106 {dimension_numbers = #tpu.dot_dimension_numbers<[1], [0], [0], [1], [0, 0, 1, 1], [], []>} : vector<32x32xf32>, vector<32x256xf32>, vector<32x256xf32> -> vector<32x256xf32>
    %134 = arith.addf %127, %133 : vector<32x256xf32>
    %c0_107 = arith.constant 0 : index
    %c127_108 = arith.constant 127 : index
    %135 = vector.load %arg20[%c0_107, %c127_108] : memref<32x512xf32, #tpu.memory_space<vmem>>, vector<32x256xf32>
    %136 = vector.broadcast %29 : vector<1x256xf32> to vector<32x256xf32>
    %137 = arith.mulf %135, %136 : vector<32x256xf32>
    %c0_109 = arith.constant 0 : index
    %c1_110 = arith.constant 1 : index
    %c0_111 = arith.constant 0 : index
    %c0_112 = arith.constant 0 : index
    %c0_113 = arith.constant 0 : index
    %138 = vector.load %arg5[%c0_109, %c1_110, %c0_111, %c0_112, %c0_113] : memref<4x3x3x32x32xf32, #tpu.memory_space<vmem>>, vector<1x1x1x32x32xf32>
    %139 = vector.shape_cast %138 : vector<1x1x1x32x32xf32> to vector<32x32xf32>
    %cst_114 = arith.constant dense<0.000000e+00> : vector<32x256xf32>
    %140 = tpu.matmul %139, %137, %cst_114 {dimension_numbers = #tpu.dot_dimension_numbers<[1], [0], [0], [1], [0, 0, 1, 1], [], []>} : vector<32x32xf32>, vector<32x256xf32>, vector<32x256xf32> -> vector<32x256xf32>
    %141 = arith.addf %134, %140 : vector<32x256xf32>
    %c0_115 = arith.constant 0 : index
    %c128_116 = arith.constant 128 : index
    %142 = vector.load %arg20[%c0_115, %c128_116] : memref<32x512xf32, #tpu.memory_space<vmem>>, vector<32x256xf32>
    %c0_117 = arith.constant 0 : index
    %c1_118 = arith.constant 1 : index
    %c1_119 = arith.constant 1 : index
    %c0_120 = arith.constant 0 : index
    %c0_121 = arith.constant 0 : index
    %143 = vector.load %arg5[%c0_117, %c1_118, %c1_119, %c0_120, %c0_121] : memref<4x3x3x32x32xf32, #tpu.memory_space<vmem>>, vector<1x1x1x32x32xf32>
    %144 = vector.shape_cast %143 : vector<1x1x1x32x32xf32> to vector<32x32xf32>
    %cst_122 = arith.constant dense<0.000000e+00> : vector<32x256xf32>
    %145 = tpu.matmul %144, %142, %cst_122 {dimension_numbers = #tpu.dot_dimension_numbers<[1], [0], [0], [1], [0, 0, 1, 1], [], []>} : vector<32x32xf32>, vector<32x256xf32>, vector<32x256xf32> -> vector<32x256xf32>
    %146 = arith.addf %141, %145 : vector<32x256xf32>
    %c0_123 = arith.constant 0 : index
    %c129_124 = arith.constant 129 : index
    %147 = vector.load %arg20[%c0_123, %c129_124] : memref<32x512xf32, #tpu.memory_space<vmem>>, vector<32x256xf32>
    %148 = vector.broadcast %40 : vector<1x256xf32> to vector<32x256xf32>
    %149 = arith.mulf %147, %148 : vector<32x256xf32>
    %c0_125 = arith.constant 0 : index
    %c1_126 = arith.constant 1 : index
    %c2_127 = arith.constant 2 : index
    %c0_128 = arith.constant 0 : index
    %c0_129 = arith.constant 0 : index
    %150 = vector.load %arg5[%c0_125, %c1_126, %c2_127, %c0_128, %c0_129] : memref<4x3x3x32x32xf32, #tpu.memory_space<vmem>>, vector<1x1x1x32x32xf32>
    %151 = vector.shape_cast %150 : vector<1x1x1x32x32xf32> to vector<32x32xf32>
    %cst_130 = arith.constant dense<0.000000e+00> : vector<32x256xf32>
    %152 = tpu.matmul %151, %149, %cst_130 {dimension_numbers = #tpu.dot_dimension_numbers<[1], [0], [0], [1], [0, 0, 1, 1], [], []>} : vector<32x32xf32>, vector<32x256xf32>, vector<32x256xf32> -> vector<32x256xf32>
    %153 = arith.addf %146, %152 : vector<32x256xf32>
    %c0_131 = arith.constant 0 : index
    %c143_132 = arith.constant 143 : index
    %154 = vector.load %arg20[%c0_131, %c143_132] : memref<32x512xf32, #tpu.memory_space<vmem>>, vector<32x256xf32>
    %155 = vector.broadcast %29 : vector<1x256xf32> to vector<32x256xf32>
    %156 = arith.mulf %154, %155 : vector<32x256xf32>
    %c0_133 = arith.constant 0 : index
    %c2_134 = arith.constant 2 : index
    %c0_135 = arith.constant 0 : index
    %c0_136 = arith.constant 0 : index
    %c0_137 = arith.constant 0 : index
    %157 = vector.load %arg5[%c0_133, %c2_134, %c0_135, %c0_136, %c0_137] : memref<4x3x3x32x32xf32, #tpu.memory_space<vmem>>, vector<1x1x1x32x32xf32>
    %158 = vector.shape_cast %157 : vector<1x1x1x32x32xf32> to vector<32x32xf32>
    %cst_138 = arith.constant dense<0.000000e+00> : vector<32x256xf32>
    %159 = tpu.matmul %158, %156, %cst_138 {dimension_numbers = #tpu.dot_dimension_numbers<[1], [0], [0], [1], [0, 0, 1, 1], [], []>} : vector<32x32xf32>, vector<32x256xf32>, vector<32x256xf32> -> vector<32x256xf32>
    %160 = arith.addf %153, %159 : vector<32x256xf32>
    %c0_139 = arith.constant 0 : index
    %c144_140 = arith.constant 144 : index
    %161 = vector.load %arg20[%c0_139, %c144_140] : memref<32x512xf32, #tpu.memory_space<vmem>>, vector<32x256xf32>
    %c0_141 = arith.constant 0 : index
    %c2_142 = arith.constant 2 : index
    %c1_143 = arith.constant 1 : index
    %c0_144 = arith.constant 0 : index
    %c0_145 = arith.constant 0 : index
    %162 = vector.load %arg5[%c0_141, %c2_142, %c1_143, %c0_144, %c0_145] : memref<4x3x3x32x32xf32, #tpu.memory_space<vmem>>, vector<1x1x1x32x32xf32>
    %163 = vector.shape_cast %162 : vector<1x1x1x32x32xf32> to vector<32x32xf32>
    %cst_146 = arith.constant dense<0.000000e+00> : vector<32x256xf32>
    %164 = tpu.matmul %163, %161, %cst_146 {dimension_numbers = #tpu.dot_dimension_numbers<[1], [0], [0], [1], [0, 0, 1, 1], [], []>} : vector<32x32xf32>, vector<32x256xf32>, vector<32x256xf32> -> vector<32x256xf32>
    %165 = arith.addf %160, %164 : vector<32x256xf32>
    %c0_147 = arith.constant 0 : index
    %c145_148 = arith.constant 145 : index
    %166 = vector.load %arg20[%c0_147, %c145_148] : memref<32x512xf32, #tpu.memory_space<vmem>>, vector<32x256xf32>
    %167 = vector.broadcast %40 : vector<1x256xf32> to vector<32x256xf32>
    %168 = arith.mulf %166, %167 : vector<32x256xf32>
    %c0_149 = arith.constant 0 : index
    %c2_150 = arith.constant 2 : index
    %c2_151 = arith.constant 2 : index
    %c0_152 = arith.constant 0 : index
    %c0_153 = arith.constant 0 : index
    %169 = vector.load %arg5[%c0_149, %c2_150, %c2_151, %c0_152, %c0_153] : memref<4x3x3x32x32xf32, #tpu.memory_space<vmem>>, vector<1x1x1x32x32xf32>
    %170 = vector.shape_cast %169 : vector<1x1x1x32x32xf32> to vector<32x32xf32>
    %cst_154 = arith.constant dense<0.000000e+00> : vector<32x256xf32>
    %171 = tpu.matmul %170, %168, %cst_154 {dimension_numbers = #tpu.dot_dimension_numbers<[1], [0], [0], [1], [0, 0, 1, 1], [], []>} : vector<32x32xf32>, vector<32x256xf32>, vector<32x256xf32> -> vector<32x256xf32>
    %172 = arith.addf %165, %171 : vector<32x256xf32>
    %173 = vector.broadcast %111 : vector<32x1xf32> to vector<32x256xf32>
    %174 = arith.mulf %172, %173 : vector<32x256xf32>
    %175 = vector.broadcast %113 : vector<32x1xf32> to vector<32x256xf32>
    %176 = arith.addf %174, %175 : vector<32x256xf32>
    %cst_155 = arith.constant 0.000000e+00 : f32
    %177 = vector.broadcast %cst_155 : f32 to vector<32x256xf32>
    %178 = arith.maximumf %176, %177 : vector<32x256xf32>
    %c1_156 = arith.constant 1 : index
    %c0_157 = arith.constant 0 : index
    %c0_158 = arith.constant 0 : index
    %179 = vector.load %arg6[%c1_156, %c0_157, %c0_158] : memref<4x32x1xf32, #tpu.memory_space<vmem>>, vector<1x32x1xf32>
    %180 = vector.shape_cast %179 : vector<1x32x1xf32> to vector<32x1xf32>
    %c1_159 = arith.constant 1 : index
    %c0_160 = arith.constant 0 : index
    %c0_161 = arith.constant 0 : index
    %181 = vector.load %arg7[%c1_159, %c0_160, %c0_161] : memref<4x32x1xf32, #tpu.memory_space<vmem>>, vector<1x32x1xf32>
    %182 = vector.shape_cast %181 : vector<1x32x1xf32> to vector<32x1xf32>
    %c0_162 = arith.constant 0 : index
    %c128_163 = arith.constant 128 : index
    %183 = vector.load %arg20[%c0_162, %c128_163] : memref<32x512xf32, #tpu.memory_space<vmem>>, vector<32x256xf32>
    tpu.vector_store %arg20[%c0_162, %c128_163], %178 {strides = array<i32>} : memref<32x512xf32, #tpu.memory_space<vmem>>, vector<32x256xf32>,
    %cst_164 = arith.constant 0.000000e+00 : f32
    %184 = vector.broadcast %cst_164 : f32 to vector<32x256xf32>
    %c0_165 = arith.constant 0 : index
    %c111_166 = arith.constant 111 : index
    %185 = vector.load %arg20[%c0_165, %c111_166] : memref<32x512xf32, #tpu.memory_space<vmem>>, vector<32x256xf32>
    %186 = vector.broadcast %29 : vector<1x256xf32> to vector<32x256xf32>
    %187 = arith.mulf %185, %186 : vector<32x256xf32>
    %c1_167 = arith.constant 1 : index
    %c0_168 = arith.constant 0 : index
    %c0_169 = arith.constant 0 : index
    %c0_170 = arith.constant 0 : index
    %c0_171 = arith.constant 0 : index
    %188 = vector.load %arg5[%c1_167, %c0_168, %c0_169, %c0_170, %c0_171] : memref<4x3x3x32x32xf32, #tpu.memory_space<vmem>>, vector<1x1x1x32x32xf32>
    %189 = vector.shape_cast %188 : vector<1x1x1x32x32xf32> to vector<32x32xf32>
    %cst_172 = arith.constant dense<0.000000e+00> : vector<32x256xf32>
    %190 = tpu.matmul %189, %187, %cst_172 {dimension_numbers = #tpu.dot_dimension_numbers<[1], [0], [0], [1], [0, 0, 1, 1], [], []>} : vector<32x32xf32>, vector<32x256xf32>, vector<32x256xf32> -> vector<32x256xf32>
    %191 = arith.addf %184, %190 : vector<32x256xf32>
    %c0_173 = arith.constant 0 : index
    %c112_174 = arith.constant 112 : index
    %192 = vector.load %arg20[%c0_173, %c112_174] : memref<32x512xf32, #tpu.memory_space<vmem>>, vector<32x256xf32>
    %c1_175 = arith.constant 1 : index
    %c0_176 = arith.constant 0 : index
    %c1_177 = arith.constant 1 : index
    %c0_178 = arith.constant 0 : index
    %c0_179 = arith.constant 0 : index
    %193 = vector.load %arg5[%c1_175, %c0_176, %c1_177, %c0_178, %c0_179] : memref<4x3x3x32x32xf32, #tpu.memory_space<vmem>>, vector<1x1x1x32x32xf32>
    %194 = vector.shape_cast %193 : vector<1x1x1x32x32xf32> to vector<32x32xf32>
    %cst_180 = arith.constant dense<0.000000e+00> : vector<32x256xf32>
    %195 = tpu.matmul %194, %192, %cst_180 {dimension_numbers = #tpu.dot_dimension_numbers<[1], [0], [0], [1], [0, 0, 1, 1], [], []>} : vector<32x32xf32>, vector<32x256xf32>, vector<32x256xf32> -> vector<32x256xf32>
    %196 = arith.addf %191, %195 : vector<32x256xf32>
    %c0_181 = arith.constant 0 : index
    %c113_182 = arith.constant 113 : index
    %197 = vector.load %arg20[%c0_181, %c113_182] : memref<32x512xf32, #tpu.memory_space<vmem>>, vector<32x256xf32>
    %198 = vector.broadcast %40 : vector<1x256xf32> to vector<32x256xf32>
    %199 = arith.mulf %197, %198 : vector<32x256xf32>
    %c1_183 = arith.constant 1 : index
    %c0_184 = arith.constant 0 : index
    %c2_185 = arith.constant 2 : index
    %c0_186 = arith.constant 0 : index
    %c0_187 = arith.constant 0 : index
    %200 = vector.load %arg5[%c1_183, %c0_184, %c2_185, %c0_186, %c0_187] : memref<4x3x3x32x32xf32, #tpu.memory_space<vmem>>, vector<1x1x1x32x32xf32>
    %201 = vector.shape_cast %200 : vector<1x1x1x32x32xf32> to vector<32x32xf32>
    %cst_188 = arith.constant dense<0.000000e+00> : vector<32x256xf32>
    %202 = tpu.matmul %201, %199, %cst_188 {dimension_numbers = #tpu.dot_dimension_numbers<[1], [0], [0], [1], [0, 0, 1, 1], [], []>} : vector<32x32xf32>, vector<32x256xf32>, vector<32x256xf32> -> vector<32x256xf32>
    %203 = arith.addf %196, %202 : vector<32x256xf32>
    %c0_189 = arith.constant 0 : index
    %c127_190 = arith.constant 127 : index
    %204 = vector.load %arg20[%c0_189, %c127_190] : memref<32x512xf32, #tpu.memory_space<vmem>>, vector<32x256xf32>
    %205 = vector.broadcast %29 : vector<1x256xf32> to vector<32x256xf32>
    %206 = arith.mulf %204, %205 : vector<32x256xf32>
    %c1_191 = arith.constant 1 : index
    %c1_192 = arith.constant 1 : index
    %c0_193 = arith.constant 0 : index
    %c0_194 = arith.constant 0 : index
    %c0_195 = arith.constant 0 : index
    %207 = vector.load %arg5[%c1_191, %c1_192, %c0_193, %c0_194, %c0_195] : memref<4x3x3x32x32xf32, #tpu.memory_space<vmem>>, vector<1x1x1x32x32xf32>
    %208 = vector.shape_cast %207 : vector<1x1x1x32x32xf32> to vector<32x32xf32>
    %cst_196 = arith.constant dense<0.000000e+00> : vector<32x256xf32>
    %209 = tpu.matmul %208, %206, %cst_196 {dimension_numbers = #tpu.dot_dimension_numbers<[1], [0], [0], [1], [0, 0, 1, 1], [], []>} : vector<32x32xf32>, vector<32x256xf32>, vector<32x256xf32> -> vector<32x256xf32>
    %210 = arith.addf %203, %209 : vector<32x256xf32>
    %c0_197 = arith.constant 0 : index
    %c128_198 = arith.constant 128 : index
    %211 = vector.load %arg20[%c0_197, %c128_198] : memref<32x512xf32, #tpu.memory_space<vmem>>, vector<32x256xf32>
    %c1_199 = arith.constant 1 : index
    %c1_200 = arith.constant 1 : index
    %c1_201 = arith.constant 1 : index
    %c0_202 = arith.constant 0 : index
    %c0_203 = arith.constant 0 : index
    %212 = vector.load %arg5[%c1_199, %c1_200, %c1_201, %c0_202, %c0_203] : memref<4x3x3x32x32xf32, #tpu.memory_space<vmem>>, vector<1x1x1x32x32xf32>
    %213 = vector.shape_cast %212 : vector<1x1x1x32x32xf32> to vector<32x32xf32>
    %cst_204 = arith.constant dense<0.000000e+00> : vector<32x256xf32>
    %214 = tpu.matmul %213, %211, %cst_204 {dimension_numbers = #tpu.dot_dimension_numbers<[1], [0], [0], [1], [0, 0, 1, 1], [], []>} : vector<32x32xf32>, vector<32x256xf32>, vector<32x256xf32> -> vector<32x256xf32>
    %215 = arith.addf %210, %214 : vector<32x256xf32>
    %c0_205 = arith.constant 0 : index
    %c129_206 = arith.constant 129 : index
    %216 = vector.load %arg20[%c0_205, %c129_206] : memref<32x512xf32, #tpu.memory_space<vmem>>, vector<32x256xf32>
    %217 = vector.broadcast %40 : vector<1x256xf32> to vector<32x256xf32>
    %218 = arith.mulf %216, %217 : vector<32x256xf32>
    %c1_207 = arith.constant 1 : index
    %c1_208 = arith.constant 1 : index
    %c2_209 = arith.constant 2 : index
    %c0_210 = arith.constant 0 : index
    %c0_211 = arith.constant 0 : index
    %219 = vector.load %arg5[%c1_207, %c1_208, %c2_209, %c0_210, %c0_211] : memref<4x3x3x32x32xf32, #tpu.memory_space<vmem>>, vector<1x1x1x32x32xf32>
    %220 = vector.shape_cast %219 : vector<1x1x1x32x32xf32> to vector<32x32xf32>
    %cst_212 = arith.constant dense<0.000000e+00> : vector<32x256xf32>
    %221 = tpu.matmul %220, %218, %cst_212 {dimension_numbers = #tpu.dot_dimension_numbers<[1], [0], [0], [1], [0, 0, 1, 1], [], []>} : vector<32x32xf32>, vector<32x256xf32>, vector<32x256xf32> -> vector<32x256xf32>
    %222 = arith.addf %215, %221 : vector<32x256xf32>
    %c0_213 = arith.constant 0 : index
    %c143_214 = arith.constant 143 : index
    %223 = vector.load %arg20[%c0_213, %c143_214] : memref<32x512xf32, #tpu.memory_space<vmem>>, vector<32x256xf32>
    %224 = vector.broadcast %29 : vector<1x256xf32> to vector<32x256xf32>
    %225 = arith.mulf %223, %224 : vector<32x256xf32>
    %c1_215 = arith.constant 1 : index
    %c2_216 = arith.constant 2 : index
    %c0_217 = arith.constant 0 : index
    %c0_218 = arith.constant 0 : index
    %c0_219 = arith.constant 0 : index
    %226 = vector.load %arg5[%c1_215, %c2_216, %c0_217, %c0_218, %c0_219] : memref<4x3x3x32x32xf32, #tpu.memory_space<vmem>>, vector<1x1x1x32x32xf32>
    %227 = vector.shape_cast %226 : vector<1x1x1x32x32xf32> to vector<32x32xf32>
    %cst_220 = arith.constant dense<0.000000e+00> : vector<32x256xf32>
    %228 = tpu.matmul %227, %225, %cst_220 {dimension_numbers = #tpu.dot_dimension_numbers<[1], [0], [0], [1], [0, 0, 1, 1], [], []>} : vector<32x32xf32>, vector<32x256xf32>, vector<32x256xf32> -> vector<32x256xf32>
    %229 = arith.addf %222, %228 : vector<32x256xf32>
    %c0_221 = arith.constant 0 : index
    %c144_222 = arith.constant 144 : index
    %230 = vector.load %arg20[%c0_221, %c144_222] : memref<32x512xf32, #tpu.memory_space<vmem>>, vector<32x256xf32>
    %c1_223 = arith.constant 1 : index
    %c2_224 = arith.constant 2 : index
    %c1_225 = arith.constant 1 : index
    %c0_226 = arith.constant 0 : index
    %c0_227 = arith.constant 0 : index
    %231 = vector.load %arg5[%c1_223, %c2_224, %c1_225, %c0_226, %c0_227] : memref<4x3x3x32x32xf32, #tpu.memory_space<vmem>>, vector<1x1x1x32x32xf32>
    %232 = vector.shape_cast %231 : vector<1x1x1x32x32xf32> to vector<32x32xf32>
    %cst_228 = arith.constant dense<0.000000e+00> : vector<32x256xf32>
    %233 = tpu.matmul %232, %230, %cst_228 {dimension_numbers = #tpu.dot_dimension_numbers<[1], [0], [0], [1], [0, 0, 1, 1], [], []>} : vector<32x32xf32>, vector<32x256xf32>, vector<32x256xf32> -> vector<32x256xf32>
    %234 = arith.addf %229, %233 : vector<32x256xf32>
    %c0_229 = arith.constant 0 : index
    %c145_230 = arith.constant 145 : index
    %235 = vector.load %arg20[%c0_229, %c145_230] : memref<32x512xf32, #tpu.memory_space<vmem>>, vector<32x256xf32>
    %236 = vector.broadcast %40 : vector<1x256xf32> to vector<32x256xf32>
    %237 = arith.mulf %235, %236 : vector<32x256xf32>
    %c1_231 = arith.constant 1 : index
    %c2_232 = arith.constant 2 : index
    %c2_233 = arith.constant 2 : index
    %c0_234 = arith.constant 0 : index
    %c0_235 = arith.constant 0 : index
    %238 = vector.load %arg5[%c1_231, %c2_232, %c2_233, %c0_234, %c0_235] : memref<4x3x3x32x32xf32, #tpu.memory_space<vmem>>, vector<1x1x1x32x32xf32>
    %239 = vector.shape_cast %238 : vector<1x1x1x32x32xf32> to vector<32x32xf32>
    %cst_236 = arith.constant dense<0.000000e+00> : vector<32x256xf32>
    %240 = tpu.matmul %239, %237, %cst_236 {dimension_numbers = #tpu.dot_dimension_numbers<[1], [0], [0], [1], [0, 0, 1, 1], [], []>} : vector<32x32xf32>, vector<32x256xf32>, vector<32x256xf32> -> vector<32x256xf32>
    %241 = arith.addf %234, %240 : vector<32x256xf32>
    %242 = vector.broadcast %180 : vector<32x1xf32> to vector<32x256xf32>
    %243 = arith.mulf %241, %242 : vector<32x256xf32>
    %244 = vector.broadcast %182 : vector<32x1xf32> to vector<32x256xf32>
    %245 = arith.addf %243, %244 : vector<32x256xf32>
    %246 = arith.addf %245, %109 : vector<32x256xf32>
    %cst_237 = arith.constant 0.000000e+00 : f32
    %247 = vector.broadcast %cst_237 : f32 to vector<32x256xf32>
    %248 = arith.maximumf %246, %247 : vector<32x256xf32>
    %c2_238 = arith.constant 2 : index
    %c0_239 = arith.constant 0 : index
    %c0_240 = arith.constant 0 : index
    %249 = vector.load %arg6[%c2_238, %c0_239, %c0_240] : memref<4x32x1xf32, #tpu.memory_space<vmem>>, vector<1x32x1xf32>
    %250 = vector.shape_cast %249 : vector<1x32x1xf32> to vector<32x1xf32>
    %c2_241 = arith.constant 2 : index
    %c0_242 = arith.constant 0 : index
    %c0_243 = arith.constant 0 : index
    %251 = vector.load %arg7[%c2_241, %c0_242, %c0_243] : memref<4x32x1xf32, #tpu.memory_space<vmem>>, vector<1x32x1xf32>
    %252 = vector.shape_cast %251 : vector<1x32x1xf32> to vector<32x1xf32>
    %c0_244 = arith.constant 0 : index
    %c128_245 = arith.constant 128 : index
    %253 = vector.load %arg20[%c0_244, %c128_245] : memref<32x512xf32, #tpu.memory_space<vmem>>, vector<32x256xf32>
    tpu.vector_store %arg20[%c0_244, %c128_245], %248 {strides = array<i32>} : memref<32x512xf32, #tpu.memory_space<vmem>>, vector<32x256xf32>,
    %cst_246 = arith.constant 0.000000e+00 : f32
    %254 = vector.broadcast %cst_246 : f32 to vector<32x256xf32>
    %c0_247 = arith.constant 0 : index
    %c111_248 = arith.constant 111 : index
    %255 = vector.load %arg20[%c0_247, %c111_248] : memref<32x512xf32, #tpu.memory_space<vmem>>, vector<32x256xf32>
    %256 = vector.broadcast %29 : vector<1x256xf32> to vector<32x256xf32>
    %257 = arith.mulf %255, %256 : vector<32x256xf32>
    %c2_249 = arith.constant 2 : index
    %c0_250 = arith.constant 0 : index
    %c0_251 = arith.constant 0 : index
    %c0_252 = arith.constant 0 : index
    %c0_253 = arith.constant 0 : index
    %258 = vector.load %arg5[%c2_249, %c0_250, %c0_251, %c0_252, %c0_253] : memref<4x3x3x32x32xf32, #tpu.memory_space<vmem>>, vector<1x1x1x32x32xf32>
    %259 = vector.shape_cast %258 : vector<1x1x1x32x32xf32> to vector<32x32xf32>
    %cst_254 = arith.constant dense<0.000000e+00> : vector<32x256xf32>
    %260 = tpu.matmul %259, %257, %cst_254 {dimension_numbers = #tpu.dot_dimension_numbers<[1], [0], [0], [1], [0, 0, 1, 1], [], []>} : vector<32x32xf32>, vector<32x256xf32>, vector<32x256xf32> -> vector<32x256xf32>
    %261 = arith.addf %254, %260 : vector<32x256xf32>
    %c0_255 = arith.constant 0 : index
    %c112_256 = arith.constant 112 : index
    %262 = vector.load %arg20[%c0_255, %c112_256] : memref<32x512xf32, #tpu.memory_space<vmem>>, vector<32x256xf32>
    %c2_257 = arith.constant 2 : index
    %c0_258 = arith.constant 0 : index
    %c1_259 = arith.constant 1 : index
    %c0_260 = arith.constant 0 : index
    %c0_261 = arith.constant 0 : index
    %263 = vector.load %arg5[%c2_257, %c0_258, %c1_259, %c0_260, %c0_261] : memref<4x3x3x32x32xf32, #tpu.memory_space<vmem>>, vector<1x1x1x32x32xf32>
    %264 = vector.shape_cast %263 : vector<1x1x1x32x32xf32> to vector<32x32xf32>
    %cst_262 = arith.constant dense<0.000000e+00> : vector<32x256xf32>
    %265 = tpu.matmul %264, %262, %cst_262 {dimension_numbers = #tpu.dot_dimension_numbers<[1], [0], [0], [1], [0, 0, 1, 1], [], []>} : vector<32x32xf32>, vector<32x256xf32>, vector<32x256xf32> -> vector<32x256xf32>
    %266 = arith.addf %261, %265 : vector<32x256xf32>
    %c0_263 = arith.constant 0 : index
    %c113_264 = arith.constant 113 : index
    %267 = vector.load %arg20[%c0_263, %c113_264] : memref<32x512xf32, #tpu.memory_space<vmem>>, vector<32x256xf32>
    %268 = vector.broadcast %40 : vector<1x256xf32> to vector<32x256xf32>
    %269 = arith.mulf %267, %268 : vector<32x256xf32>
    %c2_265 = arith.constant 2 : index
    %c0_266 = arith.constant 0 : index
    %c2_267 = arith.constant 2 : index
    %c0_268 = arith.constant 0 : index
    %c0_269 = arith.constant 0 : index
    %270 = vector.load %arg5[%c2_265, %c0_266, %c2_267, %c0_268, %c0_269] : memref<4x3x3x32x32xf32, #tpu.memory_space<vmem>>, vector<1x1x1x32x32xf32>
    %271 = vector.shape_cast %270 : vector<1x1x1x32x32xf32> to vector<32x32xf32>
    %cst_270 = arith.constant dense<0.000000e+00> : vector<32x256xf32>
    %272 = tpu.matmul %271, %269, %cst_270 {dimension_numbers = #tpu.dot_dimension_numbers<[1], [0], [0], [1], [0, 0, 1, 1], [], []>} : vector<32x32xf32>, vector<32x256xf32>, vector<32x256xf32> -> vector<32x256xf32>
    %273 = arith.addf %266, %272 : vector<32x256xf32>
    %c0_271 = arith.constant 0 : index
    %c127_272 = arith.constant 127 : index
    %274 = vector.load %arg20[%c0_271, %c127_272] : memref<32x512xf32, #tpu.memory_space<vmem>>, vector<32x256xf32>
    %275 = vector.broadcast %29 : vector<1x256xf32> to vector<32x256xf32>
    %276 = arith.mulf %274, %275 : vector<32x256xf32>
    %c2_273 = arith.constant 2 : index
    %c1_274 = arith.constant 1 : index
    %c0_275 = arith.constant 0 : index
    %c0_276 = arith.constant 0 : index
    %c0_277 = arith.constant 0 : index
    %277 = vector.load %arg5[%c2_273, %c1_274, %c0_275, %c0_276, %c0_277] : memref<4x3x3x32x32xf32, #tpu.memory_space<vmem>>, vector<1x1x1x32x32xf32>
    %278 = vector.shape_cast %277 : vector<1x1x1x32x32xf32> to vector<32x32xf32>
    %cst_278 = arith.constant dense<0.000000e+00> : vector<32x256xf32>
    %279 = tpu.matmul %278, %276, %cst_278 {dimension_numbers = #tpu.dot_dimension_numbers<[1], [0], [0], [1], [0, 0, 1, 1], [], []>} : vector<32x32xf32>, vector<32x256xf32>, vector<32x256xf32> -> vector<32x256xf32>
    %280 = arith.addf %273, %279 : vector<32x256xf32>
    %c0_279 = arith.constant 0 : index
    %c128_280 = arith.constant 128 : index
    %281 = vector.load %arg20[%c0_279, %c128_280] : memref<32x512xf32, #tpu.memory_space<vmem>>, vector<32x256xf32>
    %c2_281 = arith.constant 2 : index
    %c1_282 = arith.constant 1 : index
    %c1_283 = arith.constant 1 : index
    %c0_284 = arith.constant 0 : index
    %c0_285 = arith.constant 0 : index
    %282 = vector.load %arg5[%c2_281, %c1_282, %c1_283, %c0_284, %c0_285] : memref<4x3x3x32x32xf32, #tpu.memory_space<vmem>>, vector<1x1x1x32x32xf32>
    %283 = vector.shape_cast %282 : vector<1x1x1x32x32xf32> to vector<32x32xf32>
    %cst_286 = arith.constant dense<0.000000e+00> : vector<32x256xf32>
    %284 = tpu.matmul %283, %281, %cst_286 {dimension_numbers = #tpu.dot_dimension_numbers<[1], [0], [0], [1], [0, 0, 1, 1], [], []>} : vector<32x32xf32>, vector<32x256xf32>, vector<32x256xf32> -> vector<32x256xf32>
    %285 = arith.addf %280, %284 : vector<32x256xf32>
    %c0_287 = arith.constant 0 : index
    %c129_288 = arith.constant 129 : index
    %286 = vector.load %arg20[%c0_287, %c129_288] : memref<32x512xf32, #tpu.memory_space<vmem>>, vector<32x256xf32>
    %287 = vector.broadcast %40 : vector<1x256xf32> to vector<32x256xf32>
    %288 = arith.mulf %286, %287 : vector<32x256xf32>
    %c2_289 = arith.constant 2 : index
    %c1_290 = arith.constant 1 : index
    %c2_291 = arith.constant 2 : index
    %c0_292 = arith.constant 0 : index
    %c0_293 = arith.constant 0 : index
    %289 = vector.load %arg5[%c2_289, %c1_290, %c2_291, %c0_292, %c0_293] : memref<4x3x3x32x32xf32, #tpu.memory_space<vmem>>, vector<1x1x1x32x32xf32>
    %290 = vector.shape_cast %289 : vector<1x1x1x32x32xf32> to vector<32x32xf32>
    %cst_294 = arith.constant dense<0.000000e+00> : vector<32x256xf32>
    %291 = tpu.matmul %290, %288, %cst_294 {dimension_numbers = #tpu.dot_dimension_numbers<[1], [0], [0], [1], [0, 0, 1, 1], [], []>} : vector<32x32xf32>, vector<32x256xf32>, vector<32x256xf32> -> vector<32x256xf32>
    %292 = arith.addf %285, %291 : vector<32x256xf32>
    %c0_295 = arith.constant 0 : index
    %c143_296 = arith.constant 143 : index
    %293 = vector.load %arg20[%c0_295, %c143_296] : memref<32x512xf32, #tpu.memory_space<vmem>>, vector<32x256xf32>
    %294 = vector.broadcast %29 : vector<1x256xf32> to vector<32x256xf32>
    %295 = arith.mulf %293, %294 : vector<32x256xf32>
    %c2_297 = arith.constant 2 : index
    %c2_298 = arith.constant 2 : index
    %c0_299 = arith.constant 0 : index
    %c0_300 = arith.constant 0 : index
    %c0_301 = arith.constant 0 : index
    %296 = vector.load %arg5[%c2_297, %c2_298, %c0_299, %c0_300, %c0_301] : memref<4x3x3x32x32xf32, #tpu.memory_space<vmem>>, vector<1x1x1x32x32xf32>
    %297 = vector.shape_cast %296 : vector<1x1x1x32x32xf32> to vector<32x32xf32>
    %cst_302 = arith.constant dense<0.000000e+00> : vector<32x256xf32>
    %298 = tpu.matmul %297, %295, %cst_302 {dimension_numbers = #tpu.dot_dimension_numbers<[1], [0], [0], [1], [0, 0, 1, 1], [], []>} : vector<32x32xf32>, vector<32x256xf32>, vector<32x256xf32> -> vector<32x256xf32>
    %299 = arith.addf %292, %298 : vector<32x256xf32>
    %c0_303 = arith.constant 0 : index
    %c144_304 = arith.constant 144 : index
    %300 = vector.load %arg20[%c0_303, %c144_304] : memref<32x512xf32, #tpu.memory_space<vmem>>, vector<32x256xf32>
    %c2_305 = arith.constant 2 : index
    %c2_306 = arith.constant 2 : index
    %c1_307 = arith.constant 1 : index
    %c0_308 = arith.constant 0 : index
    %c0_309 = arith.constant 0 : index
    %301 = vector.load %arg5[%c2_305, %c2_306, %c1_307, %c0_308, %c0_309] : memref<4x3x3x32x32xf32, #tpu.memory_space<vmem>>, vector<1x1x1x32x32xf32>
    %302 = vector.shape_cast %301 : vector<1x1x1x32x32xf32> to vector<32x32xf32>
    %cst_310 = arith.constant dense<0.000000e+00> : vector<32x256xf32>
    %303 = tpu.matmul %302, %300, %cst_310 {dimension_numbers = #tpu.dot_dimension_numbers<[1], [0], [0], [1], [0, 0, 1, 1], [], []>} : vector<32x32xf32>, vector<32x256xf32>, vector<32x256xf32> -> vector<32x256xf32>
    %304 = arith.addf %299, %303 : vector<32x256xf32>
    %c0_311 = arith.constant 0 : index
    %c145_312 = arith.constant 145 : index
    %305 = vector.load %arg20[%c0_311, %c145_312] : memref<32x512xf32, #tpu.memory_space<vmem>>, vector<32x256xf32>
    %306 = vector.broadcast %40 : vector<1x256xf32> to vector<32x256xf32>
    %307 = arith.mulf %305, %306 : vector<32x256xf32>
    %c2_313 = arith.constant 2 : index
    %c2_314 = arith.constant 2 : index
    %c2_315 = arith.constant 2 : index
    %c0_316 = arith.constant 0 : index
    %c0_317 = arith.constant 0 : index
    %308 = vector.load %arg5[%c2_313, %c2_314, %c2_315, %c0_316, %c0_317] : memref<4x3x3x32x32xf32, #tpu.memory_space<vmem>>, vector<1x1x1x32x32xf32>
    %309 = vector.shape_cast %308 : vector<1x1x1x32x32xf32> to vector<32x32xf32>
    %cst_318 = arith.constant dense<0.000000e+00> : vector<32x256xf32>
    %310 = tpu.matmul %309, %307, %cst_318 {dimension_numbers = #tpu.dot_dimension_numbers<[1], [0], [0], [1], [0, 0, 1, 1], [], []>} : vector<32x32xf32>, vector<32x256xf32>, vector<32x256xf32> -> vector<32x256xf32>
    %311 = arith.addf %304, %310 : vector<32x256xf32>
    %312 = vector.broadcast %250 : vector<32x1xf32> to vector<32x256xf32>
    %313 = arith.mulf %311, %312 : vector<32x256xf32>
    %314 = vector.broadcast %252 : vector<32x1xf32> to vector<32x256xf32>
    %315 = arith.addf %313, %314 : vector<32x256xf32>
    %cst_319 = arith.constant 0.000000e+00 : f32
    %316 = vector.broadcast %cst_319 : f32 to vector<32x256xf32>
    %317 = arith.maximumf %315, %316 : vector<32x256xf32>
    %c3 = arith.constant 3 : index
    %c0_320 = arith.constant 0 : index
    %c0_321 = arith.constant 0 : index
    %318 = vector.load %arg6[%c3, %c0_320, %c0_321] : memref<4x32x1xf32, #tpu.memory_space<vmem>>, vector<1x32x1xf32>
    %319 = vector.shape_cast %318 : vector<1x32x1xf32> to vector<32x1xf32>
    %c3_322 = arith.constant 3 : index
    %c0_323 = arith.constant 0 : index
    %c0_324 = arith.constant 0 : index
    %320 = vector.load %arg7[%c3_322, %c0_323, %c0_324] : memref<4x32x1xf32, #tpu.memory_space<vmem>>, vector<1x32x1xf32>
    %321 = vector.shape_cast %320 : vector<1x32x1xf32> to vector<32x1xf32>
    %c0_325 = arith.constant 0 : index
    %c128_326 = arith.constant 128 : index
    %322 = vector.load %arg20[%c0_325, %c128_326] : memref<32x512xf32, #tpu.memory_space<vmem>>, vector<32x256xf32>
    tpu.vector_store %arg20[%c0_325, %c128_326], %317 {strides = array<i32>} : memref<32x512xf32, #tpu.memory_space<vmem>>, vector<32x256xf32>,
    %cst_327 = arith.constant 0.000000e+00 : f32
    %323 = vector.broadcast %cst_327 : f32 to vector<32x256xf32>
    %c0_328 = arith.constant 0 : index
    %c111_329 = arith.constant 111 : index
    %324 = vector.load %arg20[%c0_328, %c111_329] : memref<32x512xf32, #tpu.memory_space<vmem>>, vector<32x256xf32>
    %325 = vector.broadcast %29 : vector<1x256xf32> to vector<32x256xf32>
    %326 = arith.mulf %324, %325 : vector<32x256xf32>
    %c3_330 = arith.constant 3 : index
    %c0_331 = arith.constant 0 : index
    %c0_332 = arith.constant 0 : index
    %c0_333 = arith.constant 0 : index
    %c0_334 = arith.constant 0 : index
    %327 = vector.load %arg5[%c3_330, %c0_331, %c0_332, %c0_333, %c0_334] : memref<4x3x3x32x32xf32, #tpu.memory_space<vmem>>, vector<1x1x1x32x32xf32>
    %328 = vector.shape_cast %327 : vector<1x1x1x32x32xf32> to vector<32x32xf32>
    %cst_335 = arith.constant dense<0.000000e+00> : vector<32x256xf32>
    %329 = tpu.matmul %328, %326, %cst_335 {dimension_numbers = #tpu.dot_dimension_numbers<[1], [0], [0], [1], [0, 0, 1, 1], [], []>} : vector<32x32xf32>, vector<32x256xf32>, vector<32x256xf32> -> vector<32x256xf32>
    %330 = arith.addf %323, %329 : vector<32x256xf32>
    %c0_336 = arith.constant 0 : index
    %c112_337 = arith.constant 112 : index
    %331 = vector.load %arg20[%c0_336, %c112_337] : memref<32x512xf32, #tpu.memory_space<vmem>>, vector<32x256xf32>
    %c3_338 = arith.constant 3 : index
    %c0_339 = arith.constant 0 : index
    %c1_340 = arith.constant 1 : index
    %c0_341 = arith.constant 0 : index
    %c0_342 = arith.constant 0 : index
    %332 = vector.load %arg5[%c3_338, %c0_339, %c1_340, %c0_341, %c0_342] : memref<4x3x3x32x32xf32, #tpu.memory_space<vmem>>, vector<1x1x1x32x32xf32>
    %333 = vector.shape_cast %332 : vector<1x1x1x32x32xf32> to vector<32x32xf32>
    %cst_343 = arith.constant dense<0.000000e+00> : vector<32x256xf32>
    %334 = tpu.matmul %333, %331, %cst_343 {dimension_numbers = #tpu.dot_dimension_numbers<[1], [0], [0], [1], [0, 0, 1, 1], [], []>} : vector<32x32xf32>, vector<32x256xf32>, vector<32x256xf32> -> vector<32x256xf32>
    %335 = arith.addf %330, %334 : vector<32x256xf32>
    %c0_344 = arith.constant 0 : index
    %c113_345 = arith.constant 113 : index
    %336 = vector.load %arg20[%c0_344, %c113_345] : memref<32x512xf32, #tpu.memory_space<vmem>>, vector<32x256xf32>
    %337 = vector.broadcast %40 : vector<1x256xf32> to vector<32x256xf32>
    %338 = arith.mulf %336, %337 : vector<32x256xf32>
    %c3_346 = arith.constant 3 : index
    %c0_347 = arith.constant 0 : index
    %c2_348 = arith.constant 2 : index
    %c0_349 = arith.constant 0 : index
    %c0_350 = arith.constant 0 : index
    %339 = vector.load %arg5[%c3_346, %c0_347, %c2_348, %c0_349, %c0_350] : memref<4x3x3x32x32xf32, #tpu.memory_space<vmem>>, vector<1x1x1x32x32xf32>
    %340 = vector.shape_cast %339 : vector<1x1x1x32x32xf32> to vector<32x32xf32>
    %cst_351 = arith.constant dense<0.000000e+00> : vector<32x256xf32>
    %341 = tpu.matmul %340, %338, %cst_351 {dimension_numbers = #tpu.dot_dimension_numbers<[1], [0], [0], [1], [0, 0, 1, 1], [], []>} : vector<32x32xf32>, vector<32x256xf32>, vector<32x256xf32> -> vector<32x256xf32>
    %342 = arith.addf %335, %341 : vector<32x256xf32>
    %c0_352 = arith.constant 0 : index
    %c127_353 = arith.constant 127 : index
    %343 = vector.load %arg20[%c0_352, %c127_353] : memref<32x512xf32, #tpu.memory_space<vmem>>, vector<32x256xf32>
    %344 = vector.broadcast %29 : vector<1x256xf32> to vector<32x256xf32>
    %345 = arith.mulf %343, %344 : vector<32x256xf32>
    %c3_354 = arith.constant 3 : index
    %c1_355 = arith.constant 1 : index
    %c0_356 = arith.constant 0 : index
    %c0_357 = arith.constant 0 : index
    %c0_358 = arith.constant 0 : index
    %346 = vector.load %arg5[%c3_354, %c1_355, %c0_356, %c0_357, %c0_358] : memref<4x3x3x32x32xf32, #tpu.memory_space<vmem>>, vector<1x1x1x32x32xf32>
    %347 = vector.shape_cast %346 : vector<1x1x1x32x32xf32> to vector<32x32xf32>
    %cst_359 = arith.constant dense<0.000000e+00> : vector<32x256xf32>
    %348 = tpu.matmul %347, %345, %cst_359 {dimension_numbers = #tpu.dot_dimension_numbers<[1], [0], [0], [1], [0, 0, 1, 1], [], []>} : vector<32x32xf32>, vector<32x256xf32>, vector<32x256xf32> -> vector<32x256xf32>
    %349 = arith.addf %342, %348 : vector<32x256xf32>
    %c0_360 = arith.constant 0 : index
    %c128_361 = arith.constant 128 : index
    %350 = vector.load %arg20[%c0_360, %c128_361] : memref<32x512xf32, #tpu.memory_space<vmem>>, vector<32x256xf32>
    %c3_362 = arith.constant 3 : index
    %c1_363 = arith.constant 1 : index
    %c1_364 = arith.constant 1 : index
    %c0_365 = arith.constant 0 : index
    %c0_366 = arith.constant 0 : index
    %351 = vector.load %arg5[%c3_362, %c1_363, %c1_364, %c0_365, %c0_366] : memref<4x3x3x32x32xf32, #tpu.memory_space<vmem>>, vector<1x1x1x32x32xf32>
    %352 = vector.shape_cast %351 : vector<1x1x1x32x32xf32> to vector<32x32xf32>
    %cst_367 = arith.constant dense<0.000000e+00> : vector<32x256xf32>
    %353 = tpu.matmul %352, %350, %cst_367 {dimension_numbers = #tpu.dot_dimension_numbers<[1], [0], [0], [1], [0, 0, 1, 1], [], []>} : vector<32x32xf32>, vector<32x256xf32>, vector<32x256xf32> -> vector<32x256xf32>
    %354 = arith.addf %349, %353 : vector<32x256xf32>
    %c0_368 = arith.constant 0 : index
    %c129_369 = arith.constant 129 : index
    %355 = vector.load %arg20[%c0_368, %c129_369] : memref<32x512xf32, #tpu.memory_space<vmem>>, vector<32x256xf32>
    %356 = vector.broadcast %40 : vector<1x256xf32> to vector<32x256xf32>
    %357 = arith.mulf %355, %356 : vector<32x256xf32>
    %c3_370 = arith.constant 3 : index
    %c1_371 = arith.constant 1 : index
    %c2_372 = arith.constant 2 : index
    %c0_373 = arith.constant 0 : index
    %c0_374 = arith.constant 0 : index
    %358 = vector.load %arg5[%c3_370, %c1_371, %c2_372, %c0_373, %c0_374] : memref<4x3x3x32x32xf32, #tpu.memory_space<vmem>>, vector<1x1x1x32x32xf32>
    %359 = vector.shape_cast %358 : vector<1x1x1x32x32xf32> to vector<32x32xf32>
    %cst_375 = arith.constant dense<0.000000e+00> : vector<32x256xf32>
    %360 = tpu.matmul %359, %357, %cst_375 {dimension_numbers = #tpu.dot_dimension_numbers<[1], [0], [0], [1], [0, 0, 1, 1], [], []>} : vector<32x32xf32>, vector<32x256xf32>, vector<32x256xf32> -> vector<32x256xf32>
    %361 = arith.addf %354, %360 : vector<32x256xf32>
    %c0_376 = arith.constant 0 : index
    %c143_377 = arith.constant 143 : index
    %362 = vector.load %arg20[%c0_376, %c143_377] : memref<32x512xf32, #tpu.memory_space<vmem>>, vector<32x256xf32>
    %363 = vector.broadcast %29 : vector<1x256xf32> to vector<32x256xf32>
    %364 = arith.mulf %362, %363 : vector<32x256xf32>
    %c3_378 = arith.constant 3 : index
    %c2_379 = arith.constant 2 : index
    %c0_380 = arith.constant 0 : index
    %c0_381 = arith.constant 0 : index
    %c0_382 = arith.constant 0 : index
    %365 = vector.load %arg5[%c3_378, %c2_379, %c0_380, %c0_381, %c0_382] : memref<4x3x3x32x32xf32, #tpu.memory_space<vmem>>, vector<1x1x1x32x32xf32>
    %366 = vector.shape_cast %365 : vector<1x1x1x32x32xf32> to vector<32x32xf32>
    %cst_383 = arith.constant dense<0.000000e+00> : vector<32x256xf32>
    %367 = tpu.matmul %366, %364, %cst_383 {dimension_numbers = #tpu.dot_dimension_numbers<[1], [0], [0], [1], [0, 0, 1, 1], [], []>} : vector<32x32xf32>, vector<32x256xf32>, vector<32x256xf32> -> vector<32x256xf32>
    %368 = arith.addf %361, %367 : vector<32x256xf32>
    %c0_384 = arith.constant 0 : index
    %c144_385 = arith.constant 144 : index
    %369 = vector.load %arg20[%c0_384, %c144_385] : memref<32x512xf32, #tpu.memory_space<vmem>>, vector<32x256xf32>
    %c3_386 = arith.constant 3 : index
    %c2_387 = arith.constant 2 : index
    %c1_388 = arith.constant 1 : index
    %c0_389 = arith.constant 0 : index
    %c0_390 = arith.constant 0 : index
    %370 = vector.load %arg5[%c3_386, %c2_387, %c1_388, %c0_389, %c0_390] : memref<4x3x3x32x32xf32, #tpu.memory_space<vmem>>, vector<1x1x1x32x32xf32>
    %371 = vector.shape_cast %370 : vector<1x1x1x32x32xf32> to vector<32x32xf32>
    %cst_391 = arith.constant dense<0.000000e+00> : vector<32x256xf32>
    %372 = tpu.matmul %371, %369, %cst_391 {dimension_numbers = #tpu.dot_dimension_numbers<[1], [0], [0], [1], [0, 0, 1, 1], [], []>} : vector<32x32xf32>, vector<32x256xf32>, vector<32x256xf32> -> vector<32x256xf32>
    %373 = arith.addf %368, %372 : vector<32x256xf32>
    %c0_392 = arith.constant 0 : index
    %c145_393 = arith.constant 145 : index
    %374 = vector.load %arg20[%c0_392, %c145_393] : memref<32x512xf32, #tpu.memory_space<vmem>>, vector<32x256xf32>
    %375 = vector.broadcast %40 : vector<1x256xf32> to vector<32x256xf32>
    %376 = arith.mulf %374, %375 : vector<32x256xf32>
    %c3_394 = arith.constant 3 : index
    %c2_395 = arith.constant 2 : index
    %c2_396 = arith.constant 2 : index
    %c0_397 = arith.constant 0 : index
    %c0_398 = arith.constant 0 : index
    %377 = vector.load %arg5[%c3_394, %c2_395, %c2_396, %c0_397, %c0_398] : memref<4x3x3x32x32xf32, #tpu.memory_space<vmem>>, vector<1x1x1x32x32xf32>
    %378 = vector.shape_cast %377 : vector<1x1x1x32x32xf32> to vector<32x32xf32>
    %cst_399 = arith.constant dense<0.000000e+00> : vector<32x256xf32>
    %379 = tpu.matmul %378, %376, %cst_399 {dimension_numbers = #tpu.dot_dimension_numbers<[1], [0], [0], [1], [0, 0, 1, 1], [], []>} : vector<32x32xf32>, vector<32x256xf32>, vector<32x256xf32> -> vector<32x256xf32>
    %380 = arith.addf %373, %379 : vector<32x256xf32>
    %381 = vector.broadcast %319 : vector<32x1xf32> to vector<32x256xf32>
    %382 = arith.mulf %380, %381 : vector<32x256xf32>
    %383 = vector.broadcast %321 : vector<32x1xf32> to vector<32x256xf32>
    %384 = arith.addf %382, %383 : vector<32x256xf32>
    %385 = arith.addf %384, %248 : vector<32x256xf32>
    %cst_400 = arith.constant 0.000000e+00 : f32
    %386 = vector.broadcast %cst_400 : f32 to vector<32x256xf32>
    %387 = arith.maximumf %385, %386 : vector<32x256xf32>
    %c0_401 = arith.constant 0 : index
    %c0_402 = arith.constant 0 : index
    %388 = vector.load %arg8[%c0_401, %c0_402] : memref<4x32xf32, #tpu.memory_space<vmem>>, vector<4x32xf32>
    %cst_403 = arith.constant dense<0.000000e+00> : vector<4x256xf32>
    %389 = tpu.matmul %388, %387, %cst_403 {dimension_numbers = #tpu.dot_dimension_numbers<[1], [0], [0], [1], [0, 0, 1, 1], [], []>} : vector<4x32xf32>, vector<32x256xf32>, vector<4x256xf32> -> vector<4x256xf32>
    %c0_404 = arith.constant 0 : index
    %c0_405 = arith.constant 0 : index
    %390 = vector.load %arg9[%c0_404, %c0_405] : memref<4x1xf32, #tpu.memory_space<vmem>>, vector<4x1xf32>
    %391 = vector.broadcast %390 : vector<4x1xf32> to vector<4x256xf32>
    %392 = arith.mulf %389, %391 : vector<4x256xf32>
    %c0_406 = arith.constant 0 : index
    %c0_407 = arith.constant 0 : index
    %393 = vector.load %arg10[%c0_406, %c0_407] : memref<4x1xf32, #tpu.memory_space<vmem>>, vector<4x1xf32>
    %394 = vector.broadcast %393 : vector<4x1xf32> to vector<4x256xf32>
    %395 = arith.addf %392, %394 : vector<4x256xf32>
    %cst_408 = arith.constant 0.000000e+00 : f32
    %396 = vector.broadcast %cst_408 : f32 to vector<4x256xf32>
    %397 = arith.maximumf %395, %396 : vector<4x256xf32>
    %c0_409 = arith.constant 0 : index
    %c0_410 = arith.constant 0 : index
    %398 = vector.load %arg14[%c0_409, %c0_410] : memref<256x256xf32, #tpu.memory_space<vmem>>, vector<256x256xf32>
    %cst_411 = arith.constant dense<0.000000e+00> : vector<4x256xf32>
    %399 = tpu.matmul %397, %398, %cst_411 {dimension_numbers = #tpu.dot_dimension_numbers<[1], [0], [0], [1], [0, 0, 1, 1], [], []>} : vector<4x256xf32>, vector<256x256xf32>, vector<4x256xf32> -> vector<4x256xf32>
    %c0_412 = arith.constant 0 : index
    %c0_413 = arith.constant 0 : index
    %400 = vector.load %arg15[%c0_412, %c0_413] : memref<1x64xf32, #tpu.memory_space<vmem>>, vector<1x64xf32>
    %401 = vector.extract_strided_slice %399 {offsets = [0, 0], sizes = [1, 64], strides = [1, 1]} : vector<4x256xf32> to vector<1x64xf32>
    %402 = arith.addf %400, %401 : vector<1x64xf32>
    %403 = vector.extract_strided_slice %399 {offsets = [1, 64], sizes = [1, 64], strides = [1, 1]} : vector<4x256xf32> to vector<1x64xf32>
    %404 = arith.addf %402, %403 : vector<1x64xf32>
    %405 = vector.extract_strided_slice %399 {offsets = [2, 128], sizes = [1, 64], strides = [1, 1]} : vector<4x256xf32> to vector<1x64xf32>
    %406 = arith.addf %404, %405 : vector<1x64xf32>
    %407 = vector.extract_strided_slice %399 {offsets = [3, 192], sizes = [1, 64], strides = [1, 1]} : vector<4x256xf32> to vector<1x64xf32>
    %408 = arith.addf %406, %407 : vector<1x64xf32>
    %cst_414 = arith.constant 0.000000e+00 : f32
    %409 = vector.broadcast %cst_414 : f32 to vector<1x64xf32>
    %410 = arith.maximumf %408, %409 : vector<1x64xf32>
    %c0_415 = arith.constant 0 : index
    %c0_416 = arith.constant 0 : index
    %411 = vector.load %arg16[%c0_415, %c0_416] : memref<1x64xf32, #tpu.memory_space<vmem>>, vector<1x64xf32>
    %412 = arith.mulf %410, %411 : vector<1x64xf32>
    %cst_417 = arith.constant dense<0.000000e+00> : vector<1xf32>
    %413 = vector.multi_reduction <add>, %412, %cst_417 [1] : vector<1x64xf32> to vector<1xf32>
    %414 = vector.shape_cast %413 : vector<1xf32> to vector<1x1xf32>
    %c0_418 = arith.constant 0 : index
    %c0_419 = arith.constant 0 : index
    %415 = vector.load %arg17[%c0_418, %c0_419] : memref<1x1xf32, #tpu.memory_space<vmem>>, vector<1x1xf32>
    %416 = arith.addf %414, %415 : vector<1x1xf32>
    %417 = math.tanh %416 : vector<1x1xf32>
    %418 = vector.shape_cast %417 : vector<1x1xf32> to vector<1x1xf32>
    %419 = vector.broadcast %418 : vector<1x1xf32> to vector<1x128xf32>
    %c0_420 = arith.constant 0 : index
    %c0_421 = arith.constant 0 : index
    %c0_422 = arith.constant 0 : index
    %420 = vector.load %arg18[%c0_420, %c0_421, %c0_422] : memref<1x1x128xf32, #tpu.memory_space<vmem>>, vector<1x1x128xf32>
    %421 = vector.shape_cast %420 : vector<1x1x128xf32> to vector<1x128xf32>
    %422 = vector.shape_cast %419 : vector<1x128xf32> to vector<1x1x128xf32>
    tpu.vector_store %arg18[%c0_420, %c0_421, %c0_422], %422 {strides = array<i32>} : memref<1x1x128xf32, #tpu.memory_space<vmem>>, vector<1x1x128xf32>,
    %c0_423 = arith.constant 0 : index
    %c0_424 = arith.constant 0 : index
    %423 = vector.load %arg11[%c0_423, %c0_424] : memref<4x32xf32, #tpu.memory_space<vmem>>, vector<4x32xf32>
    %cst_425 = arith.constant dense<0.000000e+00> : vector<4x256xf32>
    %424 = tpu.matmul %423, %387, %cst_425 {dimension_numbers = #tpu.dot_dimension_numbers<[1], [0], [0], [1], [0, 0, 1, 1], [], []>} : vector<4x32xf32>, vector<32x256xf32>, vector<4x256xf32> -> vector<4x256xf32>
    %c0_426 = arith.constant 0 : index
    %c0_427 = arith.constant 0 : index
    %425 = vector.load %arg12[%c0_426, %c0_427] : memref<4x1xf32, #tpu.memory_space<vmem>>, vector<4x1xf32>
    %426 = vector.broadcast %425 : vector<4x1xf32> to vector<4x256xf32>
    %427 = arith.mulf %424, %426 : vector<4x256xf32>
    %c0_428 = arith.constant 0 : index
    %c0_429 = arith.constant 0 : index
    %428 = vector.load %arg13[%c0_428, %c0_429] : memref<4x1xf32, #tpu.memory_space<vmem>>, vector<4x1xf32>
    %429 = vector.broadcast %428 : vector<4x1xf32> to vector<4x256xf32>
    %430 = arith.addf %427, %429 : vector<4x256xf32>
    %cst_430 = arith.constant 0.000000e+00 : f32
    %431 = vector.broadcast %cst_430 : f32 to vector<4x256xf32>
    %432 = arith.maximumf %430, %431 : vector<4x256xf32>
    %c0_431 = arith.constant 0 : index
    %c0_432 = arith.constant 0 : index
    %c0_433 = arith.constant 0 : index
    %433 = vector.load %arg19[%c0_431, %c0_432, %c0_433] : memref<1x4x256xf32, #tpu.memory_space<vmem>>, vector<1x4x256xf32>
    %434 = vector.shape_cast %433 : vector<1x4x256xf32> to vector<4x256xf32>
    %435 = vector.shape_cast %432 : vector<4x256xf32> to vector<1x4x256xf32>
    tpu.vector_store %arg19[%c0_431, %c0_432, %c0_433], %435 {strides = array<i32>} : memref<1x4x256xf32, #tpu.memory_space<vmem>>, vector<1x4x256xf32>,
    return
  }
  func.func @transform_0(%arg0: i32) -> (i32, i32, i32) {
    %c0_i32 = arith.constant 0 : i32
    %c0_i32_0 = arith.constant 0 : i32
    %c0_i32_1 = arith.constant 0 : i32
    return %arg0, %c0_i32, %c0_i32_0 : i32, i32, i32
  }
  func.func @transform_1(%arg0: i32) -> (i32, i32, i32, i32) {
    %c0_i32 = arith.constant 0 : i32
    %c0_i32_0 = arith.constant 0 : i32
    %c0_i32_1 = arith.constant 0 : i32
    %c0_i32_2 = arith.constant 0 : i32
    %c0_i32_3 = arith.constant 0 : i32
    return %c0_i32, %c0_i32_0, %c0_i32_1, %c0_i32_2 : i32, i32, i32, i32
  }
  func.func @transform_2(%arg0: i32) -> (i32, i32) {
    %c0_i32 = arith.constant 0 : i32
    %c0_i32_0 = arith.constant 0 : i32
    %c0_i32_1 = arith.constant 0 : i32
    return %c0_i32, %c0_i32_0 : i32, i32
  }
  func.func @transform_3(%arg0: i32) -> (i32, i32) {
    %c0_i32 = arith.constant 0 : i32
    %c0_i32_0 = arith.constant 0 : i32
    %c0_i32_1 = arith.constant 0 : i32
    return %c0_i32, %c0_i32_0 : i32, i32
  }
  func.func @transform_4(%arg0: i32) -> (i32, i32, i32, i32, i32) {
    %c0_i32 = arith.constant 0 : i32
    %c0_i32_0 = arith.constant 0 : i32
    %c0_i32_1 = arith.constant 0 : i32
    %c0_i32_2 = arith.constant 0 : i32
    %c0_i32_3 = arith.constant 0 : i32
    %c0_i32_4 = arith.constant 0 : i32
    return %c0_i32, %c0_i32_0, %c0_i32_1, %c0_i32_2, %c0_i32_3 : i32, i32, i32, i32, i32
  }
  func.func @transform_5(%arg0: i32) -> (i32, i32, i32) {
    %c0_i32 = arith.constant 0 : i32
    %c0_i32_0 = arith.constant 0 : i32
    %c0_i32_1 = arith.constant 0 : i32
    %c0_i32_2 = arith.constant 0 : i32
    return %c0_i32, %c0_i32_0, %c0_i32_1 : i32, i32, i32
  }
  func.func @transform_6(%arg0: i32) -> (i32, i32, i32) {
    %c0_i32 = arith.constant 0 : i32
    %c0_i32_0 = arith.constant 0 : i32
    %c0_i32_1 = arith.constant 0 : i32
    %c0_i32_2 = arith.constant 0 : i32
    return %c0_i32, %c0_i32_0, %c0_i32_1 : i32, i32, i32
  }
  func.func @transform_7(%arg0: i32) -> (i32, i32) {
    %c0_i32 = arith.constant 0 : i32
    %c0_i32_0 = arith.constant 0 : i32
    %c0_i32_1 = arith.constant 0 : i32
    return %c0_i32, %c0_i32_0 : i32, i32
  }
  func.func @transform_8(%arg0: i32) -> (i32, i32) {
    %c0_i32 = arith.constant 0 : i32
    %c0_i32_0 = arith.constant 0 : i32
    %c0_i32_1 = arith.constant 0 : i32
    return %c0_i32, %c0_i32_0 : i32, i32
  }
  func.func @transform_9(%arg0: i32) -> (i32, i32) {
    %c0_i32 = arith.constant 0 : i32
    %c0_i32_0 = arith.constant 0 : i32
    %c0_i32_1 = arith.constant 0 : i32
    return %c0_i32, %c0_i32_0 : i32, i32
  }
  func.func @transform_10(%arg0: i32) -> (i32, i32) {
    %c0_i32 = arith.constant 0 : i32
    %c0_i32_0 = arith.constant 0 : i32
    %c0_i32_1 = arith.constant 0 : i32
    return %c0_i32, %c0_i32_0 : i32, i32
  }
  func.func @transform_11(%arg0: i32) -> (i32, i32) {
    %c0_i32 = arith.constant 0 : i32
    %c0_i32_0 = arith.constant 0 : i32
    %c0_i32_1 = arith.constant 0 : i32
    return %c0_i32, %c0_i32_0 : i32, i32
  }
  func.func @transform_12(%arg0: i32) -> (i32, i32) {
    %c0_i32 = arith.constant 0 : i32
    %c0_i32_0 = arith.constant 0 : i32
    %c0_i32_1 = arith.constant 0 : i32
    return %c0_i32, %c0_i32_0 : i32, i32
  }
  func.func @transform_13(%arg0: i32) -> (i32, i32) {
    %c0_i32 = arith.constant 0 : i32
    %c0_i32_0 = arith.constant 0 : i32
    %c0_i32_1 = arith.constant 0 : i32
    return %c0_i32, %c0_i32_0 : i32, i32
  }
  func.func @transform_14(%arg0: i32) -> (i32, i32) {
    %c0_i32 = arith.constant 0 : i32
    %c0_i32_0 = arith.constant 0 : i32
    %c0_i32_1 = arith.constant 0 : i32
    return %c0_i32, %c0_i32_0 : i32, i32
  }
  func.func @transform_15(%arg0: i32) -> (i32, i32) {
    %c0_i32 = arith.constant 0 : i32
    %c0_i32_0 = arith.constant 0 : i32
    %c0_i32_1 = arith.constant 0 : i32
    return %c0_i32, %c0_i32_0 : i32, i32
  }
  func.func @transform_16(%arg0: i32) -> (i32, i32) {
    %c0_i32 = arith.constant 0 : i32
    %c0_i32_0 = arith.constant 0 : i32
    %c0_i32_1 = arith.constant 0 : i32
    return %c0_i32, %c0_i32_0 : i32, i32
  }
  func.func @transform_17(%arg0: i32) -> (i32, i32, i32) {
    %c0_i32 = arith.constant 0 : i32
    %c0_i32_0 = arith.constant 0 : i32
    %c0_i32_1 = arith.constant 0 : i32
    return %arg0, %c0_i32, %c0_i32_0 : i32, i32, i32
  }
  func.func @transform_18(%arg0: i32) -> (i32, i32, i32) {
    %c0_i32 = arith.constant 0 : i32
    %c0_i32_0 = arith.constant 0 : i32
    %c0_i32_1 = arith.constant 0 : i32
    return %arg0, %c0_i32, %c0_i32_0 : i32, i32, i32
  }
}

</mosaic_0001>

<llo_original>
// kernel: forward_pallas.1
$region0: #{forward_pallas.1}
  #allocation0 [shape = 'u32[]', space=smem, size = 0x4, offset = 0x4, fixed_abs, tag = 'smem constant byte address 0x4 - core index']
  #allocation1 [shape = 'u32[144,128]{1,0:T(1,128)}', space=vmem, size = 0x12000, scoped, tag = 'internal scratch']
  #allocation2 [shape = 'f32[32,512]{1,0:T(8,128)}', space=vmem, size = 0x10000, scoped, tag = 'scratch operand']
  #allocation3 [shape = 'f32[1,1]{1,0:T(1,128)S(1)}', space=vmem, size = 0x200, scoped, tag = 'scoped memory for forward_pallas.1']
  %s0 = inlined_call_operand.vmem [shape: f32[2,32,256], index: 0, kind: input, shape index: {}]
  %s1 = inlined_call_operand.hbm [shape: f32[3,3,32,32], index: 1, kind: input, shape index: {}]
  %s2 = inlined_call_operand.vmem [shape: f32[32,1], index: 2, kind: input, shape index: {}]
  %s3 = inlined_call_operand.vmem [shape: f32[32,1], index: 3, kind: input, shape index: {}]
  %s4 = inlined_call_operand.hbm [shape: f32[4,3,3,32,32], index: 4, kind: input, shape index: {}]
  %s5 = inlined_call_operand.vmem [shape: f32[4,32,1], index: 5, kind: input, shape index: {}]
  %s6 = inlined_call_operand.vmem [shape: f32[4,32,1], index: 6, kind: input, shape index: {}]
  %s7 = inlined_call_operand.vmem [shape: f32[4,32], index: 7, kind: input, shape index: {}]
  %s8 = inlined_call_operand.vmem [shape: f32[4,1], index: 8, kind: input, shape index: {}]
  %s9 = inlined_call_operand.vmem [shape: f32[4,1], index: 9, kind: input, shape index: {}]
  %s10 = inlined_call_operand.vmem [shape: f32[4,32], index: 10, kind: input, shape index: {}]
  %s11 = inlined_call_operand.vmem [shape: f32[4,1], index: 11, kind: input, shape index: {}]
  %s12 = inlined_call_operand.vmem [shape: f32[4,1], index: 12, kind: input, shape index: {}]
  %s13 = inlined_call_operand.vmem [shape: f32[256,256], index: 13, kind: input, shape index: {}]
  %s14 = inlined_call_operand.vmem [shape: f32[1,64], index: 14, kind: input, shape index: {}]
  %s15 = inlined_call_operand.vmem [shape: f32[1,64], index: 15, kind: input, shape index: {}]
  %s16 = inlined_call_operand.<no memory space> [shape: f32[1,1], index: 16, kind: input, shape index: {}]
  %s17 = inlined_call_operand.vmem [shape: f32[2,1,128], index: 17, kind: output, shape index: {0}]
  %s18 = inlined_call_operand.vmem [shape: f32[2,4,256], index: 18, kind: output, shape index: {1}]
  %19 = xla_tuple %s17, %s18
  %s20 = sld [smem:[#allocation0]]
  $region117: #{forward_pallas.1} parent=0
    _
  %s22 = ssub.s32 1, %s20
  %s23 = scalar_select 0, %s22, %s20
  %v24 = vstv %s16
  %25 = vst [vmem:[#allocation3] sm:$0x1] %v24
  $region1: #{forward_pallas.1} parent=0
    #allocation4 [shape = 'u8[147456]{0}', space=vmem, size = 0x24000, scoped, tag = 'input window, operand 1, single buffered']
    #allocation5 [shape = 's32[2]{0}', space=sflag, size = 0x8, scoped, tag = 'scoped memory for forward_pallas.1']
    #allocation6 [shape = 'u8[589824]{0}', space=vmem, size = 0x90000, scoped, tag = 'input window, operand 4, single buffered']
    #allocation7 [shape = 's32[1]{0}', space=sflag, size = 0x4, scoped, tag = 'scoped memory for forward_pallas.1']
    %26 = vsyncpa [#allocation5], 0
    %27 = vsyncpa [#allocation7], 0
    loop: start=0, step=1, limit=4
    $region2: #{forward_pallas.1} parent=1 // loop_pre_header
      _
    $region3: #{forward_pallas.1} parent=1 // loop_header
      %s29 = sphi 0, %s33
      %p30 = scmp.ge.s32.totalorder %s29, 4
      %s39 = sphi 0, %s41
      %s42 = sphi 0, %s39
      %s43 = sphi 0, %s42
      %s59 = sphi 0, %s43
      %s63 = sphi 0, %s63
      %s65 = sphi 0, %s63
      %s66 = sphi 0, %s65
      %s80 = sphi 0, %s66
      %s84 = sphi 0, %s84
      %s86 = sphi 0, %s84
      %s87 = sphi 0, %s86
      %s101 = sphi 0, %s87
      %s105 = sphi 0, %s105
      %s107 = sphi 0, %s105
      %s108 = sphi 0, %s107
      %s122 = sphi 0, %s108
      %s126 = sphi 0, %s126
      %s128 = sphi 0, %s126
      %s129 = sphi 0, %s128
      %s143 = sphi 0, %s129
      %s147 = sphi 0, %s147
      %s149 = sphi 0, %s147
      %s150 = sphi 0, %s149
      %s164 = sphi 0, %s150
      %s168 = sphi 0, %s168
      %s170 = sphi 0, %s168
      %s171 = sphi 0, %s170
      %s185 = sphi 0, %s171
      %s189 = sphi 0, %s189
      %s191 = sphi 0, %s189
      %s192 = sphi 0, %s191
      %s206 = sphi 0, %s192
      %s210 = sphi 0, %s210
      %s212 = sphi 0, %s210
      %s213 = sphi 0, %s212
      %s227 = sphi 0, %s213
      %s231 = sphi 0, %s231
      %s233 = sphi 0, %s231
      %s234 = sphi 0, %s233
      %s248 = sphi 0, %s234
      %s252 = sphi 0, %s252
      %s254 = sphi 0, %s252
      %s255 = sphi 0, %s254
      %s269 = sphi 0, %s255
      %s273 = sphi 0, %s273
      %s275 = sphi 0, %s273
      %s276 = sphi 0, %s275
      %s290 = sphi 0, %s276
      %s294 = sphi 0, %s294
      %s296 = sphi 0, %s294
      %s297 = sphi 0, %s296
      %s311 = sphi 0, %s297
      %s315 = sphi 0, %s315
      %s317 = sphi 0, %s315
      %s318 = sphi 0, %s317
      %s332 = sphi 0, %s318
      %s336 = sphi 0, %s336
      %s338 = sphi 0, %s336
      %s339 = sphi 0, %s338
      %s353 = sphi 0, %s339
      %s357 = sphi 0, %s357
      %s359 = sphi 0, %s357
      %s360 = sphi 0, %s359
      %s374 = sphi 0, %s360
      %s378 = sphi 0, %s378
      %s380 = sphi 0, %s378
      %s381 = sphi 0, %s380
      %s395 = sphi 0, %s381
      %s401 = sphi 0, %s403
      %s404 = sphi 0, %s401
      %s405 = sphi 0, %s404
      %s421 = sphi 0, %s405
      %s427 = sphi 0, %s429
      %s430 = sphi 0, %s427
      %s431 = sphi 0, %s430
      %s447 = sphi 0, %s431
    $region4: #{forward_pallas.1} parent=1 // loop_header_branch
      %32 = sbr.rel (%p30) target = $region8
    $region5: #{forward_pallas.1} parent=1 // loop_body
      %s34 = ssub.s32 %s29, 1
      %s35 = ssub.s32 %s29, 2
      %s36 = sadd.s32 %s29, 1
      %s37 = ssub.s32 %s29, %s36
      %p38 = scmp.eq.s32.totalorder %s37, 0
      %s40 = sadd.s32 %s39, 1
      %s41 = scalar_select %p38, %s39, %s40
      %p44 = pneg %p38
      %p45 = scmp.eq.s32.totalorder %s29, 1
      %p46 = por %p44, %p45
      %p47 = scmp.ne.s32.totalorder %s39, %s42
      %p48 = scmp.eq.s32.totalorder %s29, 0
      %p49 = por %p47, %p48
      %p50 = scmp.ne.s32.totalorder %s39, %s42
      %p51 = scmp.eq.s32.totalorder %s34, 1
      %p52 = por %p50, %p51
      %p53 = scmp.ne.s32.totalorder %s42, %s43
      %p54 = scmp.eq.s32.totalorder %s34, 0
      %p55 = por %p53, %p54
      %p56 = scmp.ne.s32.totalorder %s42, %s43
      %p57 = scmp.eq.s32.totalorder %s35, 1
      %p58 = por %p56, %p57
      %p60 = scmp.ne.s32.totalorder %s43, %s59
      %p61 = scmp.eq.s32.totalorder %s35, 0
      %p62 = por %p60, %p61
      %s64 = sadd.s32 %s63, 1
      %p67 = scmp.eq.s32.totalorder %s29, 1
      %p68 = scmp.ne.s32.totalorder %s63, %s65
      %p69 = scmp.eq.s32.totalorder %s29, 0
      %p70 = por %p68, %p69
      %p71 = scmp.ne.s32.totalorder %s63, %s65
      %p72 = scmp.eq.s32.totalorder %s34, 1
      %p73 = por %p71, %p72
      %p74 = scmp.ne.s32.totalorder %s65, %s66
      %p75 = scmp.eq.s32.totalorder %s34, 0
      %p76 = por %p74, %p75
      %p77 = scmp.ne.s32.totalorder %s65, %s66
      %p78 = scmp.eq.s32.totalorder %s35, 1
      %p79 = por %p77, %p78
      %p81 = scmp.ne.s32.totalorder %s66, %s80
      %p82 = scmp.eq.s32.totalorder %s35, 0
      %p83 = por %p81, %p82
      %s85 = sadd.s32 %s84, 1
      %p88 = scmp.eq.s32.totalorder %s29, 1
      %p89 = scmp.ne.s32.totalorder %s84, %s86
      %p90 = scmp.eq.s32.totalorder %s29, 0
      %p91 = por %p89, %p90
      %p92 = scmp.ne.s32.totalorder %s84, %s86
      %p93 = scmp.eq.s32.totalorder %s34, 1
      %p94 = por %p92, %p93
      %p95 = scmp.ne.s32.totalorder %s86, %s87
      %p96 = scmp.eq.s32.totalorder %s34, 0
      %p97 = por %p95, %p96
      %p98 = scmp.ne.s32.totalorder %s86, %s87
      %p99 = scmp.eq.s32.totalorder %s35, 1
      %p100 = por %p98, %p99
      %p102 = scmp.ne.s32.totalorder %s87, %s101
      %p103 = scmp.eq.s32.totalorder %s35, 0
      %p104 = por %p102, %p103
      %s106 = sadd.s32 %s105, 1
      %p109 = scmp.eq.s32.totalorder %s29, 1
      %p110 = scmp.ne.s32.totalorder %s105, %s107
      %p111 = scmp.eq.s32.totalorder %s29, 0
      %p112 = por %p110, %p111
      %p113 = scmp.ne.s32.totalorder %s105, %s107
      %p114 = scmp.eq.s32.totalorder %s34, 1
      %p115 = por %p113, %p114
      %p116 = scmp.ne.s32.totalorder %s107, %s108
      %p117 = scmp.eq.s32.totalorder %s34, 0
      %p118 = por %p116, %p117
      %p119 = scmp.ne.s32.totalorder %s107, %s108
      %p120 = scmp.eq.s32.totalorder %s35, 1
      %p121 = por %p119, %p120
      %p123 = scmp.ne.s32.totalorder %s108, %s122
      %p124 = scmp.eq.s32.totalorder %s35, 0
      %p125 = por %p123, %p124
      %s127 = sadd.s32 %s126, 1
      %p130 = scmp.eq.s32.totalorder %s29, 1
      %p131 = scmp.ne.s32.totalorder %s126, %s128
      %p132 = scmp.eq.s32.totalorder %s29, 0
      %p133 = por %p131, %p132
      %p134 = scmp.ne.s32.totalorder %s126, %s128
      %p135 = scmp.eq.s32.totalorder %s34, 1
      %p136 = por %p134, %p135
      %p137 = scmp.ne.s32.totalorder %s128, %s129
      %p138 = scmp.eq.s32.totalorder %s34, 0
      %p139 = por %p137, %p138
      %p140 = scmp.ne.s32.totalorder %s128, %s129
      %p141 = scmp.eq.s32.totalorder %s35, 1
      %p142 = por %p140, %p141
      %p144 = scmp.ne.s32.totalorder %s129, %s143
      %p145 = scmp.eq.s32.totalorder %s35, 0
      %p146 = por %p144, %p145
      %s148 = sadd.s32 %s147, 1
      %p151 = scmp.eq.s32.totalorder %s29, 1
      %p152 = scmp.ne.s32.totalorder %s147, %s149
      %p153 = scmp.eq.s32.totalorder %s29, 0
      %p154 = por %p152, %p153
      %p155 = scmp.ne.s32.totalorder %s147, %s149
      %p156 = scmp.eq.s32.totalorder %s34, 1
      %p157 = por %p155, %p156
      %p158 = scmp.ne.s32.totalorder %s149, %s150
      %p159 = scmp.eq.s32.totalorder %s34, 0
      %p160 = por %p158, %p159
      %p161 = scmp.ne.s32.totalorder %s149, %s150
      %p162 = scmp.eq.s32.totalorder %s35, 1
      %p163 = por %p161, %p162
      %p165 = scmp.ne.s32.totalorder %s150, %s164
      %p166 = scmp.eq.s32.totalorder %s35, 0
      %p167 = por %p165, %p166
      %s169 = sadd.s32 %s168, 1
      %p172 = scmp.eq.s32.totalorder %s29, 1
      %p173 = scmp.ne.s32.totalorder %s168, %s170
      %p174 = scmp.eq.s32.totalorder %s29, 0
      %p175 = por %p173, %p174
      %p176 = scmp.ne.s32.totalorder %s168, %s170
      %p177 = scmp.eq.s32.totalorder %s34, 1
      %p178 = por %p176, %p177
      %p179 = scmp.ne.s32.totalorder %s170, %s171
      %p180 = scmp.eq.s32.totalorder %s34, 0
      %p181 = por %p179, %p180
      %p182 = scmp.ne.s32.totalorder %s170, %s171
      %p183 = scmp.eq.s32.totalorder %s35, 1
      %p184 = por %p182, %p183
      %p186 = scmp.ne.s32.totalorder %s171, %s185
      %p187 = scmp.eq.s32.totalorder %s35, 0
      %p188 = por %p186, %p187
      %s190 = sadd.s32 %s189, 1
      %p193 = scmp.eq.s32.totalorder %s29, 1
      %p194 = scmp.ne.s32.totalorder %s189, %s191
      %p195 = scmp.eq.s32.totalorder %s29, 0
      %p196 = por %p194, %p195
      %p197 = scmp.ne.s32.totalorder %s189, %s191
      %p198 = scmp.eq.s32.totalorder %s34, 1
      %p199 = por %p197, %p198
      %p200 = scmp.ne.s32.totalorder %s191, %s192
      %p201 = scmp.eq.s32.totalorder %s34, 0
      %p202 = por %p200, %p201
      %p203 = scmp.ne.s32.totalorder %s191, %s192
      %p204 = scmp.eq.s32.totalorder %s35, 1
      %p205 = por %p203, %p204
      %p207 = scmp.ne.s32.totalorder %s192, %s206
      %p208 = scmp.eq.s32.totalorder %s35, 0
      %p209 = por %p207, %p208
      %s211 = sadd.s32 %s210, 1
      %p214 = scmp.eq.s32.totalorder %s29, 1
      %p215 = scmp.ne.s32.totalorder %s210, %s212
      %p216 = scmp.eq.s32.totalorder %s29, 0
      %p217 = por %p215, %p216
      %p218 = scmp.ne.s32.totalorder %s210, %s212
      %p219 = scmp.eq.s32.totalorder %s34, 1
      %p220 = por %p218, %p219
      %p221 = scmp.ne.s32.totalorder %s212, %s213
      %p222 = scmp.eq.s32.totalorder %s34, 0
      %p223 = por %p221, %p222
      %p224 = scmp.ne.s32.totalorder %s212, %s213
      %p225 = scmp.eq.s32.totalorder %s35, 1
      %p226 = por %p224, %p225
      %p228 = scmp.ne.s32.totalorder %s213, %s227
      %p229 = scmp.eq.s32.totalorder %s35, 0
      %p230 = por %p228, %p229
      %s232 = sadd.s32 %s231, 1
      %p235 = scmp.eq.s32.totalorder %s29, 1
      %p236 = scmp.ne.s32.totalorder %s231, %s233
      %p237 = scmp.eq.s32.totalorder %s29, 0
      %p238 = por %p236, %p237
      %p239 = scmp.ne.s32.totalorder %s231, %s233
      %p240 = scmp.eq.s32.totalorder %s34, 1
      %p241 = por %p239, %p240
      %p242 = scmp.ne.s32.totalorder %s233, %s234
      %p243 = scmp.eq.s32.totalorder %s34, 0
      %p244 = por %p242, %p243
      %p245 = scmp.ne.s32.totalorder %s233, %s234
      %p246 = scmp.eq.s32.totalorder %s35, 1
      %p247 = por %p245, %p246
      %p249 = scmp.ne.s32.totalorder %s234, %s248
      %p250 = scmp.eq.s32.totalorder %s35, 0
      %p251 = por %p249, %p250
      %s253 = sadd.s32 %s252, 1
      %p256 = scmp.eq.s32.totalorder %s29, 1
      %p257 = scmp.ne.s32.totalorder %s252, %s254
      %p258 = scmp.eq.s32.totalorder %s29, 0
      %p259 = por %p257, %p258
      %p260 = scmp.ne.s32.totalorder %s252, %s254
      %p261 = scmp.eq.s32.totalorder %s34, 1
      %p262 = por %p260, %p261
      %p263 = scmp.ne.s32.totalorder %s254, %s255
      %p264 = scmp.eq.s32.totalorder %s34, 0
      %p265 = por %p263, %p264
      %p266 = scmp.ne.s32.totalorder %s254, %s255
      %p267 = scmp.eq.s32.totalorder %s35, 1
      %p268 = por %p266, %p267
      %p270 = scmp.ne.s32.totalorder %s255, %s269
      %p271 = scmp.eq.s32.totalorder %s35, 0
      %p272 = por %p270, %p271
      %s274 = sadd.s32 %s273, 1
      %p277 = scmp.eq.s32.totalorder %s29, 1
      %p278 = scmp.ne.s32.totalorder %s273, %s275
      %p279 = scmp.eq.s32.totalorder %s29, 0
      %p280 = por %p278, %p279
      %p281 = scmp.ne.s32.totalorder %s273, %s275
      %p282 = scmp.eq.s32.totalorder %s34, 1
      %p283 = por %p281, %p282
      %p284 = scmp.ne.s32.totalorder %s275, %s276
      %p285 = scmp.eq.s32.totalorder %s34, 0
      %p286 = por %p284, %p285
      %p287 = scmp.ne.s32.totalorder %s275, %s276
      %p288 = scmp.eq.s32.totalorder %s35, 1
      %p289 = por %p287, %p288
      %p291 = scmp.ne.s32.totalorder %s276, %s290
      %p292 = scmp.eq.s32.totalorder %s35, 0
      %p293 = por %p291, %p292
      %s295 = sadd.s32 %s294, 1
      %p298 = scmp.eq.s32.totalorder %s29, 1
      %p299 = scmp.ne.s32.totalorder %s294, %s296
      %p300 = scmp.eq.s32.totalorder %s29, 0
      %p301 = por %p299, %p300
      %p302 = scmp.ne.s32.totalorder %s294, %s296
      %p303 = scmp.eq.s32.totalorder %s34, 1
      %p304 = por %p302, %p303
      %p305 = scmp.ne.s32.totalorder %s296, %s297
      %p306 = scmp.eq.s32.totalorder %s34, 0
      %p307 = por %p305, %p306
      %p308 = scmp.ne.s32.totalorder %s296, %s297
      %p309 = scmp.eq.s32.totalorder %s35, 1
      %p310 = por %p308, %p309
      %p312 = scmp.ne.s32.totalorder %s297, %s311
      %p313 = scmp.eq.s32.totalorder %s35, 0
      %p314 = por %p312, %p313
      %s316 = sadd.s32 %s315, 1
      %p319 = scmp.eq.s32.totalorder %s29, 1
      %p320 = scmp.ne.s32.totalorder %s315, %s317
      %p321 = scmp.eq.s32.totalorder %s29, 0
      %p322 = por %p320, %p321
      %p323 = scmp.ne.s32.totalorder %s315, %s317
      %p324 = scmp.eq.s32.totalorder %s34, 1
      %p325 = por %p323, %p324
      %p326 = scmp.ne.s32.totalorder %s317, %s318
      %p327 = scmp.eq.s32.totalorder %s34, 0
      %p328 = por %p326, %p327
      %p329 = scmp.ne.s32.totalorder %s317, %s318
      %p330 = scmp.eq.s32.totalorder %s35, 1
      %p331 = por %p329, %p330
      %p333 = scmp.ne.s32.totalorder %s318, %s332
      %p334 = scmp.eq.s32.totalorder %s35, 0
      %p335 = por %p333, %p334
      %s337 = sadd.s32 %s336, 1
      %p340 = scmp.eq.s32.totalorder %s29, 1
      %p341 = scmp.ne.s32.totalorder %s336, %s338
      %p342 = scmp.eq.s32.totalorder %s29, 0
      %p343 = por %p341, %p342
      %p344 = scmp.ne.s32.totalorder %s336, %s338
      %p345 = scmp.eq.s32.totalorder %s34, 1
      %p346 = por %p344, %p345
      %p347 = scmp.ne.s32.totalorder %s338, %s339
      %p348 = scmp.eq.s32.totalorder %s34, 0
      %p349 = por %p347, %p348
      %p350 = scmp.ne.s32.totalorder %s338, %s339
      %p351 = scmp.eq.s32.totalorder %s35, 1
      %p352 = por %p350, %p351
      %p354 = scmp.ne.s32.totalorder %s339, %s353
      %p355 = scmp.eq.s32.totalorder %s35, 0
      %p356 = por %p354, %p355
      %s358 = sadd.s32 %s357, 1
      %p361 = scmp.eq.s32.totalorder %s29, 1
      %p362 = scmp.ne.s32.totalorder %s357, %s359
      %p363 = scmp.eq.s32.totalorder %s29, 0
      %p364 = por %p362, %p363
      %p365 = scmp.ne.s32.totalorder %s357, %s359
      %p366 = scmp.eq.s32.totalorder %s34, 1
      %p367 = por %p365, %p366
      %p368 = scmp.ne.s32.totalorder %s359, %s360
      %p369 = scmp.eq.s32.totalorder %s34, 0
      %p370 = por %p368, %p369
      %p371 = scmp.ne.s32.totalorder %s359, %s360
      %p372 = scmp.eq.s32.totalorder %s35, 1
      %p373 = por %p371, %p372
      %p375 = scmp.ne.s32.totalorder %s360, %s374
      %p376 = scmp.eq.s32.totalorder %s35, 0
      %p377 = por %p375, %p376
      %s379 = sadd.s32 %s378, 1
      %p382 = scmp.eq.s32.totalorder %s29, 1
      %p383 = scmp.ne.s32.totalorder %s378, %s380
      %p384 = scmp.eq.s32.totalorder %s29, 0
      %p385 = por %p383, %p384
      %p386 = scmp.ne.s32.totalorder %s378, %s380
      %p387 = scmp.eq.s32.totalorder %s34, 1
      %p388 = por %p386, %p387
      %p389 = scmp.ne.s32.totalorder %s380, %s381
      %p390 = scmp.eq.s32.totalorder %s34, 0
      %p391 = por %p389, %p390
      %p392 = scmp.ne.s32.totalorder %s380, %s381
      %p393 = scmp.eq.s32.totalorder %s35, 1
      %p394 = por %p392, %p393
      %p396 = scmp.ne.s32.totalorder %s381, %s395
      %p397 = scmp.eq.s32.totalorder %s35, 0
      %p398 = por %p396, %p397
      %s399 = ssub.s32 %s29, %s36
      %p400 = scmp.eq.s32.totalorder %s399, 0
      %s402 = sadd.s32 %s401, 1
      %s403 = scalar_select %p400, %s401, %s402
      %p406 = pneg %p400
      %p407 = scmp.eq.s32.totalorder %s29, 1
      %p408 = por %p406, %p407
      %p409 = scmp.ne.s32.totalorder %s401, %s404
      %p410 = scmp.eq.s32.totalorder %s29, 0
      %p411 = por %p409, %p410
      %p412 = scmp.ne.s32.totalorder %s401, %s404
      %p413 = scmp.eq.s32.totalorder %s34, 1
      %p414 = por %p412, %p413
      %p415 = scmp.ne.s32.totalorder %s404, %s405
      %p416 = scmp.eq.s32.totalorder %s34, 0
      %p417 = por %p415, %p416
      %p418 = scmp.ne.s32.totalorder %s404, %s405
      %p419 = scmp.eq.s32.totalorder %s35, 1
      %p420 = por %p418, %p419
      %p422 = scmp.ne.s32.totalorder %s405, %s421
      %p423 = scmp.eq.s32.totalorder %s35, 0
      %p424 = por %p422, %p423
      %s425 = ssub.s32 %s29, %s36
      %p426 = scmp.eq.s32.totalorder %s425, 0
      %s428 = sadd.s32 %s427, 1
      %s429 = scalar_select %p426, %s427, %s428
      %p432 = pneg %p426
      %p433 = scmp.eq.s32.totalorder %s29, 1
      %p434 = por %p432, %p433
      %p435 = scmp.ne.s32.totalorder %s427, %s430
      %p436 = scmp.eq.s32.totalorder %s29, 0
      %p437 = por %p435, %p436
      %p438 = scmp.ne.s32.totalorder %s427, %s430
      %p439 = scmp.eq.s32.totalorder %s34, 1
      %p440 = por %p438, %p439
      %p441 = scmp.ne.s32.totalorder %s430, %s431
      %p442 = scmp.eq.s32.totalorder %s34, 0
      %p443 = por %p441, %p442
      %p444 = scmp.ne.s32.totalorder %s430, %s431
      %p445 = scmp.eq.s32.totalorder %s35, 1
      %p446 = por %p444, %p445
      %p448 = scmp.ne.s32.totalorder %s431, %s447
      %p449 = scmp.eq.s32.totalorder %s35, 0
      %p450 = por %p448, %p449
      %p451 = scmp.le.s32.totalorder 1, %s29
      %p452 = scmp.lt.s32.totalorder %s29, 3
      %p453 = pnand %p451, %p452
      %p454 = pneg %p453
      // Predicated region
      $region9: #{forward_pallas.1} parent=5 // pred_check
        _
      $region10: #{forward_pallas.1} parent=5 // pred_check_branch
        %456 = sbr.rel (%p453) target = $region12
      $region11: #{forward_pallas.1} parent=5 // pred_region
        %s457 = ssub.s32 %s29, 1
        // Predicated region
        $region13: #{forward_pallas.1} parent=11 // pred_check
          %p458 = pneg %p76
        $region14: #{forward_pallas.1} parent=11 // pred_check_branch
          %460 = sbr.rel (%p458) target = $region16
        $region15: #{forward_pallas.1} parent=11 // pred_region
          %s462 = ssub.s32 4608, 4608
          %463 = vsyncadd [#allocation5], %s462
          %s464 = sshll.u32 [#allocation4], 4
          %s465 = int_to_ptr.vmem [resolvable:$true] %s464
          %470 = dma.hbm_to_vmem [thread:$0]  %s1, 4608, %s465, [#allocation5], 128, 128, 8
        $region16: #{forward_pallas.1} parent=11 // pred_fallthru
          _
        // Predicated region
        $region17: #{forward_pallas.1} parent=11 // pred_check
          %p471 = pneg %p97
        $region18: #{forward_pallas.1} parent=11 // pred_check_branch
          %473 = sbr.rel (%p471) target = $region20
        $region19: #{forward_pallas.1} parent=11 // pred_region
          _
        $region20: #{forward_pallas.1} parent=11 // pred_fallthru
          _
        // Predicated region
        $region21: #{forward_pallas.1} parent=11 // pred_check
          %p474 = pneg %p118
        $region22: #{forward_pallas.1} parent=11 // pred_check_branch
          %476 = sbr.rel (%p474) target = $region24
        $region23: #{forward_pallas.1} parent=11 // pred_region
          _
        $region24: #{forward_pallas.1} parent=11 // pred_fallthru
          _
        // Predicated region
        $region25: #{forward_pallas.1} parent=11 // pred_check
          %p477 = pneg %p139
        $region26: #{forward_pallas.1} parent=11 // pred_check_branch
          %479 = sbr.rel (%p477) target = $region28
        $region27: #{forward_pallas.1} parent=11 // pred_region
          %s481 = ssub.s32 18432, 18432
          %482 = vsyncadd [#allocation7], %s481
          %s483 = sshll.u32 [#allocation6], 4
          %s484 = int_to_ptr.vmem [resolvable:$true] %s483
          %489 = dma.hbm_to_vmem [thread:$0]  %s4, 18432, %s484, [#allocation7], 128, 128, 8
        $region28: #{forward_pallas.1} parent=11 // pred_fallthru
          _
        // Predicated region
        $region29: #{forward_pallas.1} parent=11 // pred_check
          %p490 = pneg %p160
        $region30: #{forward_pallas.1} parent=11 // pred_check_branch
          %492 = sbr.rel (%p490) target = $region32
        $region31: #{forward_pallas.1} parent=11 // pred_region
          _
        $region32: #{forward_pallas.1} parent=11 // pred_fallthru
          _
        // Predicated region
        $region33: #{forward_pallas.1} parent=11 // pred_check
          %p493 = pneg %p181
        $region34: #{forward_pallas.1} parent=11 // pred_check_branch
          %495 = sbr.rel (%p493) target = $region36
        $region35: #{forward_pallas.1} parent=11 // pred_region
          _
        $region36: #{forward_pallas.1} parent=11 // pred_fallthru
          _
        // Predicated region
        $region37: #{forward_pallas.1} parent=11 // pred_check
          %p496 = pneg %p202
        $region38: #{forward_pallas.1} parent=11 // pred_check_branch
          %498 = sbr.rel (%p496) target = $region40
        $region39: #{forward_pallas.1} parent=11 // pred_region
          _
        $region40: #{forward_pallas.1} parent=11 // pred_fallthru
          _
        // Predicated region
        $region41: #{forward_pallas.1} parent=11 // pred_check
          %p499 = pneg %p223
        $region42: #{forward_pallas.1} parent=11 // pred_check_branch
          %501 = sbr.rel (%p499) target = $region44
        $region43: #{forward_pallas.1} parent=11 // pred_region
          _
        $region44: #{forward_pallas.1} parent=11 // pred_fallthru
          _
        // Predicated region
        $region45: #{forward_pallas.1} parent=11 // pred_check
          %p502 = pneg %p244
        $region46: #{forward_pallas.1} parent=11 // pred_check_branch
          %504 = sbr.rel (%p502) target = $region48
        $region47: #{forward_pallas.1} parent=11 // pred_region
          _
        $region48: #{forward_pallas.1} parent=11 // pred_fallthru
          _
        // Predicated region
        $region49: #{forward_pallas.1} parent=11 // pred_check
          %p505 = pneg %p265
        $region50: #{forward_pallas.1} parent=11 // pred_check_branch
          %507 = sbr.rel (%p505) target = $region52
        $region51: #{forward_pallas.1} parent=11 // pred_region
          _
        $region52: #{forward_pallas.1} parent=11 // pred_fallthru
          _
        // Predicated region
        $region53: #{forward_pallas.1} parent=11 // pred_check
          %p508 = pneg %p286
        $region54: #{forward_pallas.1} parent=11 // pred_check_branch
          %510 = sbr.rel (%p508) target = $region56
        $region55: #{forward_pallas.1} parent=11 // pred_region
          _
        $region56: #{forward_pallas.1} parent=11 // pred_fallthru
          _
        // Predicated region
        $region57: #{forward_pallas.1} parent=11 // pred_check
          %p511 = pneg %p307
        $region58: #{forward_pallas.1} parent=11 // pred_check_branch
          %513 = sbr.rel (%p511) target = $region60
        $region59: #{forward_pallas.1} parent=11 // pred_region
          _
        $region60: #{forward_pallas.1} parent=11 // pred_fallthru
          _
        // Predicated region
        $region61: #{forward_pallas.1} parent=11 // pred_check
          %p514 = pneg %p328
        $region62: #{forward_pallas.1} parent=11 // pred_check_branch
          %516 = sbr.rel (%p514) target = $region64
        $region63: #{forward_pallas.1} parent=11 // pred_region
          _
        $region64: #{forward_pallas.1} parent=11 // pred_fallthru
          _
        // Predicated region
        $region65: #{forward_pallas.1} parent=11 // pred_check
          %p517 = pneg %p349
        $region66: #{forward_pallas.1} parent=11 // pred_check_branch
          %519 = sbr.rel (%p517) target = $region68
        $region67: #{forward_pallas.1} parent=11 // pred_region
          _
        $region68: #{forward_pallas.1} parent=11 // pred_fallthru
          _
        // Predicated region
        $region69: #{forward_pallas.1} parent=11 // pred_check
          %p520 = pneg %p370
        $region70: #{forward_pallas.1} parent=11 // pred_check_branch
          %522 = sbr.rel (%p520) target = $region72
        $region71: #{forward_pallas.1} parent=11 // pred_region
          _
        $region72: #{forward_pallas.1} parent=11 // pred_fallthru
          _
        // Predicated region
        $region73: #{forward_pallas.1} parent=11 // pred_check
          %p523 = pneg %p391
        $region74: #{forward_pallas.1} parent=11 // pred_check_branch
          %525 = sbr.rel (%p523) target = $region76
        $region75: #{forward_pallas.1} parent=11 // pred_region
          _
        $region76: #{forward_pallas.1} parent=11 // pred_fallthru
          _
      $region12: #{forward_pallas.1} parent=5 // pred_fallthru
        _
      %p526 = scmp.lt.s32.totalorder %s29, 2
      // Predicated region
      $region77: #{forward_pallas.1} parent=5 // pred_check
        %p527 = pneg %p526
      $region78: #{forward_pallas.1} parent=5 // pred_check_branch
        %529 = sbr.rel (%p527) target = $region80
      $region79: #{forward_pallas.1} parent=5 // pred_region
        // Predicated region
        $region81: #{forward_pallas.1} parent=79 // pred_check
          %p530 = pneg %p49
        $region82: #{forward_pallas.1} parent=79 // pred_check_branch
          %532 = sbr.rel (%p530) target = $region84
        $region83: #{forward_pallas.1} parent=79 // pred_region
          %p533 = scmp.lt.s32.totalorder %s29, 1
          %s534 = scalar_select %p533, %s29, 1
          %s535 = smul.addr %s534, 8
          %s536 = smul.addr %s535, 8
          %s537 = scalar_lea.vmem %s0, %s536
        $region84: #{forward_pallas.1} parent=79 // pred_fallthru
          _
      $region80: #{forward_pallas.1} parent=5 // pred_fallthru
        _
      %p538 = scmp.le.s32.totalorder 1, %s29
      %p539 = scmp.lt.s32.totalorder %s29, 3
      %p540 = pnand %p538, %p539
      %p541 = pneg %p540
      // Predicated region
      $region85: #{forward_pallas.1} parent=5 // pred_check
        _
      $region86: #{forward_pallas.1} parent=5 // pred_check_branch
        %543 = sbr.rel (%p540) target = $region88
      $region87: #{forward_pallas.1} parent=5 // pred_region
        %s544 = ssub.s32 %s29, 1
        // Predicated region
        $region89: #{forward_pallas.1} parent=87 // pred_check
          %p545 = pneg %p76
        $region90: #{forward_pallas.1} parent=87 // pred_check_branch
          %547 = sbr.rel (%p545) target = $region92
        $region91: #{forward_pallas.1} parent=87 // pred_region
          %548 = dma.done [#allocation5], 4608
        $region92: #{forward_pallas.1} parent=87 // pred_fallthru
          _
        // Predicated region
        $region93: #{forward_pallas.1} parent=87 // pred_check
          %p549 = pneg %p139
        $region94: #{forward_pallas.1} parent=87 // pred_check_branch
          %551 = sbr.rel (%p549) target = $region96
        $region95: #{forward_pallas.1} parent=87 // pred_region
          %552 = dma.done [#allocation7], 18432
        $region96: #{forward_pallas.1} parent=87 // pred_fallthru
          _
        %p553 = scmp.lt.s32.totalorder %s34, 1
        %s554 = scalar_select %p553, %s34, 1
        %s555 = smul.addr %s554, 8
        %s556 = smul.addr %s555, 8
        %s557 = scalar_lea.vmem %s0, %s556
        %p558 = pneg %p55
        %p559 = pneg %p52
        %p560 = pneg %p76
        %p561 = pneg %p73
        %p562 = pneg %p97
        %p563 = pneg %p94
        %p564 = pneg %p118
        %p565 = pneg %p115
        %p566 = pneg %p139
        %p567 = pneg %p136
        %p568 = pneg %p160
        %p569 = pneg %p157
        %p570 = pneg %p181
        %p571 = pneg %p178
        %p572 = pneg %p202
        %p573 = pneg %p199
        %p574 = pneg %p223
        %p575 = pneg %p220
        %p576 = pneg %p244
        %p577 = pneg %p241
        %p578 = pneg %p265
        %p579 = pneg %p262
        %p580 = pneg %p286
        %p581 = pneg %p283
        %p582 = pneg %p307
        %p583 = pneg %p304
        %p584 = pneg %p328
        %p585 = pneg %p325
        %p586 = pneg %p349
        %p587 = pneg %p346
        %p588 = pneg %p370
        %p589 = pneg %p367
        %p590 = pneg %p391
        %p591 = pneg %p388
        %p592 = pneg %p417
        %p593 = pneg %p414
        %p594 = scmp.lt.s32.totalorder %s34, 1
        %s595 = scalar_select %p594, %s34, 1
        %s596 = scalar_lea.vmem %s17, %s595
        %p597 = pneg %p443
        %p598 = pneg %p440
        %p599 = scmp.lt.s32.totalorder %s34, 1
        %s600 = scalar_select %p599, %s34, 1
        %s601 = smul.addr %s600, 2
        %s602 = smul.addr %s601, 4
        %s603 = scalar_lea.vmem %s18, %s602
        %p604 = scmp.lt.s32.totalorder %s34, 1
        %s605 = scalar_select %p604, %s34, 1
        %s606 = smul.addr %s605, 8
        %s607 = smul.addr %s606, 8
        %s608 = scalar_lea.vmem %s0, %s607
        %p609 = scmp.lt.s32.totalorder %s34, 1
        %s610 = scalar_select %p609, %s34, 1
        %s611 = scalar_lea.vmem %s17, %s610
        %p612 = scmp.lt.s32.totalorder %s34, 1
        %s613 = scalar_select %p612, %s34, 1
        %s614 = smul.addr %s613, 2
        %s615 = smul.addr %s614, 4
        %s616 = scalar_lea.vmem %s18, %s615
        %617 = vst [vmem:[#allocation2] sm:$0xff] 0.0
        %618 = vst [vmem:[#allocation2 + $0x8] sm:$0xff] 0.0
        %619 = vst [vmem:[#allocation2 + $0x10] sm:$0xff] 0.0
        %620 = vst [vmem:[#allocation2 + $0x18] sm:$0xff] 0.0
        %621 = vst [vmem:[#allocation2 + $0x20] sm:$0xff] 0.0
        %622 = vst [vmem:[#allocation2 + $0x28] sm:$0xff] 0.0
        %623 = vst [vmem:[#allocation2 + $0x30] sm:$0xff] 0.0
        %624 = vst [vmem:[#allocation2 + $0x38] sm:$0xff] 0.0
        %625 = vst [vmem:[#allocation2 + $0x40] sm:$0xff] 0.0
        %626 = vst [vmem:[#allocation2 + $0x48] sm:$0xff] 0.0
        %627 = vst [vmem:[#allocation2 + $0x50] sm:$0xff] 0.0
        %628 = vst [vmem:[#allocation2 + $0x58] sm:$0xff] 0.0
        %629 = vst [vmem:[#allocation2 + $0x60] sm:$0xff] 0.0
        %630 = vst [vmem:[#allocation2 + $0x68] sm:$0xff] 0.0
        %631 = vst [vmem:[#allocation2 + $0x70] sm:$0xff] 0.0
        %632 = vst [vmem:[#allocation2 + $0x78] sm:$0xff] 0.0
        %v633 = vlaneseq
        %v634 = vand.u32 %v633, 127
        %v635 = vadd.s32 %v634, 128
        %vm636 = vcmp.lt.s32.totalorder %v634, 0
        %v637 = vsub.s32 0, %v634
        %v638 = vsel %vm636, %v637, %v634
        %v639 = vshrl.u32 %v638, 4
        %v640 = vand.u32 %v638, 15
        %v641 = vsub.s32 0, %v640
        %v642 = vsel %vm636, %v641, %v640
        %vm643 = vcmp.lt.s32.totalorder %v635, 0
        %v644 = vsub.s32 0, %v635
        %v645 = vsel %vm643, %v644, %v635
        %v646 = vshrl.u32 %v645, 4
        %v647 = vand.u32 %v645, 15
        %v648 = vsub.s32 0, %v647
        %v649 = vsel %vm643, %v648, %v647
        %vm650 = vcmp.ne.s32.totalorder %v642, 0
        %vm651 = vcmp.ne.s32.totalorder %v649, 0
        %vm652 = vcmp.lt.s32.totalorder %v642, 0
        %vm653 = vcmp.lt.s32.totalorder %v649, 0
        %vm654 = vmand %vm652, %vm650
        %vm655 = vmand %vm653, %vm651
        %v656 = vadd.s32 %v642, 16
        %v657 = vadd.s32 %v649, 16
        %v658 = vsel %vm654, %v656, %v642
        %v659 = vsel %vm655, %v657, %v649
        %v660 = vadd.s32 %v658, 4294967295
        %v661 = vadd.s32 %v659, 4294967295
        %vm662 = vcmp.ge.s32.totalorder %v660, 0
        %vm663 = vcmp.ge.s32.totalorder %v661, 0
        %vm664 = vcmp.lt.s32.totalorder %v660, 16
        %vm665 = vcmp.lt.s32.totalorder %v661, 16
        %vm666 = vmand %vm662, %vm664
        %vm667 = vmand %vm663, %vm665
        %v668 = vsel %vm666, 1, 0
        %v669 = vsel %vm667, 1, 0
        %v670 = vcvt.s32.f32 %v668
        %v671 = vcvt.s32.f32 %v669
        %v672 = vadd.s32 %v658, 1
        %v673 = vadd.s32 %v659, 1
        %vm674 = vcmp.ge.s32.totalorder %v672, 0
        %vm675 = vcmp.ge.s32.totalorder %v673, 0
        %vm676 = vcmp.lt.s32.totalorder %v672, 16
        %vm677 = vcmp.lt.s32.totalorder %v673, 16
        %vm678 = vmand %vm674, %vm676
        %vm679 = vmand %vm675, %vm677
        %v680 = vsel %vm678, 1, 0
        %v681 = vsel %vm679, 1, 0
        %v682 = vcvt.s32.f32 %v680
        %v683 = vcvt.s32.f32 %v681
        %v684 = vld [vmem:[%s608] sm:$0xff]
        %v685 = vld [vmem:[%s608 + $0x8] sm:$0xff]
        %v686 = vld [vmem:[%s608 + $0x10] sm:$0xff]
        %v687 = vld [vmem:[%s608 + $0x18] sm:$0xff]
        %v688 = vld [vmem:[%s608 + $0x20] sm:$0xff]
        %v689 = vld [vmem:[%s608 + $0x28] sm:$0xff]
        %v690 = vld [vmem:[%s608 + $0x30] sm:$0xff]
        %v691 = vld [vmem:[%s608 + $0x38] sm:$0xff]
        %v692 = vld [vmem:[%s2] sm:$0xff]
        %v693 = vld [vmem:[%s2 + $0x8] sm:$0xff]
        %v694 = vld [vmem:[%s2 + $0x10] sm:$0xff]
        %v695 = vld [vmem:[%s2 + $0x18] sm:$0xff]
        %v696 = vld [vmem:[%s3] sm:$0xff]
        %v697 = vld [vmem:[%s3 + $0x8] sm:$0xff]
        %v698 = vld [vmem:[%s3 + $0x10] sm:$0xff]
        %v699 = vld [vmem:[%s3 + $0x18] sm:$0xff]
        %700 = vst [vmem:[#allocation2 + $0x8] sm:$0xff] %v684
        %701 = vst [vmem:[#allocation2 + $0x10] sm:$0xff] %v685
        %702 = vst [vmem:[#allocation2 + $0x28] sm:$0xff] %v686
        %703 = vst [vmem:[#allocation2 + $0x30] sm:$0xff] %v687
        %704 = vst [vmem:[#allocation2 + $0x48] sm:$0xff] %v688
        %705 = vst [vmem:[#allocation2 + $0x50] sm:$0xff] %v689
        %706 = vst [vmem:[#allocation2 + $0x68] sm:$0xff] %v690
        %707 = vst [vmem:[#allocation2 + $0x70] sm:$0xff] %v691
        %v708 = vld [vmem:[#allocation2] sm:$0xff]
        %v709 = vld [vmem:[#allocation2 + $0x8] sm:$0xff]
        %v710 = vld [vmem:[#allocation2 + $0x10] sm:$0xff]
        %v711 = vld [vmem:[#allocation2 + $0x20] sm:$0xff]
        %v712 = vld [vmem:[#allocation2 + $0x28] sm:$0xff]
        %v713 = vld [vmem:[#allocation2 + $0x30] sm:$0xff]
        %v714 = vld [vmem:[#allocation2 + $0x40] sm:$0xff]
        %v715 = vld [vmem:[#allocation2 + $0x48] sm:$0xff]
        %v716 = vld [vmem:[#allocation2 + $0x50] sm:$0xff]
        %v717 = vld [vmem:[#allocation2 + $0x60] sm:$0xff]
        %v718 = vld [vmem:[#allocation2 + $0x68] sm:$0xff]
        %v719 = vld [vmem:[#allocation2 + $0x70] sm:$0xff]
        %722 = vrot.lane.b32.xlu0 %v670, 111
        %v723 = vpop.permute.xlu0 %722
        %724 = vrot.lane.b32.xlu0 %v671, 111
        %v725 = vpop.permute.xlu0 %724
        %vm726 = vcmask 908288
        %v727 = vsel %vm726, %v723, %v725
        %v731 = vmul.f32 %v708, %v723
        %v732 = vmul.f32 %v709, %v727
        %v733 = vmul.f32 %v710, %v725
        %v734 = vmul.f32 %v711, %v723
        %v735 = vmul.f32 %v712, %v727
        %v736 = vmul.f32 %v713, %v725
        %v737 = vmul.f32 %v714, %v723
        %v738 = vmul.f32 %v715, %v727
        %v739 = vmul.f32 %v716, %v725
        %v740 = vmul.f32 %v717, %v723
        %v741 = vmul.f32 %v718, %v727
        %v742 = vmul.f32 %v719, %v725
        %v743 = vld [vmem:[#allocation4] sm:$0xff]
        %v744 = vld [vmem:[#allocation4 + $0x8] sm:$0xff]
        %v745 = vld [vmem:[#allocation4 + $0x10] sm:$0xff]
        %v746 = vld [vmem:[#allocation4 + $0x18] sm:$0xff]
        %s747 = scalar_lea.vmem [#allocation4], 32
        %v748 = vld [vmem:[%s747] sm:$0xff]
        %v749 = vld [vmem:[%s747 + $0x8] sm:$0xff]
        %v750 = vld [vmem:[%s747 + $0x10] sm:$0xff]
        %v751 = vld [vmem:[%s747 + $0x18] sm:$0xff]
        %764 = vrot.lane.b32.xlu0 %v708, 16
        %v765 = vpop.permute.xlu0 %764
        %766 = vrot.lane.b32.xlu0 %v709, 16
        %v767 = vpop.permute.xlu0 %766
        %768 = vrot.lane.b32.xlu0 %v710, 16
        %v769 = vpop.permute.xlu0 %768
        %770 = vrot.lane.b32.xlu0 %v711, 16
        %v771 = vpop.permute.xlu0 %770
        %772 = vrot.lane.b32.xlu0 %v712, 16
        %v773 = vpop.permute.xlu0 %772
        %774 = vrot.lane.b32.xlu0 %v713, 16
        %v775 = vpop.permute.xlu0 %774
        %776 = vrot.lane.b32.xlu0 %v714, 16
        %v777 = vpop.permute.xlu0 %776
        %778 = vrot.lane.b32.xlu0 %v715, 16
        %v779 = vpop.permute.xlu0 %778
        %780 = vrot.lane.b32.xlu0 %v716, 16
        %v781 = vpop.permute.xlu0 %780
        %782 = vrot.lane.b32.xlu0 %v717, 16
        %v783 = vpop.permute.xlu0 %782
        %784 = vrot.lane.b32.xlu0 %v718, 16
        %v785 = vpop.permute.xlu0 %784
        %786 = vrot.lane.b32.xlu0 %v719, 16
        %v787 = vpop.permute.xlu0 %786
        %vm788 = vcmask 130048
        %v789 = vsel %vm788, %v765, %v767
        %v790 = vsel %vm788, %v767, %v769
        %v791 = vsel %vm788, %v771, %v773
        %v792 = vsel %vm788, %v773, %v775
        %v793 = vsel %vm788, %v777, %v779
        %v794 = vsel %vm788, %v779, %v781
        %v795 = vsel %vm788, %v783, %v785
        %v796 = vsel %vm788, %v785, %v787
        %vm805 = vcmask 261120
        %v807 = vsel %vm805, %v748, 0
        %v810 = vsel %vm805, %v749, 0
        %v813 = vsel %vm805, %v750, 0
        %v816 = vsel %vm805, %v751, 0
        %818 = vmatprep.subr.mxu0 0.0
        %819 = vmatpush1.msra.mxu0 0.0
        %820 = vmatprep.subr.mxu0 0.0
        %821 = vmatpush1.msra.mxu0 0.0
        %822 = vmatprep.subr.mxu0 0.0
        %823 = vmatpush1.msra.mxu0 0.0
        %824 = vmatprep.subr.mxu0 0.0
        %825 = vmatpush1.msra.mxu0 0.0
        %826 = vmatprep.subr.mxu0 0.0
        %827 = vmatpush1.msra.mxu0 0.0
        %828 = vmatprep.subr.mxu0 0.0
        %829 = vmatpush1.msra.mxu0 0.0
        %830 = vmatprep.subr.mxu0 0.0
        %831 = vmatpush1.msra.mxu0 0.0
        %832 = vmatprep.subr.mxu0 0.0
        %833 = vmatpush1.msra.mxu0 0.0
        %834 = vmatprep.subr.mxu0 0.0
        %835 = vmatpush1.msra.mxu0 0.0
        %836 = vmatprep.subr.mxu0 0.0
        %837 = vmatpush1.msra.mxu0 0.0
        %838 = vmatprep.subr.mxu0 0.0
        %839 = vmatpush1.msra.mxu0 0.0
        %840 = vmatprep.subr.mxu0 0.0
        %841 = vmatpush1.msra.mxu0 0.0
        %842 = vmatprep.subr.mxu0 %v796
        %843 = vmatpush1.msra.mxu0 %v795
        %844 = vmatprep.subr.mxu0 %v794
        %845 = vmatpush1.msra.mxu0 %v793
        %846 = vmatprep.subr.mxu0 %v792
        %847 = vmatpush1.msra.mxu0 %v791
        %848 = vmatprep.subr.mxu0 %v790
        %849 = vmatpush1.msra.mxu0 %v789
        %850 = vmatprep.subr.mxu0 0.0
        %851 = vmatpush2.msra.mxu0 0.0
        %852 = vmatprep.subr.mxu0 0.0
        %853 = vmatpush2.msra.mxu0 0.0
        %854 = vmatprep.subr.mxu0 0.0
        %855 = vmatpush2.msra.mxu0 0.0
        %856 = vmatprep.subr.mxu0 0.0
        %857 = vmatpush2.msra.mxu0 0.0
        %858 = vmatprep.subr.mxu0 0.0
        %859 = vmatpush2.msra.mxu0 0.0
        %860 = vmatprep.subr.mxu0 0.0
        %861 = vmatpush2.msra.mxu0 0.0
        %862 = vmatprep.subr.mxu0 0.0
        %863 = vmatpush2.msra.mxu0 0.0
        %864 = vmatprep.subr.mxu0 0.0
        %865 = vmatpush2.msra.mxu0 0.0
        %866 = vmatprep.subr.mxu0 0.0
        %867 = vmatpush2.msra.mxu0 0.0
        %868 = vmatprep.subr.mxu0 0.0
        %869 = vmatpush2.msra.mxu0 0.0
        %870 = vmatprep.subr.mxu0 0.0
        %871 = vmatpush2.msra.mxu0 0.0
        %872 = vmatprep.subr.mxu0 0.0
        %873 = vmatpush2.msra.mxu0 0.0
        %874 = vmatprep.subr.mxu0 0.0
        %875 = vmatpush2.msra.mxu0 0.0
        %876 = vmatprep.subr.mxu0 0.0
        %877 = vmatpush2.msra.mxu0 0.0
        %878 = vmatprep.subr.mxu0 0.0
        %879 = vmatpush2.msra.mxu0 0.0
        %880 = vmatprep.subr.mxu0 0.0
        %881 = vmatpush2.msra.mxu0 0.0
        %882 = vmatprep.mubr.f32.mxu0 0.0
        %883 = vmatmul.mubr.f32.gmra.mxu0 %v807
        %v884 = vpop.f32.mrf.mxu0
        %v885 = vadd.f32 0.0, %v884
        %v886 = vpop.f32.mrf.mxu0
        %v887 = vadd.f32 0.0, %v886
        %888 = vmatprep.mubr.f32.mxu0 0.0
        %889 = vmatmul.mubr.f32.gmra.mxu0 %v810
        %v890 = vpop.f32.mrf.mxu0
        %v891 = vadd.f32 0.0, %v890
        %v892 = vpop.f32.mrf.mxu0
        %v893 = vadd.f32 0.0, %v892
        %894 = vmatprep.mubr.f32.mxu0 0.0
        %895 = vmatmul.mubr.f32.gmra.mxu0 %v813
        %v896 = vpop.f32.mrf.mxu0
        %v897 = vadd.f32 0.0, %v896
        %v898 = vpop.f32.mrf.mxu0
        %v899 = vadd.f32 0.0, %v898
        %900 = vmatprep.mubr.f32.mxu0 0.0
        %901 = vmatmul.mubr.f32.gmra.mxu0 %v816
        %v902 = vpop.f32.mrf.mxu0
        %v903 = vadd.f32 0.0, %v902
        %v904 = vpop.f32.mrf.mxu0
        %v905 = vadd.f32 0.0, %v904
        %906 = vdwg.mxu0
        %919 = vrot.lane.b32.xlu0 %v731, 17
        %v920 = vpop.permute.xlu0 %919
        %921 = vrot.lane.b32.xlu0 %v732, 17
        %v922 = vpop.permute.xlu0 %921
        %923 = vrot.lane.b32.xlu0 %v733, 17
        %v924 = vpop.permute.xlu0 %923
        %925 = vrot.lane.b32.xlu0 %v734, 17
        %v926 = vpop.permute.xlu0 %925
        %927 = vrot.lane.b32.xlu0 %v735, 17
        %v928 = vpop.permute.xlu0 %927
        %929 = vrot.lane.b32.xlu0 %v736, 17
        %v930 = vpop.permute.xlu0 %929
        %931 = vrot.lane.b32.xlu0 %v737, 17
        %v932 = vpop.permute.xlu0 %931
        %933 = vrot.lane.b32.xlu0 %v738, 17
        %v934 = vpop.permute.xlu0 %933
        %935 = vrot.lane.b32.xlu0 %v739, 17
        %v936 = vpop.permute.xlu0 %935
        %937 = vrot.lane.b32.xlu0 %v740, 17
        %v938 = vpop.permute.xlu0 %937
        %939 = vrot.lane.b32.xlu0 %v741, 17
        %v940 = vpop.permute.xlu0 %939
        %941 = vrot.lane.b32.xlu0 %v742, 17
        %v942 = vpop.permute.xlu0 %941
        %vm943 = vcmask 138240
        %v944 = vsel %vm943, %v920, %v922
        %v945 = vsel %vm943, %v922, %v924
        %v946 = vsel %vm943, %v926, %v928
        %v947 = vsel %vm943, %v928, %v930
        %v948 = vsel %vm943, %v932, %v934
        %v949 = vsel %vm943, %v934, %v936
        %v950 = vsel %vm943, %v938, %v940
        %v951 = vsel %vm943, %v940, %v942
        %v961 = vsel %vm805, %v743, 0
        %v964 = vsel %vm805, %v744, 0
        %v967 = vsel %vm805, %v745, 0
        %v970 = vsel %vm805, %v746, 0
        %972 = vmatprep.subr.mxu0 0.0
        %973 = vmatpush1.msra.mxu0 0.0
        %974 = vmatprep.subr.mxu0 0.0
        %975 = vmatpush1.msra.mxu0 0.0
        %976 = vmatprep.subr.mxu0 0.0
        %977 = vmatpush1.msra.mxu0 0.0
        %978 = vmatprep.subr.mxu0 0.0
        %979 = vmatpush1.msra.mxu0 0.0
        %980 = vmatprep.subr.mxu0 0.0
        %981 = vmatpush1.msra.mxu0 0.0
        %982 = vmatprep.subr.mxu0 0.0
        %983 = vmatpush1.msra.mxu0 0.0
        %984 = vmatprep.subr.mxu0 0.0
        %985 = vmatpush1.msra.mxu0 0.0
        %986 = vmatprep.subr.mxu0 0.0
        %987 = vmatpush1.msra.mxu0 0.0
        %988 = vmatprep.subr.mxu0 0.0
        %989 = vmatpush1.msra.mxu0 0.0
        %990 = vmatprep.subr.mxu0 0.0
        %991 = vmatpush1.msra.mxu0 0.0
        %992 = vmatprep.subr.mxu0 0.0
        %993 = vmatpush1.msra.mxu0 0.0
        %994 = vmatprep.subr.mxu0 0.0
        %995 = vmatpush1.msra.mxu0 0.0
        %996 = vmatprep.subr.mxu0 %v951
        %997 = vmatpush1.msra.mxu0 %v950
        %998 = vmatprep.subr.mxu0 %v949
        %999 = vmatpush1.msra.mxu0 %v948
        %1000 = vmatprep.subr.mxu0 %v947
        %1001 = vmatpush1.msra.mxu0 %v946
        %1002 = vmatprep.subr.mxu0 %v945
        %1003 = vmatpush1.msra.mxu0 %v944
        %1004 = vmatprep.subr.mxu0 0.0
        %1005 = vmatpush2.msra.mxu0 0.0
        %1006 = vmatprep.subr.mxu0 0.0
        %1007 = vmatpush2.msra.mxu0 0.0
        %1008 = vmatprep.subr.mxu0 0.0
        %1009 = vmatpush2.msra.mxu0 0.0
        %1010 = vmatprep.subr.mxu0 0.0
        %1011 = vmatpush2.msra.mxu0 0.0
        %1012 = vmatprep.subr.mxu0 0.0
        %1013 = vmatpush2.msra.mxu0 0.0
        %1014 = vmatprep.subr.mxu0 0.0
        %1015 = vmatpush2.msra.mxu0 0.0
        %1016 = vmatprep.subr.mxu0 0.0
        %1017 = vmatpush2.msra.mxu0 0.0
        %1018 = vmatprep.subr.mxu0 0.0
        %1019 = vmatpush2.msra.mxu0 0.0
        %1020 = vmatprep.subr.mxu0 0.0
        %1021 = vmatpush2.msra.mxu0 0.0
        %1022 = vmatprep.subr.mxu0 0.0
        %1023 = vmatpush2.msra.mxu0 0.0
        %1024 = vmatprep.subr.mxu0 0.0
        %1025 = vmatpush2.msra.mxu0 0.0
        %1026 = vmatprep.subr.mxu0 0.0
        %1027 = vmatpush2.msra.mxu0 0.0
        %1028 = vmatprep.subr.mxu0 0.0
        %1029 = vmatpush2.msra.mxu0 0.0
        %1030 = vmatprep.subr.mxu0 0.0
        %1031 = vmatpush2.msra.mxu0 0.0
        %1032 = vmatprep.subr.mxu0 0.0
        %1033 = vmatpush2.msra.mxu0 0.0
        %1034 = vmatprep.subr.mxu0 0.0
        %1035 = vmatpush2.msra.mxu0 0.0
        %1036 = vmatprep.mubr.f32.mxu0 0.0
        %1037 = vmatmul.mubr.f32.gmra.mxu0 %v961
        %v1038 = vpop.f32.mrf.mxu0
        %v1039 = vadd.f32 %v885, %v1038
        %v1040 = vpop.f32.mrf.mxu0
        %v1041 = vadd.f32 %v887, %v1040
        %1042 = vmatprep.mubr.f32.mxu0 0.0
        %1043 = vmatmul.mubr.f32.gmra.mxu0 %v964
        %v1044 = vpop.f32.mrf.mxu0
        %v1045 = vadd.f32 %v891, %v1044
        %v1046 = vpop.f32.mrf.mxu0
        %v1047 = vadd.f32 %v893, %v1046
        %1048 = vmatprep.mubr.f32.mxu0 0.0
        %1049 = vmatmul.mubr.f32.gmra.mxu0 %v967
        %v1050 = vpop.f32.mrf.mxu0
        %v1051 = vadd.f32 %v897, %v1050
        %v1052 = vpop.f32.mrf.mxu0
        %v1053 = vadd.f32 %v899, %v1052
        %1054 = vmatprep.mubr.f32.mxu0 0.0
        %1055 = vmatmul.mubr.f32.gmra.mxu0 %v970
        %v1056 = vpop.f32.mrf.mxu0
        %v1057 = vadd.f32 %v903, %v1056
        %v1058 = vpop.f32.mrf.mxu0
        %v1059 = vadd.f32 %v905, %v1058
        %1060 = vdwg.mxu0
        %1063 = vrot.lane.b32.xlu0 %v682, 113
        %v1064 = vpop.permute.xlu0 %1063
        %1065 = vrot.lane.b32.xlu0 %v683, 113
        %v1066 = vpop.permute.xlu0 %1065
        %vm1067 = vcmask 924672
        %v1068 = vsel %vm1067, %v1064, %v1066
        %v1072 = vmul.f32 %v708, %v1064
        %v1073 = vmul.f32 %v709, %v1068
        %v1074 = vmul.f32 %v710, %v1066
        %v1075 = vmul.f32 %v711, %v1064
        %v1076 = vmul.f32 %v712, %v1068
        %v1077 = vmul.f32 %v713, %v1066
        %v1078 = vmul.f32 %v714, %v1064
        %v1079 = vmul.f32 %v715, %v1068
        %v1080 = vmul.f32 %v716, %v1066
        %v1081 = vmul.f32 %v717, %v1064
        %v1082 = vmul.f32 %v718, %v1068
        %v1083 = vmul.f32 %v719, %v1066
        %s1084 = scalar_lea.vmem [#allocation4], 64
        %v1085 = vld [vmem:[%s1084] sm:$0xff]
        %v1086 = vld [vmem:[%s1084 + $0x8] sm:$0xff]
        %v1087 = vld [vmem:[%s1084 + $0x10] sm:$0xff]
        %v1088 = vld [vmem:[%s1084 + $0x18] sm:$0xff]
        %1101 = vrot.lane.b32.xlu0 %v1072, 15
        %v1102 = vpop.permute.xlu0 %1101
        %1103 = vrot.lane.b32.xlu0 %v1073, 15
        %v1104 = vpop.permute.xlu0 %1103
        %1105 = vrot.lane.b32.xlu0 %v1074, 15
        %v1106 = vpop.permute.xlu0 %1105
        %1107 = vrot.lane.b32.xlu0 %v1075, 15
        %v1108 = vpop.permute.xlu0 %1107
        %1109 = vrot.lane.b32.xlu0 %v1076, 15
        %v1110 = vpop.permute.xlu0 %1109
        %1111 = vrot.lane.b32.xlu0 %v1077, 15
        %v1112 = vpop.permute.xlu0 %1111
        %1113 = vrot.lane.b32.xlu0 %v1078, 15
        %v1114 = vpop.permute.xlu0 %1113
        %1115 = vrot.lane.b32.xlu0 %v1079, 15
        %v1116 = vpop.permute.xlu0 %1115
        %1117 = vrot.lane.b32.xlu0 %v1080, 15
        %v1118 = vpop.permute.xlu0 %1117
        %1119 = vrot.lane.b32.xlu0 %v1081, 15
        %v1120 = vpop.permute.xlu0 %1119
        %1121 = vrot.lane.b32.xlu0 %v1082, 15
        %v1122 = vpop.permute.xlu0 %1121
        %1123 = vrot.lane.b32.xlu0 %v1083, 15
        %v1124 = vpop.permute.xlu0 %1123
        %vm1125 = vcmask 121856
        %v1126 = vsel %vm1125, %v1102, %v1104
        %v1127 = vsel %vm1125, %v1104, %v1106
        %v1128 = vsel %vm1125, %v1108, %v1110
        %v1129 = vsel %vm1125, %v1110, %v1112
        %v1130 = vsel %vm1125, %v1114, %v1116
        %v1131 = vsel %vm1125, %v1116, %v1118
        %v1132 = vsel %vm1125, %v1120, %v1122
        %v1133 = vsel %vm1125, %v1122, %v1124
        %v1143 = vsel %vm805, %v1085, 0
        %v1146 = vsel %vm805, %v1086, 0
        %v1149 = vsel %vm805, %v1087, 0
        %v1152 = vsel %vm805, %v1088, 0
        %1154 = vmatprep.subr.mxu0 0.0
        %1155 = vmatpush1.msra.mxu0 0.0
        %1156 = vmatprep.subr.mxu0 0.0
        %1157 = vmatpush1.msra.mxu0 0.0
        %1158 = vmatprep.subr.mxu0 0.0
        %1159 = vmatpush1.msra.mxu0 0.0
        %1160 = vmatprep.subr.mxu0 0.0
        %1161 = vmatpush1.msra.mxu0 0.0
        %1162 = vmatprep.subr.mxu0 0.0
        %1163 = vmatpush1.msra.mxu0 0.0
        %1164 = vmatprep.subr.mxu0 0.0
        %1165 = vmatpush1.msra.mxu0 0.0
        %1166 = vmatprep.subr.mxu0 0.0
        %1167 = vmatpush1.msra.mxu0 0.0
        %1168 = vmatprep.subr.mxu0 0.0
        %1169 = vmatpush1.msra.mxu0 0.0
        %1170 = vmatprep.subr.mxu0 0.0
        %1171 = vmatpush1.msra.mxu0 0.0
        %1172 = vmatprep.subr.mxu0 0.0
        %1173 = vmatpush1.msra.mxu0 0.0
        %1174 = vmatprep.subr.mxu0 0.0
        %1175 = vmatpush1.msra.mxu0 0.0
        %1176 = vmatprep.subr.mxu0 0.0
        %1177 = vmatpush1.msra.mxu0 0.0
        %1178 = vmatprep.subr.mxu0 %v1133
        %1179 = vmatpush1.msra.mxu0 %v1132
        %1180 = vmatprep.subr.mxu0 %v1131
        %1181 = vmatpush1.msra.mxu0 %v1130
        %1182 = vmatprep.subr.mxu0 %v1129
        %1183 = vmatpush1.msra.mxu0 %v1128
        %1184 = vmatprep.subr.mxu0 %v1127
        %1185 = vmatpush1.msra.mxu0 %v1126
        %1186 = vmatprep.subr.mxu0 0.0
        %1187 = vmatpush2.msra.mxu0 0.0
        %1188 = vmatprep.subr.mxu0 0.0
        %1189 = vmatpush2.msra.mxu0 0.0
        %1190 = vmatprep.subr.mxu0 0.0
        %1191 = vmatpush2.msra.mxu0 0.0
        %1192 = vmatprep.subr.mxu0 0.0
        %1193 = vmatpush2.msra.mxu0 0.0
        %1194 = vmatprep.subr.mxu0 0.0
        %1195 = vmatpush2.msra.mxu0 0.0
        %1196 = vmatprep.subr.mxu0 0.0
        %1197 = vmatpush2.msra.mxu0 0.0
        %1198 = vmatprep.subr.mxu0 0.0
        %1199 = vmatpush2.msra.mxu0 0.0
        %1200 = vmatprep.subr.mxu0 0.0
        %1201 = vmatpush2.msra.mxu0 0.0
        %1202 = vmatprep.subr.mxu0 0.0
        %1203 = vmatpush2.msra.mxu0 0.0
        %1204 = vmatprep.subr.mxu0 0.0
        %1205 = vmatpush2.msra.mxu0 0.0
        %1206 = vmatprep.subr.mxu0 0.0
        %1207 = vmatpush2.msra.mxu0 0.0
        %1208 = vmatprep.subr.mxu0 0.0
        %1209 = vmatpush2.msra.mxu0 0.0
        %1210 = vmatprep.subr.mxu0 0.0
        %1211 = vmatpush2.msra.mxu0 0.0
        %1212 = vmatprep.subr.mxu0 0.0
        %1213 = vmatpush2.msra.mxu0 0.0
        %1214 = vmatprep.subr.mxu0 0.0
        %1215 = vmatpush2.msra.mxu0 0.0
        %1216 = vmatprep.subr.mxu0 0.0
        %1217 = vmatpush2.msra.mxu0 0.0
        %1218 = vmatprep.mubr.f32.mxu0 0.0
        %1219 = vmatmul.mubr.f32.gmra.mxu0 %v1143
        %v1220 = vpop.f32.mrf.mxu0
        %v1221 = vadd.f32 0.0, %v1220
        %v1222 = vpop.f32.mrf.mxu0
        %v1223 = vadd.f32 0.0, %v1222
        %1224 = vmatprep.mubr.f32.mxu0 0.0
        %1225 = vmatmul.mubr.f32.gmra.mxu0 %v1146
        %v1226 = vpop.f32.mrf.mxu0
        %v1227 = vadd.f32 0.0, %v1226
        %v1228 = vpop.f32.mrf.mxu0
        %v1229 = vadd.f32 0.0, %v1228
        %1230 = vmatprep.mubr.f32.mxu0 0.0
        %1231 = vmatmul.mubr.f32.gmra.mxu0 %v1149
        %v1232 = vpop.f32.mrf.mxu0
        %v1233 = vadd.f32 0.0, %v1232
        %v1234 = vpop.f32.mrf.mxu0
        %v1235 = vadd.f32 0.0, %v1234
        %1236 = vmatprep.mubr.f32.mxu0 0.0
        %1237 = vmatmul.mubr.f32.gmra.mxu0 %v1152
        %v1238 = vpop.f32.mrf.mxu0
        %v1239 = vadd.f32 0.0, %v1238
        %v1240 = vpop.f32.mrf.mxu0
        %v1241 = vadd.f32 0.0, %v1240
        %1242 = vdwg.mxu0
        %v1243 = vadd.f32 %v1039, %v1221
        %v1244 = vadd.f32 %v1041, %v1223
        %v1245 = vadd.f32 %v1045, %v1227
        %v1246 = vadd.f32 %v1047, %v1229
        %v1247 = vadd.f32 %v1051, %v1233
        %v1248 = vadd.f32 %v1053, %v1235
        %v1249 = vadd.f32 %v1057, %v1239
        %v1250 = vadd.f32 %v1059, %v1241
        %1251 = vrot.lane.b32.xlu0 %v670, 127
        %v1252 = vpop.permute.xlu0 %1251
        %1253 = vrot.lane.b32.xlu0 %v671, 127
        %v1254 = vpop.permute.xlu0 %1253
        %vm1255 = vcmask 1039360
        %v1256 = vsel %vm1255, %v1252, %v1254
        %v1260 = vmul.f32 %v708, %v1252
        %v1261 = vmul.f32 %v709, %v1256
        %v1262 = vmul.f32 %v710, %v1254
        %v1263 = vmul.f32 %v711, %v1252
        %v1264 = vmul.f32 %v712, %v1256
        %v1265 = vmul.f32 %v713, %v1254
        %v1266 = vmul.f32 %v714, %v1252
        %v1267 = vmul.f32 %v715, %v1256
        %v1268 = vmul.f32 %v716, %v1254
        %v1269 = vmul.f32 %v717, %v1252
        %v1270 = vmul.f32 %v718, %v1256
        %v1271 = vmul.f32 %v719, %v1254
        %s1272 = scalar_lea.vmem [#allocation4], 96
        %v1273 = vld [vmem:[%s1272] sm:$0xff]
        %v1274 = vld [vmem:[%s1272 + $0x8] sm:$0xff]
        %v1275 = vld [vmem:[%s1272 + $0x10] sm:$0xff]
        %v1276 = vld [vmem:[%s1272 + $0x18] sm:$0xff]
        %1289 = vrot.lane.b32.xlu0 %v1260, 1
        %v1290 = vpop.permute.xlu0 %1289
        %1291 = vrot.lane.b32.xlu0 %v1261, 1
        %v1292 = vpop.permute.xlu0 %1291
        %1293 = vrot.lane.b32.xlu0 %v1262, 1
        %v1294 = vpop.permute.xlu0 %1293
        %1295 = vrot.lane.b32.xlu0 %v1263, 1
        %v1296 = vpop.permute.xlu0 %1295
        %1297 = vrot.lane.b32.xlu0 %v1264, 1
        %v1298 = vpop.permute.xlu0 %1297
        %1299 = vrot.lane.b32.xlu0 %v1265, 1
        %v1300 = vpop.permute.xlu0 %1299
        %1301 = vrot.lane.b32.xlu0 %v1266, 1
        %v1302 = vpop.permute.xlu0 %1301
        %1303 = vrot.lane.b32.xlu0 %v1267, 1
        %v1304 = vpop.permute.xlu0 %1303
        %1305 = vrot.lane.b32.xlu0 %v1268, 1
        %v1306 = vpop.permute.xlu0 %1305
        %1307 = vrot.lane.b32.xlu0 %v1269, 1
        %v1308 = vpop.permute.xlu0 %1307
        %1309 = vrot.lane.b32.xlu0 %v1270, 1
        %v1310 = vpop.permute.xlu0 %1309
        %1311 = vrot.lane.b32.xlu0 %v1271, 1
        %v1312 = vpop.permute.xlu0 %1311
        %vm1313 = vcmask 7168
        %v1314 = vsel %vm1313, %v1290, %v1292
        %v1315 = vsel %vm1313, %v1292, %v1294
        %v1316 = vsel %vm1313, %v1296, %v1298
        %v1317 = vsel %vm1313, %v1298, %v1300
        %v1318 = vsel %vm1313, %v1302, %v1304
        %v1319 = vsel %vm1313, %v1304, %v1306
        %v1320 = vsel %vm1313, %v1308, %v1310
        %v1321 = vsel %vm1313, %v1310, %v1312
        %v1331 = vsel %vm805, %v1273, 0
        %v1334 = vsel %vm805, %v1274, 0
        %v1337 = vsel %vm805, %v1275, 0
        %v1340 = vsel %vm805, %v1276, 0
        %1342 = vmatprep.subr.mxu0 0.0
        %1343 = vmatpush1.msra.mxu0 0.0
        %1344 = vmatprep.subr.mxu0 0.0
        %1345 = vmatpush1.msra.mxu0 0.0
        %1346 = vmatprep.subr.mxu0 0.0
        %1347 = vmatpush1.msra.mxu0 0.0
        %1348 = vmatprep.subr.mxu0 0.0
        %1349 = vmatpush1.msra.mxu0 0.0
        %1350 = vmatprep.subr.mxu0 0.0
        %1351 = vmatpush1.msra.mxu0 0.0
        %1352 = vmatprep.subr.mxu0 0.0
        %1353 = vmatpush1.msra.mxu0 0.0
        %1354 = vmatprep.subr.mxu0 0.0
        %1355 = vmatpush1.msra.mxu0 0.0
        %1356 = vmatprep.subr.mxu0 0.0
        %1357 = vmatpush1.msra.mxu0 0.0
        %1358 = vmatprep.subr.mxu0 0.0
        %1359 = vmatpush1.msra.mxu0 0.0
        %1360 = vmatprep.subr.mxu0 0.0
        %1361 = vmatpush1.msra.mxu0 0.0
        %1362 = vmatprep.subr.mxu0 0.0
        %1363 = vmatpush1.msra.mxu0 0.0
        %1364 = vmatprep.subr.mxu0 0.0
        %1365 = vmatpush1.msra.mxu0 0.0
        %1366 = vmatprep.subr.mxu0 %v1321
        %1367 = vmatpush1.msra.mxu0 %v1320
        %1368 = vmatprep.subr.mxu0 %v1319
        %1369 = vmatpush1.msra.mxu0 %v1318
        %1370 = vmatprep.subr.mxu0 %v1317
        %1371 = vmatpush1.msra.mxu0 %v1316
        %1372 = vmatprep.subr.mxu0 %v1315
        %1373 = vmatpush1.msra.mxu0 %v1314
        %1374 = vmatprep.subr.mxu0 0.0
        %1375 = vmatpush2.msra.mxu0 0.0
        %1376 = vmatprep.subr.mxu0 0.0
        %1377 = vmatpush2.msra.mxu0 0.0
        %1378 = vmatprep.subr.mxu0 0.0
        %1379 = vmatpush2.msra.mxu0 0.0
        %1380 = vmatprep.subr.mxu0 0.0
        %1381 = vmatpush2.msra.mxu0 0.0
        %1382 = vmatprep.subr.mxu0 0.0
        %1383 = vmatpush2.msra.mxu0 0.0
        %1384 = vmatprep.subr.mxu0 0.0
        %1385 = vmatpush2.msra.mxu0 0.0
        %1386 = vmatprep.subr.mxu0 0.0
        %1387 = vmatpush2.msra.mxu0 0.0
        %1388 = vmatprep.subr.mxu0 0.0
        %1389 = vmatpush2.msra.mxu0 0.0
        %1390 = vmatprep.subr.mxu0 0.0
        %1391 = vmatpush2.msra.mxu0 0.0
        %1392 = vmatprep.subr.mxu0 0.0
        %1393 = vmatpush2.msra.mxu0 0.0
        %1394 = vmatprep.subr.mxu0 0.0
        %1395 = vmatpush2.msra.mxu0 0.0
        %1396 = vmatprep.subr.mxu0 0.0
        %1397 = vmatpush2.msra.mxu0 0.0
        %1398 = vmatprep.subr.mxu0 0.0
        %1399 = vmatpush2.msra.mxu0 0.0
        %1400 = vmatprep.subr.mxu0 0.0
        %1401 = vmatpush2.msra.mxu0 0.0
        %1402 = vmatprep.subr.mxu0 0.0
        %1403 = vmatpush2.msra.mxu0 0.0
        %1404 = vmatprep.subr.mxu0 0.0
        %1405 = vmatpush2.msra.mxu0 0.0
        %1406 = vmatprep.mubr.f32.mxu0 0.0
        %1407 = vmatmul.mubr.f32.gmra.mxu0 %v1331
        %v1408 = vpop.f32.mrf.mxu0
        %v1409 = vadd.f32 0.0, %v1408
        %v1410 = vpop.f32.mrf.mxu0
        %v1411 = vadd.f32 0.0, %v1410
        %1412 = vmatprep.mubr.f32.mxu0 0.0
        %1413 = vmatmul.mubr.f32.gmra.mxu0 %v1334
        %v1414 = vpop.f32.mrf.mxu0
        %v1415 = vadd.f32 0.0, %v1414
        %v1416 = vpop.f32.mrf.mxu0
        %v1417 = vadd.f32 0.0, %v1416
        %1418 = vmatprep.mubr.f32.mxu0 0.0
        %1419 = vmatmul.mubr.f32.gmra.mxu0 %v1337
        %v1420 = vpop.f32.mrf.mxu0
        %v1421 = vadd.f32 0.0, %v1420
        %v1422 = vpop.f32.mrf.mxu0
        %v1423 = vadd.f32 0.0, %v1422
        %1424 = vmatprep.mubr.f32.mxu0 0.0
        %1425 = vmatmul.mubr.f32.gmra.mxu0 %v1340
        %v1426 = vpop.f32.mrf.mxu0
        %v1427 = vadd.f32 0.0, %v1426
        %v1428 = vpop.f32.mrf.mxu0
        %v1429 = vadd.f32 0.0, %v1428
        %1430 = vdwg.mxu0
        %v1431 = vadd.f32 %v1243, %v1409
        %v1432 = vadd.f32 %v1244, %v1411
        %v1433 = vadd.f32 %v1245, %v1415
        %v1434 = vadd.f32 %v1246, %v1417
        %v1435 = vadd.f32 %v1247, %v1421
        %v1436 = vadd.f32 %v1248, %v1423
        %v1437 = vadd.f32 %v1249, %v1427
        %v1438 = vadd.f32 %v1250, %v1429
        %s1439 = scalar_lea.vmem [#allocation4], 128
        %v1440 = vld [vmem:[%s1439] sm:$0xff]
        %v1441 = vld [vmem:[%s1439 + $0x8] sm:$0xff]
        %v1442 = vld [vmem:[%s1439 + $0x10] sm:$0xff]
        %v1443 = vld [vmem:[%s1439 + $0x18] sm:$0xff]
        %v1445 = vsel %vm805, %v1440, 0
        %v1448 = vsel %vm805, %v1441, 0
        %v1451 = vsel %vm805, %v1442, 0
        %v1454 = vsel %vm805, %v1443, 0
        %1456 = vmatprep.subr.mxu0 0.0
        %1457 = vmatpush1.msra.mxu0 0.0
        %1458 = vmatprep.subr.mxu0 0.0
        %1459 = vmatpush1.msra.mxu0 0.0
        %1460 = vmatprep.subr.mxu0 0.0
        %1461 = vmatpush1.msra.mxu0 0.0
        %1462 = vmatprep.subr.mxu0 0.0
        %1463 = vmatpush1.msra.mxu0 0.0
        %1464 = vmatprep.subr.mxu0 0.0
        %1465 = vmatpush1.msra.mxu0 0.0
        %1466 = vmatprep.subr.mxu0 0.0
        %1467 = vmatpush1.msra.mxu0 0.0
        %1468 = vmatprep.subr.mxu0 0.0
        %1469 = vmatpush1.msra.mxu0 0.0
        %1470 = vmatprep.subr.mxu0 0.0
        %1471 = vmatpush1.msra.mxu0 0.0
        %1472 = vmatprep.subr.mxu0 0.0
        %1473 = vmatpush1.msra.mxu0 0.0
        %1474 = vmatprep.subr.mxu0 0.0
        %1475 = vmatpush1.msra.mxu0 0.0
        %1476 = vmatprep.subr.mxu0 0.0
        %1477 = vmatpush1.msra.mxu0 0.0
        %1478 = vmatprep.subr.mxu0 0.0
        %1479 = vmatpush1.msra.mxu0 0.0
        %1480 = vmatprep.subr.mxu0 %v719
        %1481 = vmatpush1.msra.mxu0 %v718
        %1482 = vmatprep.subr.mxu0 %v716
        %1483 = vmatpush1.msra.mxu0 %v715
        %1484 = vmatprep.subr.mxu0 %v713
        %1485 = vmatpush1.msra.mxu0 %v712
        %1486 = vmatprep.subr.mxu0 %v710
        %1487 = vmatpush1.msra.mxu0 %v709
        %1488 = vmatprep.subr.mxu0 0.0
        %1489 = vmatpush2.msra.mxu0 0.0
        %1490 = vmatprep.subr.mxu0 0.0
        %1491 = vmatpush2.msra.mxu0 0.0
        %1492 = vmatprep.subr.mxu0 0.0
        %1493 = vmatpush2.msra.mxu0 0.0
        %1494 = vmatprep.subr.mxu0 0.0
        %1495 = vmatpush2.msra.mxu0 0.0
        %1496 = vmatprep.subr.mxu0 0.0
        %1497 = vmatpush2.msra.mxu0 0.0
        %1498 = vmatprep.subr.mxu0 0.0
        %1499 = vmatpush2.msra.mxu0 0.0
        %1500 = vmatprep.subr.mxu0 0.0
        %1501 = vmatpush2.msra.mxu0 0.0
        %1502 = vmatprep.subr.mxu0 0.0
        %1503 = vmatpush2.msra.mxu0 0.0
        %1504 = vmatprep.subr.mxu0 0.0
        %1505 = vmatpush2.msra.mxu0 0.0
        %1506 = vmatprep.subr.mxu0 0.0
        %1507 = vmatpush2.msra.mxu0 0.0
        %1508 = vmatprep.subr.mxu0 0.0
        %1509 = vmatpush2.msra.mxu0 0.0
        %1510 = vmatprep.subr.mxu0 0.0
        %1511 = vmatpush2.msra.mxu0 0.0
        %1512 = vmatprep.subr.mxu0 0.0
        %1513 = vmatpush2.msra.mxu0 0.0
        %1514 = vmatprep.subr.mxu0 0.0
        %1515 = vmatpush2.msra.mxu0 0.0
        %1516 = vmatprep.subr.mxu0 0.0
        %1517 = vmatpush2.msra.mxu0 0.0
        %1518 = vmatprep.subr.mxu0 0.0
        %1519 = vmatpush2.msra.mxu0 0.0
        %1520 = vmatprep.mubr.f32.mxu0 0.0
        %1521 = vmatmul.mubr.f32.gmra.mxu0 %v1445
        %v1522 = vpop.f32.mrf.mxu0
        %v1523 = vadd.f32 0.0, %v1522
        %v1524 = vpop.f32.mrf.mxu0
        %v1525 = vadd.f32 0.0, %v1524
        %1526 = vmatprep.mubr.f32.mxu0 0.0
        %1527 = vmatmul.mubr.f32.gmra.mxu0 %v1448
        %v1528 = vpop.f32.mrf.mxu0
        %v1529 = vadd.f32 0.0, %v1528
        %v1530 = vpop.f32.mrf.mxu0
        %v1531 = vadd.f32 0.0, %v1530
        %1532 = vmatprep.mubr.f32.mxu0 0.0
        %1533 = vmatmul.mubr.f32.gmra.mxu0 %v1451
        %v1534 = vpop.f32.mrf.mxu0
        %v1535 = vadd.f32 0.0, %v1534
        %v1536 = vpop.f32.mrf.mxu0
        %v1537 = vadd.f32 0.0, %v1536
        %1538 = vmatprep.mubr.f32.mxu0 0.0
        %1539 = vmatmul.mubr.f32.gmra.mxu0 %v1454
        %v1540 = vpop.f32.mrf.mxu0
        %v1541 = vadd.f32 0.0, %v1540
        %v1542 = vpop.f32.mrf.mxu0
        %v1543 = vadd.f32 0.0, %v1542
        %1544 = vdwg.mxu0
        %v1545 = vadd.f32 %v1431, %v1523
        %v1546 = vadd.f32 %v1432, %v1525
        %v1547 = vadd.f32 %v1433, %v1529
        %v1548 = vadd.f32 %v1434, %v1531
        %v1549 = vadd.f32 %v1435, %v1535
        %v1550 = vadd.f32 %v1436, %v1537
        %v1551 = vadd.f32 %v1437, %v1541
        %v1552 = vadd.f32 %v1438, %v1543
        %v1553 = vld [vmem:[#allocation2 + $0x8] sm:$0xff]
        %v1554 = vld [vmem:[#allocation2 + $0x10] sm:$0xff]
        %v1555 = vld [vmem:[#allocation2 + $0x18] sm:$0xff]
        %v1556 = vld [vmem:[#allocation2 + $0x28] sm:$0xff]
        %v1557 = vld [vmem:[#allocation2 + $0x30] sm:$0xff]
        %v1558 = vld [vmem:[#allocation2 + $0x38] sm:$0xff]
        %v1559 = vld [vmem:[#allocation2 + $0x48] sm:$0xff]
        %v1560 = vld [vmem:[#allocation2 + $0x50] sm:$0xff]
        %v1561 = vld [vmem:[#allocation2 + $0x58] sm:$0xff]
        %v1562 = vld [vmem:[#allocation2 + $0x68] sm:$0xff]
        %v1563 = vld [vmem:[#allocation2 + $0x70] sm:$0xff]
        %v1564 = vld [vmem:[#allocation2 + $0x78] sm:$0xff]
        %1565 = vrot.lane.b32.xlu0 %v682, 1
        %v1566 = vpop.permute.xlu0 %1565
        %1567 = vrot.lane.b32.xlu0 %v683, 1
        %v1568 = vpop.permute.xlu0 %1567
        %v1569 = vsel %vm1313, %v1566, %v1568
        %v1573 = vmul.f32 %v1553, %v1566
        %v1574 = vmul.f32 %v1554, %v1569
        %v1575 = vmul.f32 %v1555, %v1568
        %v1576 = vmul.f32 %v1556, %v1566
        %v1577 = vmul.f32 %v1557, %v1569
        %v1578 = vmul.f32 %v1558, %v1568
        %v1579 = vmul.f32 %v1559, %v1566
        %v1580 = vmul.f32 %v1560, %v1569
        %v1581 = vmul.f32 %v1561, %v1568
        %v1582 = vmul.f32 %v1562, %v1566
        %v1583 = vmul.f32 %v1563, %v1569
        %v1584 = vmul.f32 %v1564, %v1568
        %s1585 = scalar_lea.vmem [#allocation4], 160
        %v1586 = vld [vmem:[%s1585] sm:$0xff]
        %v1587 = vld [vmem:[%s1585 + $0x8] sm:$0xff]
        %v1588 = vld [vmem:[%s1585 + $0x10] sm:$0xff]
        %v1589 = vld [vmem:[%s1585 + $0x18] sm:$0xff]
        %1602 = vrot.lane.b32.xlu0 %v1573, 127
        %v1603 = vpop.permute.xlu0 %1602
        %1604 = vrot.lane.b32.xlu0 %v1574, 127
        %v1605 = vpop.permute.xlu0 %1604
        %1606 = vrot.lane.b32.xlu0 %v1575, 127
        %v1607 = vpop.permute.xlu0 %1606
        %1608 = vrot.lane.b32.xlu0 %v1576, 127
        %v1609 = vpop.permute.xlu0 %1608
        %1610 = vrot.lane.b32.xlu0 %v1577, 127
        %v1611 = vpop.permute.xlu0 %1610
        %1612 = vrot.lane.b32.xlu0 %v1578, 127
        %v1613 = vpop.permute.xlu0 %1612
        %1614 = vrot.lane.b32.xlu0 %v1579, 127
        %v1615 = vpop.permute.xlu0 %1614
        %1616 = vrot.lane.b32.xlu0 %v1580, 127
        %v1617 = vpop.permute.xlu0 %1616
        %1618 = vrot.lane.b32.xlu0 %v1581, 127
        %v1619 = vpop.permute.xlu0 %1618
        %1620 = vrot.lane.b32.xlu0 %v1582, 127
        %v1621 = vpop.permute.xlu0 %1620
        %1622 = vrot.lane.b32.xlu0 %v1583, 127
        %v1623 = vpop.permute.xlu0 %1622
        %1624 = vrot.lane.b32.xlu0 %v1584, 127
        %v1625 = vpop.permute.xlu0 %1624
        %v1626 = vsel %vm1255, %v1603, %v1605
        %v1627 = vsel %vm1255, %v1605, %v1607
        %v1628 = vsel %vm1255, %v1609, %v1611
        %v1629 = vsel %vm1255, %v1611, %v1613
        %v1630 = vsel %vm1255, %v1615, %v1617
        %v1631 = vsel %vm1255, %v1617, %v1619
        %v1632 = vsel %vm1255, %v1621, %v1623
        %v1633 = vsel %vm1255, %v1623, %v1625
        %v1643 = vsel %vm805, %v1586, 0
        %v1646 = vsel %vm805, %v1587, 0
        %v1649 = vsel %vm805, %v1588, 0
        %v1652 = vsel %vm805, %v1589, 0
        %1654 = vmatprep.subr.mxu0 0.0
        %1655 = vmatpush1.msra.mxu0 0.0
        %1656 = vmatprep.subr.mxu0 0.0
        %1657 = vmatpush1.msra.mxu0 0.0
        %1658 = vmatprep.subr.mxu0 0.0
        %1659 = vmatpush1.msra.mxu0 0.0
        %1660 = vmatprep.subr.mxu0 0.0
        %1661 = vmatpush1.msra.mxu0 0.0
        %1662 = vmatprep.subr.mxu0 0.0
        %1663 = vmatpush1.msra.mxu0 0.0
        %1664 = vmatprep.subr.mxu0 0.0
        %1665 = vmatpush1.msra.mxu0 0.0
        %1666 = vmatprep.subr.mxu0 0.0
        %1667 = vmatpush1.msra.mxu0 0.0
        %1668 = vmatprep.subr.mxu0 0.0
        %1669 = vmatpush1.msra.mxu0 0.0
        %1670 = vmatprep.subr.mxu0 0.0
        %1671 = vmatpush1.msra.mxu0 0.0
        %1672 = vmatprep.subr.mxu0 0.0
        %1673 = vmatpush1.msra.mxu0 0.0
        %1674 = vmatprep.subr.mxu0 0.0
        %1675 = vmatpush1.msra.mxu0 0.0
        %1676 = vmatprep.subr.mxu0 0.0
        %1677 = vmatpush1.msra.mxu0 0.0
        %1678 = vmatprep.subr.mxu0 %v1633
        %1679 = vmatpush1.msra.mxu0 %v1632
        %1680 = vmatprep.subr.mxu0 %v1631
        %1681 = vmatpush1.msra.mxu0 %v1630
        %1682 = vmatprep.subr.mxu0 %v1629
        %1683 = vmatpush1.msra.mxu0 %v1628
        %1684 = vmatprep.subr.mxu0 %v1627
        %1685 = vmatpush1.msra.mxu0 %v1626
        %1686 = vmatprep.subr.mxu0 0.0
        %1687 = vmatpush2.msra.mxu0 0.0
        %1688 = vmatprep.subr.mxu0 0.0
        %1689 = vmatpush2.msra.mxu0 0.0
        %1690 = vmatprep.subr.mxu0 0.0
        %1691 = vmatpush2.msra.mxu0 0.0
        %1692 = vmatprep.subr.mxu0 0.0
        %1693 = vmatpush2.msra.mxu0 0.0
        %1694 = vmatprep.subr.mxu0 0.0
        %1695 = vmatpush2.msra.mxu0 0.0
        %1696 = vmatprep.subr.mxu0 0.0
        %1697 = vmatpush2.msra.mxu0 0.0
        %1698 = vmatprep.subr.mxu0 0.0
        %1699 = vmatpush2.msra.mxu0 0.0
        %1700 = vmatprep.subr.mxu0 0.0
        %1701 = vmatpush2.msra.mxu0 0.0
        %1702 = vmatprep.subr.mxu0 0.0
        %1703 = vmatpush2.msra.mxu0 0.0
        %1704 = vmatprep.subr.mxu0 0.0
        %1705 = vmatpush2.msra.mxu0 0.0
        %1706 = vmatprep.subr.mxu0 0.0
        %1707 = vmatpush2.msra.mxu0 0.0
        %1708 = vmatprep.subr.mxu0 0.0
        %1709 = vmatpush2.msra.mxu0 0.0
        %1710 = vmatprep.subr.mxu0 0.0
        %1711 = vmatpush2.msra.mxu0 0.0
        %1712 = vmatprep.subr.mxu0 0.0
        %1713 = vmatpush2.msra.mxu0 0.0
        %1714 = vmatprep.subr.mxu0 0.0
        %1715 = vmatpush2.msra.mxu0 0.0
        %1716 = vmatprep.subr.mxu0 0.0
        %1717 = vmatpush2.msra.mxu0 0.0
        %1718 = vmatprep.mubr.f32.mxu0 0.0
        %1719 = vmatmul.mubr.f32.gmra.mxu0 %v1643
        %v1720 = vpop.f32.mrf.mxu0
        %v1721 = vadd.f32 0.0, %v1720
        %v1722 = vpop.f32.mrf.mxu0
        %v1723 = vadd.f32 0.0, %v1722
        %1724 = vmatprep.mubr.f32.mxu0 0.0
        %1725 = vmatmul.mubr.f32.gmra.mxu0 %v1646
        %v1726 = vpop.f32.mrf.mxu0
        %v1727 = vadd.f32 0.0, %v1726
        %v1728 = vpop.f32.mrf.mxu0
        %v1729 = vadd.f32 0.0, %v1728
        %1730 = vmatprep.mubr.f32.mxu0 0.0
        %1731 = vmatmul.mubr.f32.gmra.mxu0 %v1649
        %v1732 = vpop.f32.mrf.mxu0
        %v1733 = vadd.f32 0.0, %v1732
        %v1734 = vpop.f32.mrf.mxu0
        %v1735 = vadd.f32 0.0, %v1734
        %1736 = vmatprep.mubr.f32.mxu0 0.0
        %1737 = vmatmul.mubr.f32.gmra.mxu0 %v1652
        %v1738 = vpop.f32.mrf.mxu0
        %v1739 = vadd.f32 0.0, %v1738
        %v1740 = vpop.f32.mrf.mxu0
        %v1741 = vadd.f32 0.0, %v1740
        %1742 = vdwg.mxu0
        %v1743 = vadd.f32 %v1545, %v1721
        %v1744 = vadd.f32 %v1546, %v1723
        %v1745 = vadd.f32 %v1547, %v1727
        %v1746 = vadd.f32 %v1548, %v1729
        %v1747 = vadd.f32 %v1549, %v1733
        %v1748 = vadd.f32 %v1550, %v1735
        %v1749 = vadd.f32 %v1551, %v1739
        %v1750 = vadd.f32 %v1552, %v1741
        %1751 = vrot.lane.b32.xlu0 %v670, 15
        %v1752 = vpop.permute.xlu0 %1751
        %1753 = vrot.lane.b32.xlu0 %v671, 15
        %v1754 = vpop.permute.xlu0 %1753
        %v1755 = vsel %vm1125, %v1752, %v1754
        %v1759 = vmul.f32 %v1553, %v1752
        %v1760 = vmul.f32 %v1554, %v1755
        %v1761 = vmul.f32 %v1555, %v1754
        %v1762 = vmul.f32 %v1556, %v1752
        %v1763 = vmul.f32 %v1557, %v1755
        %v1764 = vmul.f32 %v1558, %v1754
        %v1765 = vmul.f32 %v1559, %v1752
        %v1766 = vmul.f32 %v1560, %v1755
        %v1767 = vmul.f32 %v1561, %v1754
        %v1768 = vmul.f32 %v1562, %v1752
        %v1769 = vmul.f32 %v1563, %v1755
        %v1770 = vmul.f32 %v1564, %v1754
        %s1771 = scalar_lea.vmem [#allocation4], 192
        %v1772 = vld [vmem:[%s1771] sm:$0xff]
        %v1773 = vld [vmem:[%s1771 + $0x8] sm:$0xff]
        %v1774 = vld [vmem:[%s1771 + $0x10] sm:$0xff]
        %v1775 = vld [vmem:[%s1771 + $0x18] sm:$0xff]
        %1788 = vrot.lane.b32.xlu0 %v1759, 113
        %v1789 = vpop.permute.xlu0 %1788
        %1790 = vrot.lane.b32.xlu0 %v1760, 113
        %v1791 = vpop.permute.xlu0 %1790
        %1792 = vrot.lane.b32.xlu0 %v1761, 113
        %v1793 = vpop.permute.xlu0 %1792
        %1794 = vrot.lane.b32.xlu0 %v1762, 113
        %v1795 = vpop.permute.xlu0 %1794
        %1796 = vrot.lane.b32.xlu0 %v1763, 113
        %v1797 = vpop.permute.xlu0 %1796
        %1798 = vrot.lane.b32.xlu0 %v1764, 113
        %v1799 = vpop.permute.xlu0 %1798
        %1800 = vrot.lane.b32.xlu0 %v1765, 113
        %v1801 = vpop.permute.xlu0 %1800
        %1802 = vrot.lane.b32.xlu0 %v1766, 113
        %v1803 = vpop.permute.xlu0 %1802
        %1804 = vrot.lane.b32.xlu0 %v1767, 113
        %v1805 = vpop.permute.xlu0 %1804
        %1806 = vrot.lane.b32.xlu0 %v1768, 113
        %v1807 = vpop.permute.xlu0 %1806
        %1808 = vrot.lane.b32.xlu0 %v1769, 113
        %v1809 = vpop.permute.xlu0 %1808
        %1810 = vrot.lane.b32.xlu0 %v1770, 113
        %v1811 = vpop.permute.xlu0 %1810
        %v1812 = vsel %vm1067, %v1789, %v1791
        %v1813 = vsel %vm1067, %v1791, %v1793
        %v1814 = vsel %vm1067, %v1795, %v1797
        %v1815 = vsel %vm1067, %v1797, %v1799
        %v1816 = vsel %vm1067, %v1801, %v1803
        %v1817 = vsel %vm1067, %v1803, %v1805
        %v1818 = vsel %vm1067, %v1807, %v1809
        %v1819 = vsel %vm1067, %v1809, %v1811
        %v1829 = vsel %vm805, %v1772, 0
        %v1832 = vsel %vm805, %v1773, 0
        %v1835 = vsel %vm805, %v1774, 0
        %v1838 = vsel %vm805, %v1775, 0
        %1840 = vmatprep.subr.mxu0 0.0
        %1841 = vmatpush1.msra.mxu0 0.0
        %1842 = vmatprep.subr.mxu0 0.0
        %1843 = vmatpush1.msra.mxu0 0.0
        %1844 = vmatprep.subr.mxu0 0.0
        %1845 = vmatpush1.msra.mxu0 0.0
        %1846 = vmatprep.subr.mxu0 0.0
        %1847 = vmatpush1.msra.mxu0 0.0
        %1848 = vmatprep.subr.mxu0 0.0
        %1849 = vmatpush1.msra.mxu0 0.0
        %1850 = vmatprep.subr.mxu0 0.0
        %1851 = vmatpush1.msra.mxu0 0.0
        %1852 = vmatprep.subr.mxu0 0.0
        %1853 = vmatpush1.msra.mxu0 0.0
        %1854 = vmatprep.subr.mxu0 0.0
        %1855 = vmatpush1.msra.mxu0 0.0
        %1856 = vmatprep.subr.mxu0 0.0
        %1857 = vmatpush1.msra.mxu0 0.0
        %1858 = vmatprep.subr.mxu0 0.0
        %1859 = vmatpush1.msra.mxu0 0.0
        %1860 = vmatprep.subr.mxu0 0.0
        %1861 = vmatpush1.msra.mxu0 0.0
        %1862 = vmatprep.subr.mxu0 0.0
        %1863 = vmatpush1.msra.mxu0 0.0
        %1864 = vmatprep.subr.mxu0 %v1819
        %1865 = vmatpush1.msra.mxu0 %v1818
        %1866 = vmatprep.subr.mxu0 %v1817
        %1867 = vmatpush1.msra.mxu0 %v1816
        %1868 = vmatprep.subr.mxu0 %v1815
        %1869 = vmatpush1.msra.mxu0 %v1814
        %1870 = vmatprep.subr.mxu0 %v1813
        %1871 = vmatpush1.msra.mxu0 %v1812
        %1872 = vmatprep.subr.mxu0 0.0
        %1873 = vmatpush2.msra.mxu0 0.0
        %1874 = vmatprep.subr.mxu0 0.0
        %1875 = vmatpush2.msra.mxu0 0.0
        %1876 = vmatprep.subr.mxu0 0.0
        %1877 = vmatpush2.msra.mxu0 0.0
        %1878 = vmatprep.subr.mxu0 0.0
        %1879 = vmatpush2.msra.mxu0 0.0
        %1880 = vmatprep.subr.mxu0 0.0
        %1881 = vmatpush2.msra.mxu0 0.0
        %1882 = vmatprep.subr.mxu0 0.0
        %1883 = vmatpush2.msra.mxu0 0.0
        %1884 = vmatprep.subr.mxu0 0.0
        %1885 = vmatpush2.msra.mxu0 0.0
        %1886 = vmatprep.subr.mxu0 0.0
        %1887 = vmatpush2.msra.mxu0 0.0
        %1888 = vmatprep.subr.mxu0 0.0
        %1889 = vmatpush2.msra.mxu0 0.0
        %1890 = vmatprep.subr.mxu0 0.0
        %1891 = vmatpush2.msra.mxu0 0.0
        %1892 = vmatprep.subr.mxu0 0.0
        %1893 = vmatpush2.msra.mxu0 0.0
        %1894 = vmatprep.subr.mxu0 0.0
        %1895 = vmatpush2.msra.mxu0 0.0
        %1896 = vmatprep.subr.mxu0 0.0
        %1897 = vmatpush2.msra.mxu0 0.0
        %1898 = vmatprep.subr.mxu0 0.0
        %1899 = vmatpush2.msra.mxu0 0.0
        %1900 = vmatprep.subr.mxu0 0.0
        %1901 = vmatpush2.msra.mxu0 0.0
        %1902 = vmatprep.subr.mxu0 0.0
        %1903 = vmatpush2.msra.mxu0 0.0
        %1904 = vmatprep.mubr.f32.mxu0 0.0
        %1905 = vmatmul.mubr.f32.gmra.mxu0 %v1829
        %v1906 = vpop.f32.mrf.mxu0
        %v1907 = vadd.f32 0.0, %v1906
        %v1908 = vpop.f32.mrf.mxu0
        %v1909 = vadd.f32 0.0, %v1908
        %1910 = vmatprep.mubr.f32.mxu0 0.0
        %1911 = vmatmul.mubr.f32.gmra.mxu0 %v1832
        %v1912 = vpop.f32.mrf.mxu0
        %v1913 = vadd.f32 0.0, %v1912
        %v1914 = vpop.f32.mrf.mxu0
        %v1915 = vadd.f32 0.0, %v1914
        %1916 = vmatprep.mubr.f32.mxu0 0.0
        %1917 = vmatmul.mubr.f32.gmra.mxu0 %v1835
        %v1918 = vpop.f32.mrf.mxu0
        %v1919 = vadd.f32 0.0, %v1918
        %v1920 = vpop.f32.mrf.mxu0
        %v1921 = vadd.f32 0.0, %v1920
        %1922 = vmatprep.mubr.f32.mxu0 0.0
        %1923 = vmatmul.mubr.f32.gmra.mxu0 %v1838
        %v1924 = vpop.f32.mrf.mxu0
        %v1925 = vadd.f32 0.0, %v1924
        %v1926 = vpop.f32.mrf.mxu0
        %v1927 = vadd.f32 0.0, %v1926
        %1928 = vdwg.mxu0
        %v1929 = vadd.f32 %v1743, %v1907
        %v1930 = vadd.f32 %v1744, %v1909
        %v1931 = vadd.f32 %v1745, %v1913
        %v1932 = vadd.f32 %v1746, %v1915
        %v1933 = vadd.f32 %v1747, %v1919
        %v1934 = vadd.f32 %v1748, %v1921
        %v1935 = vadd.f32 %v1749, %v1925
        %v1936 = vadd.f32 %v1750, %v1927
        %s1937 = scalar_lea.vmem [#allocation4], 224
        %v1938 = vld [vmem:[%s1937] sm:$0xff]
        %v1939 = vld [vmem:[%s1937 + $0x8] sm:$0xff]
        %v1940 = vld [vmem:[%s1937 + $0x10] sm:$0xff]
        %v1941 = vld [vmem:[%s1937 + $0x18] sm:$0xff]
        %1954 = vrot.lane.b32.xlu0 %v1553, 112
        %v1955 = vpop.permute.xlu0 %1954
        %1956 = vrot.lane.b32.xlu0 %v1554, 112
        %v1957 = vpop.permute.xlu0 %1956
        %1958 = vrot.lane.b32.xlu0 %v1555, 112
        %v1959 = vpop.permute.xlu0 %1958
        %1960 = vrot.lane.b32.xlu0 %v1556, 112
        %v1961 = vpop.permute.xlu0 %1960
        %1962 = vrot.lane.b32.xlu0 %v1557, 112
        %v1963 = vpop.permute.xlu0 %1962
        %1964 = vrot.lane.b32.xlu0 %v1558, 112
        %v1965 = vpop.permute.xlu0 %1964
        %1966 = vrot.lane.b32.xlu0 %v1559, 112
        %v1967 = vpop.permute.xlu0 %1966
        %1968 = vrot.lane.b32.xlu0 %v1560, 112
        %v1969 = vpop.permute.xlu0 %1968
        %1970 = vrot.lane.b32.xlu0 %v1561, 112
        %v1971 = vpop.permute.xlu0 %1970
        %1972 = vrot.lane.b32.xlu0 %v1562, 112
        %v1973 = vpop.permute.xlu0 %1972
        %1974 = vrot.lane.b32.xlu0 %v1563, 112
        %v1975 = vpop.permute.xlu0 %1974
        %1976 = vrot.lane.b32.xlu0 %v1564, 112
        %v1977 = vpop.permute.xlu0 %1976
        %vm1978 = vcmask 916480
        %v1979 = vsel %vm1978, %v1955, %v1957
        %v1980 = vsel %vm1978, %v1957, %v1959
        %v1981 = vsel %vm1978, %v1961, %v1963
        %v1982 = vsel %vm1978, %v1963, %v1965
        %v1983 = vsel %vm1978, %v1967, %v1969
        %v1984 = vsel %vm1978, %v1969, %v1971
        %v1985 = vsel %vm1978, %v1973, %v1975
        %v1986 = vsel %vm1978, %v1975, %v1977
        %v1996 = vsel %vm805, %v1938, 0
        %v1999 = vsel %vm805, %v1939, 0
        %v2002 = vsel %vm805, %v1940, 0
        %v2005 = vsel %vm805, %v1941, 0
        %2007 = vmatprep.subr.mxu0 0.0
        %2008 = vmatpush1.msra.mxu0 0.0
        %2009 = vmatprep.subr.mxu0 0.0
        %2010 = vmatpush1.msra.mxu0 0.0
        %2011 = vmatprep.subr.mxu0 0.0
        %2012 = vmatpush1.msra.mxu0 0.0
        %2013 = vmatprep.subr.mxu0 0.0
        %2014 = vmatpush1.msra.mxu0 0.0
        %2015 = vmatprep.subr.mxu0 0.0
        %2016 = vmatpush1.msra.mxu0 0.0
        %2017 = vmatprep.subr.mxu0 0.0
        %2018 = vmatpush1.msra.mxu0 0.0
        %2019 = vmatprep.subr.mxu0 0.0
        %2020 = vmatpush1.msra.mxu0 0.0
        %2021 = vmatprep.subr.mxu0 0.0
        %2022 = vmatpush1.msra.mxu0 0.0
        %2023 = vmatprep.subr.mxu0 0.0
        %2024 = vmatpush1.msra.mxu0 0.0
        %2025 = vmatprep.subr.mxu0 0.0
        %2026 = vmatpush1.msra.mxu0 0.0
        %2027 = vmatprep.subr.mxu0 0.0
        %2028 = vmatpush1.msra.mxu0 0.0
        %2029 = vmatprep.subr.mxu0 0.0
        %2030 = vmatpush1.msra.mxu0 0.0
        %2031 = vmatprep.subr.mxu0 %v1986
        %2032 = vmatpush1.msra.mxu0 %v1985
        %2033 = vmatprep.subr.mxu0 %v1984
        %2034 = vmatpush1.msra.mxu0 %v1983
        %2035 = vmatprep.subr.mxu0 %v1982
        %2036 = vmatpush1.msra.mxu0 %v1981
        %2037 = vmatprep.subr.mxu0 %v1980
        %2038 = vmatpush1.msra.mxu0 %v1979
        %2039 = vmatprep.subr.mxu0 0.0
        %2040 = vmatpush2.msra.mxu0 0.0
        %2041 = vmatprep.subr.mxu0 0.0
        %2042 = vmatpush2.msra.mxu0 0.0
        %2043 = vmatprep.subr.mxu0 0.0
        %2044 = vmatpush2.msra.mxu0 0.0
        %2045 = vmatprep.subr.mxu0 0.0
        %2046 = vmatpush2.msra.mxu0 0.0
        %2047 = vmatprep.subr.mxu0 0.0
        %2048 = vmatpush2.msra.mxu0 0.0
        %2049 = vmatprep.subr.mxu0 0.0
        %2050 = vmatpush2.msra.mxu0 0.0
        %2051 = vmatprep.subr.mxu0 0.0
        %2052 = vmatpush2.msra.mxu0 0.0
        %2053 = vmatprep.subr.mxu0 0.0
        %2054 = vmatpush2.msra.mxu0 0.0
        %2055 = vmatprep.subr.mxu0 0.0
        %2056 = vmatpush2.msra.mxu0 0.0
        %2057 = vmatprep.subr.mxu0 0.0
        %2058 = vmatpush2.msra.mxu0 0.0
        %2059 = vmatprep.subr.mxu0 0.0
        %2060 = vmatpush2.msra.mxu0 0.0
        %2061 = vmatprep.subr.mxu0 0.0
        %2062 = vmatpush2.msra.mxu0 0.0
        %2063 = vmatprep.subr.mxu0 0.0
        %2064 = vmatpush2.msra.mxu0 0.0
        %2065 = vmatprep.subr.mxu0 0.0
        %2066 = vmatpush2.msra.mxu0 0.0
        %2067 = vmatprep.subr.mxu0 0.0
        %2068 = vmatpush2.msra.mxu0 0.0
        %2069 = vmatprep.subr.mxu0 0.0
        %2070 = vmatpush2.msra.mxu0 0.0
        %2071 = vmatprep.mubr.f32.mxu0 0.0
        %2072 = vmatmul.mubr.f32.gmra.mxu0 %v1996
        %v2073 = vpop.f32.mrf.mxu0
        %v2074 = vadd.f32 0.0, %v2073
        %v2075 = vpop.f32.mrf.mxu0
        %v2076 = vadd.f32 0.0, %v2075
        %2077 = vmatprep.mubr.f32.mxu0 0.0
        %2078 = vmatmul.mubr.f32.gmra.mxu0 %v1999
        %v2079 = vpop.f32.mrf.mxu0
        %v2080 = vadd.f32 0.0, %v2079
        %v2081 = vpop.f32.mrf.mxu0
        %v2082 = vadd.f32 0.0, %v2081
        %2083 = vmatprep.mubr.f32.mxu0 0.0
        %2084 = vmatmul.mubr.f32.gmra.mxu0 %v2002
        %v2085 = vpop.f32.mrf.mxu0
        %v2086 = vadd.f32 0.0, %v2085
        %v2087 = vpop.f32.mrf.mxu0
        %v2088 = vadd.f32 0.0, %v2087
        %2089 = vmatprep.mubr.f32.mxu0 0.0
        %2090 = vmatmul.mubr.f32.gmra.mxu0 %v2005
        %v2091 = vpop.f32.mrf.mxu0
        %v2092 = vadd.f32 0.0, %v2091
        %v2093 = vpop.f32.mrf.mxu0
        %v2094 = vadd.f32 0.0, %v2093
        %2095 = vdwg.mxu0
        %v2096 = vadd.f32 %v1929, %v2074
        %v2097 = vadd.f32 %v1930, %v2076
        %v2098 = vadd.f32 %v1931, %v2080
        %v2099 = vadd.f32 %v1932, %v2082
        %v2100 = vadd.f32 %v1933, %v2086
        %v2101 = vadd.f32 %v1934, %v2088
        %v2102 = vadd.f32 %v1935, %v2092
        %v2103 = vadd.f32 %v1936, %v2094
        %2104 = vrot.lane.b32.xlu0 %v682, 17
        %v2105 = vpop.permute.xlu0 %2104
        %2106 = vrot.lane.b32.xlu0 %v683, 17
        %v2107 = vpop.permute.xlu0 %2106
        %v2108 = vsel %vm943, %v2105, %v2107
        %v2112 = vmul.f32 %v1553, %v2105
        %v2113 = vmul.f32 %v1554, %v2108
        %v2114 = vmul.f32 %v1555, %v2107
        %v2115 = vmul.f32 %v1556, %v2105
        %v2116 = vmul.f32 %v1557, %v2108
        %v2117 = vmul.f32 %v1558, %v2107
        %v2118 = vmul.f32 %v1559, %v2105
        %v2119 = vmul.f32 %v1560, %v2108
        %v2120 = vmul.f32 %v1561, %v2107
        %v2121 = vmul.f32 %v1562, %v2105
        %v2122 = vmul.f32 %v1563, %v2108
        %v2123 = vmul.f32 %v1564, %v2107
        %s2124 = scalar_lea.vmem [#allocation4], 256
        %v2125 = vld [vmem:[%s2124] sm:$0xff]
        %v2126 = vld [vmem:[%s2124 + $0x8] sm:$0xff]
        %v2127 = vld [vmem:[%s2124 + $0x10] sm:$0xff]
        %v2128 = vld [vmem:[%s2124 + $0x18] sm:$0xff]
        %2141 = vrot.lane.b32.xlu0 %v2112, 111
        %v2142 = vpop.permute.xlu0 %2141
        %2143 = vrot.lane.b32.xlu0 %v2113, 111
        %v2144 = vpop.permute.xlu0 %2143
        %2145 = vrot.lane.b32.xlu0 %v2114, 111
        %v2146 = vpop.permute.xlu0 %2145
        %2147 = vrot.lane.b32.xlu0 %v2115, 111
        %v2148 = vpop.permute.xlu0 %2147
        %2149 = vrot.lane.b32.xlu0 %v2116, 111
        %v2150 = vpop.permute.xlu0 %2149
        %2151 = vrot.lane.b32.xlu0 %v2117, 111
        %v2152 = vpop.permute.xlu0 %2151
        %2153 = vrot.lane.b32.xlu0 %v2118, 111
        %v2154 = vpop.permute.xlu0 %2153
        %2155 = vrot.lane.b32.xlu0 %v2119, 111
        %v2156 = vpop.permute.xlu0 %2155
        %2157 = vrot.lane.b32.xlu0 %v2120, 111
        %v2158 = vpop.permute.xlu0 %2157
        %2159 = vrot.lane.b32.xlu0 %v2121, 111
        %v2160 = vpop.permute.xlu0 %2159
        %2161 = vrot.lane.b32.xlu0 %v2122, 111
        %v2162 = vpop.permute.xlu0 %2161
        %2163 = vrot.lane.b32.xlu0 %v2123, 111
        %v2164 = vpop.permute.xlu0 %2163
        %v2165 = vsel %vm726, %v2142, %v2144
        %v2166 = vsel %vm726, %v2144, %v2146
        %v2167 = vsel %vm726, %v2148, %v2150
        %v2168 = vsel %vm726, %v2150, %v2152
        %v2169 = vsel %vm726, %v2154, %v2156
        %v2170 = vsel %vm726, %v2156, %v2158
        %v2171 = vsel %vm726, %v2160, %v2162
        %v2172 = vsel %vm726, %v2162, %v2164
        %v2182 = vsel %vm805, %v2125, 0
        %v2185 = vsel %vm805, %v2126, 0
        %v2188 = vsel %vm805, %v2127, 0
        %v2191 = vsel %vm805, %v2128, 0
        %2193 = vmatprep.subr.mxu0 0.0
        %2194 = vmatpush1.msra.mxu0 0.0
        %2195 = vmatprep.subr.mxu0 0.0
        %2196 = vmatpush1.msra.mxu0 0.0
        %2197 = vmatprep.subr.mxu0 0.0
        %2198 = vmatpush1.msra.mxu0 0.0
        %2199 = vmatprep.subr.mxu0 0.0
        %2200 = vmatpush1.msra.mxu0 0.0
        %2201 = vmatprep.subr.mxu0 0.0
        %2202 = vmatpush1.msra.mxu0 0.0
        %2203 = vmatprep.subr.mxu0 0.0
        %2204 = vmatpush1.msra.mxu0 0.0
        %2205 = vmatprep.subr.mxu0 0.0
        %2206 = vmatpush1.msra.mxu0 0.0
        %2207 = vmatprep.subr.mxu0 0.0
        %2208 = vmatpush1.msra.mxu0 0.0
        %2209 = vmatprep.subr.mxu0 0.0
        %2210 = vmatpush1.msra.mxu0 0.0
        %2211 = vmatprep.subr.mxu0 0.0
        %2212 = vmatpush1.msra.mxu0 0.0
        %2213 = vmatprep.subr.mxu0 0.0
        %2214 = vmatpush1.msra.mxu0 0.0
        %2215 = vmatprep.subr.mxu0 0.0
        %2216 = vmatpush1.msra.mxu0 0.0
        %2217 = vmatprep.subr.mxu0 %v2172
        %2218 = vmatpush1.msra.mxu0 %v2171
        %2219 = vmatprep.subr.mxu0 %v2170
        %2220 = vmatpush1.msra.mxu0 %v2169
        %2221 = vmatprep.subr.mxu0 %v2168
        %2222 = vmatpush1.msra.mxu0 %v2167
        %2223 = vmatprep.subr.mxu0 %v2166
        %2224 = vmatpush1.msra.mxu0 %v2165
        %2225 = vmatprep.subr.mxu0 0.0
        %2226 = vmatpush2.msra.mxu0 0.0
        %2227 = vmatprep.subr.mxu0 0.0
        %2228 = vmatpush2.msra.mxu0 0.0
        %2229 = vmatprep.subr.mxu0 0.0
        %2230 = vmatpush2.msra.mxu0 0.0
        %2231 = vmatprep.subr.mxu0 0.0
        %2232 = vmatpush2.msra.mxu0 0.0
        %2233 = vmatprep.subr.mxu0 0.0
        %2234 = vmatpush2.msra.mxu0 0.0
        %2235 = vmatprep.subr.mxu0 0.0
        %2236 = vmatpush2.msra.mxu0 0.0
        %2237 = vmatprep.subr.mxu0 0.0
        %2238 = vmatpush2.msra.mxu0 0.0
        %2239 = vmatprep.subr.mxu0 0.0
        %2240 = vmatpush2.msra.mxu0 0.0
        %2241 = vmatprep.subr.mxu0 0.0
        %2242 = vmatpush2.msra.mxu0 0.0
        %2243 = vmatprep.subr.mxu0 0.0
        %2244 = vmatpush2.msra.mxu0 0.0
        %2245 = vmatprep.subr.mxu0 0.0
        %2246 = vmatpush2.msra.mxu0 0.0
        %2247 = vmatprep.subr.mxu0 0.0
        %2248 = vmatpush2.msra.mxu0 0.0
        %2249 = vmatprep.subr.mxu0 0.0
        %2250 = vmatpush2.msra.mxu0 0.0
        %2251 = vmatprep.subr.mxu0 0.0
        %2252 = vmatpush2.msra.mxu0 0.0
        %2253 = vmatprep.subr.mxu0 0.0
        %2254 = vmatpush2.msra.mxu0 0.0
        %2255 = vmatprep.subr.mxu0 0.0
        %2256 = vmatpush2.msra.mxu0 0.0
        %2257 = vmatprep.mubr.f32.mxu0 0.0
        %2258 = vmatmul.mubr.f32.gmra.mxu0 %v2182
        %v2259 = vpop.f32.mrf.mxu0
        %v2260 = vadd.f32 0.0, %v2259
        %v2261 = vpop.f32.mrf.mxu0
        %v2262 = vadd.f32 0.0, %v2261
        %2263 = vmatprep.mubr.f32.mxu0 0.0
        %2264 = vmatmul.mubr.f32.gmra.mxu0 %v2185
        %v2265 = vpop.f32.mrf.mxu0
        %v2266 = vadd.f32 0.0, %v2265
        %v2267 = vpop.f32.mrf.mxu0
        %v2268 = vadd.f32 0.0, %v2267
        %2269 = vmatprep.mubr.f32.mxu0 0.0
        %2270 = vmatmul.mubr.f32.gmra.mxu0 %v2188
        %v2271 = vpop.f32.mrf.mxu0
        %v2272 = vadd.f32 0.0, %v2271
        %v2273 = vpop.f32.mrf.mxu0
        %v2274 = vadd.f32 0.0, %v2273
        %2275 = vmatprep.mubr.f32.mxu0 0.0
        %2276 = vmatmul.mubr.f32.gmra.mxu0 %v2191
        %v2277 = vpop.f32.mrf.mxu0
        %v2278 = vadd.f32 0.0, %v2277
        %v2279 = vpop.f32.mrf.mxu0
        %v2280 = vadd.f32 0.0, %v2279
        %2281 = vdwg.mxu0
        %v2282 = vadd.f32 %v2096, %v2260
        %v2283 = vadd.f32 %v2097, %v2262
        %v2284 = vadd.f32 %v2098, %v2266
        %v2285 = vadd.f32 %v2099, %v2268
        %v2286 = vadd.f32 %v2100, %v2272
        %v2287 = vadd.f32 %v2101, %v2274
        %v2288 = vadd.f32 %v2102, %v2278
        %v2289 = vadd.f32 %v2103, %v2280
        %2291 = vset.pattern.permute.xlu0 0
        %2292 = vperm.xlu0 %2291, %v692
        %v2293 = vpop.permute.xlu0 %2292
        %2296 = vset.pattern.permute.xlu0 0
        %2297 = vperm.xlu0 %2296, %v693
        %v2298 = vpop.permute.xlu0 %2297
        %2301 = vset.pattern.permute.xlu0 0
        %2302 = vperm.xlu0 %2301, %v694
        %v2303 = vpop.permute.xlu0 %2302
        %2306 = vset.pattern.permute.xlu0 0
        %2307 = vperm.xlu0 %2306, %v695
        %v2308 = vpop.permute.xlu0 %2307
        %v2310 = vmul.f32 %v2282, %v2293
        %v2311 = vmul.f32 %v2283, %v2293
        %v2312 = vmul.f32 %v2284, %v2298
        %v2313 = vmul.f32 %v2285, %v2298
        %v2314 = vmul.f32 %v2286, %v2303
        %v2315 = vmul.f32 %v2287, %v2303
        %v2316 = vmul.f32 %v2288, %v2308
        %v2317 = vmul.f32 %v2289, %v2308
        %2319 = vset.pattern.permute.xlu0 0
        %2320 = vperm.xlu0 %2319, %v696
        %v2321 = vpop.permute.xlu0 %2320
        %2324 = vset.pattern.permute.xlu0 0
        %2325 = vperm.xlu0 %2324, %v697
        %v2326 = vpop.permute.xlu0 %2325
        %2329 = vset.pattern.permute.xlu0 0
        %2330 = vperm.xlu0 %2329, %v698
        %v2331 = vpop.permute.xlu0 %2330
        %2334 = vset.pattern.permute.xlu0 0
        %2335 = vperm.xlu0 %2334, %v699
        %v2336 = vpop.permute.xlu0 %2335
        %v2338 = vadd.f32 %v2310, %v2321
        %v2339 = vadd.f32 %v2311, %v2321
        %v2340 = vadd.f32 %v2312, %v2326
        %v2341 = vadd.f32 %v2313, %v2326
        %v2342 = vadd.f32 %v2314, %v2331
        %v2343 = vadd.f32 %v2315, %v2331
        %v2344 = vadd.f32 %v2316, %v2336
        %v2345 = vadd.f32 %v2317, %v2336
        %v2346 = vmax.f32 %v2338, 0.0
        %v2347 = vmax.f32 %v2339, 0.0
        %v2348 = vmax.f32 %v2340, 0.0
        %v2349 = vmax.f32 %v2341, 0.0
        %v2350 = vmax.f32 %v2342, 0.0
        %v2351 = vmax.f32 %v2343, 0.0
        %v2352 = vmax.f32 %v2344, 0.0
        %v2353 = vmax.f32 %v2345, 0.0
        %v2354 = vld [vmem:[%s5] sm:$0xff]
        %v2355 = vld [vmem:[%s5 + $0x8] sm:$0xff]
        %v2356 = vld [vmem:[%s5 + $0x10] sm:$0xff]
        %v2357 = vld [vmem:[%s5 + $0x18] sm:$0xff]
        %v2358 = vld [vmem:[%s6] sm:$0xff]
        %v2359 = vld [vmem:[%s6 + $0x8] sm:$0xff]
        %v2360 = vld [vmem:[%s6 + $0x10] sm:$0xff]
        %v2361 = vld [vmem:[%s6 + $0x18] sm:$0xff]
        %2362 = vst [vmem:[#allocation2 + $0x8] sm:$0xff] %v2346
        %2363 = vst [vmem:[#allocation2 + $0x10] sm:$0xff] %v2347
        %2364 = vst [vmem:[#allocation2 + $0x28] sm:$0xff] %v2348
        %2365 = vst [vmem:[#allocation2 + $0x30] sm:$0xff] %v2349
        %2366 = vst [vmem:[#allocation2 + $0x48] sm:$0xff] %v2350
        %2367 = vst [vmem:[#allocation2 + $0x50] sm:$0xff] %v2351
        %2368 = vst [vmem:[#allocation2 + $0x68] sm:$0xff] %v2352
        %2369 = vst [vmem:[#allocation2 + $0x70] sm:$0xff] %v2353
        %v2370 = vld [vmem:[#allocation2] sm:$0xff]
        %v2371 = vld [vmem:[#allocation2 + $0x8] sm:$0xff]
        %v2372 = vld [vmem:[#allocation2 + $0x10] sm:$0xff]
        %v2373 = vld [vmem:[#allocation2 + $0x20] sm:$0xff]
        %v2374 = vld [vmem:[#allocation2 + $0x28] sm:$0xff]
        %v2375 = vld [vmem:[#allocation2 + $0x30] sm:$0xff]
        %v2376 = vld [vmem:[#allocation2 + $0x40] sm:$0xff]
        %v2377 = vld [vmem:[#allocation2 + $0x48] sm:$0xff]
        %v2378 = vld [vmem:[#allocation2 + $0x50] sm:$0xff]
        %v2379 = vld [vmem:[#allocation2 + $0x60] sm:$0xff]
        %v2380 = vld [vmem:[#allocation2 + $0x68] sm:$0xff]
        %v2381 = vld [vmem:[#allocation2 + $0x70] sm:$0xff]
        %v2382 = vmul.f32 %v2370, %v723
        %v2383 = vmul.f32 %v2371, %v727
        %v2384 = vmul.f32 %v2372, %v725
        %v2385 = vmul.f32 %v2373, %v723
        %v2386 = vmul.f32 %v2374, %v727
        %v2387 = vmul.f32 %v2375, %v725
        %v2388 = vmul.f32 %v2376, %v723
        %v2389 = vmul.f32 %v2377, %v727
        %v2390 = vmul.f32 %v2378, %v725
        %v2391 = vmul.f32 %v2379, %v723
        %v2392 = vmul.f32 %v2380, %v727
        %v2393 = vmul.f32 %v2381, %v725
        %v2394 = vld [vmem:[#allocation6] sm:$0xff]
        %v2395 = vld [vmem:[#allocation6 + $0x8] sm:$0xff]
        %v2396 = vld [vmem:[#allocation6 + $0x10] sm:$0xff]
        %v2397 = vld [vmem:[#allocation6 + $0x18] sm:$0xff]
        %s2398 = scalar_lea.vmem [#allocation6], 32
        %v2399 = vld [vmem:[%s2398] sm:$0xff]
        %v2400 = vld [vmem:[%s2398 + $0x8] sm:$0xff]
        %v2401 = vld [vmem:[%s2398 + $0x10] sm:$0xff]
        %v2402 = vld [vmem:[%s2398 + $0x18] sm:$0xff]
        %2415 = vrot.lane.b32.xlu0 %v2370, 16
        %v2416 = vpop.permute.xlu0 %2415
        %2417 = vrot.lane.b32.xlu0 %v2371, 16
        %v2418 = vpop.permute.xlu0 %2417
        %2419 = vrot.lane.b32.xlu0 %v2372, 16
        %v2420 = vpop.permute.xlu0 %2419
        %2421 = vrot.lane.b32.xlu0 %v2373, 16
        %v2422 = vpop.permute.xlu0 %2421
        %2423 = vrot.lane.b32.xlu0 %v2374, 16
        %v2424 = vpop.permute.xlu0 %2423
        %2425 = vrot.lane.b32.xlu0 %v2375, 16
        %v2426 = vpop.permute.xlu0 %2425
        %2427 = vrot.lane.b32.xlu0 %v2376, 16
        %v2428 = vpop.permute.xlu0 %2427
        %2429 = vrot.lane.b32.xlu0 %v2377, 16
        %v2430 = vpop.permute.xlu0 %2429
        %2431 = vrot.lane.b32.xlu0 %v2378, 16
        %v2432 = vpop.permute.xlu0 %2431
        %2433 = vrot.lane.b32.xlu0 %v2379, 16
        %v2434 = vpop.permute.xlu0 %2433
        %2435 = vrot.lane.b32.xlu0 %v2380, 16
        %v2436 = vpop.permute.xlu0 %2435
        %2437 = vrot.lane.b32.xlu0 %v2381, 16
        %v2438 = vpop.permute.xlu0 %2437
        %v2439 = vsel %vm788, %v2416, %v2418
        %v2440 = vsel %vm788, %v2418, %v2420
        %v2441 = vsel %vm788, %v2422, %v2424
        %v2442 = vsel %vm788, %v2424, %v2426
        %v2443 = vsel %vm788, %v2428, %v2430
        %v2444 = vsel %vm788, %v2430, %v2432
        %v2445 = vsel %vm788, %v2434, %v2436
        %v2446 = vsel %vm788, %v2436, %v2438
        %v2456 = vsel %vm805, %v2399, 0
        %v2459 = vsel %vm805, %v2400, 0
        %v2462 = vsel %vm805, %v2401, 0
        %v2465 = vsel %vm805, %v2402, 0
        %2467 = vmatprep.subr.mxu0 0.0
        %2468 = vmatpush1.msra.mxu0 0.0
        %2469 = vmatprep.subr.mxu0 0.0
        %2470 = vmatpush1.msra.mxu0 0.0
        %2471 = vmatprep.subr.mxu0 0.0
        %2472 = vmatpush1.msra.mxu0 0.0
        %2473 = vmatprep.subr.mxu0 0.0
        %2474 = vmatpush1.msra.mxu0 0.0
        %2475 = vmatprep.subr.mxu0 0.0
        %2476 = vmatpush1.msra.mxu0 0.0
        %2477 = vmatprep.subr.mxu0 0.0
        %2478 = vmatpush1.msra.mxu0 0.0
        %2479 = vmatprep.subr.mxu0 0.0
        %2480 = vmatpush1.msra.mxu0 0.0
        %2481 = vmatprep.subr.mxu0 0.0
        %2482 = vmatpush1.msra.mxu0 0.0
        %2483 = vmatprep.subr.mxu0 0.0
        %2484 = vmatpush1.msra.mxu0 0.0
        %2485 = vmatprep.subr.mxu0 0.0
        %2486 = vmatpush1.msra.mxu0 0.0
        %2487 = vmatprep.subr.mxu0 0.0
        %2488 = vmatpush1.msra.mxu0 0.0
        %2489 = vmatprep.subr.mxu0 0.0
        %2490 = vmatpush1.msra.mxu0 0.0
        %2491 = vmatprep.subr.mxu0 %v2446
        %2492 = vmatpush1.msra.mxu0 %v2445
        %2493 = vmatprep.subr.mxu0 %v2444
        %2494 = vmatpush1.msra.mxu0 %v2443
        %2495 = vmatprep.subr.mxu0 %v2442
        %2496 = vmatpush1.msra.mxu0 %v2441
        %2497 = vmatprep.subr.mxu0 %v2440
        %2498 = vmatpush1.msra.mxu0 %v2439
        %2499 = vmatprep.subr.mxu0 0.0
        %2500 = vmatpush2.msra.mxu0 0.0
        %2501 = vmatprep.subr.mxu0 0.0
        %2502 = vmatpush2.msra.mxu0 0.0
        %2503 = vmatprep.subr.mxu0 0.0
        %2504 = vmatpush2.msra.mxu0 0.0
        %2505 = vmatprep.subr.mxu0 0.0
        %2506 = vmatpush2.msra.mxu0 0.0
        %2507 = vmatprep.subr.mxu0 0.0
        %2508 = vmatpush2.msra.mxu0 0.0
        %2509 = vmatprep.subr.mxu0 0.0
        %2510 = vmatpush2.msra.mxu0 0.0
        %2511 = vmatprep.subr.mxu0 0.0
        %2512 = vmatpush2.msra.mxu0 0.0
        %2513 = vmatprep.subr.mxu0 0.0
        %2514 = vmatpush2.msra.mxu0 0.0
        %2515 = vmatprep.subr.mxu0 0.0
        %2516 = vmatpush2.msra.mxu0 0.0
        %2517 = vmatprep.subr.mxu0 0.0
        %2518 = vmatpush2.msra.mxu0 0.0
        %2519 = vmatprep.subr.mxu0 0.0
        %2520 = vmatpush2.msra.mxu0 0.0
        %2521 = vmatprep.subr.mxu0 0.0
        %2522 = vmatpush2.msra.mxu0 0.0
        %2523 = vmatprep.subr.mxu0 0.0
        %2524 = vmatpush2.msra.mxu0 0.0
        %2525 = vmatprep.subr.mxu0 0.0
        %2526 = vmatpush2.msra.mxu0 0.0
        %2527 = vmatprep.subr.mxu0 0.0
        %2528 = vmatpush2.msra.mxu0 0.0
        %2529 = vmatprep.subr.mxu0 0.0
        %2530 = vmatpush2.msra.mxu0 0.0
        %2531 = vmatprep.mubr.f32.mxu0 0.0
        %2532 = vmatmul.mubr.f32.gmra.mxu0 %v2456
        %v2533 = vpop.f32.mrf.mxu0
        %v2534 = vadd.f32 0.0, %v2533
        %v2535 = vpop.f32.mrf.mxu0
        %v2536 = vadd.f32 0.0, %v2535
        %2537 = vmatprep.mubr.f32.mxu0 0.0
        %2538 = vmatmul.mubr.f32.gmra.mxu0 %v2459
        %v2539 = vpop.f32.mrf.mxu0
        %v2540 = vadd.f32 0.0, %v2539
        %v2541 = vpop.f32.mrf.mxu0
        %v2542 = vadd.f32 0.0, %v2541
        %2543 = vmatprep.mubr.f32.mxu0 0.0
        %2544 = vmatmul.mubr.f32.gmra.mxu0 %v2462
        %v2545 = vpop.f32.mrf.mxu0
        %v2546 = vadd.f32 0.0, %v2545
        %v2547 = vpop.f32.mrf.mxu0
        %v2548 = vadd.f32 0.0, %v2547
        %2549 = vmatprep.mubr.f32.mxu0 0.0
        %2550 = vmatmul.mubr.f32.gmra.mxu0 %v2465
        %v2551 = vpop.f32.mrf.mxu0
        %v2552 = vadd.f32 0.0, %v2551
        %v2553 = vpop.f32.mrf.mxu0
        %v2554 = vadd.f32 0.0, %v2553
        %2555 = vdwg.mxu0
        %2568 = vrot.lane.b32.xlu0 %v2382, 17
        %v2569 = vpop.permute.xlu0 %2568
        %2570 = vrot.lane.b32.xlu0 %v2383, 17
        %v2571 = vpop.permute.xlu0 %2570
        %2572 = vrot.lane.b32.xlu0 %v2384, 17
        %v2573 = vpop.permute.xlu0 %2572
        %2574 = vrot.lane.b32.xlu0 %v2385, 17
        %v2575 = vpop.permute.xlu0 %2574
        %2576 = vrot.lane.b32.xlu0 %v2386, 17
        %v2577 = vpop.permute.xlu0 %2576
        %2578 = vrot.lane.b32.xlu0 %v2387, 17
        %v2579 = vpop.permute.xlu0 %2578
        %2580 = vrot.lane.b32.xlu0 %v2388, 17
        %v2581 = vpop.permute.xlu0 %2580
        %2582 = vrot.lane.b32.xlu0 %v2389, 17
        %v2583 = vpop.permute.xlu0 %2582
        %2584 = vrot.lane.b32.xlu0 %v2390, 17
        %v2585 = vpop.permute.xlu0 %2584
        %2586 = vrot.lane.b32.xlu0 %v2391, 17
        %v2587 = vpop.permute.xlu0 %2586
        %2588 = vrot.lane.b32.xlu0 %v2392, 17
        %v2589 = vpop.permute.xlu0 %2588
        %2590 = vrot.lane.b32.xlu0 %v2393, 17
        %v2591 = vpop.permute.xlu0 %2590
        %v2592 = vsel %vm943, %v2569, %v2571
        %v2593 = vsel %vm943, %v2571, %v2573
        %v2594 = vsel %vm943, %v2575, %v2577
        %v2595 = vsel %vm943, %v2577, %v2579
        %v2596 = vsel %vm943, %v2581, %v2583
        %v2597 = vsel %vm943, %v2583, %v2585
        %v2598 = vsel %vm943, %v2587, %v2589
        %v2599 = vsel %vm943, %v2589, %v2591
        %v2609 = vsel %vm805, %v2394, 0
        %v2612 = vsel %vm805, %v2395, 0
        %v2615 = vsel %vm805, %v2396, 0
        %v2618 = vsel %vm805, %v2397, 0
        %2620 = vmatprep.subr.mxu0 0.0
        %2621 = vmatpush1.msra.mxu0 0.0
        %2622 = vmatprep.subr.mxu0 0.0
        %2623 = vmatpush1.msra.mxu0 0.0
        %2624 = vmatprep.subr.mxu0 0.0
        %2625 = vmatpush1.msra.mxu0 0.0
        %2626 = vmatprep.subr.mxu0 0.0
        %2627 = vmatpush1.msra.mxu0 0.0
        %2628 = vmatprep.subr.mxu0 0.0
        %2629 = vmatpush1.msra.mxu0 0.0
        %2630 = vmatprep.subr.mxu0 0.0
        %2631 = vmatpush1.msra.mxu0 0.0
        %2632 = vmatprep.subr.mxu0 0.0
        %2633 = vmatpush1.msra.mxu0 0.0
        %2634 = vmatprep.subr.mxu0 0.0
        %2635 = vmatpush1.msra.mxu0 0.0
        %2636 = vmatprep.subr.mxu0 0.0
        %2637 = vmatpush1.msra.mxu0 0.0
        %2638 = vmatprep.subr.mxu0 0.0
        %2639 = vmatpush1.msra.mxu0 0.0
        %2640 = vmatprep.subr.mxu0 0.0
        %2641 = vmatpush1.msra.mxu0 0.0
        %2642 = vmatprep.subr.mxu0 0.0
        %2643 = vmatpush1.msra.mxu0 0.0
        %2644 = vmatprep.subr.mxu0 %v2599
        %2645 = vmatpush1.msra.mxu0 %v2598
        %2646 = vmatprep.subr.mxu0 %v2597
        %2647 = vmatpush1.msra.mxu0 %v2596
        %2648 = vmatprep.subr.mxu0 %v2595
        %2649 = vmatpush1.msra.mxu0 %v2594
        %2650 = vmatprep.subr.mxu0 %v2593
        %2651 = vmatpush1.msra.mxu0 %v2592
        %2652 = vmatprep.subr.mxu0 0.0
        %2653 = vmatpush2.msra.mxu0 0.0
        %2654 = vmatprep.subr.mxu0 0.0
        %2655 = vmatpush2.msra.mxu0 0.0
        %2656 = vmatprep.subr.mxu0 0.0
        %2657 = vmatpush2.msra.mxu0 0.0
        %2658 = vmatprep.subr.mxu0 0.0
        %2659 = vmatpush2.msra.mxu0 0.0
        %2660 = vmatprep.subr.mxu0 0.0
        %2661 = vmatpush2.msra.mxu0 0.0
        %2662 = vmatprep.subr.mxu0 0.0
        %2663 = vmatpush2.msra.mxu0 0.0
        %2664 = vmatprep.subr.mxu0 0.0
        %2665 = vmatpush2.msra.mxu0 0.0
        %2666 = vmatprep.subr.mxu0 0.0
        %2667 = vmatpush2.msra.mxu0 0.0
        %2668 = vmatprep.subr.mxu0 0.0
        %2669 = vmatpush2.msra.mxu0 0.0
        %2670 = vmatprep.subr.mxu0 0.0
        %2671 = vmatpush2.msra.mxu0 0.0
        %2672 = vmatprep.subr.mxu0 0.0
        %2673 = vmatpush2.msra.mxu0 0.0
        %2674 = vmatprep.subr.mxu0 0.0
        %2675 = vmatpush2.msra.mxu0 0.0
        %2676 = vmatprep.subr.mxu0 0.0
        %2677 = vmatpush2.msra.mxu0 0.0
        %2678 = vmatprep.subr.mxu0 0.0
        %2679 = vmatpush2.msra.mxu0 0.0
        %2680 = vmatprep.subr.mxu0 0.0
        %2681 = vmatpush2.msra.mxu0 0.0
        %2682 = vmatprep.subr.mxu0 0.0
        %2683 = vmatpush2.msra.mxu0 0.0
        %2684 = vmatprep.mubr.f32.mxu0 0.0
        %2685 = vmatmul.mubr.f32.gmra.mxu0 %v2609
        %v2686 = vpop.f32.mrf.mxu0
        %v2687 = vadd.f32 %v2534, %v2686
        %v2688 = vpop.f32.mrf.mxu0
        %v2689 = vadd.f32 %v2536, %v2688
        %2690 = vmatprep.mubr.f32.mxu0 0.0
        %2691 = vmatmul.mubr.f32.gmra.mxu0 %v2612
        %v2692 = vpop.f32.mrf.mxu0
        %v2693 = vadd.f32 %v2540, %v2692
        %v2694 = vpop.f32.mrf.mxu0
        %v2695 = vadd.f32 %v2542, %v2694
        %2696 = vmatprep.mubr.f32.mxu0 0.0
        %2697 = vmatmul.mubr.f32.gmra.mxu0 %v2615
        %v2698 = vpop.f32.mrf.mxu0
        %v2699 = vadd.f32 %v2546, %v2698
        %v2700 = vpop.f32.mrf.mxu0
        %v2701 = vadd.f32 %v2548, %v2700
        %2702 = vmatprep.mubr.f32.mxu0 0.0
        %2703 = vmatmul.mubr.f32.gmra.mxu0 %v2618
        %v2704 = vpop.f32.mrf.mxu0
        %v2705 = vadd.f32 %v2552, %v2704
        %v2706 = vpop.f32.mrf.mxu0
        %v2707 = vadd.f32 %v2554, %v2706
        %2708 = vdwg.mxu0
        %v2709 = vmul.f32 %v2370, %v1064
        %v2710 = vmul.f32 %v2371, %v1068
        %v2711 = vmul.f32 %v2372, %v1066
        %v2712 = vmul.f32 %v2373, %v1064
        %v2713 = vmul.f32 %v2374, %v1068
        %v2714 = vmul.f32 %v2375, %v1066
        %v2715 = vmul.f32 %v2376, %v1064
        %v2716 = vmul.f32 %v2377, %v1068
        %v2717 = vmul.f32 %v2378, %v1066
        %v2718 = vmul.f32 %v2379, %v1064
        %v2719 = vmul.f32 %v2380, %v1068
        %v2720 = vmul.f32 %v2381, %v1066
        %s2721 = scalar_lea.vmem [#allocation6], 64
        %v2722 = vld [vmem:[%s2721] sm:$0xff]
        %v2723 = vld [vmem:[%s2721 + $0x8] sm:$0xff]
        %v2724 = vld [vmem:[%s2721 + $0x10] sm:$0xff]
        %v2725 = vld [vmem:[%s2721 + $0x18] sm:$0xff]
        %2738 = vrot.lane.b32.xlu0 %v2709, 15
        %v2739 = vpop.permute.xlu0 %2738
        %2740 = vrot.lane.b32.xlu0 %v2710, 15
        %v2741 = vpop.permute.xlu0 %2740
        %2742 = vrot.lane.b32.xlu0 %v2711, 15
        %v2743 = vpop.permute.xlu0 %2742
        %2744 = vrot.lane.b32.xlu0 %v2712, 15
        %v2745 = vpop.permute.xlu0 %2744
        %2746 = vrot.lane.b32.xlu0 %v2713, 15
        %v2747 = vpop.permute.xlu0 %2746
        %2748 = vrot.lane.b32.xlu0 %v2714, 15
        %v2749 = vpop.permute.xlu0 %2748
        %2750 = vrot.lane.b32.xlu0 %v2715, 15
        %v2751 = vpop.permute.xlu0 %2750
        %2752 = vrot.lane.b32.xlu0 %v2716, 15
        %v2753 = vpop.permute.xlu0 %2752
        %2754 = vrot.lane.b32.xlu0 %v2717, 15
        %v2755 = vpop.permute.xlu0 %2754
        %2756 = vrot.lane.b32.xlu0 %v2718, 15
        %v2757 = vpop.permute.xlu0 %2756
        %2758 = vrot.lane.b32.xlu0 %v2719, 15
        %v2759 = vpop.permute.xlu0 %2758
        %2760 = vrot.lane.b32.xlu0 %v2720, 15
        %v2761 = vpop.permute.xlu0 %2760
        %v2762 = vsel %vm1125, %v2739, %v2741
        %v2763 = vsel %vm1125, %v2741, %v2743
        %v2764 = vsel %vm1125, %v2745, %v2747
        %v2765 = vsel %vm1125, %v2747, %v2749
        %v2766 = vsel %vm1125, %v2751, %v2753
        %v2767 = vsel %vm1125, %v2753, %v2755
        %v2768 = vsel %vm1125, %v2757, %v2759
        %v2769 = vsel %vm1125, %v2759, %v2761
        %v2779 = vsel %vm805, %v2722, 0
        %v2782 = vsel %vm805, %v2723, 0
        %v2785 = vsel %vm805, %v2724, 0
        %v2788 = vsel %vm805, %v2725, 0
        %2790 = vmatprep.subr.mxu0 0.0
        %2791 = vmatpush1.msra.mxu0 0.0
        %2792 = vmatprep.subr.mxu0 0.0
        %2793 = vmatpush1.msra.mxu0 0.0
        %2794 = vmatprep.subr.mxu0 0.0
        %2795 = vmatpush1.msra.mxu0 0.0
        %2796 = vmatprep.subr.mxu0 0.0
        %2797 = vmatpush1.msra.mxu0 0.0
        %2798 = vmatprep.subr.mxu0 0.0
        %2799 = vmatpush1.msra.mxu0 0.0
        %2800 = vmatprep.subr.mxu0 0.0
        %2801 = vmatpush1.msra.mxu0 0.0
        %2802 = vmatprep.subr.mxu0 0.0
        %2803 = vmatpush1.msra.mxu0 0.0
        %2804 = vmatprep.subr.mxu0 0.0
        %2805 = vmatpush1.msra.mxu0 0.0
        %2806 = vmatprep.subr.mxu0 0.0
        %2807 = vmatpush1.msra.mxu0 0.0
        %2808 = vmatprep.subr.mxu0 0.0
        %2809 = vmatpush1.msra.mxu0 0.0
        %2810 = vmatprep.subr.mxu0 0.0
        %2811 = vmatpush1.msra.mxu0 0.0
        %2812 = vmatprep.subr.mxu0 0.0
        %2813 = vmatpush1.msra.mxu0 0.0
        %2814 = vmatprep.subr.mxu0 %v2769
        %2815 = vmatpush1.msra.mxu0 %v2768
        %2816 = vmatprep.subr.mxu0 %v2767
        %2817 = vmatpush1.msra.mxu0 %v2766
        %2818 = vmatprep.subr.mxu0 %v2765
        %2819 = vmatpush1.msra.mxu0 %v2764
        %2820 = vmatprep.subr.mxu0 %v2763
        %2821 = vmatpush1.msra.mxu0 %v2762
        %2822 = vmatprep.subr.mxu0 0.0
        %2823 = vmatpush2.msra.mxu0 0.0
        %2824 = vmatprep.subr.mxu0 0.0
        %2825 = vmatpush2.msra.mxu0 0.0
        %2826 = vmatprep.subr.mxu0 0.0
        %2827 = vmatpush2.msra.mxu0 0.0
        %2828 = vmatprep.subr.mxu0 0.0
        %2829 = vmatpush2.msra.mxu0 0.0
        %2830 = vmatprep.subr.mxu0 0.0
        %2831 = vmatpush2.msra.mxu0 0.0
        %2832 = vmatprep.subr.mxu0 0.0
        %2833 = vmatpush2.msra.mxu0 0.0
        %2834 = vmatprep.subr.mxu0 0.0
        %2835 = vmatpush2.msra.mxu0 0.0
        %2836 = vmatprep.subr.mxu0 0.0
        %2837 = vmatpush2.msra.mxu0 0.0
        %2838 = vmatprep.subr.mxu0 0.0
        %2839 = vmatpush2.msra.mxu0 0.0
        %2840 = vmatprep.subr.mxu0 0.0
        %2841 = vmatpush2.msra.mxu0 0.0
        %2842 = vmatprep.subr.mxu0 0.0
        %2843 = vmatpush2.msra.mxu0 0.0
        %2844 = vmatprep.subr.mxu0 0.0
        %2845 = vmatpush2.msra.mxu0 0.0
        %2846 = vmatprep.subr.mxu0 0.0
        %2847 = vmatpush2.msra.mxu0 0.0
        %2848 = vmatprep.subr.mxu0 0.0
        %2849 = vmatpush2.msra.mxu0 0.0
        %2850 = vmatprep.subr.mxu0 0.0
        %2851 = vmatpush2.msra.mxu0 0.0
        %2852 = vmatprep.subr.mxu0 0.0
        %2853 = vmatpush2.msra.mxu0 0.0
        %2854 = vmatprep.mubr.f32.mxu0 0.0
        %2855 = vmatmul.mubr.f32.gmra.mxu0 %v2779
        %v2856 = vpop.f32.mrf.mxu0
        %v2857 = vadd.f32 0.0, %v2856
        %v2858 = vpop.f32.mrf.mxu0
        %v2859 = vadd.f32 0.0, %v2858
        %2860 = vmatprep.mubr.f32.mxu0 0.0
        %2861 = vmatmul.mubr.f32.gmra.mxu0 %v2782
        %v2862 = vpop.f32.mrf.mxu0
        %v2863 = vadd.f32 0.0, %v2862
        %v2864 = vpop.f32.mrf.mxu0
        %v2865 = vadd.f32 0.0, %v2864
        %2866 = vmatprep.mubr.f32.mxu0 0.0
        %2867 = vmatmul.mubr.f32.gmra.mxu0 %v2785
        %v2868 = vpop.f32.mrf.mxu0
        %v2869 = vadd.f32 0.0, %v2868
        %v2870 = vpop.f32.mrf.mxu0
        %v2871 = vadd.f32 0.0, %v2870
        %2872 = vmatprep.mubr.f32.mxu0 0.0
        %2873 = vmatmul.mubr.f32.gmra.mxu0 %v2788
        %v2874 = vpop.f32.mrf.mxu0
        %v2875 = vadd.f32 0.0, %v2874
        %v2876 = vpop.f32.mrf.mxu0
        %v2877 = vadd.f32 0.0, %v2876
        %2878 = vdwg.mxu0
        %v2879 = vadd.f32 %v2687, %v2857
        %v2880 = vadd.f32 %v2689, %v2859
        %v2881 = vadd.f32 %v2693, %v2863
        %v2882 = vadd.f32 %v2695, %v2865
        %v2883 = vadd.f32 %v2699, %v2869
        %v2884 = vadd.f32 %v2701, %v2871
        %v2885 = vadd.f32 %v2705, %v2875
        %v2886 = vadd.f32 %v2707, %v2877
        %v2887 = vmul.f32 %v2370, %v1252
        %v2888 = vmul.f32 %v2371, %v1256
        %v2889 = vmul.f32 %v2372, %v1254
        %v2890 = vmul.f32 %v2373, %v1252
        %v2891 = vmul.f32 %v2374, %v1256
        %v2892 = vmul.f32 %v2375, %v1254
        %v2893 = vmul.f32 %v2376, %v1252
        %v2894 = vmul.f32 %v2377, %v1256
        %v2895 = vmul.f32 %v2378, %v1254
        %v2896 = vmul.f32 %v2379, %v1252
        %v2897 = vmul.f32 %v2380, %v1256
        %v2898 = vmul.f32 %v2381, %v1254
        %s2899 = scalar_lea.vmem [#allocation6], 96
        %v2900 = vld [vmem:[%s2899] sm:$0xff]
        %v2901 = vld [vmem:[%s2899 + $0x8] sm:$0xff]
        %v2902 = vld [vmem:[%s2899 + $0x10] sm:$0xff]
        %v2903 = vld [vmem:[%s2899 + $0x18] sm:$0xff]
        %2916 = vrot.lane.b32.xlu0 %v2887, 1
        %v2917 = vpop.permute.xlu0 %2916
        %2918 = vrot.lane.b32.xlu0 %v2888, 1
        %v2919 = vpop.permute.xlu0 %2918
        %2920 = vrot.lane.b32.xlu0 %v2889, 1
        %v2921 = vpop.permute.xlu0 %2920
        %2922 = vrot.lane.b32.xlu0 %v2890, 1
        %v2923 = vpop.permute.xlu0 %2922
        %2924 = vrot.lane.b32.xlu0 %v2891, 1
        %v2925 = vpop.permute.xlu0 %2924
        %2926 = vrot.lane.b32.xlu0 %v2892, 1
        %v2927 = vpop.permute.xlu0 %2926
        %2928 = vrot.lane.b32.xlu0 %v2893, 1
        %v2929 = vpop.permute.xlu0 %2928
        %2930 = vrot.lane.b32.xlu0 %v2894, 1
        %v2931 = vpop.permute.xlu0 %2930
        %2932 = vrot.lane.b32.xlu0 %v2895, 1
        %v2933 = vpop.permute.xlu0 %2932
        %2934 = vrot.lane.b32.xlu0 %v2896, 1
        %v2935 = vpop.permute.xlu0 %2934
        %2936 = vrot.lane.b32.xlu0 %v2897, 1
        %v2937 = vpop.permute.xlu0 %2936
        %2938 = vrot.lane.b32.xlu0 %v2898, 1
        %v2939 = vpop.permute.xlu0 %2938
        %v2940 = vsel %vm1313, %v2917, %v2919
        %v2941 = vsel %vm1313, %v2919, %v2921
        %v2942 = vsel %vm1313, %v2923, %v2925
        %v2943 = vsel %vm1313, %v2925, %v2927
        %v2944 = vsel %vm1313, %v2929, %v2931
        %v2945 = vsel %vm1313, %v2931, %v2933
        %v2946 = vsel %vm1313, %v2935, %v2937
        %v2947 = vsel %vm1313, %v2937, %v2939
        %v2957 = vsel %vm805, %v2900, 0
        %v2960 = vsel %vm805, %v2901, 0
        %v2963 = vsel %vm805, %v2902, 0
        %v2966 = vsel %vm805, %v2903, 0
        %2968 = vmatprep.subr.mxu0 0.0
        %2969 = vmatpush1.msra.mxu0 0.0
        %2970 = vmatprep.subr.mxu0 0.0
        %2971 = vmatpush1.msra.mxu0 0.0
        %2972 = vmatprep.subr.mxu0 0.0
        %2973 = vmatpush1.msra.mxu0 0.0
        %2974 = vmatprep.subr.mxu0 0.0
        %2975 = vmatpush1.msra.mxu0 0.0
        %2976 = vmatprep.subr.mxu0 0.0
        %2977 = vmatpush1.msra.mxu0 0.0
        %2978 = vmatprep.subr.mxu0 0.0
        %2979 = vmatpush1.msra.mxu0 0.0
        %2980 = vmatprep.subr.mxu0 0.0
        %2981 = vmatpush1.msra.mxu0 0.0
        %2982 = vmatprep.subr.mxu0 0.0
        %2983 = vmatpush1.msra.mxu0 0.0
        %2984 = vmatprep.subr.mxu0 0.0
        %2985 = vmatpush1.msra.mxu0 0.0
        %2986 = vmatprep.subr.mxu0 0.0
        %2987 = vmatpush1.msra.mxu0 0.0
        %2988 = vmatprep.subr.mxu0 0.0
        %2989 = vmatpush1.msra.mxu0 0.0
        %2990 = vmatprep.subr.mxu0 0.0
        %2991 = vmatpush1.msra.mxu0 0.0
        %2992 = vmatprep.subr.mxu0 %v2947
        %2993 = vmatpush1.msra.mxu0 %v2946
        %2994 = vmatprep.subr.mxu0 %v2945
        %2995 = vmatpush1.msra.mxu0 %v2944
        %2996 = vmatprep.subr.mxu0 %v2943
        %2997 = vmatpush1.msra.mxu0 %v2942
        %2998 = vmatprep.subr.mxu0 %v2941
        %2999 = vmatpush1.msra.mxu0 %v2940
        %3000 = vmatprep.subr.mxu0 0.0
        %3001 = vmatpush2.msra.mxu0 0.0
        %3002 = vmatprep.subr.mxu0 0.0
        %3003 = vmatpush2.msra.mxu0 0.0
        %3004 = vmatprep.subr.mxu0 0.0
        %3005 = vmatpush2.msra.mxu0 0.0
        %3006 = vmatprep.subr.mxu0 0.0
        %3007 = vmatpush2.msra.mxu0 0.0
        %3008 = vmatprep.subr.mxu0 0.0
        %3009 = vmatpush2.msra.mxu0 0.0
        %3010 = vmatprep.subr.mxu0 0.0
        %3011 = vmatpush2.msra.mxu0 0.0
        %3012 = vmatprep.subr.mxu0 0.0
        %3013 = vmatpush2.msra.mxu0 0.0
        %3014 = vmatprep.subr.mxu0 0.0
        %3015 = vmatpush2.msra.mxu0 0.0
        %3016 = vmatprep.subr.mxu0 0.0
        %3017 = vmatpush2.msra.mxu0 0.0
        %3018 = vmatprep.subr.mxu0 0.0
        %3019 = vmatpush2.msra.mxu0 0.0
        %3020 = vmatprep.subr.mxu0 0.0
        %3021 = vmatpush2.msra.mxu0 0.0
        %3022 = vmatprep.subr.mxu0 0.0
        %3023 = vmatpush2.msra.mxu0 0.0
        %3024 = vmatprep.subr.mxu0 0.0
        %3025 = vmatpush2.msra.mxu0 0.0
        %3026 = vmatprep.subr.mxu0 0.0
        %3027 = vmatpush2.msra.mxu0 0.0
        %3028 = vmatprep.subr.mxu0 0.0
        %3029 = vmatpush2.msra.mxu0 0.0
        %3030 = vmatprep.subr.mxu0 0.0
        %3031 = vmatpush2.msra.mxu0 0.0
        %3032 = vmatprep.mubr.f32.mxu0 0.0
        %3033 = vmatmul.mubr.f32.gmra.mxu0 %v2957
        %v3034 = vpop.f32.mrf.mxu0
        %v3035 = vadd.f32 0.0, %v3034
        %v3036 = vpop.f32.mrf.mxu0
        %v3037 = vadd.f32 0.0, %v3036
        %3038 = vmatprep.mubr.f32.mxu0 0.0
        %3039 = vmatmul.mubr.f32.gmra.mxu0 %v2960
        %v3040 = vpop.f32.mrf.mxu0
        %v3041 = vadd.f32 0.0, %v3040
        %v3042 = vpop.f32.mrf.mxu0
        %v3043 = vadd.f32 0.0, %v3042
        %3044 = vmatprep.mubr.f32.mxu0 0.0
        %3045 = vmatmul.mubr.f32.gmra.mxu0 %v2963
        %v3046 = vpop.f32.mrf.mxu0
        %v3047 = vadd.f32 0.0, %v3046
        %v3048 = vpop.f32.mrf.mxu0
        %v3049 = vadd.f32 0.0, %v3048
        %3050 = vmatprep.mubr.f32.mxu0 0.0
        %3051 = vmatmul.mubr.f32.gmra.mxu0 %v2966
        %v3052 = vpop.f32.mrf.mxu0
        %v3053 = vadd.f32 0.0, %v3052
        %v3054 = vpop.f32.mrf.mxu0
        %v3055 = vadd.f32 0.0, %v3054
        %3056 = vdwg.mxu0
        %v3057 = vadd.f32 %v2879, %v3035
        %v3058 = vadd.f32 %v2880, %v3037
        %v3059 = vadd.f32 %v2881, %v3041
        %v3060 = vadd.f32 %v2882, %v3043
        %v3061 = vadd.f32 %v2883, %v3047
        %v3062 = vadd.f32 %v2884, %v3049
        %v3063 = vadd.f32 %v2885, %v3053
        %v3064 = vadd.f32 %v2886, %v3055
        %s3065 = scalar_lea.vmem [#allocation6], 128
        %v3066 = vld [vmem:[%s3065] sm:$0xff]
        %v3067 = vld [vmem:[%s3065 + $0x8] sm:$0xff]
        %v3068 = vld [vmem:[%s3065 + $0x10] sm:$0xff]
        %v3069 = vld [vmem:[%s3065 + $0x18] sm:$0xff]
        %v3071 = vsel %vm805, %v3066, 0
        %v3074 = vsel %vm805, %v3067, 0
        %v3077 = vsel %vm805, %v3068, 0
        %v3080 = vsel %vm805, %v3069, 0
        %3082 = vmatprep.subr.mxu0 0.0
        %3083 = vmatpush1.msra.mxu0 0.0
        %3084 = vmatprep.subr.mxu0 0.0
        %3085 = vmatpush1.msra.mxu0 0.0
        %3086 = vmatprep.subr.mxu0 0.0
        %3087 = vmatpush1.msra.mxu0 0.0
        %3088 = vmatprep.subr.mxu0 0.0
        %3089 = vmatpush1.msra.mxu0 0.0
        %3090 = vmatprep.subr.mxu0 0.0
        %3091 = vmatpush1.msra.mxu0 0.0
        %3092 = vmatprep.subr.mxu0 0.0
        %3093 = vmatpush1.msra.mxu0 0.0
        %3094 = vmatprep.subr.mxu0 0.0
        %3095 = vmatpush1.msra.mxu0 0.0
        %3096 = vmatprep.subr.mxu0 0.0
        %3097 = vmatpush1.msra.mxu0 0.0
        %3098 = vmatprep.subr.mxu0 0.0
        %3099 = vmatpush1.msra.mxu0 0.0
        %3100 = vmatprep.subr.mxu0 0.0
        %3101 = vmatpush1.msra.mxu0 0.0
        %3102 = vmatprep.subr.mxu0 0.0
        %3103 = vmatpush1.msra.mxu0 0.0
        %3104 = vmatprep.subr.mxu0 0.0
        %3105 = vmatpush1.msra.mxu0 0.0
        %3106 = vmatprep.subr.mxu0 %v2381
        %3107 = vmatpush1.msra.mxu0 %v2380
        %3108 = vmatprep.subr.mxu0 %v2378
        %3109 = vmatpush1.msra.mxu0 %v2377
        %3110 = vmatprep.subr.mxu0 %v2375
        %3111 = vmatpush1.msra.mxu0 %v2374
        %3112 = vmatprep.subr.mxu0 %v2372
        %3113 = vmatpush1.msra.mxu0 %v2371
        %3114 = vmatprep.subr.mxu0 0.0
        %3115 = vmatpush2.msra.mxu0 0.0
        %3116 = vmatprep.subr.mxu0 0.0
        %3117 = vmatpush2.msra.mxu0 0.0
        %3118 = vmatprep.subr.mxu0 0.0
        %3119 = vmatpush2.msra.mxu0 0.0
        %3120 = vmatprep.subr.mxu0 0.0
        %3121 = vmatpush2.msra.mxu0 0.0
        %3122 = vmatprep.subr.mxu0 0.0
        %3123 = vmatpush2.msra.mxu0 0.0
        %3124 = vmatprep.subr.mxu0 0.0
        %3125 = vmatpush2.msra.mxu0 0.0
        %3126 = vmatprep.subr.mxu0 0.0
        %3127 = vmatpush2.msra.mxu0 0.0
        %3128 = vmatprep.subr.mxu0 0.0
        %3129 = vmatpush2.msra.mxu0 0.0
        %3130 = vmatprep.subr.mxu0 0.0
        %3131 = vmatpush2.msra.mxu0 0.0
        %3132 = vmatprep.subr.mxu0 0.0
        %3133 = vmatpush2.msra.mxu0 0.0
        %3134 = vmatprep.subr.mxu0 0.0
        %3135 = vmatpush2.msra.mxu0 0.0
        %3136 = vmatprep.subr.mxu0 0.0
        %3137 = vmatpush2.msra.mxu0 0.0
        %3138 = vmatprep.subr.mxu0 0.0
        %3139 = vmatpush2.msra.mxu0 0.0
        %3140 = vmatprep.subr.mxu0 0.0
        %3141 = vmatpush2.msra.mxu0 0.0
        %3142 = vmatprep.subr.mxu0 0.0
        %3143 = vmatpush2.msra.mxu0 0.0
        %3144 = vmatprep.subr.mxu0 0.0
        %3145 = vmatpush2.msra.mxu0 0.0
        %3146 = vmatprep.mubr.f32.mxu0 0.0
        %3147 = vmatmul.mubr.f32.gmra.mxu0 %v3071
        %v3148 = vpop.f32.mrf.mxu0
        %v3149 = vadd.f32 0.0, %v3148
        %v3150 = vpop.f32.mrf.mxu0
        %v3151 = vadd.f32 0.0, %v3150
        %3152 = vmatprep.mubr.f32.mxu0 0.0
        %3153 = vmatmul.mubr.f32.gmra.mxu0 %v3074
        %v3154 = vpop.f32.mrf.mxu0
        %v3155 = vadd.f32 0.0, %v3154
        %v3156 = vpop.f32.mrf.mxu0
        %v3157 = vadd.f32 0.0, %v3156
        %3158 = vmatprep.mubr.f32.mxu0 0.0
        %3159 = vmatmul.mubr.f32.gmra.mxu0 %v3077
        %v3160 = vpop.f32.mrf.mxu0
        %v3161 = vadd.f32 0.0, %v3160
        %v3162 = vpop.f32.mrf.mxu0
        %v3163 = vadd.f32 0.0, %v3162
        %3164 = vmatprep.mubr.f32.mxu0 0.0
        %3165 = vmatmul.mubr.f32.gmra.mxu0 %v3080
        %v3166 = vpop.f32.mrf.mxu0
        %v3167 = vadd.f32 0.0, %v3166
        %v3168 = vpop.f32.mrf.mxu0
        %v3169 = vadd.f32 0.0, %v3168
        %3170 = vdwg.mxu0
        %v3171 = vadd.f32 %v3057, %v3149
        %v3172 = vadd.f32 %v3058, %v3151
        %v3173 = vadd.f32 %v3059, %v3155
        %v3174 = vadd.f32 %v3060, %v3157
        %v3175 = vadd.f32 %v3061, %v3161
        %v3176 = vadd.f32 %v3062, %v3163
        %v3177 = vadd.f32 %v3063, %v3167
        %v3178 = vadd.f32 %v3064, %v3169
        %v3179 = vld [vmem:[#allocation2 + $0x8] sm:$0xff]
        %v3180 = vld [vmem:[#allocation2 + $0x10] sm:$0xff]
        %v3181 = vld [vmem:[#allocation2 + $0x18] sm:$0xff]
        %v3182 = vld [vmem:[#allocation2 + $0x28] sm:$0xff]
        %v3183 = vld [vmem:[#allocation2 + $0x30] sm:$0xff]
        %v3184 = vld [vmem:[#allocation2 + $0x38] sm:$0xff]
        %v3185 = vld [vmem:[#allocation2 + $0x48] sm:$0xff]
        %v3186 = vld [vmem:[#allocation2 + $0x50] sm:$0xff]
        %v3187 = vld [vmem:[#allocation2 + $0x58] sm:$0xff]
        %v3188 = vld [vmem:[#allocation2 + $0x68] sm:$0xff]
        %v3189 = vld [vmem:[#allocation2 + $0x70] sm:$0xff]
        %v3190 = vld [vmem:[#allocation2 + $0x78] sm:$0xff]
        %v3191 = vmul.f32 %v3179, %v1566
        %v3192 = vmul.f32 %v3180, %v1569
        %v3193 = vmul.f32 %v3181, %v1568
        %v3194 = vmul.f32 %v3182, %v1566
        %v3195 = vmul.f32 %v3183, %v1569
        %v3196 = vmul.f32 %v3184, %v1568
        %v3197 = vmul.f32 %v3185, %v1566
        %v3198 = vmul.f32 %v3186, %v1569
        %v3199 = vmul.f32 %v3187, %v1568
        %v3200 = vmul.f32 %v3188, %v1566
        %v3201 = vmul.f32 %v3189, %v1569
        %v3202 = vmul.f32 %v3190, %v1568
        %s3203 = scalar_lea.vmem [#allocation6], 160
        %v3204 = vld [vmem:[%s3203] sm:$0xff]
        %v3205 = vld [vmem:[%s3203 + $0x8] sm:$0xff]
        %v3206 = vld [vmem:[%s3203 + $0x10] sm:$0xff]
        %v3207 = vld [vmem:[%s3203 + $0x18] sm:$0xff]
        %3220 = vrot.lane.b32.xlu0 %v3191, 127
        %v3221 = vpop.permute.xlu0 %3220
        %3222 = vrot.lane.b32.xlu0 %v3192, 127
        %v3223 = vpop.permute.xlu0 %3222
        %3224 = vrot.lane.b32.xlu0 %v3193, 127
        %v3225 = vpop.permute.xlu0 %3224
        %3226 = vrot.lane.b32.xlu0 %v3194, 127
        %v3227 = vpop.permute.xlu0 %3226
        %3228 = vrot.lane.b32.xlu0 %v3195, 127
        %v3229 = vpop.permute.xlu0 %3228
        %3230 = vrot.lane.b32.xlu0 %v3196, 127
        %v3231 = vpop.permute.xlu0 %3230
        %3232 = vrot.lane.b32.xlu0 %v3197, 127
        %v3233 = vpop.permute.xlu0 %3232
        %3234 = vrot.lane.b32.xlu0 %v3198, 127
        %v3235 = vpop.permute.xlu0 %3234
        %3236 = vrot.lane.b32.xlu0 %v3199, 127
        %v3237 = vpop.permute.xlu0 %3236
        %3238 = vrot.lane.b32.xlu0 %v3200, 127
        %v3239 = vpop.permute.xlu0 %3238
        %3240 = vrot.lane.b32.xlu0 %v3201, 127
        %v3241 = vpop.permute.xlu0 %3240
        %3242 = vrot.lane.b32.xlu0 %v3202, 127
        %v3243 = vpop.permute.xlu0 %3242
        %v3244 = vsel %vm1255, %v3221, %v3223
        %v3245 = vsel %vm1255, %v3223, %v3225
        %v3246 = vsel %vm1255, %v3227, %v3229
        %v3247 = vsel %vm1255, %v3229, %v3231
        %v3248 = vsel %vm1255, %v3233, %v3235
        %v3249 = vsel %vm1255, %v3235, %v3237
        %v3250 = vsel %vm1255, %v3239, %v3241
        %v3251 = vsel %vm1255, %v3241, %v3243
        %v3261 = vsel %vm805, %v3204, 0
        %v3264 = vsel %vm805, %v3205, 0
        %v3267 = vsel %vm805, %v3206, 0
        %v3270 = vsel %vm805, %v3207, 0
        %3272 = vmatprep.subr.mxu0 0.0
        %3273 = vmatpush1.msra.mxu0 0.0
        %3274 = vmatprep.subr.mxu0 0.0
        %3275 = vmatpush1.msra.mxu0 0.0
        %3276 = vmatprep.subr.mxu0 0.0
        %3277 = vmatpush1.msra.mxu0 0.0
        %3278 = vmatprep.subr.mxu0 0.0
        %3279 = vmatpush1.msra.mxu0 0.0
        %3280 = vmatprep.subr.mxu0 0.0
        %3281 = vmatpush1.msra.mxu0 0.0
        %3282 = vmatprep.subr.mxu0 0.0
        %3283 = vmatpush1.msra.mxu0 0.0
        %3284 = vmatprep.subr.mxu0 0.0
        %3285 = vmatpush1.msra.mxu0 0.0
        %3286 = vmatprep.subr.mxu0 0.0
        %3287 = vmatpush1.msra.mxu0 0.0
        %3288 = vmatprep.subr.mxu0 0.0
        %3289 = vmatpush1.msra.mxu0 0.0
        %3290 = vmatprep.subr.mxu0 0.0
        %3291 = vmatpush1.msra.mxu0 0.0
        %3292 = vmatprep.subr.mxu0 0.0
        %3293 = vmatpush1.msra.mxu0 0.0
        %3294 = vmatprep.subr.mxu0 0.0
        %3295 = vmatpush1.msra.mxu0 0.0
        %3296 = vmatprep.subr.mxu0 %v3251
        %3297 = vmatpush1.msra.mxu0 %v3250
        %3298 = vmatprep.subr.mxu0 %v3249
        %3299 = vmatpush1.msra.mxu0 %v3248
        %3300 = vmatprep.subr.mxu0 %v3247
        %3301 = vmatpush1.msra.mxu0 %v3246
        %3302 = vmatprep.subr.mxu0 %v3245
        %3303 = vmatpush1.msra.mxu0 %v3244
        %3304 = vmatprep.subr.mxu0 0.0
        %3305 = vmatpush2.msra.mxu0 0.0
        %3306 = vmatprep.subr.mxu0 0.0
        %3307 = vmatpush2.msra.mxu0 0.0
        %3308 = vmatprep.subr.mxu0 0.0
        %3309 = vmatpush2.msra.mxu0 0.0
        %3310 = vmatprep.subr.mxu0 0.0
        %3311 = vmatpush2.msra.mxu0 0.0
        %3312 = vmatprep.subr.mxu0 0.0
        %3313 = vmatpush2.msra.mxu0 0.0
        %3314 = vmatprep.subr.mxu0 0.0
        %3315 = vmatpush2.msra.mxu0 0.0
        %3316 = vmatprep.subr.mxu0 0.0
        %3317 = vmatpush2.msra.mxu0 0.0
        %3318 = vmatprep.subr.mxu0 0.0
        %3319 = vmatpush2.msra.mxu0 0.0
        %3320 = vmatprep.subr.mxu0 0.0
        %3321 = vmatpush2.msra.mxu0 0.0
        %3322 = vmatprep.subr.mxu0 0.0
        %3323 = vmatpush2.msra.mxu0 0.0
        %3324 = vmatprep.subr.mxu0 0.0
        %3325 = vmatpush2.msra.mxu0 0.0
        %3326 = vmatprep.subr.mxu0 0.0
        %3327 = vmatpush2.msra.mxu0 0.0
        %3328 = vmatprep.subr.mxu0 0.0
        %3329 = vmatpush2.msra.mxu0 0.0
        %3330 = vmatprep.subr.mxu0 0.0
        %3331 = vmatpush2.msra.mxu0 0.0
        %3332 = vmatprep.subr.mxu0 0.0
        %3333 = vmatpush2.msra.mxu0 0.0
        %3334 = vmatprep.subr.mxu0 0.0
        %3335 = vmatpush2.msra.mxu0 0.0
        %3336 = vmatprep.mubr.f32.mxu0 0.0
        %3337 = vmatmul.mubr.f32.gmra.mxu0 %v3261
        %v3338 = vpop.f32.mrf.mxu0
        %v3339 = vadd.f32 0.0, %v3338
        %v3340 = vpop.f32.mrf.mxu0
        %v3341 = vadd.f32 0.0, %v3340
        %3342 = vmatprep.mubr.f32.mxu0 0.0
        %3343 = vmatmul.mubr.f32.gmra.mxu0 %v3264
        %v3344 = vpop.f32.mrf.mxu0
        %v3345 = vadd.f32 0.0, %v3344
        %v3346 = vpop.f32.mrf.mxu0
        %v3347 = vadd.f32 0.0, %v3346
        %3348 = vmatprep.mubr.f32.mxu0 0.0
        %3349 = vmatmul.mubr.f32.gmra.mxu0 %v3267
        %v3350 = vpop.f32.mrf.mxu0
        %v3351 = vadd.f32 0.0, %v3350
        %v3352 = vpop.f32.mrf.mxu0
        %v3353 = vadd.f32 0.0, %v3352
        %3354 = vmatprep.mubr.f32.mxu0 0.0
        %3355 = vmatmul.mubr.f32.gmra.mxu0 %v3270
        %v3356 = vpop.f32.mrf.mxu0
        %v3357 = vadd.f32 0.0, %v3356
        %v3358 = vpop.f32.mrf.mxu0
        %v3359 = vadd.f32 0.0, %v3358
        %3360 = vdwg.mxu0
        %v3361 = vadd.f32 %v3171, %v3339
        %v3362 = vadd.f32 %v3172, %v3341
        %v3363 = vadd.f32 %v3173, %v3345
        %v3364 = vadd.f32 %v3174, %v3347
        %v3365 = vadd.f32 %v3175, %v3351
        %v3366 = vadd.f32 %v3176, %v3353
        %v3367 = vadd.f32 %v3177, %v3357
        %v3368 = vadd.f32 %v3178, %v3359
        %v3369 = vmul.f32 %v3179, %v1752
        %v3370 = vmul.f32 %v3180, %v1755
        %v3371 = vmul.f32 %v3181, %v1754
        %v3372 = vmul.f32 %v3182, %v1752
        %v3373 = vmul.f32 %v3183, %v1755
        %v3374 = vmul.f32 %v3184, %v1754
        %v3375 = vmul.f32 %v3185, %v1752
        %v3376 = vmul.f32 %v3186, %v1755
        %v3377 = vmul.f32 %v3187, %v1754
        %v3378 = vmul.f32 %v3188, %v1752
        %v3379 = vmul.f32 %v3189, %v1755
        %v3380 = vmul.f32 %v3190, %v1754
        %s3381 = scalar_lea.vmem [#allocation6], 192
        %v3382 = vld [vmem:[%s3381] sm:$0xff]
        %v3383 = vld [vmem:[%s3381 + $0x8] sm:$0xff]
        %v3384 = vld [vmem:[%s3381 + $0x10] sm:$0xff]
        %v3385 = vld [vmem:[%s3381 + $0x18] sm:$0xff]
        %3398 = vrot.lane.b32.xlu0 %v3369, 113
        %v3399 = vpop.permute.xlu0 %3398
        %3400 = vrot.lane.b32.xlu0 %v3370, 113
        %v3401 = vpop.permute.xlu0 %3400
        %3402 = vrot.lane.b32.xlu0 %v3371, 113
        %v3403 = vpop.permute.xlu0 %3402
        %3404 = vrot.lane.b32.xlu0 %v3372, 113
        %v3405 = vpop.permute.xlu0 %3404
        %3406 = vrot.lane.b32.xlu0 %v3373, 113
        %v3407 = vpop.permute.xlu0 %3406
        %3408 = vrot.lane.b32.xlu0 %v3374, 113
        %v3409 = vpop.permute.xlu0 %3408
        %3410 = vrot.lane.b32.xlu0 %v3375, 113
        %v3411 = vpop.permute.xlu0 %3410
        %3412 = vrot.lane.b32.xlu0 %v3376, 113
        %v3413 = vpop.permute.xlu0 %3412
        %3414 = vrot.lane.b32.xlu0 %v3377, 113
        %v3415 = vpop.permute.xlu0 %3414
        %3416 = vrot.lane.b32.xlu0 %v3378, 113
        %v3417 = vpop.permute.xlu0 %3416
        %3418 = vrot.lane.b32.xlu0 %v3379, 113
        %v3419 = vpop.permute.xlu0 %3418
        %3420 = vrot.lane.b32.xlu0 %v3380, 113
        %v3421 = vpop.permute.xlu0 %3420
        %v3422 = vsel %vm1067, %v3399, %v3401
        %v3423 = vsel %vm1067, %v3401, %v3403
        %v3424 = vsel %vm1067, %v3405, %v3407
        %v3425 = vsel %vm1067, %v3407, %v3409
        %v3426 = vsel %vm1067, %v3411, %v3413
        %v3427 = vsel %vm1067, %v3413, %v3415
        %v3428 = vsel %vm1067, %v3417, %v3419
        %v3429 = vsel %vm1067, %v3419, %v3421
        %v3439 = vsel %vm805, %v3382, 0
        %v3442 = vsel %vm805, %v3383, 0
        %v3445 = vsel %vm805, %v3384, 0
        %v3448 = vsel %vm805, %v3385, 0
        %3450 = vmatprep.subr.mxu0 0.0
        %3451 = vmatpush1.msra.mxu0 0.0
        %3452 = vmatprep.subr.mxu0 0.0
        %3453 = vmatpush1.msra.mxu0 0.0
        %3454 = vmatprep.subr.mxu0 0.0
        %3455 = vmatpush1.msra.mxu0 0.0
        %3456 = vmatprep.subr.mxu0 0.0
        %3457 = vmatpush1.msra.mxu0 0.0
        %3458 = vmatprep.subr.mxu0 0.0
        %3459 = vmatpush1.msra.mxu0 0.0
        %3460 = vmatprep.subr.mxu0 0.0
        %3461 = vmatpush1.msra.mxu0 0.0
        %3462 = vmatprep.subr.mxu0 0.0
        %3463 = vmatpush1.msra.mxu0 0.0
        %3464 = vmatprep.subr.mxu0 0.0
        %3465 = vmatpush1.msra.mxu0 0.0
        %3466 = vmatprep.subr.mxu0 0.0
        %3467 = vmatpush1.msra.mxu0 0.0
        %3468 = vmatprep.subr.mxu0 0.0
        %3469 = vmatpush1.msra.mxu0 0.0
        %3470 = vmatprep.subr.mxu0 0.0
        %3471 = vmatpush1.msra.mxu0 0.0
        %3472 = vmatprep.subr.mxu0 0.0
        %3473 = vmatpush1.msra.mxu0 0.0
        %3474 = vmatprep.subr.mxu0 %v3429
        %3475 = vmatpush1.msra.mxu0 %v3428
        %3476 = vmatprep.subr.mxu0 %v3427
        %3477 = vmatpush1.msra.mxu0 %v3426
        %3478 = vmatprep.subr.mxu0 %v3425
        %3479 = vmatpush1.msra.mxu0 %v3424
        %3480 = vmatprep.subr.mxu0 %v3423
        %3481 = vmatpush1.msra.mxu0 %v3422
        %3482 = vmatprep.subr.mxu0 0.0
        %3483 = vmatpush2.msra.mxu0 0.0
        %3484 = vmatprep.subr.mxu0 0.0
        %3485 = vmatpush2.msra.mxu0 0.0
        %3486 = vmatprep.subr.mxu0 0.0
        %3487 = vmatpush2.msra.mxu0 0.0
        %3488 = vmatprep.subr.mxu0 0.0
        %3489 = vmatpush2.msra.mxu0 0.0
        %3490 = vmatprep.subr.mxu0 0.0
        %3491 = vmatpush2.msra.mxu0 0.0
        %3492 = vmatprep.subr.mxu0 0.0
        %3493 = vmatpush2.msra.mxu0 0.0
        %3494 = vmatprep.subr.mxu0 0.0
        %3495 = vmatpush2.msra.mxu0 0.0
        %3496 = vmatprep.subr.mxu0 0.0
        %3497 = vmatpush2.msra.mxu0 0.0
        %3498 = vmatprep.subr.mxu0 0.0
        %3499 = vmatpush2.msra.mxu0 0.0
        %3500 = vmatprep.subr.mxu0 0.0
        %3501 = vmatpush2.msra.mxu0 0.0
        %3502 = vmatprep.subr.mxu0 0.0
        %3503 = vmatpush2.msra.mxu0 0.0
        %3504 = vmatprep.subr.mxu0 0.0
        %3505 = vmatpush2.msra.mxu0 0.0
        %3506 = vmatprep.subr.mxu0 0.0
        %3507 = vmatpush2.msra.mxu0 0.0
        %3508 = vmatprep.subr.mxu0 0.0
        %3509 = vmatpush2.msra.mxu0 0.0
        %3510 = vmatprep.subr.mxu0 0.0
        %3511 = vmatpush2.msra.mxu0 0.0
        %3512 = vmatprep.subr.mxu0 0.0
        %3513 = vmatpush2.msra.mxu0 0.0
        %3514 = vmatprep.mubr.f32.mxu0 0.0
        %3515 = vmatmul.mubr.f32.gmra.mxu0 %v3439
        %v3516 = vpop.f32.mrf.mxu0
        %v3517 = vadd.f32 0.0, %v3516
        %v3518 = vpop.f32.mrf.mxu0
        %v3519 = vadd.f32 0.0, %v3518
        %3520 = vmatprep.mubr.f32.mxu0 0.0
        %3521 = vmatmul.mubr.f32.gmra.mxu0 %v3442
        %v3522 = vpop.f32.mrf.mxu0
        %v3523 = vadd.f32 0.0, %v3522
        %v3524 = vpop.f32.mrf.mxu0
        %v3525 = vadd.f32 0.0, %v3524
        %3526 = vmatprep.mubr.f32.mxu0 0.0
        %3527 = vmatmul.mubr.f32.gmra.mxu0 %v3445
        %v3528 = vpop.f32.mrf.mxu0
        %v3529 = vadd.f32 0.0, %v3528
        %v3530 = vpop.f32.mrf.mxu0
        %v3531 = vadd.f32 0.0, %v3530
        %3532 = vmatprep.mubr.f32.mxu0 0.0
        %3533 = vmatmul.mubr.f32.gmra.mxu0 %v3448
        %v3534 = vpop.f32.mrf.mxu0
        %v3535 = vadd.f32 0.0, %v3534
        %v3536 = vpop.f32.mrf.mxu0
        %v3537 = vadd.f32 0.0, %v3536
        %3538 = vdwg.mxu0
        %v3539 = vadd.f32 %v3361, %v3517
        %v3540 = vadd.f32 %v3362, %v3519
        %v3541 = vadd.f32 %v3363, %v3523
        %v3542 = vadd.f32 %v3364, %v3525
        %v3543 = vadd.f32 %v3365, %v3529
        %v3544 = vadd.f32 %v3366, %v3531
        %v3545 = vadd.f32 %v3367, %v3535
        %v3546 = vadd.f32 %v3368, %v3537
        %s3547 = scalar_lea.vmem [#allocation6], 224
        %v3548 = vld [vmem:[%s3547] sm:$0xff]
        %v3549 = vld [vmem:[%s3547 + $0x8] sm:$0xff]
        %v3550 = vld [vmem:[%s3547 + $0x10] sm:$0xff]
        %v3551 = vld [vmem:[%s3547 + $0x18] sm:$0xff]
        %3564 = vrot.lane.b32.xlu0 %v3179, 112
        %v3565 = vpop.permute.xlu0 %3564
        %3566 = vrot.lane.b32.xlu0 %v3180, 112
        %v3567 = vpop.permute.xlu0 %3566
        %3568 = vrot.lane.b32.xlu0 %v3181, 112
        %v3569 = vpop.permute.xlu0 %3568
        %3570 = vrot.lane.b32.xlu0 %v3182, 112
        %v3571 = vpop.permute.xlu0 %3570
        %3572 = vrot.lane.b32.xlu0 %v3183, 112
        %v3573 = vpop.permute.xlu0 %3572
        %3574 = vrot.lane.b32.xlu0 %v3184, 112
        %v3575 = vpop.permute.xlu0 %3574
        %3576 = vrot.lane.b32.xlu0 %v3185, 112
        %v3577 = vpop.permute.xlu0 %3576
        %3578 = vrot.lane.b32.xlu0 %v3186, 112
        %v3579 = vpop.permute.xlu0 %3578
        %3580 = vrot.lane.b32.xlu0 %v3187, 112
        %v3581 = vpop.permute.xlu0 %3580
        %3582 = vrot.lane.b32.xlu0 %v3188, 112
        %v3583 = vpop.permute.xlu0 %3582
        %3584 = vrot.lane.b32.xlu0 %v3189, 112
        %v3585 = vpop.permute.xlu0 %3584
        %3586 = vrot.lane.b32.xlu0 %v3190, 112
        %v3587 = vpop.permute.xlu0 %3586
        %v3588 = vsel %vm1978, %v3565, %v3567
        %v3589 = vsel %vm1978, %v3567, %v3569
        %v3590 = vsel %vm1978, %v3571, %v3573
        %v3591 = vsel %vm1978, %v3573, %v3575
        %v3592 = vsel %vm1978, %v3577, %v3579
        %v3593 = vsel %vm1978, %v3579, %v3581
        %v3594 = vsel %vm1978, %v3583, %v3585
        %v3595 = vsel %vm1978, %v3585, %v3587
        %v3605 = vsel %vm805, %v3548, 0
        %v3608 = vsel %vm805, %v3549, 0
        %v3611 = vsel %vm805, %v3550, 0
        %v3614 = vsel %vm805, %v3551, 0
        %3616 = vmatprep.subr.mxu0 0.0
        %3617 = vmatpush1.msra.mxu0 0.0
        %3618 = vmatprep.subr.mxu0 0.0
        %3619 = vmatpush1.msra.mxu0 0.0
        %3620 = vmatprep.subr.mxu0 0.0
        %3621 = vmatpush1.msra.mxu0 0.0
        %3622 = vmatprep.subr.mxu0 0.0
        %3623 = vmatpush1.msra.mxu0 0.0
        %3624 = vmatprep.subr.mxu0 0.0
        %3625 = vmatpush1.msra.mxu0 0.0
        %3626 = vmatprep.subr.mxu0 0.0
        %3627 = vmatpush1.msra.mxu0 0.0
        %3628 = vmatprep.subr.mxu0 0.0
        %3629 = vmatpush1.msra.mxu0 0.0
        %3630 = vmatprep.subr.mxu0 0.0
        %3631 = vmatpush1.msra.mxu0 0.0
        %3632 = vmatprep.subr.mxu0 0.0
        %3633 = vmatpush1.msra.mxu0 0.0
        %3634 = vmatprep.subr.mxu0 0.0
        %3635 = vmatpush1.msra.mxu0 0.0
        %3636 = vmatprep.subr.mxu0 0.0
        %3637 = vmatpush1.msra.mxu0 0.0
        %3638 = vmatprep.subr.mxu0 0.0
        %3639 = vmatpush1.msra.mxu0 0.0
        %3640 = vmatprep.subr.mxu0 %v3595
        %3641 = vmatpush1.msra.mxu0 %v3594
        %3642 = vmatprep.subr.mxu0 %v3593
        %3643 = vmatpush1.msra.mxu0 %v3592
        %3644 = vmatprep.subr.mxu0 %v3591
        %3645 = vmatpush1.msra.mxu0 %v3590
        %3646 = vmatprep.subr.mxu0 %v3589
        %3647 = vmatpush1.msra.mxu0 %v3588
        %3648 = vmatprep.subr.mxu0 0.0
        %3649 = vmatpush2.msra.mxu0 0.0
        %3650 = vmatprep.subr.mxu0 0.0
        %3651 = vmatpush2.msra.mxu0 0.0
        %3652 = vmatprep.subr.mxu0 0.0
        %3653 = vmatpush2.msra.mxu0 0.0
        %3654 = vmatprep.subr.mxu0 0.0
        %3655 = vmatpush2.msra.mxu0 0.0
        %3656 = vmatprep.subr.mxu0 0.0
        %3657 = vmatpush2.msra.mxu0 0.0
        %3658 = vmatprep.subr.mxu0 0.0
        %3659 = vmatpush2.msra.mxu0 0.0
        %3660 = vmatprep.subr.mxu0 0.0
        %3661 = vmatpush2.msra.mxu0 0.0
        %3662 = vmatprep.subr.mxu0 0.0
        %3663 = vmatpush2.msra.mxu0 0.0
        %3664 = vmatprep.subr.mxu0 0.0
        %3665 = vmatpush2.msra.mxu0 0.0
        %3666 = vmatprep.subr.mxu0 0.0
        %3667 = vmatpush2.msra.mxu0 0.0
        %3668 = vmatprep.subr.mxu0 0.0
        %3669 = vmatpush2.msra.mxu0 0.0
        %3670 = vmatprep.subr.mxu0 0.0
        %3671 = vmatpush2.msra.mxu0 0.0
        %3672 = vmatprep.subr.mxu0 0.0
        %3673 = vmatpush2.msra.mxu0 0.0
        %3674 = vmatprep.subr.mxu0 0.0
        %3675 = vmatpush2.msra.mxu0 0.0
        %3676 = vmatprep.subr.mxu0 0.0
        %3677 = vmatpush2.msra.mxu0 0.0
        %3678 = vmatprep.subr.mxu0 0.0
        %3679 = vmatpush2.msra.mxu0 0.0
        %3680 = vmatprep.mubr.f32.mxu0 0.0
        %3681 = vmatmul.mubr.f32.gmra.mxu0 %v3605
        %v3682 = vpop.f32.mrf.mxu0
        %v3683 = vadd.f32 0.0, %v3682
        %v3684 = vpop.f32.mrf.mxu0
        %v3685 = vadd.f32 0.0, %v3684
        %3686 = vmatprep.mubr.f32.mxu0 0.0
        %3687 = vmatmul.mubr.f32.gmra.mxu0 %v3608
        %v3688 = vpop.f32.mrf.mxu0
        %v3689 = vadd.f32 0.0, %v3688
        %v3690 = vpop.f32.mrf.mxu0
        %v3691 = vadd.f32 0.0, %v3690
        %3692 = vmatprep.mubr.f32.mxu0 0.0
        %3693 = vmatmul.mubr.f32.gmra.mxu0 %v3611
        %v3694 = vpop.f32.mrf.mxu0
        %v3695 = vadd.f32 0.0, %v3694
        %v3696 = vpop.f32.mrf.mxu0
        %v3697 = vadd.f32 0.0, %v3696
        %3698 = vmatprep.mubr.f32.mxu0 0.0
        %3699 = vmatmul.mubr.f32.gmra.mxu0 %v3614
        %v3700 = vpop.f32.mrf.mxu0
        %v3701 = vadd.f32 0.0, %v3700
        %v3702 = vpop.f32.mrf.mxu0
        %v3703 = vadd.f32 0.0, %v3702
        %3704 = vdwg.mxu0
        %v3705 = vadd.f32 %v3539, %v3683
        %v3706 = vadd.f32 %v3540, %v3685
        %v3707 = vadd.f32 %v3541, %v3689
        %v3708 = vadd.f32 %v3542, %v3691
        %v3709 = vadd.f32 %v3543, %v3695
        %v3710 = vadd.f32 %v3544, %v3697
        %v3711 = vadd.f32 %v3545, %v3701
        %v3712 = vadd.f32 %v3546, %v3703
        %v3713 = vmul.f32 %v3179, %v2105
        %v3714 = vmul.f32 %v3180, %v2108
        %v3715 = vmul.f32 %v3181, %v2107
        %v3716 = vmul.f32 %v3182, %v2105
        %v3717 = vmul.f32 %v3183, %v2108
        %v3718 = vmul.f32 %v3184, %v2107
        %v3719 = vmul.f32 %v3185, %v2105
        %v3720 = vmul.f32 %v3186, %v2108
        %v3721 = vmul.f32 %v3187, %v2107
        %v3722 = vmul.f32 %v3188, %v2105
        %v3723 = vmul.f32 %v3189, %v2108
        %v3724 = vmul.f32 %v3190, %v2107
        %s3725 = scalar_lea.vmem [#allocation6], 256
        %v3726 = vld [vmem:[%s3725] sm:$0xff]
        %v3727 = vld [vmem:[%s3725 + $0x8] sm:$0xff]
        %v3728 = vld [vmem:[%s3725 + $0x10] sm:$0xff]
        %v3729 = vld [vmem:[%s3725 + $0x18] sm:$0xff]
        %3742 = vrot.lane.b32.xlu0 %v3713, 111
        %v3743 = vpop.permute.xlu0 %3742
        %3744 = vrot.lane.b32.xlu0 %v3714, 111
        %v3745 = vpop.permute.xlu0 %3744
        %3746 = vrot.lane.b32.xlu0 %v3715, 111
        %v3747 = vpop.permute.xlu0 %3746
        %3748 = vrot.lane.b32.xlu0 %v3716, 111
        %v3749 = vpop.permute.xlu0 %3748
        %3750 = vrot.lane.b32.xlu0 %v3717, 111
        %v3751 = vpop.permute.xlu0 %3750
        %3752 = vrot.lane.b32.xlu0 %v3718, 111
        %v3753 = vpop.permute.xlu0 %3752
        %3754 = vrot.lane.b32.xlu0 %v3719, 111
        %v3755 = vpop.permute.xlu0 %3754
        %3756 = vrot.lane.b32.xlu0 %v3720, 111
        %v3757 = vpop.permute.xlu0 %3756
        %3758 = vrot.lane.b32.xlu0 %v3721, 111
        %v3759 = vpop.permute.xlu0 %3758
        %3760 = vrot.lane.b32.xlu0 %v3722, 111
        %v3761 = vpop.permute.xlu0 %3760
        %3762 = vrot.lane.b32.xlu0 %v3723, 111
        %v3763 = vpop.permute.xlu0 %3762
        %3764 = vrot.lane.b32.xlu0 %v3724, 111
        %v3765 = vpop.permute.xlu0 %3764
        %v3766 = vsel %vm726, %v3743, %v3745
        %v3767 = vsel %vm726, %v3745, %v3747
        %v3768 = vsel %vm726, %v3749, %v3751
        %v3769 = vsel %vm726, %v3751, %v3753
        %v3770 = vsel %vm726, %v3755, %v3757
        %v3771 = vsel %vm726, %v3757, %v3759
        %v3772 = vsel %vm726, %v3761, %v3763
        %v3773 = vsel %vm726, %v3763, %v3765
        %v3783 = vsel %vm805, %v3726, 0
        %v3786 = vsel %vm805, %v3727, 0
        %v3789 = vsel %vm805, %v3728, 0
        %v3792 = vsel %vm805, %v3729, 0
        %3794 = vmatprep.subr.mxu0 0.0
        %3795 = vmatpush1.msra.mxu0 0.0
        %3796 = vmatprep.subr.mxu0 0.0
        %3797 = vmatpush1.msra.mxu0 0.0
        %3798 = vmatprep.subr.mxu0 0.0
        %3799 = vmatpush1.msra.mxu0 0.0
        %3800 = vmatprep.subr.mxu0 0.0
        %3801 = vmatpush1.msra.mxu0 0.0
        %3802 = vmatprep.subr.mxu0 0.0
        %3803 = vmatpush1.msra.mxu0 0.0
        %3804 = vmatprep.subr.mxu0 0.0
        %3805 = vmatpush1.msra.mxu0 0.0
        %3806 = vmatprep.subr.mxu0 0.0
        %3807 = vmatpush1.msra.mxu0 0.0
        %3808 = vmatprep.subr.mxu0 0.0
        %3809 = vmatpush1.msra.mxu0 0.0
        %3810 = vmatprep.subr.mxu0 0.0
        %3811 = vmatpush1.msra.mxu0 0.0
        %3812 = vmatprep.subr.mxu0 0.0
        %3813 = vmatpush1.msra.mxu0 0.0
        %3814 = vmatprep.subr.mxu0 0.0
        %3815 = vmatpush1.msra.mxu0 0.0
        %3816 = vmatprep.subr.mxu0 0.0
        %3817 = vmatpush1.msra.mxu0 0.0
        %3818 = vmatprep.subr.mxu0 %v3773
        %3819 = vmatpush1.msra.mxu0 %v3772
        %3820 = vmatprep.subr.mxu0 %v3771
        %3821 = vmatpush1.msra.mxu0 %v3770
        %3822 = vmatprep.subr.mxu0 %v3769
        %3823 = vmatpush1.msra.mxu0 %v3768
        %3824 = vmatprep.subr.mxu0 %v3767
        %3825 = vmatpush1.msra.mxu0 %v3766
        %3826 = vmatprep.subr.mxu0 0.0
        %3827 = vmatpush2.msra.mxu0 0.0
        %3828 = vmatprep.subr.mxu0 0.0
        %3829 = vmatpush2.msra.mxu0 0.0
        %3830 = vmatprep.subr.mxu0 0.0
        %3831 = vmatpush2.msra.mxu0 0.0
        %3832 = vmatprep.subr.mxu0 0.0
        %3833 = vmatpush2.msra.mxu0 0.0
        %3834 = vmatprep.subr.mxu0 0.0
        %3835 = vmatpush2.msra.mxu0 0.0
        %3836 = vmatprep.subr.mxu0 0.0
        %3837 = vmatpush2.msra.mxu0 0.0
        %3838 = vmatprep.subr.mxu0 0.0
        %3839 = vmatpush2.msra.mxu0 0.0
        %3840 = vmatprep.subr.mxu0 0.0
        %3841 = vmatpush2.msra.mxu0 0.0
        %3842 = vmatprep.subr.mxu0 0.0
        %3843 = vmatpush2.msra.mxu0 0.0
        %3844 = vmatprep.subr.mxu0 0.0
        %3845 = vmatpush2.msra.mxu0 0.0
        %3846 = vmatprep.subr.mxu0 0.0
        %3847 = vmatpush2.msra.mxu0 0.0
        %3848 = vmatprep.subr.mxu0 0.0
        %3849 = vmatpush2.msra.mxu0 0.0
        %3850 = vmatprep.subr.mxu0 0.0
        %3851 = vmatpush2.msra.mxu0 0.0
        %3852 = vmatprep.subr.mxu0 0.0
        %3853 = vmatpush2.msra.mxu0 0.0
        %3854 = vmatprep.subr.mxu0 0.0
        %3855 = vmatpush2.msra.mxu0 0.0
        %3856 = vmatprep.subr.mxu0 0.0
        %3857 = vmatpush2.msra.mxu0 0.0
        %3858 = vmatprep.mubr.f32.mxu0 0.0
        %3859 = vmatmul.mubr.f32.gmra.mxu0 %v3783
        %v3860 = vpop.f32.mrf.mxu0
        %v3861 = vadd.f32 0.0, %v3860
        %v3862 = vpop.f32.mrf.mxu0
        %v3863 = vadd.f32 0.0, %v3862
        %3864 = vmatprep.mubr.f32.mxu0 0.0
        %3865 = vmatmul.mubr.f32.gmra.mxu0 %v3786
        %v3866 = vpop.f32.mrf.mxu0
        %v3867 = vadd.f32 0.0, %v3866
        %v3868 = vpop.f32.mrf.mxu0
        %v3869 = vadd.f32 0.0, %v3868
        %3870 = vmatprep.mubr.f32.mxu0 0.0
        %3871 = vmatmul.mubr.f32.gmra.mxu0 %v3789
        %v3872 = vpop.f32.mrf.mxu0
        %v3873 = vadd.f32 0.0, %v3872
        %v3874 = vpop.f32.mrf.mxu0
        %v3875 = vadd.f32 0.0, %v3874
        %3876 = vmatprep.mubr.f32.mxu0 0.0
        %3877 = vmatmul.mubr.f32.gmra.mxu0 %v3792
        %v3878 = vpop.f32.mrf.mxu0
        %v3879 = vadd.f32 0.0, %v3878
        %v3880 = vpop.f32.mrf.mxu0
        %v3881 = vadd.f32 0.0, %v3880
        %3882 = vdwg.mxu0
        %v3883 = vadd.f32 %v3705, %v3861
        %v3884 = vadd.f32 %v3706, %v3863
        %v3885 = vadd.f32 %v3707, %v3867
        %v3886 = vadd.f32 %v3708, %v3869
        %v3887 = vadd.f32 %v3709, %v3873
        %v3888 = vadd.f32 %v3710, %v3875
        %v3889 = vadd.f32 %v3711, %v3879
        %v3890 = vadd.f32 %v3712, %v3881
        %3892 = vset.pattern.permute.xlu0 0
        %3893 = vperm.xlu0 %3892, %v2354
        %v3894 = vpop.permute.xlu0 %3893
        %3897 = vset.pattern.permute.xlu0 0
        %3898 = vperm.xlu0 %3897, %v2355
        %v3899 = vpop.permute.xlu0 %3898
        %3902 = vset.pattern.permute.xlu0 0
        %3903 = vperm.xlu0 %3902, %v2356
        %v3904 = vpop.permute.xlu0 %3903
        %3907 = vset.pattern.permute.xlu0 0
        %3908 = vperm.xlu0 %3907, %v2357
        %v3909 = vpop.permute.xlu0 %3908
        %v3911 = vmul.f32 %v3883, %v3894
        %v3912 = vmul.f32 %v3884, %v3894
        %v3913 = vmul.f32 %v3885, %v3899
        %v3914 = vmul.f32 %v3886, %v3899
        %v3915 = vmul.f32 %v3887, %v3904
        %v3916 = vmul.f32 %v3888, %v3904
        %v3917 = vmul.f32 %v3889, %v3909
        %v3918 = vmul.f32 %v3890, %v3909
        %3920 = vset.pattern.permute.xlu0 0
        %3921 = vperm.xlu0 %3920, %v2358
        %v3922 = vpop.permute.xlu0 %3921
        %3925 = vset.pattern.permute.xlu0 0
        %3926 = vperm.xlu0 %3925, %v2359
        %v3927 = vpop.permute.xlu0 %3926
        %3930 = vset.pattern.permute.xlu0 0
        %3931 = vperm.xlu0 %3930, %v2360
        %v3932 = vpop.permute.xlu0 %3931
        %3935 = vset.pattern.permute.xlu0 0
        %3936 = vperm.xlu0 %3935, %v2361
        %v3937 = vpop.permute.xlu0 %3936
        %v3939 = vadd.f32 %v3911, %v3922
        %v3940 = vadd.f32 %v3912, %v3922
        %v3941 = vadd.f32 %v3913, %v3927
        %v3942 = vadd.f32 %v3914, %v3927
        %v3943 = vadd.f32 %v3915, %v3932
        %v3944 = vadd.f32 %v3916, %v3932
        %v3945 = vadd.f32 %v3917, %v3937
        %v3946 = vadd.f32 %v3918, %v3937
        %v3947 = vmax.f32 %v3939, 0.0
        %v3948 = vmax.f32 %v3940, 0.0
        %v3949 = vmax.f32 %v3941, 0.0
        %v3950 = vmax.f32 %v3942, 0.0
        %v3951 = vmax.f32 %v3943, 0.0
        %v3952 = vmax.f32 %v3944, 0.0
        %v3953 = vmax.f32 %v3945, 0.0
        %v3954 = vmax.f32 %v3946, 0.0
        %s3955 = scalar_lea.vmem %s5, 32
        %v3956 = vld [vmem:[%s3955] sm:$0xff]
        %v3957 = vld [vmem:[%s3955 + $0x8] sm:$0xff]
        %v3958 = vld [vmem:[%s3955 + $0x10] sm:$0xff]
        %v3959 = vld [vmem:[%s3955 + $0x18] sm:$0xff]
        %s3960 = scalar_lea.vmem %s6, 32
        %v3961 = vld [vmem:[%s3960] sm:$0xff]
        %v3962 = vld [vmem:[%s3960 + $0x8] sm:$0xff]
        %v3963 = vld [vmem:[%s3960 + $0x10] sm:$0xff]
        %v3964 = vld [vmem:[%s3960 + $0x18] sm:$0xff]
        %3965 = vst [vmem:[#allocation2 + $0x8] sm:$0xff] %v3947
        %3966 = vst [vmem:[#allocation2 + $0x10] sm:$0xff] %v3948
        %3967 = vst [vmem:[#allocation2 + $0x28] sm:$0xff] %v3949
        %3968 = vst [vmem:[#allocation2 + $0x30] sm:$0xff] %v3950
        %3969 = vst [vmem:[#allocation2 + $0x48] sm:$0xff] %v3951
        %3970 = vst [vmem:[#allocation2 + $0x50] sm:$0xff] %v3952
        %3971 = vst [vmem:[#allocation2 + $0x68] sm:$0xff] %v3953
        %3972 = vst [vmem:[#allocation2 + $0x70] sm:$0xff] %v3954
        %v3973 = vld [vmem:[#allocation2] sm:$0xff]
        %v3974 = vld [vmem:[#allocation2 + $0x8] sm:$0xff]
        %v3975 = vld [vmem:[#allocation2 + $0x10] sm:$0xff]
        %v3976 = vld [vmem:[#allocation2 + $0x20] sm:$0xff]
        %v3977 = vld [vmem:[#allocation2 + $0x28] sm:$0xff]
        %v3978 = vld [vmem:[#allocation2 + $0x30] sm:$0xff]
        %v3979 = vld [vmem:[#allocation2 + $0x40] sm:$0xff]
        %v3980 = vld [vmem:[#allocation2 + $0x48] sm:$0xff]
        %v3981 = vld [vmem:[#allocation2 + $0x50] sm:$0xff]
        %v3982 = vld [vmem:[#allocation2 + $0x60] sm:$0xff]
        %v3983 = vld [vmem:[#allocation2 + $0x68] sm:$0xff]
        %v3984 = vld [vmem:[#allocation2 + $0x70] sm:$0xff]
        %v3985 = vmul.f32 %v3973, %v723
        %v3986 = vmul.f32 %v3974, %v727
        %v3987 = vmul.f32 %v3975, %v725
        %v3988 = vmul.f32 %v3976, %v723
        %v3989 = vmul.f32 %v3977, %v727
        %v3990 = vmul.f32 %v3978, %v725
        %v3991 = vmul.f32 %v3979, %v723
        %v3992 = vmul.f32 %v3980, %v727
        %v3993 = vmul.f32 %v3981, %v725
        %v3994 = vmul.f32 %v3982, %v723
        %v3995 = vmul.f32 %v3983, %v727
        %v3996 = vmul.f32 %v3984, %v725
        %s3997 = scalar_lea.vmem [#allocation6], 288
        %v3998 = vld [vmem:[%s3997] sm:$0xff]
        %v3999 = vld [vmem:[%s3997 + $0x8] sm:$0xff]
        %v4000 = vld [vmem:[%s3997 + $0x10] sm:$0xff]
        %v4001 = vld [vmem:[%s3997 + $0x18] sm:$0xff]
        %s4002 = scalar_lea.vmem [#allocation6], 320
        %v4003 = vld [vmem:[%s4002] sm:$0xff]
        %v4004 = vld [vmem:[%s4002 + $0x8] sm:$0xff]
        %v4005 = vld [vmem:[%s4002 + $0x10] sm:$0xff]
        %v4006 = vld [vmem:[%s4002 + $0x18] sm:$0xff]
        %4019 = vrot.lane.b32.xlu0 %v3973, 16
        %v4020 = vpop.permute.xlu0 %4019
        %4021 = vrot.lane.b32.xlu0 %v3974, 16
        %v4022 = vpop.permute.xlu0 %4021
        %4023 = vrot.lane.b32.xlu0 %v3975, 16
        %v4024 = vpop.permute.xlu0 %4023
        %4025 = vrot.lane.b32.xlu0 %v3976, 16
        %v4026 = vpop.permute.xlu0 %4025
        %4027 = vrot.lane.b32.xlu0 %v3977, 16
        %v4028 = vpop.permute.xlu0 %4027
        %4029 = vrot.lane.b32.xlu0 %v3978, 16
        %v4030 = vpop.permute.xlu0 %4029
        %4031 = vrot.lane.b32.xlu0 %v3979, 16
        %v4032 = vpop.permute.xlu0 %4031
        %4033 = vrot.lane.b32.xlu0 %v3980, 16
        %v4034 = vpop.permute.xlu0 %4033
        %4035 = vrot.lane.b32.xlu0 %v3981, 16
        %v4036 = vpop.permute.xlu0 %4035
        %4037 = vrot.lane.b32.xlu0 %v3982, 16
        %v4038 = vpop.permute.xlu0 %4037
        %4039 = vrot.lane.b32.xlu0 %v3983, 16
        %v4040 = vpop.permute.xlu0 %4039
        %4041 = vrot.lane.b32.xlu0 %v3984, 16
        %v4042 = vpop.permute.xlu0 %4041
        %v4043 = vsel %vm788, %v4020, %v4022
        %v4044 = vsel %vm788, %v4022, %v4024
        %v4045 = vsel %vm788, %v4026, %v4028
        %v4046 = vsel %vm788, %v4028, %v4030
        %v4047 = vsel %vm788, %v4032, %v4034
        %v4048 = vsel %vm788, %v4034, %v4036
        %v4049 = vsel %vm788, %v4038, %v4040
        %v4050 = vsel %vm788, %v4040, %v4042
        %v4060 = vsel %vm805, %v4003, 0
        %v4063 = vsel %vm805, %v4004, 0
        %v4066 = vsel %vm805, %v4005, 0
        %v4069 = vsel %vm805, %v4006, 0
        %4071 = vmatprep.subr.mxu0 0.0
        %4072 = vmatpush1.msra.mxu0 0.0
        %4073 = vmatprep.subr.mxu0 0.0
        %4074 = vmatpush1.msra.mxu0 0.0
        %4075 = vmatprep.subr.mxu0 0.0
        %4076 = vmatpush1.msra.mxu0 0.0
        %4077 = vmatprep.subr.mxu0 0.0
        %4078 = vmatpush1.msra.mxu0 0.0
        %4079 = vmatprep.subr.mxu0 0.0
        %4080 = vmatpush1.msra.mxu0 0.0
        %4081 = vmatprep.subr.mxu0 0.0
        %4082 = vmatpush1.msra.mxu0 0.0
        %4083 = vmatprep.subr.mxu0 0.0
        %4084 = vmatpush1.msra.mxu0 0.0
        %4085 = vmatprep.subr.mxu0 0.0
        %4086 = vmatpush1.msra.mxu0 0.0
        %4087 = vmatprep.subr.mxu0 0.0
        %4088 = vmatpush1.msra.mxu0 0.0
        %4089 = vmatprep.subr.mxu0 0.0
        %4090 = vmatpush1.msra.mxu0 0.0
        %4091 = vmatprep.subr.mxu0 0.0
        %4092 = vmatpush1.msra.mxu0 0.0
        %4093 = vmatprep.subr.mxu0 0.0
        %4094 = vmatpush1.msra.mxu0 0.0
        %4095 = vmatprep.subr.mxu0 %v4050
        %4096 = vmatpush1.msra.mxu0 %v4049
        %4097 = vmatprep.subr.mxu0 %v4048
        %4098 = vmatpush1.msra.mxu0 %v4047
        %4099 = vmatprep.subr.mxu0 %v4046
        %4100 = vmatpush1.msra.mxu0 %v4045
        %4101 = vmatprep.subr.mxu0 %v4044
        %4102 = vmatpush1.msra.mxu0 %v4043
        %4103 = vmatprep.subr.mxu0 0.0
        %4104 = vmatpush2.msra.mxu0 0.0
        %4105 = vmatprep.subr.mxu0 0.0
        %4106 = vmatpush2.msra.mxu0 0.0
        %4107 = vmatprep.subr.mxu0 0.0
        %4108 = vmatpush2.msra.mxu0 0.0
        %4109 = vmatprep.subr.mxu0 0.0
        %4110 = vmatpush2.msra.mxu0 0.0
        %4111 = vmatprep.subr.mxu0 0.0
        %4112 = vmatpush2.msra.mxu0 0.0
        %4113 = vmatprep.subr.mxu0 0.0
        %4114 = vmatpush2.msra.mxu0 0.0
        %4115 = vmatprep.subr.mxu0 0.0
        %4116 = vmatpush2.msra.mxu0 0.0
        %4117 = vmatprep.subr.mxu0 0.0
        %4118 = vmatpush2.msra.mxu0 0.0
        %4119 = vmatprep.subr.mxu0 0.0
        %4120 = vmatpush2.msra.mxu0 0.0
        %4121 = vmatprep.subr.mxu0 0.0
        %4122 = vmatpush2.msra.mxu0 0.0
        %4123 = vmatprep.subr.mxu0 0.0
        %4124 = vmatpush2.msra.mxu0 0.0
        %4125 = vmatprep.subr.mxu0 0.0
        %4126 = vmatpush2.msra.mxu0 0.0
        %4127 = vmatprep.subr.mxu0 0.0
        %4128 = vmatpush2.msra.mxu0 0.0
        %4129 = vmatprep.subr.mxu0 0.0
        %4130 = vmatpush2.msra.mxu0 0.0
        %4131 = vmatprep.subr.mxu0 0.0
        %4132 = vmatpush2.msra.mxu0 0.0
        %4133 = vmatprep.subr.mxu0 0.0
        %4134 = vmatpush2.msra.mxu0 0.0
        %4135 = vmatprep.mubr.f32.mxu0 0.0
        %4136 = vmatmul.mubr.f32.gmra.mxu0 %v4060
        %v4137 = vpop.f32.mrf.mxu0
        %v4138 = vadd.f32 0.0, %v4137
        %v4139 = vpop.f32.mrf.mxu0
        %v4140 = vadd.f32 0.0, %v4139
        %4141 = vmatprep.mubr.f32.mxu0 0.0
        %4142 = vmatmul.mubr.f32.gmra.mxu0 %v4063
        %v4143 = vpop.f32.mrf.mxu0
        %v4144 = vadd.f32 0.0, %v4143
        %v4145 = vpop.f32.mrf.mxu0
        %v4146 = vadd.f32 0.0, %v4145
        %4147 = vmatprep.mubr.f32.mxu0 0.0
        %4148 = vmatmul.mubr.f32.gmra.mxu0 %v4066
        %v4149 = vpop.f32.mrf.mxu0
        %v4150 = vadd.f32 0.0, %v4149
        %v4151 = vpop.f32.mrf.mxu0
        %v4152 = vadd.f32 0.0, %v4151
        %4153 = vmatprep.mubr.f32.mxu0 0.0
        %4154 = vmatmul.mubr.f32.gmra.mxu0 %v4069
        %v4155 = vpop.f32.mrf.mxu0
        %v4156 = vadd.f32 0.0, %v4155
        %v4157 = vpop.f32.mrf.mxu0
        %v4158 = vadd.f32 0.0, %v4157
        %4159 = vdwg.mxu0
        %4172 = vrot.lane.b32.xlu0 %v3985, 17
        %v4173 = vpop.permute.xlu0 %4172
        %4174 = vrot.lane.b32.xlu0 %v3986, 17
        %v4175 = vpop.permute.xlu0 %4174
        %4176 = vrot.lane.b32.xlu0 %v3987, 17
        %v4177 = vpop.permute.xlu0 %4176
        %4178 = vrot.lane.b32.xlu0 %v3988, 17
        %v4179 = vpop.permute.xlu0 %4178
        %4180 = vrot.lane.b32.xlu0 %v3989, 17
        %v4181 = vpop.permute.xlu0 %4180
        %4182 = vrot.lane.b32.xlu0 %v3990, 17
        %v4183 = vpop.permute.xlu0 %4182
        %4184 = vrot.lane.b32.xlu0 %v3991, 17
        %v4185 = vpop.permute.xlu0 %4184
        %4186 = vrot.lane.b32.xlu0 %v3992, 17
        %v4187 = vpop.permute.xlu0 %4186
        %4188 = vrot.lane.b32.xlu0 %v3993, 17
        %v4189 = vpop.permute.xlu0 %4188
        %4190 = vrot.lane.b32.xlu0 %v3994, 17
        %v4191 = vpop.permute.xlu0 %4190
        %4192 = vrot.lane.b32.xlu0 %v3995, 17
        %v4193 = vpop.permute.xlu0 %4192
        %4194 = vrot.lane.b32.xlu0 %v3996, 17
        %v4195 = vpop.permute.xlu0 %4194
        %v4196 = vsel %vm943, %v4173, %v4175
        %v4197 = vsel %vm943, %v4175, %v4177
        %v4198 = vsel %vm943, %v4179, %v4181
        %v4199 = vsel %vm943, %v4181, %v4183
        %v4200 = vsel %vm943, %v4185, %v4187
        %v4201 = vsel %vm943, %v4187, %v4189
        %v4202 = vsel %vm943, %v4191, %v4193
        %v4203 = vsel %vm943, %v4193, %v4195
        %v4213 = vsel %vm805, %v3998, 0
        %v4216 = vsel %vm805, %v3999, 0
        %v4219 = vsel %vm805, %v4000, 0
        %v4222 = vsel %vm805, %v4001, 0
        %4224 = vmatprep.subr.mxu0 0.0
        %4225 = vmatpush1.msra.mxu0 0.0
        %4226 = vmatprep.subr.mxu0 0.0
        %4227 = vmatpush1.msra.mxu0 0.0
        %4228 = vmatprep.subr.mxu0 0.0
        %4229 = vmatpush1.msra.mxu0 0.0
        %4230 = vmatprep.subr.mxu0 0.0
        %4231 = vmatpush1.msra.mxu0 0.0
        %4232 = vmatprep.subr.mxu0 0.0
        %4233 = vmatpush1.msra.mxu0 0.0
        %4234 = vmatprep.subr.mxu0 0.0
        %4235 = vmatpush1.msra.mxu0 0.0
        %4236 = vmatprep.subr.mxu0 0.0
        %4237 = vmatpush1.msra.mxu0 0.0
        %4238 = vmatprep.subr.mxu0 0.0
        %4239 = vmatpush1.msra.mxu0 0.0
        %4240 = vmatprep.subr.mxu0 0.0
        %4241 = vmatpush1.msra.mxu0 0.0
        %4242 = vmatprep.subr.mxu0 0.0
        %4243 = vmatpush1.msra.mxu0 0.0
        %4244 = vmatprep.subr.mxu0 0.0
        %4245 = vmatpush1.msra.mxu0 0.0
        %4246 = vmatprep.subr.mxu0 0.0
        %4247 = vmatpush1.msra.mxu0 0.0
        %4248 = vmatprep.subr.mxu0 %v4203
        %4249 = vmatpush1.msra.mxu0 %v4202
        %4250 = vmatprep.subr.mxu0 %v4201
        %4251 = vmatpush1.msra.mxu0 %v4200
        %4252 = vmatprep.subr.mxu0 %v4199
        %4253 = vmatpush1.msra.mxu0 %v4198
        %4254 = vmatprep.subr.mxu0 %v4197
        %4255 = vmatpush1.msra.mxu0 %v4196
        %4256 = vmatprep.subr.mxu0 0.0
        %4257 = vmatpush2.msra.mxu0 0.0
        %4258 = vmatprep.subr.mxu0 0.0
        %4259 = vmatpush2.msra.mxu0 0.0
        %4260 = vmatprep.subr.mxu0 0.0
        %4261 = vmatpush2.msra.mxu0 0.0
        %4262 = vmatprep.subr.mxu0 0.0
        %4263 = vmatpush2.msra.mxu0 0.0
        %4264 = vmatprep.subr.mxu0 0.0
        %4265 = vmatpush2.msra.mxu0 0.0
        %4266 = vmatprep.subr.mxu0 0.0
        %4267 = vmatpush2.msra.mxu0 0.0
        %4268 = vmatprep.subr.mxu0 0.0
        %4269 = vmatpush2.msra.mxu0 0.0
        %4270 = vmatprep.subr.mxu0 0.0
        %4271 = vmatpush2.msra.mxu0 0.0
        %4272 = vmatprep.subr.mxu0 0.0
        %4273 = vmatpush2.msra.mxu0 0.0
        %4274 = vmatprep.subr.mxu0 0.0
        %4275 = vmatpush2.msra.mxu0 0.0
        %4276 = vmatprep.subr.mxu0 0.0
        %4277 = vmatpush2.msra.mxu0 0.0
        %4278 = vmatprep.subr.mxu0 0.0
        %4279 = vmatpush2.msra.mxu0 0.0
        %4280 = vmatprep.subr.mxu0 0.0
        %4281 = vmatpush2.msra.mxu0 0.0
        %4282 = vmatprep.subr.mxu0 0.0
        %4283 = vmatpush2.msra.mxu0 0.0
        %4284 = vmatprep.subr.mxu0 0.0
        %4285 = vmatpush2.msra.mxu0 0.0
        %4286 = vmatprep.subr.mxu0 0.0
        %4287 = vmatpush2.msra.mxu0 0.0
        %4288 = vmatprep.mubr.f32.mxu0 0.0
        %4289 = vmatmul.mubr.f32.gmra.mxu0 %v4213
        %v4290 = vpop.f32.mrf.mxu0
        %v4291 = vadd.f32 %v4138, %v4290
        %v4292 = vpop.f32.mrf.mxu0
        %v4293 = vadd.f32 %v4140, %v4292
        %4294 = vmatprep.mubr.f32.mxu0 0.0
        %4295 = vmatmul.mubr.f32.gmra.mxu0 %v4216
        %v4296 = vpop.f32.mrf.mxu0
        %v4297 = vadd.f32 %v4144, %v4296
        %v4298 = vpop.f32.mrf.mxu0
        %v4299 = vadd.f32 %v4146, %v4298
        %4300 = vmatprep.mubr.f32.mxu0 0.0
        %4301 = vmatmul.mubr.f32.gmra.mxu0 %v4219
        %v4302 = vpop.f32.mrf.mxu0
        %v4303 = vadd.f32 %v4150, %v4302
        %v4304 = vpop.f32.mrf.mxu0
        %v4305 = vadd.f32 %v4152, %v4304
        %4306 = vmatprep.mubr.f32.mxu0 0.0
        %4307 = vmatmul.mubr.f32.gmra.mxu0 %v4222
        %v4308 = vpop.f32.mrf.mxu0
        %v4309 = vadd.f32 %v4156, %v4308
        %v4310 = vpop.f32.mrf.mxu0
        %v4311 = vadd.f32 %v4158, %v4310
        %4312 = vdwg.mxu0
        %v4313 = vmul.f32 %v3973, %v1064
        %v4314 = vmul.f32 %v3974, %v1068
        %v4315 = vmul.f32 %v3975, %v1066
        %v4316 = vmul.f32 %v3976, %v1064
        %v4317 = vmul.f32 %v3977, %v1068
        %v4318 = vmul.f32 %v3978, %v1066
        %v4319 = vmul.f32 %v3979, %v1064
        %v4320 = vmul.f32 %v3980, %v1068
        %v4321 = vmul.f32 %v3981, %v1066
        %v4322 = vmul.f32 %v3982, %v1064
        %v4323 = vmul.f32 %v3983, %v1068
        %v4324 = vmul.f32 %v3984, %v1066
        %s4325 = scalar_lea.vmem [#allocation6], 352
        %v4326 = vld [vmem:[%s4325] sm:$0xff]
        %v4327 = vld [vmem:[%s4325 + $0x8] sm:$0xff]
        %v4328 = vld [vmem:[%s4325 + $0x10] sm:$0xff]
        %v4329 = vld [vmem:[%s4325 + $0x18] sm:$0xff]
        %4342 = vrot.lane.b32.xlu0 %v4313, 15
        %v4343 = vpop.permute.xlu0 %4342
        %4344 = vrot.lane.b32.xlu0 %v4314, 15
        %v4345 = vpop.permute.xlu0 %4344
        %4346 = vrot.lane.b32.xlu0 %v4315, 15
        %v4347 = vpop.permute.xlu0 %4346
        %4348 = vrot.lane.b32.xlu0 %v4316, 15
        %v4349 = vpop.permute.xlu0 %4348
        %4350 = vrot.lane.b32.xlu0 %v4317, 15
        %v4351 = vpop.permute.xlu0 %4350
        %4352 = vrot.lane.b32.xlu0 %v4318, 15
        %v4353 = vpop.permute.xlu0 %4352
        %4354 = vrot.lane.b32.xlu0 %v4319, 15
        %v4355 = vpop.permute.xlu0 %4354
        %4356 = vrot.lane.b32.xlu0 %v4320, 15
        %v4357 = vpop.permute.xlu0 %4356
        %4358 = vrot.lane.b32.xlu0 %v4321, 15
        %v4359 = vpop.permute.xlu0 %4358
        %4360 = vrot.lane.b32.xlu0 %v4322, 15
        %v4361 = vpop.permute.xlu0 %4360
        %4362 = vrot.lane.b32.xlu0 %v4323, 15
        %v4363 = vpop.permute.xlu0 %4362
        %4364 = vrot.lane.b32.xlu0 %v4324, 15
        %v4365 = vpop.permute.xlu0 %4364
        %v4366 = vsel %vm1125, %v4343, %v4345
        %v4367 = vsel %vm1125, %v4345, %v4347
        %v4368 = vsel %vm1125, %v4349, %v4351
        %v4369 = vsel %vm1125, %v4351, %v4353
        %v4370 = vsel %vm1125, %v4355, %v4357
        %v4371 = vsel %vm1125, %v4357, %v4359
        %v4372 = vsel %vm1125, %v4361, %v4363
        %v4373 = vsel %vm1125, %v4363, %v4365
        %v4383 = vsel %vm805, %v4326, 0
        %v4386 = vsel %vm805, %v4327, 0
        %v4389 = vsel %vm805, %v4328, 0
        %v4392 = vsel %vm805, %v4329, 0
        %4394 = vmatprep.subr.mxu0 0.0
        %4395 = vmatpush1.msra.mxu0 0.0
        %4396 = vmatprep.subr.mxu0 0.0
        %4397 = vmatpush1.msra.mxu0 0.0
        %4398 = vmatprep.subr.mxu0 0.0
        %4399 = vmatpush1.msra.mxu0 0.0
        %4400 = vmatprep.subr.mxu0 0.0
        %4401 = vmatpush1.msra.mxu0 0.0
        %4402 = vmatprep.subr.mxu0 0.0
        %4403 = vmatpush1.msra.mxu0 0.0
        %4404 = vmatprep.subr.mxu0 0.0
        %4405 = vmatpush1.msra.mxu0 0.0
        %4406 = vmatprep.subr.mxu0 0.0
        %4407 = vmatpush1.msra.mxu0 0.0
        %4408 = vmatprep.subr.mxu0 0.0
        %4409 = vmatpush1.msra.mxu0 0.0
        %4410 = vmatprep.subr.mxu0 0.0
        %4411 = vmatpush1.msra.mxu0 0.0
        %4412 = vmatprep.subr.mxu0 0.0
        %4413 = vmatpush1.msra.mxu0 0.0
        %4414 = vmatprep.subr.mxu0 0.0
        %4415 = vmatpush1.msra.mxu0 0.0
        %4416 = vmatprep.subr.mxu0 0.0
        %4417 = vmatpush1.msra.mxu0 0.0
        %4418 = vmatprep.subr.mxu0 %v4373
        %4419 = vmatpush1.msra.mxu0 %v4372
        %4420 = vmatprep.subr.mxu0 %v4371
        %4421 = vmatpush1.msra.mxu0 %v4370
        %4422 = vmatprep.subr.mxu0 %v4369
        %4423 = vmatpush1.msra.mxu0 %v4368
        %4424 = vmatprep.subr.mxu0 %v4367
        %4425 = vmatpush1.msra.mxu0 %v4366
        %4426 = vmatprep.subr.mxu0 0.0
        %4427 = vmatpush2.msra.mxu0 0.0
        %4428 = vmatprep.subr.mxu0 0.0
        %4429 = vmatpush2.msra.mxu0 0.0
        %4430 = vmatprep.subr.mxu0 0.0
        %4431 = vmatpush2.msra.mxu0 0.0
        %4432 = vmatprep.subr.mxu0 0.0
        %4433 = vmatpush2.msra.mxu0 0.0
        %4434 = vmatprep.subr.mxu0 0.0
        %4435 = vmatpush2.msra.mxu0 0.0
        %4436 = vmatprep.subr.mxu0 0.0
        %4437 = vmatpush2.msra.mxu0 0.0
        %4438 = vmatprep.subr.mxu0 0.0
        %4439 = vmatpush2.msra.mxu0 0.0
        %4440 = vmatprep.subr.mxu0 0.0
        %4441 = vmatpush2.msra.mxu0 0.0
        %4442 = vmatprep.subr.mxu0 0.0
        %4443 = vmatpush2.msra.mxu0 0.0
        %4444 = vmatprep.subr.mxu0 0.0
        %4445 = vmatpush2.msra.mxu0 0.0
        %4446 = vmatprep.subr.mxu0 0.0
        %4447 = vmatpush2.msra.mxu0 0.0
        %4448 = vmatprep.subr.mxu0 0.0
        %4449 = vmatpush2.msra.mxu0 0.0
        %4450 = vmatprep.subr.mxu0 0.0
        %4451 = vmatpush2.msra.mxu0 0.0
        %4452 = vmatprep.subr.mxu0 0.0
        %4453 = vmatpush2.msra.mxu0 0.0
        %4454 = vmatprep.subr.mxu0 0.0
        %4455 = vmatpush2.msra.mxu0 0.0
        %4456 = vmatprep.subr.mxu0 0.0
        %4457 = vmatpush2.msra.mxu0 0.0
        %4458 = vmatprep.mubr.f32.mxu0 0.0
        %4459 = vmatmul.mubr.f32.gmra.mxu0 %v4383
        %v4460 = vpop.f32.mrf.mxu0
        %v4461 = vadd.f32 0.0, %v4460
        %v4462 = vpop.f32.mrf.mxu0
        %v4463 = vadd.f32 0.0, %v4462
        %4464 = vmatprep.mubr.f32.mxu0 0.0
        %4465 = vmatmul.mubr.f32.gmra.mxu0 %v4386
        %v4466 = vpop.f32.mrf.mxu0
        %v4467 = vadd.f32 0.0, %v4466
        %v4468 = vpop.f32.mrf.mxu0
        %v4469 = vadd.f32 0.0, %v4468
        %4470 = vmatprep.mubr.f32.mxu0 0.0
        %4471 = vmatmul.mubr.f32.gmra.mxu0 %v4389
        %v4472 = vpop.f32.mrf.mxu0
        %v4473 = vadd.f32 0.0, %v4472
        %v4474 = vpop.f32.mrf.mxu0
        %v4475 = vadd.f32 0.0, %v4474
        %4476 = vmatprep.mubr.f32.mxu0 0.0
        %4477 = vmatmul.mubr.f32.gmra.mxu0 %v4392
        %v4478 = vpop.f32.mrf.mxu0
        %v4479 = vadd.f32 0.0, %v4478
        %v4480 = vpop.f32.mrf.mxu0
        %v4481 = vadd.f32 0.0, %v4480
        %4482 = vdwg.mxu0
        %v4483 = vadd.f32 %v4291, %v4461
        %v4484 = vadd.f32 %v4293, %v4463
        %v4485 = vadd.f32 %v4297, %v4467
        %v4486 = vadd.f32 %v4299, %v4469
        %v4487 = vadd.f32 %v4303, %v4473
        %v4488 = vadd.f32 %v4305, %v4475
        %v4489 = vadd.f32 %v4309, %v4479
        %v4490 = vadd.f32 %v4311, %v4481
        %v4491 = vmul.f32 %v3973, %v1252
        %v4492 = vmul.f32 %v3974, %v1256
        %v4493 = vmul.f32 %v3975, %v1254
        %v4494 = vmul.f32 %v3976, %v1252
        %v4495 = vmul.f32 %v3977, %v1256
        %v4496 = vmul.f32 %v3978, %v1254
        %v4497 = vmul.f32 %v3979, %v1252
        %v4498 = vmul.f32 %v3980, %v1256
        %v4499 = vmul.f32 %v3981, %v1254
        %v4500 = vmul.f32 %v3982, %v1252
        %v4501 = vmul.f32 %v3983, %v1256
        %v4502 = vmul.f32 %v3984, %v1254
        %s4503 = scalar_lea.vmem [#allocation6], 384
        %v4504 = vld [vmem:[%s4503] sm:$0xff]
        %v4505 = vld [vmem:[%s4503 + $0x8] sm:$0xff]
        %v4506 = vld [vmem:[%s4503 + $0x10] sm:$0xff]
        %v4507 = vld [vmem:[%s4503 + $0x18] sm:$0xff]
        %4520 = vrot.lane.b32.xlu0 %v4491, 1
        %v4521 = vpop.permute.xlu0 %4520
        %4522 = vrot.lane.b32.xlu0 %v4492, 1
        %v4523 = vpop.permute.xlu0 %4522
        %4524 = vrot.lane.b32.xlu0 %v4493, 1
        %v4525 = vpop.permute.xlu0 %4524
        %4526 = vrot.lane.b32.xlu0 %v4494, 1
        %v4527 = vpop.permute.xlu0 %4526
        %4528 = vrot.lane.b32.xlu0 %v4495, 1
        %v4529 = vpop.permute.xlu0 %4528
        %4530 = vrot.lane.b32.xlu0 %v4496, 1
        %v4531 = vpop.permute.xlu0 %4530
        %4532 = vrot.lane.b32.xlu0 %v4497, 1
        %v4533 = vpop.permute.xlu0 %4532
        %4534 = vrot.lane.b32.xlu0 %v4498, 1
        %v4535 = vpop.permute.xlu0 %4534
        %4536 = vrot.lane.b32.xlu0 %v4499, 1
        %v4537 = vpop.permute.xlu0 %4536
        %4538 = vrot.lane.b32.xlu0 %v4500, 1
        %v4539 = vpop.permute.xlu0 %4538
        %4540 = vrot.lane.b32.xlu0 %v4501, 1
        %v4541 = vpop.permute.xlu0 %4540
        %4542 = vrot.lane.b32.xlu0 %v4502, 1
        %v4543 = vpop.permute.xlu0 %4542
        %v4544 = vsel %vm1313, %v4521, %v4523
        %v4545 = vsel %vm1313, %v4523, %v4525
        %v4546 = vsel %vm1313, %v4527, %v4529
        %v4547 = vsel %vm1313, %v4529, %v4531
        %v4548 = vsel %vm1313, %v4533, %v4535
        %v4549 = vsel %vm1313, %v4535, %v4537
        %v4550 = vsel %vm1313, %v4539, %v4541
        %v4551 = vsel %vm1313, %v4541, %v4543
        %v4561 = vsel %vm805, %v4504, 0
        %v4564 = vsel %vm805, %v4505, 0
        %v4567 = vsel %vm805, %v4506, 0
        %v4570 = vsel %vm805, %v4507, 0
        %4572 = vmatprep.subr.mxu0 0.0
        %4573 = vmatpush1.msra.mxu0 0.0
        %4574 = vmatprep.subr.mxu0 0.0
        %4575 = vmatpush1.msra.mxu0 0.0
        %4576 = vmatprep.subr.mxu0 0.0
        %4577 = vmatpush1.msra.mxu0 0.0
        %4578 = vmatprep.subr.mxu0 0.0
        %4579 = vmatpush1.msra.mxu0 0.0
        %4580 = vmatprep.subr.mxu0 0.0
        %4581 = vmatpush1.msra.mxu0 0.0
        %4582 = vmatprep.subr.mxu0 0.0
        %4583 = vmatpush1.msra.mxu0 0.0
        %4584 = vmatprep.subr.mxu0 0.0
        %4585 = vmatpush1.msra.mxu0 0.0
        %4586 = vmatprep.subr.mxu0 0.0
        %4587 = vmatpush1.msra.mxu0 0.0
        %4588 = vmatprep.subr.mxu0 0.0
        %4589 = vmatpush1.msra.mxu0 0.0
        %4590 = vmatprep.subr.mxu0 0.0
        %4591 = vmatpush1.msra.mxu0 0.0
        %4592 = vmatprep.subr.mxu0 0.0
        %4593 = vmatpush1.msra.mxu0 0.0
        %4594 = vmatprep.subr.mxu0 0.0
        %4595 = vmatpush1.msra.mxu0 0.0
        %4596 = vmatprep.subr.mxu0 %v4551
        %4597 = vmatpush1.msra.mxu0 %v4550
        %4598 = vmatprep.subr.mxu0 %v4549
        %4599 = vmatpush1.msra.mxu0 %v4548
        %4600 = vmatprep.subr.mxu0 %v4547
        %4601 = vmatpush1.msra.mxu0 %v4546
        %4602 = vmatprep.subr.mxu0 %v4545
        %4603 = vmatpush1.msra.mxu0 %v4544
        %4604 = vmatprep.subr.mxu0 0.0
        %4605 = vmatpush2.msra.mxu0 0.0
        %4606 = vmatprep.subr.mxu0 0.0
        %4607 = vmatpush2.msra.mxu0 0.0
        %4608 = vmatprep.subr.mxu0 0.0
        %4609 = vmatpush2.msra.mxu0 0.0
        %4610 = vmatprep.subr.mxu0 0.0
        %4611 = vmatpush2.msra.mxu0 0.0
        %4612 = vmatprep.subr.mxu0 0.0
        %4613 = vmatpush2.msra.mxu0 0.0
        %4614 = vmatprep.subr.mxu0 0.0
        %4615 = vmatpush2.msra.mxu0 0.0
        %4616 = vmatprep.subr.mxu0 0.0
        %4617 = vmatpush2.msra.mxu0 0.0
        %4618 = vmatprep.subr.mxu0 0.0
        %4619 = vmatpush2.msra.mxu0 0.0
        %4620 = vmatprep.subr.mxu0 0.0
        %4621 = vmatpush2.msra.mxu0 0.0
        %4622 = vmatprep.subr.mxu0 0.0
        %4623 = vmatpush2.msra.mxu0 0.0
        %4624 = vmatprep.subr.mxu0 0.0
        %4625 = vmatpush2.msra.mxu0 0.0
        %4626 = vmatprep.subr.mxu0 0.0
        %4627 = vmatpush2.msra.mxu0 0.0
        %4628 = vmatprep.subr.mxu0 0.0
        %4629 = vmatpush2.msra.mxu0 0.0
        %4630 = vmatprep.subr.mxu0 0.0
        %4631 = vmatpush2.msra.mxu0 0.0
        %4632 = vmatprep.subr.mxu0 0.0
        %4633 = vmatpush2.msra.mxu0 0.0
        %4634 = vmatprep.subr.mxu0 0.0
        %4635 = vmatpush2.msra.mxu0 0.0
        %4636 = vmatprep.mubr.f32.mxu0 0.0
        %4637 = vmatmul.mubr.f32.gmra.mxu0 %v4561
        %v4638 = vpop.f32.mrf.mxu0
        %v4639 = vadd.f32 0.0, %v4638
        %v4640 = vpop.f32.mrf.mxu0
        %v4641 = vadd.f32 0.0, %v4640
        %4642 = vmatprep.mubr.f32.mxu0 0.0
        %4643 = vmatmul.mubr.f32.gmra.mxu0 %v4564
        %v4644 = vpop.f32.mrf.mxu0
        %v4645 = vadd.f32 0.0, %v4644
        %v4646 = vpop.f32.mrf.mxu0
        %v4647 = vadd.f32 0.0, %v4646
        %4648 = vmatprep.mubr.f32.mxu0 0.0
        %4649 = vmatmul.mubr.f32.gmra.mxu0 %v4567
        %v4650 = vpop.f32.mrf.mxu0
        %v4651 = vadd.f32 0.0, %v4650
        %v4652 = vpop.f32.mrf.mxu0
        %v4653 = vadd.f32 0.0, %v4652
        %4654 = vmatprep.mubr.f32.mxu0 0.0
        %4655 = vmatmul.mubr.f32.gmra.mxu0 %v4570
        %v4656 = vpop.f32.mrf.mxu0
        %v4657 = vadd.f32 0.0, %v4656
        %v4658 = vpop.f32.mrf.mxu0
        %v4659 = vadd.f32 0.0, %v4658
        %4660 = vdwg.mxu0
        %v4661 = vadd.f32 %v4483, %v4639
        %v4662 = vadd.f32 %v4484, %v4641
        %v4663 = vadd.f32 %v4485, %v4645
        %v4664 = vadd.f32 %v4486, %v4647
        %v4665 = vadd.f32 %v4487, %v4651
        %v4666 = vadd.f32 %v4488, %v4653
        %v4667 = vadd.f32 %v4489, %v4657
        %v4668 = vadd.f32 %v4490, %v4659
        %s4669 = scalar_lea.vmem [#allocation6], 416
        %v4670 = vld [vmem:[%s4669] sm:$0xff]
        %v4671 = vld [vmem:[%s4669 + $0x8] sm:$0xff]
        %v4672 = vld [vmem:[%s4669 + $0x10] sm:$0xff]
        %v4673 = vld [vmem:[%s4669 + $0x18] sm:$0xff]
        %v4675 = vsel %vm805, %v4670, 0
        %v4678 = vsel %vm805, %v4671, 0
        %v4681 = vsel %vm805, %v4672, 0
        %v4684 = vsel %vm805, %v4673, 0
        %4686 = vmatprep.subr.mxu0 0.0
        %4687 = vmatpush1.msra.mxu0 0.0
        %4688 = vmatprep.subr.mxu0 0.0
        %4689 = vmatpush1.msra.mxu0 0.0
        %4690 = vmatprep.subr.mxu0 0.0
        %4691 = vmatpush1.msra.mxu0 0.0
        %4692 = vmatprep.subr.mxu0 0.0
        %4693 = vmatpush1.msra.mxu0 0.0
        %4694 = vmatprep.subr.mxu0 0.0
        %4695 = vmatpush1.msra.mxu0 0.0
        %4696 = vmatprep.subr.mxu0 0.0
        %4697 = vmatpush1.msra.mxu0 0.0
        %4698 = vmatprep.subr.mxu0 0.0
        %4699 = vmatpush1.msra.mxu0 0.0
        %4700 = vmatprep.subr.mxu0 0.0
        %4701 = vmatpush1.msra.mxu0 0.0
        %4702 = vmatprep.subr.mxu0 0.0
        %4703 = vmatpush1.msra.mxu0 0.0
        %4704 = vmatprep.subr.mxu0 0.0
        %4705 = vmatpush1.msra.mxu0 0.0
        %4706 = vmatprep.subr.mxu0 0.0
        %4707 = vmatpush1.msra.mxu0 0.0
        %4708 = vmatprep.subr.mxu0 0.0
        %4709 = vmatpush1.msra.mxu0 0.0
        %4710 = vmatprep.subr.mxu0 %v3984
        %4711 = vmatpush1.msra.mxu0 %v3983
        %4712 = vmatprep.subr.mxu0 %v3981
        %4713 = vmatpush1.msra.mxu0 %v3980
        %4714 = vmatprep.subr.mxu0 %v3978
        %4715 = vmatpush1.msra.mxu0 %v3977
        %4716 = vmatprep.subr.mxu0 %v3975
        %4717 = vmatpush1.msra.mxu0 %v3974
        %4718 = vmatprep.subr.mxu0 0.0
        %4719 = vmatpush2.msra.mxu0 0.0
        %4720 = vmatprep.subr.mxu0 0.0
        %4721 = vmatpush2.msra.mxu0 0.0
        %4722 = vmatprep.subr.mxu0 0.0
        %4723 = vmatpush2.msra.mxu0 0.0
        %4724 = vmatprep.subr.mxu0 0.0
        %4725 = vmatpush2.msra.mxu0 0.0
        %4726 = vmatprep.subr.mxu0 0.0
        %4727 = vmatpush2.msra.mxu0 0.0
        %4728 = vmatprep.subr.mxu0 0.0
        %4729 = vmatpush2.msra.mxu0 0.0
        %4730 = vmatprep.subr.mxu0 0.0
        %4731 = vmatpush2.msra.mxu0 0.0
        %4732 = vmatprep.subr.mxu0 0.0
        %4733 = vmatpush2.msra.mxu0 0.0
        %4734 = vmatprep.subr.mxu0 0.0
        %4735 = vmatpush2.msra.mxu0 0.0
        %4736 = vmatprep.subr.mxu0 0.0
        %4737 = vmatpush2.msra.mxu0 0.0
        %4738 = vmatprep.subr.mxu0 0.0
        %4739 = vmatpush2.msra.mxu0 0.0
        %4740 = vmatprep.subr.mxu0 0.0
        %4741 = vmatpush2.msra.mxu0 0.0
        %4742 = vmatprep.subr.mxu0 0.0
        %4743 = vmatpush2.msra.mxu0 0.0
        %4744 = vmatprep.subr.mxu0 0.0
        %4745 = vmatpush2.msra.mxu0 0.0
        %4746 = vmatprep.subr.mxu0 0.0
        %4747 = vmatpush2.msra.mxu0 0.0
        %4748 = vmatprep.subr.mxu0 0.0
        %4749 = vmatpush2.msra.mxu0 0.0
        %4750 = vmatprep.mubr.f32.mxu0 0.0
        %4751 = vmatmul.mubr.f32.gmra.mxu0 %v4675
        %v4752 = vpop.f32.mrf.mxu0
        %v4753 = vadd.f32 0.0, %v4752
        %v4754 = vpop.f32.mrf.mxu0
        %v4755 = vadd.f32 0.0, %v4754
        %4756 = vmatprep.mubr.f32.mxu0 0.0
        %4757 = vmatmul.mubr.f32.gmra.mxu0 %v4678
        %v4758 = vpop.f32.mrf.mxu0
        %v4759 = vadd.f32 0.0, %v4758
        %v4760 = vpop.f32.mrf.mxu0
        %v4761 = vadd.f32 0.0, %v4760
        %4762 = vmatprep.mubr.f32.mxu0 0.0
        %4763 = vmatmul.mubr.f32.gmra.mxu0 %v4681
        %v4764 = vpop.f32.mrf.mxu0
        %v4765 = vadd.f32 0.0, %v4764
        %v4766 = vpop.f32.mrf.mxu0
        %v4767 = vadd.f32 0.0, %v4766
        %4768 = vmatprep.mubr.f32.mxu0 0.0
        %4769 = vmatmul.mubr.f32.gmra.mxu0 %v4684
        %v4770 = vpop.f32.mrf.mxu0
        %v4771 = vadd.f32 0.0, %v4770
        %v4772 = vpop.f32.mrf.mxu0
        %v4773 = vadd.f32 0.0, %v4772
        %4774 = vdwg.mxu0
        %v4775 = vadd.f32 %v4661, %v4753
        %v4776 = vadd.f32 %v4662, %v4755
        %v4777 = vadd.f32 %v4663, %v4759
        %v4778 = vadd.f32 %v4664, %v4761
        %v4779 = vadd.f32 %v4665, %v4765
        %v4780 = vadd.f32 %v4666, %v4767
        %v4781 = vadd.f32 %v4667, %v4771
        %v4782 = vadd.f32 %v4668, %v4773
        %v4783 = vld [vmem:[#allocation2 + $0x8] sm:$0xff]
        %v4784 = vld [vmem:[#allocation2 + $0x10] sm:$0xff]
        %v4785 = vld [vmem:[#allocation2 + $0x18] sm:$0xff]
        %v4786 = vld [vmem:[#allocation2 + $0x28] sm:$0xff]
        %v4787 = vld [vmem:[#allocation2 + $0x30] sm:$0xff]
        %v4788 = vld [vmem:[#allocation2 + $0x38] sm:$0xff]
        %v4789 = vld [vmem:[#allocation2 + $0x48] sm:$0xff]
        %v4790 = vld [vmem:[#allocation2 + $0x50] sm:$0xff]
        %v4791 = vld [vmem:[#allocation2 + $0x58] sm:$0xff]
        %v4792 = vld [vmem:[#allocation2 + $0x68] sm:$0xff]
        %v4793 = vld [vmem:[#allocation2 + $0x70] sm:$0xff]
        %v4794 = vld [vmem:[#allocation2 + $0x78] sm:$0xff]
        %v4795 = vmul.f32 %v4783, %v1566
        %v4796 = vmul.f32 %v4784, %v1569
        %v4797 = vmul.f32 %v4785, %v1568
        %v4798 = vmul.f32 %v4786, %v1566
        %v4799 = vmul.f32 %v4787, %v1569
        %v4800 = vmul.f32 %v4788, %v1568
        %v4801 = vmul.f32 %v4789, %v1566
        %v4802 = vmul.f32 %v4790, %v1569
        %v4803 = vmul.f32 %v4791, %v1568
        %v4804 = vmul.f32 %v4792, %v1566
        %v4805 = vmul.f32 %v4793, %v1569
        %v4806 = vmul.f32 %v4794, %v1568
        %s4807 = scalar_lea.vmem [#allocation6], 448
        %v4808 = vld [vmem:[%s4807] sm:$0xff]
        %v4809 = vld [vmem:[%s4807 + $0x8] sm:$0xff]
        %v4810 = vld [vmem:[%s4807 + $0x10] sm:$0xff]
        %v4811 = vld [vmem:[%s4807 + $0x18] sm:$0xff]
        %4824 = vrot.lane.b32.xlu0 %v4795, 127
        %v4825 = vpop.permute.xlu0 %4824
        %4826 = vrot.lane.b32.xlu0 %v4796, 127
        %v4827 = vpop.permute.xlu0 %4826
        %4828 = vrot.lane.b32.xlu0 %v4797, 127
        %v4829 = vpop.permute.xlu0 %4828
        %4830 = vrot.lane.b32.xlu0 %v4798, 127
        %v4831 = vpop.permute.xlu0 %4830
        %4832 = vrot.lane.b32.xlu0 %v4799, 127
        %v4833 = vpop.permute.xlu0 %4832
        %4834 = vrot.lane.b32.xlu0 %v4800, 127
        %v4835 = vpop.permute.xlu0 %4834
        %4836 = vrot.lane.b32.xlu0 %v4801, 127
        %v4837 = vpop.permute.xlu0 %4836
        %4838 = vrot.lane.b32.xlu0 %v4802, 127
        %v4839 = vpop.permute.xlu0 %4838
        %4840 = vrot.lane.b32.xlu0 %v4803, 127
        %v4841 = vpop.permute.xlu0 %4840
        %4842 = vrot.lane.b32.xlu0 %v4804, 127
        %v4843 = vpop.permute.xlu0 %4842
        %4844 = vrot.lane.b32.xlu0 %v4805, 127
        %v4845 = vpop.permute.xlu0 %4844
        %4846 = vrot.lane.b32.xlu0 %v4806, 127
        %v4847 = vpop.permute.xlu0 %4846
        %v4848 = vsel %vm1255, %v4825, %v4827
        %v4849 = vsel %vm1255, %v4827, %v4829
        %v4850 = vsel %vm1255, %v4831, %v4833
        %v4851 = vsel %vm1255, %v4833, %v4835
        %v4852 = vsel %vm1255, %v4837, %v4839
        %v4853 = vsel %vm1255, %v4839, %v4841
        %v4854 = vsel %vm1255, %v4843, %v4845
        %v4855 = vsel %vm1255, %v4845, %v4847
        %v4865 = vsel %vm805, %v4808, 0
        %v4868 = vsel %vm805, %v4809, 0
        %v4871 = vsel %vm805, %v4810, 0
        %v4874 = vsel %vm805, %v4811, 0
        %4876 = vmatprep.subr.mxu0 0.0
        %4877 = vmatpush1.msra.mxu0 0.0
        %4878 = vmatprep.subr.mxu0 0.0
        %4879 = vmatpush1.msra.mxu0 0.0
        %4880 = vmatprep.subr.mxu0 0.0
        %4881 = vmatpush1.msra.mxu0 0.0
        %4882 = vmatprep.subr.mxu0 0.0
        %4883 = vmatpush1.msra.mxu0 0.0
        %4884 = vmatprep.subr.mxu0 0.0
        %4885 = vmatpush1.msra.mxu0 0.0
        %4886 = vmatprep.subr.mxu0 0.0
        %4887 = vmatpush1.msra.mxu0 0.0
        %4888 = vmatprep.subr.mxu0 0.0
        %4889 = vmatpush1.msra.mxu0 0.0
        %4890 = vmatprep.subr.mxu0 0.0
        %4891 = vmatpush1.msra.mxu0 0.0
        %4892 = vmatprep.subr.mxu0 0.0
        %4893 = vmatpush1.msra.mxu0 0.0
        %4894 = vmatprep.subr.mxu0 0.0
        %4895 = vmatpush1.msra.mxu0 0.0
        %4896 = vmatprep.subr.mxu0 0.0
        %4897 = vmatpush1.msra.mxu0 0.0
        %4898 = vmatprep.subr.mxu0 0.0
        %4899 = vmatpush1.msra.mxu0 0.0
        %4900 = vmatprep.subr.mxu0 %v4855
        %4901 = vmatpush1.msra.mxu0 %v4854
        %4902 = vmatprep.subr.mxu0 %v4853
        %4903 = vmatpush1.msra.mxu0 %v4852
        %4904 = vmatprep.subr.mxu0 %v4851
        %4905 = vmatpush1.msra.mxu0 %v4850
        %4906 = vmatprep.subr.mxu0 %v4849
        %4907 = vmatpush1.msra.mxu0 %v4848
        %4908 = vmatprep.subr.mxu0 0.0
        %4909 = vmatpush2.msra.mxu0 0.0
        %4910 = vmatprep.subr.mxu0 0.0
        %4911 = vmatpush2.msra.mxu0 0.0
        %4912 = vmatprep.subr.mxu0 0.0
        %4913 = vmatpush2.msra.mxu0 0.0
        %4914 = vmatprep.subr.mxu0 0.0
        %4915 = vmatpush2.msra.mxu0 0.0
        %4916 = vmatprep.subr.mxu0 0.0
        %4917 = vmatpush2.msra.mxu0 0.0
        %4918 = vmatprep.subr.mxu0 0.0
        %4919 = vmatpush2.msra.mxu0 0.0
        %4920 = vmatprep.subr.mxu0 0.0
        %4921 = vmatpush2.msra.mxu0 0.0
        %4922 = vmatprep.subr.mxu0 0.0
        %4923 = vmatpush2.msra.mxu0 0.0
        %4924 = vmatprep.subr.mxu0 0.0
        %4925 = vmatpush2.msra.mxu0 0.0
        %4926 = vmatprep.subr.mxu0 0.0
        %4927 = vmatpush2.msra.mxu0 0.0
        %4928 = vmatprep.subr.mxu0 0.0
        %4929 = vmatpush2.msra.mxu0 0.0
        %4930 = vmatprep.subr.mxu0 0.0
        %4931 = vmatpush2.msra.mxu0 0.0
        %4932 = vmatprep.subr.mxu0 0.0
        %4933 = vmatpush2.msra.mxu0 0.0
        %4934 = vmatprep.subr.mxu0 0.0
        %4935 = vmatpush2.msra.mxu0 0.0
        %4936 = vmatprep.subr.mxu0 0.0
        %4937 = vmatpush2.msra.mxu0 0.0
        %4938 = vmatprep.subr.mxu0 0.0
        %4939 = vmatpush2.msra.mxu0 0.0
        %4940 = vmatprep.mubr.f32.mxu0 0.0
        %4941 = vmatmul.mubr.f32.gmra.mxu0 %v4865
        %v4942 = vpop.f32.mrf.mxu0
        %v4943 = vadd.f32 0.0, %v4942
        %v4944 = vpop.f32.mrf.mxu0
        %v4945 = vadd.f32 0.0, %v4944
        %4946 = vmatprep.mubr.f32.mxu0 0.0
        %4947 = vmatmul.mubr.f32.gmra.mxu0 %v4868
        %v4948 = vpop.f32.mrf.mxu0
        %v4949 = vadd.f32 0.0, %v4948
        %v4950 = vpop.f32.mrf.mxu0
        %v4951 = vadd.f32 0.0, %v4950
        %4952 = vmatprep.mubr.f32.mxu0 0.0
        %4953 = vmatmul.mubr.f32.gmra.mxu0 %v4871
        %v4954 = vpop.f32.mrf.mxu0
        %v4955 = vadd.f32 0.0, %v4954
        %v4956 = vpop.f32.mrf.mxu0
        %v4957 = vadd.f32 0.0, %v4956
        %4958 = vmatprep.mubr.f32.mxu0 0.0
        %4959 = vmatmul.mubr.f32.gmra.mxu0 %v4874
        %v4960 = vpop.f32.mrf.mxu0
        %v4961 = vadd.f32 0.0, %v4960
        %v4962 = vpop.f32.mrf.mxu0
        %v4963 = vadd.f32 0.0, %v4962
        %4964 = vdwg.mxu0
        %v4965 = vadd.f32 %v4775, %v4943
        %v4966 = vadd.f32 %v4776, %v4945
        %v4967 = vadd.f32 %v4777, %v4949
        %v4968 = vadd.f32 %v4778, %v4951
        %v4969 = vadd.f32 %v4779, %v4955
        %v4970 = vadd.f32 %v4780, %v4957
        %v4971 = vadd.f32 %v4781, %v4961
        %v4972 = vadd.f32 %v4782, %v4963
        %v4973 = vmul.f32 %v4783, %v1752
        %v4974 = vmul.f32 %v4784, %v1755
        %v4975 = vmul.f32 %v4785, %v1754
        %v4976 = vmul.f32 %v4786, %v1752
        %v4977 = vmul.f32 %v4787, %v1755
        %v4978 = vmul.f32 %v4788, %v1754
        %v4979 = vmul.f32 %v4789, %v1752
        %v4980 = vmul.f32 %v4790, %v1755
        %v4981 = vmul.f32 %v4791, %v1754
        %v4982 = vmul.f32 %v4792, %v1752
        %v4983 = vmul.f32 %v4793, %v1755
        %v4984 = vmul.f32 %v4794, %v1754
        %s4985 = scalar_lea.vmem [#allocation6], 480
        %v4986 = vld [vmem:[%s4985] sm:$0xff]
        %v4987 = vld [vmem:[%s4985 + $0x8] sm:$0xff]
        %v4988 = vld [vmem:[%s4985 + $0x10] sm:$0xff]
        %v4989 = vld [vmem:[%s4985 + $0x18] sm:$0xff]
        %5002 = vrot.lane.b32.xlu0 %v4973, 113
        %v5003 = vpop.permute.xlu0 %5002
        %5004 = vrot.lane.b32.xlu0 %v4974, 113
        %v5005 = vpop.permute.xlu0 %5004
        %5006 = vrot.lane.b32.xlu0 %v4975, 113
        %v5007 = vpop.permute.xlu0 %5006
        %5008 = vrot.lane.b32.xlu0 %v4976, 113
        %v5009 = vpop.permute.xlu0 %5008
        %5010 = vrot.lane.b32.xlu0 %v4977, 113
        %v5011 = vpop.permute.xlu0 %5010
        %5012 = vrot.lane.b32.xlu0 %v4978, 113
        %v5013 = vpop.permute.xlu0 %5012
        %5014 = vrot.lane.b32.xlu0 %v4979, 113
        %v5015 = vpop.permute.xlu0 %5014
        %5016 = vrot.lane.b32.xlu0 %v4980, 113
        %v5017 = vpop.permute.xlu0 %5016
        %5018 = vrot.lane.b32.xlu0 %v4981, 113
        %v5019 = vpop.permute.xlu0 %5018
        %5020 = vrot.lane.b32.xlu0 %v4982, 113
        %v5021 = vpop.permute.xlu0 %5020
        %5022 = vrot.lane.b32.xlu0 %v4983, 113
        %v5023 = vpop.permute.xlu0 %5022
        %5024 = vrot.lane.b32.xlu0 %v4984, 113
        %v5025 = vpop.permute.xlu0 %5024
        %v5026 = vsel %vm1067, %v5003, %v5005
        %v5027 = vsel %vm1067, %v5005, %v5007
        %v5028 = vsel %vm1067, %v5009, %v5011
        %v5029 = vsel %vm1067, %v5011, %v5013
        %v5030 = vsel %vm1067, %v5015, %v5017
        %v5031 = vsel %vm1067, %v5017, %v5019
        %v5032 = vsel %vm1067, %v5021, %v5023
        %v5033 = vsel %vm1067, %v5023, %v5025
        %v5043 = vsel %vm805, %v4986, 0
        %v5046 = vsel %vm805, %v4987, 0
        %v5049 = vsel %vm805, %v4988, 0
        %v5052 = vsel %vm805, %v4989, 0
        %5054 = vmatprep.subr.mxu0 0.0
        %5055 = vmatpush1.msra.mxu0 0.0
        %5056 = vmatprep.subr.mxu0 0.0
        %5057 = vmatpush1.msra.mxu0 0.0
        %5058 = vmatprep.subr.mxu0 0.0
        %5059 = vmatpush1.msra.mxu0 0.0
        %5060 = vmatprep.subr.mxu0 0.0
        %5061 = vmatpush1.msra.mxu0 0.0
        %5062 = vmatprep.subr.mxu0 0.0
        %5063 = vmatpush1.msra.mxu0 0.0
        %5064 = vmatprep.subr.mxu0 0.0
        %5065 = vmatpush1.msra.mxu0 0.0
        %5066 = vmatprep.subr.mxu0 0.0
        %5067 = vmatpush1.msra.mxu0 0.0
        %5068 = vmatprep.subr.mxu0 0.0
        %5069 = vmatpush1.msra.mxu0 0.0
        %5070 = vmatprep.subr.mxu0 0.0
        %5071 = vmatpush1.msra.mxu0 0.0
        %5072 = vmatprep.subr.mxu0 0.0
        %5073 = vmatpush1.msra.mxu0 0.0
        %5074 = vmatprep.subr.mxu0 0.0
        %5075 = vmatpush1.msra.mxu0 0.0
        %5076 = vmatprep.subr.mxu0 0.0
        %5077 = vmatpush1.msra.mxu0 0.0
        %5078 = vmatprep.subr.mxu0 %v5033
        %5079 = vmatpush1.msra.mxu0 %v5032
        %5080 = vmatprep.subr.mxu0 %v5031
        %5081 = vmatpush1.msra.mxu0 %v5030
        %5082 = vmatprep.subr.mxu0 %v5029
        %5083 = vmatpush1.msra.mxu0 %v5028
        %5084 = vmatprep.subr.mxu0 %v5027
        %5085 = vmatpush1.msra.mxu0 %v5026
        %5086 = vmatprep.subr.mxu0 0.0
        %5087 = vmatpush2.msra.mxu0 0.0
        %5088 = vmatprep.subr.mxu0 0.0
        %5089 = vmatpush2.msra.mxu0 0.0
        %5090 = vmatprep.subr.mxu0 0.0
        %5091 = vmatpush2.msra.mxu0 0.0
        %5092 = vmatprep.subr.mxu0 0.0
        %5093 = vmatpush2.msra.mxu0 0.0
        %5094 = vmatprep.subr.mxu0 0.0
        %5095 = vmatpush2.msra.mxu0 0.0
        %5096 = vmatprep.subr.mxu0 0.0
        %5097 = vmatpush2.msra.mxu0 0.0
        %5098 = vmatprep.subr.mxu0 0.0
        %5099 = vmatpush2.msra.mxu0 0.0
        %5100 = vmatprep.subr.mxu0 0.0
        %5101 = vmatpush2.msra.mxu0 0.0
        %5102 = vmatprep.subr.mxu0 0.0
        %5103 = vmatpush2.msra.mxu0 0.0
        %5104 = vmatprep.subr.mxu0 0.0
        %5105 = vmatpush2.msra.mxu0 0.0
        %5106 = vmatprep.subr.mxu0 0.0
        %5107 = vmatpush2.msra.mxu0 0.0
        %5108 = vmatprep.subr.mxu0 0.0
        %5109 = vmatpush2.msra.mxu0 0.0
        %5110 = vmatprep.subr.mxu0 0.0
        %5111 = vmatpush2.msra.mxu0 0.0
        %5112 = vmatprep.subr.mxu0 0.0
        %5113 = vmatpush2.msra.mxu0 0.0
        %5114 = vmatprep.subr.mxu0 0.0
        %5115 = vmatpush2.msra.mxu0 0.0
        %5116 = vmatprep.subr.mxu0 0.0
        %5117 = vmatpush2.msra.mxu0 0.0
        %5118 = vmatprep.mubr.f32.mxu0 0.0
        %5119 = vmatmul.mubr.f32.gmra.mxu0 %v5043
        %v5120 = vpop.f32.mrf.mxu0
        %v5121 = vadd.f32 0.0, %v5120
        %v5122 = vpop.f32.mrf.mxu0
        %v5123 = vadd.f32 0.0, %v5122
        %5124 = vmatprep.mubr.f32.mxu0 0.0
        %5125 = vmatmul.mubr.f32.gmra.mxu0 %v5046
        %v5126 = vpop.f32.mrf.mxu0
        %v5127 = vadd.f32 0.0, %v5126
        %v5128 = vpop.f32.mrf.mxu0
        %v5129 = vadd.f32 0.0, %v5128
        %5130 = vmatprep.mubr.f32.mxu0 0.0
        %5131 = vmatmul.mubr.f32.gmra.mxu0 %v5049
        %v5132 = vpop.f32.mrf.mxu0
        %v5133 = vadd.f32 0.0, %v5132
        %v5134 = vpop.f32.mrf.mxu0
        %v5135 = vadd.f32 0.0, %v5134
        %5136 = vmatprep.mubr.f32.mxu0 0.0
        %5137 = vmatmul.mubr.f32.gmra.mxu0 %v5052
        %v5138 = vpop.f32.mrf.mxu0
        %v5139 = vadd.f32 0.0, %v5138
        %v5140 = vpop.f32.mrf.mxu0
        %v5141 = vadd.f32 0.0, %v5140
        %5142 = vdwg.mxu0
        %v5143 = vadd.f32 %v4965, %v5121
        %v5144 = vadd.f32 %v4966, %v5123
        %v5145 = vadd.f32 %v4967, %v5127
        %v5146 = vadd.f32 %v4968, %v5129
        %v5147 = vadd.f32 %v4969, %v5133
        %v5148 = vadd.f32 %v4970, %v5135
        %v5149 = vadd.f32 %v4971, %v5139
        %v5150 = vadd.f32 %v4972, %v5141
        %s5151 = scalar_lea.vmem [#allocation6], 512
        %v5152 = vld [vmem:[%s5151] sm:$0xff]
        %v5153 = vld [vmem:[%s5151 + $0x8] sm:$0xff]
        %v5154 = vld [vmem:[%s5151 + $0x10] sm:$0xff]
        %v5155 = vld [vmem:[%s5151 + $0x18] sm:$0xff]
        %5168 = vrot.lane.b32.xlu0 %v4783, 112
        %v5169 = vpop.permute.xlu0 %5168
        %5170 = vrot.lane.b32.xlu0 %v4784, 112
        %v5171 = vpop.permute.xlu0 %5170
        %5172 = vrot.lane.b32.xlu0 %v4785, 112
        %v5173 = vpop.permute.xlu0 %5172
        %5174 = vrot.lane.b32.xlu0 %v4786, 112
        %v5175 = vpop.permute.xlu0 %5174
        %5176 = vrot.lane.b32.xlu0 %v4787, 112
        %v5177 = vpop.permute.xlu0 %5176
        %5178 = vrot.lane.b32.xlu0 %v4788, 112
        %v5179 = vpop.permute.xlu0 %5178
        %5180 = vrot.lane.b32.xlu0 %v4789, 112
        %v5181 = vpop.permute.xlu0 %5180
        %5182 = vrot.lane.b32.xlu0 %v4790, 112
        %v5183 = vpop.permute.xlu0 %5182
        %5184 = vrot.lane.b32.xlu0 %v4791, 112
        %v5185 = vpop.permute.xlu0 %5184
        %5186 = vrot.lane.b32.xlu0 %v4792, 112
        %v5187 = vpop.permute.xlu0 %5186
        %5188 = vrot.lane.b32.xlu0 %v4793, 112
        %v5189 = vpop.permute.xlu0 %5188
        %5190 = vrot.lane.b32.xlu0 %v4794, 112
        %v5191 = vpop.permute.xlu0 %5190
        %v5192 = vsel %vm1978, %v5169, %v5171
        %v5193 = vsel %vm1978, %v5171, %v5173
        %v5194 = vsel %vm1978, %v5175, %v5177
        %v5195 = vsel %vm1978, %v5177, %v5179
        %v5196 = vsel %vm1978, %v5181, %v5183
        %v5197 = vsel %vm1978, %v5183, %v5185
        %v5198 = vsel %vm1978, %v5187, %v5189
        %v5199 = vsel %vm1978, %v5189, %v5191
        %v5209 = vsel %vm805, %v5152, 0
        %v5212 = vsel %vm805, %v5153, 0
        %v5215 = vsel %vm805, %v5154, 0
        %v5218 = vsel %vm805, %v5155, 0
        %5220 = vmatprep.subr.mxu0 0.0
        %5221 = vmatpush1.msra.mxu0 0.0
        %5222 = vmatprep.subr.mxu0 0.0
        %5223 = vmatpush1.msra.mxu0 0.0
        %5224 = vmatprep.subr.mxu0 0.0
        %5225 = vmatpush1.msra.mxu0 0.0
        %5226 = vmatprep.subr.mxu0 0.0
        %5227 = vmatpush1.msra.mxu0 0.0
        %5228 = vmatprep.subr.mxu0 0.0
        %5229 = vmatpush1.msra.mxu0 0.0
        %5230 = vmatprep.subr.mxu0 0.0
        %5231 = vmatpush1.msra.mxu0 0.0
        %5232 = vmatprep.subr.mxu0 0.0
        %5233 = vmatpush1.msra.mxu0 0.0
        %5234 = vmatprep.subr.mxu0 0.0
        %5235 = vmatpush1.msra.mxu0 0.0
        %5236 = vmatprep.subr.mxu0 0.0
        %5237 = vmatpush1.msra.mxu0 0.0
        %5238 = vmatprep.subr.mxu0 0.0
        %5239 = vmatpush1.msra.mxu0 0.0
        %5240 = vmatprep.subr.mxu0 0.0
        %5241 = vmatpush1.msra.mxu0 0.0
        %5242 = vmatprep.subr.mxu0 0.0
        %5243 = vmatpush1.msra.mxu0 0.0
        %5244 = vmatprep.subr.mxu0 %v5199
        %5245 = vmatpush1.msra.mxu0 %v5198
        %5246 = vmatprep.subr.mxu0 %v5197
        %5247 = vmatpush1.msra.mxu0 %v5196
        %5248 = vmatprep.subr.mxu0 %v5195
        %5249 = vmatpush1.msra.mxu0 %v5194
        %5250 = vmatprep.subr.mxu0 %v5193
        %5251 = vmatpush1.msra.mxu0 %v5192
        %5252 = vmatprep.subr.mxu0 0.0
        %5253 = vmatpush2.msra.mxu0 0.0
        %5254 = vmatprep.subr.mxu0 0.0
        %5255 = vmatpush2.msra.mxu0 0.0
        %5256 = vmatprep.subr.mxu0 0.0
        %5257 = vmatpush2.msra.mxu0 0.0
        %5258 = vmatprep.subr.mxu0 0.0
        %5259 = vmatpush2.msra.mxu0 0.0
        %5260 = vmatprep.subr.mxu0 0.0
        %5261 = vmatpush2.msra.mxu0 0.0
        %5262 = vmatprep.subr.mxu0 0.0
        %5263 = vmatpush2.msra.mxu0 0.0
        %5264 = vmatprep.subr.mxu0 0.0
        %5265 = vmatpush2.msra.mxu0 0.0
        %5266 = vmatprep.subr.mxu0 0.0
        %5267 = vmatpush2.msra.mxu0 0.0
        %5268 = vmatprep.subr.mxu0 0.0
        %5269 = vmatpush2.msra.mxu0 0.0
        %5270 = vmatprep.subr.mxu0 0.0
        %5271 = vmatpush2.msra.mxu0 0.0
        %5272 = vmatprep.subr.mxu0 0.0
        %5273 = vmatpush2.msra.mxu0 0.0
        %5274 = vmatprep.subr.mxu0 0.0
        %5275 = vmatpush2.msra.mxu0 0.0
        %5276 = vmatprep.subr.mxu0 0.0
        %5277 = vmatpush2.msra.mxu0 0.0
        %5278 = vmatprep.subr.mxu0 0.0
        %5279 = vmatpush2.msra.mxu0 0.0
        %5280 = vmatprep.subr.mxu0 0.0
        %5281 = vmatpush2.msra.mxu0 0.0
        %5282 = vmatprep.subr.mxu0 0.0
        %5283 = vmatpush2.msra.mxu0 0.0
        %5284 = vmatprep.mubr.f32.mxu0 0.0
        %5285 = vmatmul.mubr.f32.gmra.mxu0 %v5209
        %v5286 = vpop.f32.mrf.mxu0
        %v5287 = vadd.f32 0.0, %v5286
        %v5288 = vpop.f32.mrf.mxu0
        %v5289 = vadd.f32 0.0, %v5288
        %5290 = vmatprep.mubr.f32.mxu0 0.0
        %5291 = vmatmul.mubr.f32.gmra.mxu0 %v5212
        %v5292 = vpop.f32.mrf.mxu0
        %v5293 = vadd.f32 0.0, %v5292
        %v5294 = vpop.f32.mrf.mxu0
        %v5295 = vadd.f32 0.0, %v5294
        %5296 = vmatprep.mubr.f32.mxu0 0.0
        %5297 = vmatmul.mubr.f32.gmra.mxu0 %v5215
        %v5298 = vpop.f32.mrf.mxu0
        %v5299 = vadd.f32 0.0, %v5298
        %v5300 = vpop.f32.mrf.mxu0
        %v5301 = vadd.f32 0.0, %v5300
        %5302 = vmatprep.mubr.f32.mxu0 0.0
        %5303 = vmatmul.mubr.f32.gmra.mxu0 %v5218
        %v5304 = vpop.f32.mrf.mxu0
        %v5305 = vadd.f32 0.0, %v5304
        %v5306 = vpop.f32.mrf.mxu0
        %v5307 = vadd.f32 0.0, %v5306
        %5308 = vdwg.mxu0
        %v5309 = vadd.f32 %v5143, %v5287
        %v5310 = vadd.f32 %v5144, %v5289
        %v5311 = vadd.f32 %v5145, %v5293
        %v5312 = vadd.f32 %v5146, %v5295
        %v5313 = vadd.f32 %v5147, %v5299
        %v5314 = vadd.f32 %v5148, %v5301
        %v5315 = vadd.f32 %v5149, %v5305
        %v5316 = vadd.f32 %v5150, %v5307
        %v5317 = vmul.f32 %v4783, %v2105
        %v5318 = vmul.f32 %v4784, %v2108
        %v5319 = vmul.f32 %v4785, %v2107
        %v5320 = vmul.f32 %v4786, %v2105
        %v5321 = vmul.f32 %v4787, %v2108
        %v5322 = vmul.f32 %v4788, %v2107
        %v5323 = vmul.f32 %v4789, %v2105
        %v5324 = vmul.f32 %v4790, %v2108
        %v5325 = vmul.f32 %v4791, %v2107
        %v5326 = vmul.f32 %v4792, %v2105
        %v5327 = vmul.f32 %v4793, %v2108
        %v5328 = vmul.f32 %v4794, %v2107
        %s5329 = scalar_lea.vmem [#allocation6], 544
        %v5330 = vld [vmem:[%s5329] sm:$0xff]
        %v5331 = vld [vmem:[%s5329 + $0x8] sm:$0xff]
        %v5332 = vld [vmem:[%s5329 + $0x10] sm:$0xff]
        %v5333 = vld [vmem:[%s5329 + $0x18] sm:$0xff]
        %5346 = vrot.lane.b32.xlu0 %v5317, 111
        %v5347 = vpop.permute.xlu0 %5346
        %5348 = vrot.lane.b32.xlu0 %v5318, 111
        %v5349 = vpop.permute.xlu0 %5348
        %5350 = vrot.lane.b32.xlu0 %v5319, 111
        %v5351 = vpop.permute.xlu0 %5350
        %5352 = vrot.lane.b32.xlu0 %v5320, 111
        %v5353 = vpop.permute.xlu0 %5352
        %5354 = vrot.lane.b32.xlu0 %v5321, 111
        %v5355 = vpop.permute.xlu0 %5354
        %5356 = vrot.lane.b32.xlu0 %v5322, 111
        %v5357 = vpop.permute.xlu0 %5356
        %5358 = vrot.lane.b32.xlu0 %v5323, 111
        %v5359 = vpop.permute.xlu0 %5358
        %5360 = vrot.lane.b32.xlu0 %v5324, 111
        %v5361 = vpop.permute.xlu0 %5360
        %5362 = vrot.lane.b32.xlu0 %v5325, 111
        %v5363 = vpop.permute.xlu0 %5362
        %5364 = vrot.lane.b32.xlu0 %v5326, 111
        %v5365 = vpop.permute.xlu0 %5364
        %5366 = vrot.lane.b32.xlu0 %v5327, 111
        %v5367 = vpop.permute.xlu0 %5366
        %5368 = vrot.lane.b32.xlu0 %v5328, 111
        %v5369 = vpop.permute.xlu0 %5368
        %v5370 = vsel %vm726, %v5347, %v5349
        %v5371 = vsel %vm726, %v5349, %v5351
        %v5372 = vsel %vm726, %v5353, %v5355
        %v5373 = vsel %vm726, %v5355, %v5357
        %v5374 = vsel %vm726, %v5359, %v5361
        %v5375 = vsel %vm726, %v5361, %v5363
        %v5376 = vsel %vm726, %v5365, %v5367
        %v5377 = vsel %vm726, %v5367, %v5369
        %v5387 = vsel %vm805, %v5330, 0
        %v5390 = vsel %vm805, %v5331, 0
        %v5393 = vsel %vm805, %v5332, 0
        %v5396 = vsel %vm805, %v5333, 0
        %5398 = vmatprep.subr.mxu0 0.0
        %5399 = vmatpush1.msra.mxu0 0.0
        %5400 = vmatprep.subr.mxu0 0.0
        %5401 = vmatpush1.msra.mxu0 0.0
        %5402 = vmatprep.subr.mxu0 0.0
        %5403 = vmatpush1.msra.mxu0 0.0
        %5404 = vmatprep.subr.mxu0 0.0
        %5405 = vmatpush1.msra.mxu0 0.0
        %5406 = vmatprep.subr.mxu0 0.0
        %5407 = vmatpush1.msra.mxu0 0.0
        %5408 = vmatprep.subr.mxu0 0.0
        %5409 = vmatpush1.msra.mxu0 0.0
        %5410 = vmatprep.subr.mxu0 0.0
        %5411 = vmatpush1.msra.mxu0 0.0
        %5412 = vmatprep.subr.mxu0 0.0
        %5413 = vmatpush1.msra.mxu0 0.0
        %5414 = vmatprep.subr.mxu0 0.0
        %5415 = vmatpush1.msra.mxu0 0.0
        %5416 = vmatprep.subr.mxu0 0.0
        %5417 = vmatpush1.msra.mxu0 0.0
        %5418 = vmatprep.subr.mxu0 0.0
        %5419 = vmatpush1.msra.mxu0 0.0
        %5420 = vmatprep.subr.mxu0 0.0
        %5421 = vmatpush1.msra.mxu0 0.0
        %5422 = vmatprep.subr.mxu0 %v5377
        %5423 = vmatpush1.msra.mxu0 %v5376
        %5424 = vmatprep.subr.mxu0 %v5375
        %5425 = vmatpush1.msra.mxu0 %v5374
        %5426 = vmatprep.subr.mxu0 %v5373
        %5427 = vmatpush1.msra.mxu0 %v5372
        %5428 = vmatprep.subr.mxu0 %v5371
        %5429 = vmatpush1.msra.mxu0 %v5370
        %5430 = vmatprep.subr.mxu0 0.0
        %5431 = vmatpush2.msra.mxu0 0.0
        %5432 = vmatprep.subr.mxu0 0.0
        %5433 = vmatpush2.msra.mxu0 0.0
        %5434 = vmatprep.subr.mxu0 0.0
        %5435 = vmatpush2.msra.mxu0 0.0
        %5436 = vmatprep.subr.mxu0 0.0
        %5437 = vmatpush2.msra.mxu0 0.0
        %5438 = vmatprep.subr.mxu0 0.0
        %5439 = vmatpush2.msra.mxu0 0.0
        %5440 = vmatprep.subr.mxu0 0.0
        %5441 = vmatpush2.msra.mxu0 0.0
        %5442 = vmatprep.subr.mxu0 0.0
        %5443 = vmatpush2.msra.mxu0 0.0
        %5444 = vmatprep.subr.mxu0 0.0
        %5445 = vmatpush2.msra.mxu0 0.0
        %5446 = vmatprep.subr.mxu0 0.0
        %5447 = vmatpush2.msra.mxu0 0.0
        %5448 = vmatprep.subr.mxu0 0.0
        %5449 = vmatpush2.msra.mxu0 0.0
        %5450 = vmatprep.subr.mxu0 0.0
        %5451 = vmatpush2.msra.mxu0 0.0
        %5452 = vmatprep.subr.mxu0 0.0
        %5453 = vmatpush2.msra.mxu0 0.0
        %5454 = vmatprep.subr.mxu0 0.0
        %5455 = vmatpush2.msra.mxu0 0.0
        %5456 = vmatprep.subr.mxu0 0.0
        %5457 = vmatpush2.msra.mxu0 0.0
        %5458 = vmatprep.subr.mxu0 0.0
        %5459 = vmatpush2.msra.mxu0 0.0
        %5460 = vmatprep.subr.mxu0 0.0
        %5461 = vmatpush2.msra.mxu0 0.0
        %5462 = vmatprep.mubr.f32.mxu0 0.0
        %5463 = vmatmul.mubr.f32.gmra.mxu0 %v5387
        %v5464 = vpop.f32.mrf.mxu0
        %v5465 = vadd.f32 0.0, %v5464
        %v5466 = vpop.f32.mrf.mxu0
        %v5467 = vadd.f32 0.0, %v5466
        %5468 = vmatprep.mubr.f32.mxu0 0.0
        %5469 = vmatmul.mubr.f32.gmra.mxu0 %v5390
        %v5470 = vpop.f32.mrf.mxu0
        %v5471 = vadd.f32 0.0, %v5470
        %v5472 = vpop.f32.mrf.mxu0
        %v5473 = vadd.f32 0.0, %v5472
        %5474 = vmatprep.mubr.f32.mxu0 0.0
        %5475 = vmatmul.mubr.f32.gmra.mxu0 %v5393
        %v5476 = vpop.f32.mrf.mxu0
        %v5477 = vadd.f32 0.0, %v5476
        %v5478 = vpop.f32.mrf.mxu0
        %v5479 = vadd.f32 0.0, %v5478
        %5480 = vmatprep.mubr.f32.mxu0 0.0
        %5481 = vmatmul.mubr.f32.gmra.mxu0 %v5396
        %v5482 = vpop.f32.mrf.mxu0
        %v5483 = vadd.f32 0.0, %v5482
        %v5484 = vpop.f32.mrf.mxu0
        %v5485 = vadd.f32 0.0, %v5484
        %5486 = vdwg.mxu0
        %v5487 = vadd.f32 %v5309, %v5465
        %v5488 = vadd.f32 %v5310, %v5467
        %v5489 = vadd.f32 %v5311, %v5471
        %v5490 = vadd.f32 %v5312, %v5473
        %v5491 = vadd.f32 %v5313, %v5477
        %v5492 = vadd.f32 %v5314, %v5479
        %v5493 = vadd.f32 %v5315, %v5483
        %v5494 = vadd.f32 %v5316, %v5485
        %5496 = vset.pattern.permute.xlu0 0
        %5497 = vperm.xlu0 %5496, %v3956
        %v5498 = vpop.permute.xlu0 %5497
        %5501 = vset.pattern.permute.xlu0 0
        %5502 = vperm.xlu0 %5501, %v3957
        %v5503 = vpop.permute.xlu0 %5502
        %5506 = vset.pattern.permute.xlu0 0
        %5507 = vperm.xlu0 %5506, %v3958
        %v5508 = vpop.permute.xlu0 %5507
        %5511 = vset.pattern.permute.xlu0 0
        %5512 = vperm.xlu0 %5511, %v3959
        %v5513 = vpop.permute.xlu0 %5512
        %v5515 = vmul.f32 %v5487, %v5498
        %v5516 = vmul.f32 %v5488, %v5498
        %v5517 = vmul.f32 %v5489, %v5503
        %v5518 = vmul.f32 %v5490, %v5503
        %v5519 = vmul.f32 %v5491, %v5508
        %v5520 = vmul.f32 %v5492, %v5508
        %v5521 = vmul.f32 %v5493, %v5513
        %v5522 = vmul.f32 %v5494, %v5513
        %5524 = vset.pattern.permute.xlu0 0
        %5525 = vperm.xlu0 %5524, %v3961
        %v5526 = vpop.permute.xlu0 %5525
        %5529 = vset.pattern.permute.xlu0 0
        %5530 = vperm.xlu0 %5529, %v3962
        %v5531 = vpop.permute.xlu0 %5530
        %5534 = vset.pattern.permute.xlu0 0
        %5535 = vperm.xlu0 %5534, %v3963
        %v5536 = vpop.permute.xlu0 %5535
        %5539 = vset.pattern.permute.xlu0 0
        %5540 = vperm.xlu0 %5539, %v3964
        %v5541 = vpop.permute.xlu0 %5540
        %v5543 = vadd.f32 %v5515, %v5526
        %v5544 = vadd.f32 %v5516, %v5526
        %v5545 = vadd.f32 %v5517, %v5531
        %v5546 = vadd.f32 %v5518, %v5531
        %v5547 = vadd.f32 %v5519, %v5536
        %v5548 = vadd.f32 %v5520, %v5536
        %v5549 = vadd.f32 %v5521, %v5541
        %v5550 = vadd.f32 %v5522, %v5541
        %v5551 = vadd.f32 %v5543, %v2346
        %v5552 = vadd.f32 %v5544, %v2347
        %v5553 = vadd.f32 %v5545, %v2348
        %v5554 = vadd.f32 %v5546, %v2349
        %v5555 = vadd.f32 %v5547, %v2350
        %v5556 = vadd.f32 %v5548, %v2351
        %v5557 = vadd.f32 %v5549, %v2352
        %v5558 = vadd.f32 %v5550, %v2353
        %v5559 = vmax.f32 %v5551, 0.0
        %v5560 = vmax.f32 %v5552, 0.0
        %v5561 = vmax.f32 %v5553, 0.0
        %v5562 = vmax.f32 %v5554, 0.0
        %v5563 = vmax.f32 %v5555, 0.0
        %v5564 = vmax.f32 %v5556, 0.0
        %v5565 = vmax.f32 %v5557, 0.0
        %v5566 = vmax.f32 %v5558, 0.0
        %s5567 = scalar_lea.vmem %s5, 64
        %v5568 = vld [vmem:[%s5567] sm:$0xff]
        %v5569 = vld [vmem:[%s5567 + $0x8] sm:$0xff]
        %v5570 = vld [vmem:[%s5567 + $0x10] sm:$0xff]
        %v5571 = vld [vmem:[%s5567 + $0x18] sm:$0xff]
        %s5572 = scalar_lea.vmem %s6, 64
        %v5573 = vld [vmem:[%s5572] sm:$0xff]
        %v5574 = vld [vmem:[%s5572 + $0x8] sm:$0xff]
        %v5575 = vld [vmem:[%s5572 + $0x10] sm:$0xff]
        %v5576 = vld [vmem:[%s5572 + $0x18] sm:$0xff]
        %5577 = vst [vmem:[#allocation2 + $0x8] sm:$0xff] %v5559
        %5578 = vst [vmem:[#allocation2 + $0x10] sm:$0xff] %v5560
        %5579 = vst [vmem:[#allocation2 + $0x28] sm:$0xff] %v5561
        %5580 = vst [vmem:[#allocation2 + $0x30] sm:$0xff] %v5562
        %5581 = vst [vmem:[#allocation2 + $0x48] sm:$0xff] %v5563
        %5582 = vst [vmem:[#allocation2 + $0x50] sm:$0xff] %v5564
        %5583 = vst [vmem:[#allocation2 + $0x68] sm:$0xff] %v5565
        %5584 = vst [vmem:[#allocation2 + $0x70] sm:$0xff] %v5566
        %v5585 = vld [vmem:[#allocation2] sm:$0xff]
        %v5586 = vld [vmem:[#allocation2 + $0x8] sm:$0xff]
        %v5587 = vld [vmem:[#allocation2 + $0x10] sm:$0xff]
        %v5588 = vld [vmem:[#allocation2 + $0x20] sm:$0xff]
        %v5589 = vld [vmem:[#allocation2 + $0x28] sm:$0xff]
        %v5590 = vld [vmem:[#allocation2 + $0x30] sm:$0xff]
        %v5591 = vld [vmem:[#allocation2 + $0x40] sm:$0xff]
        %v5592 = vld [vmem:[#allocation2 + $0x48] sm:$0xff]
        %v5593 = vld [vmem:[#allocation2 + $0x50] sm:$0xff]
        %v5594 = vld [vmem:[#allocation2 + $0x60] sm:$0xff]
        %v5595 = vld [vmem:[#allocation2 + $0x68] sm:$0xff]
        %v5596 = vld [vmem:[#allocation2 + $0x70] sm:$0xff]
        %v5597 = vmul.f32 %v5585, %v723
        %v5598 = vmul.f32 %v5586, %v727
        %v5599 = vmul.f32 %v5587, %v725
        %v5600 = vmul.f32 %v5588, %v723
        %v5601 = vmul.f32 %v5589, %v727
        %v5602 = vmul.f32 %v5590, %v725
        %v5603 = vmul.f32 %v5591, %v723
        %v5604 = vmul.f32 %v5592, %v727
        %v5605 = vmul.f32 %v5593, %v725
        %v5606 = vmul.f32 %v5594, %v723
        %v5607 = vmul.f32 %v5595, %v727
        %v5608 = vmul.f32 %v5596, %v725
        %s5609 = scalar_lea.vmem [#allocation6], 576
        %v5610 = vld [vmem:[%s5609] sm:$0xff]
        %v5611 = vld [vmem:[%s5609 + $0x8] sm:$0xff]
        %v5612 = vld [vmem:[%s5609 + $0x10] sm:$0xff]
        %v5613 = vld [vmem:[%s5609 + $0x18] sm:$0xff]
        %s5614 = scalar_lea.vmem [#allocation6], 608
        %v5615 = vld [vmem:[%s5614] sm:$0xff]
        %v5616 = vld [vmem:[%s5614 + $0x8] sm:$0xff]
        %v5617 = vld [vmem:[%s5614 + $0x10] sm:$0xff]
        %v5618 = vld [vmem:[%s5614 + $0x18] sm:$0xff]
        %5631 = vrot.lane.b32.xlu0 %v5585, 16
        %v5632 = vpop.permute.xlu0 %5631
        %5633 = vrot.lane.b32.xlu0 %v5586, 16
        %v5634 = vpop.permute.xlu0 %5633
        %5635 = vrot.lane.b32.xlu0 %v5587, 16
        %v5636 = vpop.permute.xlu0 %5635
        %5637 = vrot.lane.b32.xlu0 %v5588, 16
        %v5638 = vpop.permute.xlu0 %5637
        %5639 = vrot.lane.b32.xlu0 %v5589, 16
        %v5640 = vpop.permute.xlu0 %5639
        %5641 = vrot.lane.b32.xlu0 %v5590, 16
        %v5642 = vpop.permute.xlu0 %5641
        %5643 = vrot.lane.b32.xlu0 %v5591, 16
        %v5644 = vpop.permute.xlu0 %5643
        %5645 = vrot.lane.b32.xlu0 %v5592, 16
        %v5646 = vpop.permute.xlu0 %5645
        %5647 = vrot.lane.b32.xlu0 %v5593, 16
        %v5648 = vpop.permute.xlu0 %5647
        %5649 = vrot.lane.b32.xlu0 %v5594, 16
        %v5650 = vpop.permute.xlu0 %5649
        %5651 = vrot.lane.b32.xlu0 %v5595, 16
        %v5652 = vpop.permute.xlu0 %5651
        %5653 = vrot.lane.b32.xlu0 %v5596, 16
        %v5654 = vpop.permute.xlu0 %5653
        %v5655 = vsel %vm788, %v5632, %v5634
        %v5656 = vsel %vm788, %v5634, %v5636
        %v5657 = vsel %vm788, %v5638, %v5640
        %v5658 = vsel %vm788, %v5640, %v5642
        %v5659 = vsel %vm788, %v5644, %v5646
        %v5660 = vsel %vm788, %v5646, %v5648
        %v5661 = vsel %vm788, %v5650, %v5652
        %v5662 = vsel %vm788, %v5652, %v5654
        %v5672 = vsel %vm805, %v5615, 0
        %v5675 = vsel %vm805, %v5616, 0
        %v5678 = vsel %vm805, %v5617, 0
        %v5681 = vsel %vm805, %v5618, 0
        %5683 = vmatprep.subr.mxu0 0.0
        %5684 = vmatpush1.msra.mxu0 0.0
        %5685 = vmatprep.subr.mxu0 0.0
        %5686 = vmatpush1.msra.mxu0 0.0
        %5687 = vmatprep.subr.mxu0 0.0
        %5688 = vmatpush1.msra.mxu0 0.0
        %5689 = vmatprep.subr.mxu0 0.0
        %5690 = vmatpush1.msra.mxu0 0.0
        %5691 = vmatprep.subr.mxu0 0.0
        %5692 = vmatpush1.msra.mxu0 0.0
        %5693 = vmatprep.subr.mxu0 0.0
        %5694 = vmatpush1.msra.mxu0 0.0
        %5695 = vmatprep.subr.mxu0 0.0
        %5696 = vmatpush1.msra.mxu0 0.0
        %5697 = vmatprep.subr.mxu0 0.0
        %5698 = vmatpush1.msra.mxu0 0.0
        %5699 = vmatprep.subr.mxu0 0.0
        %5700 = vmatpush1.msra.mxu0 0.0
        %5701 = vmatprep.subr.mxu0 0.0
        %5702 = vmatpush1.msra.mxu0 0.0
        %5703 = vmatprep.subr.mxu0 0.0
        %5704 = vmatpush1.msra.mxu0 0.0
        %5705 = vmatprep.subr.mxu0 0.0
        %5706 = vmatpush1.msra.mxu0 0.0
        %5707 = vmatprep.subr.mxu0 %v5662
        %5708 = vmatpush1.msra.mxu0 %v5661
        %5709 = vmatprep.subr.mxu0 %v5660
        %5710 = vmatpush1.msra.mxu0 %v5659
        %5711 = vmatprep.subr.mxu0 %v5658
        %5712 = vmatpush1.msra.mxu0 %v5657
        %5713 = vmatprep.subr.mxu0 %v5656
        %5714 = vmatpush1.msra.mxu0 %v5655
        %5715 = vmatprep.subr.mxu0 0.0
        %5716 = vmatpush2.msra.mxu0 0.0
        %5717 = vmatprep.subr.mxu0 0.0
        %5718 = vmatpush2.msra.mxu0 0.0
        %5719 = vmatprep.subr.mxu0 0.0
        %5720 = vmatpush2.msra.mxu0 0.0
        %5721 = vmatprep.subr.mxu0 0.0
        %5722 = vmatpush2.msra.mxu0 0.0
        %5723 = vmatprep.subr.mxu0 0.0
        %5724 = vmatpush2.msra.mxu0 0.0
        %5725 = vmatprep.subr.mxu0 0.0
        %5726 = vmatpush2.msra.mxu0 0.0
        %5727 = vmatprep.subr.mxu0 0.0
        %5728 = vmatpush2.msra.mxu0 0.0
        %5729 = vmatprep.subr.mxu0 0.0
        %5730 = vmatpush2.msra.mxu0 0.0
        %5731 = vmatprep.subr.mxu0 0.0
        %5732 = vmatpush2.msra.mxu0 0.0
        %5733 = vmatprep.subr.mxu0 0.0
        %5734 = vmatpush2.msra.mxu0 0.0
        %5735 = vmatprep.subr.mxu0 0.0
        %5736 = vmatpush2.msra.mxu0 0.0
        %5737 = vmatprep.subr.mxu0 0.0
        %5738 = vmatpush2.msra.mxu0 0.0
        %5739 = vmatprep.subr.mxu0 0.0
        %5740 = vmatpush2.msra.mxu0 0.0
        %5741 = vmatprep.subr.mxu0 0.0
        %5742 = vmatpush2.msra.mxu0 0.0
        %5743 = vmatprep.subr.mxu0 0.0
        %5744 = vmatpush2.msra.mxu0 0.0
        %5745 = vmatprep.subr.mxu0 0.0
        %5746 = vmatpush2.msra.mxu0 0.0
        %5747 = vmatprep.mubr.f32.mxu0 0.0
        %5748 = vmatmul.mubr.f32.gmra.mxu0 %v5672
        %v5749 = vpop.f32.mrf.mxu0
        %v5750 = vadd.f32 0.0, %v5749
        %v5751 = vpop.f32.mrf.mxu0
        %v5752 = vadd.f32 0.0, %v5751
        %5753 = vmatprep.mubr.f32.mxu0 0.0
        %5754 = vmatmul.mubr.f32.gmra.mxu0 %v5675
        %v5755 = vpop.f32.mrf.mxu0
        %v5756 = vadd.f32 0.0, %v5755
        %v5757 = vpop.f32.mrf.mxu0
        %v5758 = vadd.f32 0.0, %v5757
        %5759 = vmatprep.mubr.f32.mxu0 0.0
        %5760 = vmatmul.mubr.f32.gmra.mxu0 %v5678
        %v5761 = vpop.f32.mrf.mxu0
        %v5762 = vadd.f32 0.0, %v5761
        %v5763 = vpop.f32.mrf.mxu0
        %v5764 = vadd.f32 0.0, %v5763
        %5765 = vmatprep.mubr.f32.mxu0 0.0
        %5766 = vmatmul.mubr.f32.gmra.mxu0 %v5681
        %v5767 = vpop.f32.mrf.mxu0
        %v5768 = vadd.f32 0.0, %v5767
        %v5769 = vpop.f32.mrf.mxu0
        %v5770 = vadd.f32 0.0, %v5769
        %5771 = vdwg.mxu0
        %5784 = vrot.lane.b32.xlu0 %v5597, 17
        %v5785 = vpop.permute.xlu0 %5784
        %5786 = vrot.lane.b32.xlu0 %v5598, 17
        %v5787 = vpop.permute.xlu0 %5786
        %5788 = vrot.lane.b32.xlu0 %v5599, 17
        %v5789 = vpop.permute.xlu0 %5788
        %5790 = vrot.lane.b32.xlu0 %v5600, 17
        %v5791 = vpop.permute.xlu0 %5790
        %5792 = vrot.lane.b32.xlu0 %v5601, 17
        %v5793 = vpop.permute.xlu0 %5792
        %5794 = vrot.lane.b32.xlu0 %v5602, 17
        %v5795 = vpop.permute.xlu0 %5794
        %5796 = vrot.lane.b32.xlu0 %v5603, 17
        %v5797 = vpop.permute.xlu0 %5796
        %5798 = vrot.lane.b32.xlu0 %v5604, 17
        %v5799 = vpop.permute.xlu0 %5798
        %5800 = vrot.lane.b32.xlu0 %v5605, 17
        %v5801 = vpop.permute.xlu0 %5800
        %5802 = vrot.lane.b32.xlu0 %v5606, 17
        %v5803 = vpop.permute.xlu0 %5802
        %5804 = vrot.lane.b32.xlu0 %v5607, 17
        %v5805 = vpop.permute.xlu0 %5804
        %5806 = vrot.lane.b32.xlu0 %v5608, 17
        %v5807 = vpop.permute.xlu0 %5806
        %v5808 = vsel %vm943, %v5785, %v5787
        %v5809 = vsel %vm943, %v5787, %v5789
        %v5810 = vsel %vm943, %v5791, %v5793
        %v5811 = vsel %vm943, %v5793, %v5795
        %v5812 = vsel %vm943, %v5797, %v5799
        %v5813 = vsel %vm943, %v5799, %v5801
        %v5814 = vsel %vm943, %v5803, %v5805
        %v5815 = vsel %vm943, %v5805, %v5807
        %v5825 = vsel %vm805, %v5610, 0
        %v5828 = vsel %vm805, %v5611, 0
        %v5831 = vsel %vm805, %v5612, 0
        %v5834 = vsel %vm805, %v5613, 0
        %5836 = vmatprep.subr.mxu0 0.0
        %5837 = vmatpush1.msra.mxu0 0.0
        %5838 = vmatprep.subr.mxu0 0.0
        %5839 = vmatpush1.msra.mxu0 0.0
        %5840 = vmatprep.subr.mxu0 0.0
        %5841 = vmatpush1.msra.mxu0 0.0
        %5842 = vmatprep.subr.mxu0 0.0
        %5843 = vmatpush1.msra.mxu0 0.0
        %5844 = vmatprep.subr.mxu0 0.0
        %5845 = vmatpush1.msra.mxu0 0.0
        %5846 = vmatprep.subr.mxu0 0.0
        %5847 = vmatpush1.msra.mxu0 0.0
        %5848 = vmatprep.subr.mxu0 0.0
        %5849 = vmatpush1.msra.mxu0 0.0
        %5850 = vmatprep.subr.mxu0 0.0
        %5851 = vmatpush1.msra.mxu0 0.0
        %5852 = vmatprep.subr.mxu0 0.0
        %5853 = vmatpush1.msra.mxu0 0.0
        %5854 = vmatprep.subr.mxu0 0.0
        %5855 = vmatpush1.msra.mxu0 0.0
        %5856 = vmatprep.subr.mxu0 0.0
        %5857 = vmatpush1.msra.mxu0 0.0
        %5858 = vmatprep.subr.mxu0 0.0
        %5859 = vmatpush1.msra.mxu0 0.0
        %5860 = vmatprep.subr.mxu0 %v5815
        %5861 = vmatpush1.msra.mxu0 %v5814
        %5862 = vmatprep.subr.mxu0 %v5813
        %5863 = vmatpush1.msra.mxu0 %v5812
        %5864 = vmatprep.subr.mxu0 %v5811
        %5865 = vmatpush1.msra.mxu0 %v5810
        %5866 = vmatprep.subr.mxu0 %v5809
        %5867 = vmatpush1.msra.mxu0 %v5808
        %5868 = vmatprep.subr.mxu0 0.0
        %5869 = vmatpush2.msra.mxu0 0.0
        %5870 = vmatprep.subr.mxu0 0.0
        %5871 = vmatpush2.msra.mxu0 0.0
        %5872 = vmatprep.subr.mxu0 0.0
        %5873 = vmatpush2.msra.mxu0 0.0
        %5874 = vmatprep.subr.mxu0 0.0
        %5875 = vmatpush2.msra.mxu0 0.0
        %5876 = vmatprep.subr.mxu0 0.0
        %5877 = vmatpush2.msra.mxu0 0.0
        %5878 = vmatprep.subr.mxu0 0.0
        %5879 = vmatpush2.msra.mxu0 0.0
        %5880 = vmatprep.subr.mxu0 0.0
        %5881 = vmatpush2.msra.mxu0 0.0
        %5882 = vmatprep.subr.mxu0 0.0
        %5883 = vmatpush2.msra.mxu0 0.0
        %5884 = vmatprep.subr.mxu0 0.0
        %5885 = vmatpush2.msra.mxu0 0.0
        %5886 = vmatprep.subr.mxu0 0.0
        %5887 = vmatpush2.msra.mxu0 0.0
        %5888 = vmatprep.subr.mxu0 0.0
        %5889 = vmatpush2.msra.mxu0 0.0
        %5890 = vmatprep.subr.mxu0 0.0
        %5891 = vmatpush2.msra.mxu0 0.0
        %5892 = vmatprep.subr.mxu0 0.0
        %5893 = vmatpush2.msra.mxu0 0.0
        %5894 = vmatprep.subr.mxu0 0.0
        %5895 = vmatpush2.msra.mxu0 0.0
        %5896 = vmatprep.subr.mxu0 0.0
        %5897 = vmatpush2.msra.mxu0 0.0
        %5898 = vmatprep.subr.mxu0 0.0
        %5899 = vmatpush2.msra.mxu0 0.0
        %5900 = vmatprep.mubr.f32.mxu0 0.0
        %5901 = vmatmul.mubr.f32.gmra.mxu0 %v5825
        %v5902 = vpop.f32.mrf.mxu0
        %v5903 = vadd.f32 %v5750, %v5902
        %v5904 = vpop.f32.mrf.mxu0
        %v5905 = vadd.f32 %v5752, %v5904
        %5906 = vmatprep.mubr.f32.mxu0 0.0
        %5907 = vmatmul.mubr.f32.gmra.mxu0 %v5828
        %v5908 = vpop.f32.mrf.mxu0
        %v5909 = vadd.f32 %v5756, %v5908
        %v5910 = vpop.f32.mrf.mxu0
        %v5911 = vadd.f32 %v5758, %v5910
        %5912 = vmatprep.mubr.f32.mxu0 0.0
        %5913 = vmatmul.mubr.f32.gmra.mxu0 %v5831
        %v5914 = vpop.f32.mrf.mxu0
        %v5915 = vadd.f32 %v5762, %v5914
        %v5916 = vpop.f32.mrf.mxu0
        %v5917 = vadd.f32 %v5764, %v5916
        %5918 = vmatprep.mubr.f32.mxu0 0.0
        %5919 = vmatmul.mubr.f32.gmra.mxu0 %v5834
        %v5920 = vpop.f32.mrf.mxu0
        %v5921 = vadd.f32 %v5768, %v5920
        %v5922 = vpop.f32.mrf.mxu0
        %v5923 = vadd.f32 %v5770, %v5922
        %5924 = vdwg.mxu0
        %v5925 = vmul.f32 %v5585, %v1064
        %v5926 = vmul.f32 %v5586, %v1068
        %v5927 = vmul.f32 %v5587, %v1066
        %v5928 = vmul.f32 %v5588, %v1064
        %v5929 = vmul.f32 %v5589, %v1068
        %v5930 = vmul.f32 %v5590, %v1066
        %v5931 = vmul.f32 %v5591, %v1064
        %v5932 = vmul.f32 %v5592, %v1068
        %v5933 = vmul.f32 %v5593, %v1066
        %v5934 = vmul.f32 %v5594, %v1064
        %v5935 = vmul.f32 %v5595, %v1068
        %v5936 = vmul.f32 %v5596, %v1066
        %s5937 = scalar_lea.vmem [#allocation6], 640
        %v5938 = vld [vmem:[%s5937] sm:$0xff]
        %v5939 = vld [vmem:[%s5937 + $0x8] sm:$0xff]
        %v5940 = vld [vmem:[%s5937 + $0x10] sm:$0xff]
        %v5941 = vld [vmem:[%s5937 + $0x18] sm:$0xff]
        %5954 = vrot.lane.b32.xlu0 %v5925, 15
        %v5955 = vpop.permute.xlu0 %5954
        %5956 = vrot.lane.b32.xlu0 %v5926, 15
        %v5957 = vpop.permute.xlu0 %5956
        %5958 = vrot.lane.b32.xlu0 %v5927, 15
        %v5959 = vpop.permute.xlu0 %5958
        %5960 = vrot.lane.b32.xlu0 %v5928, 15
        %v5961 = vpop.permute.xlu0 %5960
        %5962 = vrot.lane.b32.xlu0 %v5929, 15
        %v5963 = vpop.permute.xlu0 %5962
        %5964 = vrot.lane.b32.xlu0 %v5930, 15
        %v5965 = vpop.permute.xlu0 %5964
        %5966 = vrot.lane.b32.xlu0 %v5931, 15
        %v5967 = vpop.permute.xlu0 %5966
        %5968 = vrot.lane.b32.xlu0 %v5932, 15
        %v5969 = vpop.permute.xlu0 %5968
        %5970 = vrot.lane.b32.xlu0 %v5933, 15
        %v5971 = vpop.permute.xlu0 %5970
        %5972 = vrot.lane.b32.xlu0 %v5934, 15
        %v5973 = vpop.permute.xlu0 %5972
        %5974 = vrot.lane.b32.xlu0 %v5935, 15
        %v5975 = vpop.permute.xlu0 %5974
        %5976 = vrot.lane.b32.xlu0 %v5936, 15
        %v5977 = vpop.permute.xlu0 %5976
        %v5978 = vsel %vm1125, %v5955, %v5957
        %v5979 = vsel %vm1125, %v5957, %v5959
        %v5980 = vsel %vm1125, %v5961, %v5963
        %v5981 = vsel %vm1125, %v5963, %v5965
        %v5982 = vsel %vm1125, %v5967, %v5969
        %v5983 = vsel %vm1125, %v5969, %v5971
        %v5984 = vsel %vm1125, %v5973, %v5975
        %v5985 = vsel %vm1125, %v5975, %v5977
        %v5995 = vsel %vm805, %v5938, 0
        %v5998 = vsel %vm805, %v5939, 0
        %v6001 = vsel %vm805, %v5940, 0
        %v6004 = vsel %vm805, %v5941, 0
        %6006 = vmatprep.subr.mxu0 0.0
        %6007 = vmatpush1.msra.mxu0 0.0
        %6008 = vmatprep.subr.mxu0 0.0
        %6009 = vmatpush1.msra.mxu0 0.0
        %6010 = vmatprep.subr.mxu0 0.0
        %6011 = vmatpush1.msra.mxu0 0.0
        %6012 = vmatprep.subr.mxu0 0.0
        %6013 = vmatpush1.msra.mxu0 0.0
        %6014 = vmatprep.subr.mxu0 0.0
        %6015 = vmatpush1.msra.mxu0 0.0
        %6016 = vmatprep.subr.mxu0 0.0
        %6017 = vmatpush1.msra.mxu0 0.0
        %6018 = vmatprep.subr.mxu0 0.0
        %6019 = vmatpush1.msra.mxu0 0.0
        %6020 = vmatprep.subr.mxu0 0.0
        %6021 = vmatpush1.msra.mxu0 0.0
        %6022 = vmatprep.subr.mxu0 0.0
        %6023 = vmatpush1.msra.mxu0 0.0
        %6024 = vmatprep.subr.mxu0 0.0
        %6025 = vmatpush1.msra.mxu0 0.0
        %6026 = vmatprep.subr.mxu0 0.0
        %6027 = vmatpush1.msra.mxu0 0.0
        %6028 = vmatprep.subr.mxu0 0.0
        %6029 = vmatpush1.msra.mxu0 0.0
        %6030 = vmatprep.subr.mxu0 %v5985
        %6031 = vmatpush1.msra.mxu0 %v5984
        %6032 = vmatprep.subr.mxu0 %v5983
        %6033 = vmatpush1.msra.mxu0 %v5982
        %6034 = vmatprep.subr.mxu0 %v5981
        %6035 = vmatpush1.msra.mxu0 %v5980
        %6036 = vmatprep.subr.mxu0 %v5979
        %6037 = vmatpush1.msra.mxu0 %v5978
        %6038 = vmatprep.subr.mxu0 0.0
        %6039 = vmatpush2.msra.mxu0 0.0
        %6040 = vmatprep.subr.mxu0 0.0
        %6041 = vmatpush2.msra.mxu0 0.0
        %6042 = vmatprep.subr.mxu0 0.0
        %6043 = vmatpush2.msra.mxu0 0.0
        %6044 = vmatprep.subr.mxu0 0.0
        %6045 = vmatpush2.msra.mxu0 0.0
        %6046 = vmatprep.subr.mxu0 0.0
        %6047 = vmatpush2.msra.mxu0 0.0
        %6048 = vmatprep.subr.mxu0 0.0
        %6049 = vmatpush2.msra.mxu0 0.0
        %6050 = vmatprep.subr.mxu0 0.0
        %6051 = vmatpush2.msra.mxu0 0.0
        %6052 = vmatprep.subr.mxu0 0.0
        %6053 = vmatpush2.msra.mxu0 0.0
        %6054 = vmatprep.subr.mxu0 0.0
        %6055 = vmatpush2.msra.mxu0 0.0
        %6056 = vmatprep.subr.mxu0 0.0
        %6057 = vmatpush2.msra.mxu0 0.0
        %6058 = vmatprep.subr.mxu0 0.0
        %6059 = vmatpush2.msra.mxu0 0.0
        %6060 = vmatprep.subr.mxu0 0.0
        %6061 = vmatpush2.msra.mxu0 0.0
        %6062 = vmatprep.subr.mxu0 0.0
        %6063 = vmatpush2.msra.mxu0 0.0
        %6064 = vmatprep.subr.mxu0 0.0
        %6065 = vmatpush2.msra.mxu0 0.0
        %6066 = vmatprep.subr.mxu0 0.0
        %6067 = vmatpush2.msra.mxu0 0.0
        %6068 = vmatprep.subr.mxu0 0.0
        %6069 = vmatpush2.msra.mxu0 0.0
        %6070 = vmatprep.mubr.f32.mxu0 0.0
        %6071 = vmatmul.mubr.f32.gmra.mxu0 %v5995
        %v6072 = vpop.f32.mrf.mxu0
        %v6073 = vadd.f32 0.0, %v6072
        %v6074 = vpop.f32.mrf.mxu0
        %v6075 = vadd.f32 0.0, %v6074
        %6076 = vmatprep.mubr.f32.mxu0 0.0
        %6077 = vmatmul.mubr.f32.gmra.mxu0 %v5998
        %v6078 = vpop.f32.mrf.mxu0
        %v6079 = vadd.f32 0.0, %v6078
        %v6080 = vpop.f32.mrf.mxu0
        %v6081 = vadd.f32 0.0, %v6080
        %6082 = vmatprep.mubr.f32.mxu0 0.0
        %6083 = vmatmul.mubr.f32.gmra.mxu0 %v6001
        %v6084 = vpop.f32.mrf.mxu0
        %v6085 = vadd.f32 0.0, %v6084
        %v6086 = vpop.f32.mrf.mxu0
        %v6087 = vadd.f32 0.0, %v6086
        %6088 = vmatprep.mubr.f32.mxu0 0.0
        %6089 = vmatmul.mubr.f32.gmra.mxu0 %v6004
        %v6090 = vpop.f32.mrf.mxu0
        %v6091 = vadd.f32 0.0, %v6090
        %v6092 = vpop.f32.mrf.mxu0
        %v6093 = vadd.f32 0.0, %v6092
        %6094 = vdwg.mxu0
        %v6095 = vadd.f32 %v5903, %v6073
        %v6096 = vadd.f32 %v5905, %v6075
        %v6097 = vadd.f32 %v5909, %v6079
        %v6098 = vadd.f32 %v5911, %v6081
        %v6099 = vadd.f32 %v5915, %v6085
        %v6100 = vadd.f32 %v5917, %v6087
        %v6101 = vadd.f32 %v5921, %v6091
        %v6102 = vadd.f32 %v5923, %v6093
        %v6103 = vmul.f32 %v5585, %v1252
        %v6104 = vmul.f32 %v5586, %v1256
        %v6105 = vmul.f32 %v5587, %v1254
        %v6106 = vmul.f32 %v5588, %v1252
        %v6107 = vmul.f32 %v5589, %v1256
        %v6108 = vmul.f32 %v5590, %v1254
        %v6109 = vmul.f32 %v5591, %v1252
        %v6110 = vmul.f32 %v5592, %v1256
        %v6111 = vmul.f32 %v5593, %v1254
        %v6112 = vmul.f32 %v5594, %v1252
        %v6113 = vmul.f32 %v5595, %v1256
        %v6114 = vmul.f32 %v5596, %v1254
        %s6115 = scalar_lea.vmem [#allocation6], 672
        %v6116 = vld [vmem:[%s6115] sm:$0xff]
        %v6117 = vld [vmem:[%s6115 + $0x8] sm:$0xff]
        %v6118 = vld [vmem:[%s6115 + $0x10] sm:$0xff]
        %v6119 = vld [vmem:[%s6115 + $0x18] sm:$0xff]
        %6132 = vrot.lane.b32.xlu0 %v6103, 1
        %v6133 = vpop.permute.xlu0 %6132
        %6134 = vrot.lane.b32.xlu0 %v6104, 1
        %v6135 = vpop.permute.xlu0 %6134
        %6136 = vrot.lane.b32.xlu0 %v6105, 1
        %v6137 = vpop.permute.xlu0 %6136
        %6138 = vrot.lane.b32.xlu0 %v6106, 1
        %v6139 = vpop.permute.xlu0 %6138
        %6140 = vrot.lane.b32.xlu0 %v6107, 1
        %v6141 = vpop.permute.xlu0 %6140
        %6142 = vrot.lane.b32.xlu0 %v6108, 1
        %v6143 = vpop.permute.xlu0 %6142
        %6144 = vrot.lane.b32.xlu0 %v6109, 1
        %v6145 = vpop.permute.xlu0 %6144
        %6146 = vrot.lane.b32.xlu0 %v6110, 1
        %v6147 = vpop.permute.xlu0 %6146
        %6148 = vrot.lane.b32.xlu0 %v6111, 1
        %v6149 = vpop.permute.xlu0 %6148
        %6150 = vrot.lane.b32.xlu0 %v6112, 1
        %v6151 = vpop.permute.xlu0 %6150
        %6152 = vrot.lane.b32.xlu0 %v6113, 1
        %v6153 = vpop.permute.xlu0 %6152
        %6154 = vrot.lane.b32.xlu0 %v6114, 1
        %v6155 = vpop.permute.xlu0 %6154
        %v6156 = vsel %vm1313, %v6133, %v6135
        %v6157 = vsel %vm1313, %v6135, %v6137
        %v6158 = vsel %vm1313, %v6139, %v6141
        %v6159 = vsel %vm1313, %v6141, %v6143
        %v6160 = vsel %vm1313, %v6145, %v6147
        %v6161 = vsel %vm1313, %v6147, %v6149
        %v6162 = vsel %vm1313, %v6151, %v6153
        %v6163 = vsel %vm1313, %v6153, %v6155
        %v6173 = vsel %vm805, %v6116, 0
        %v6176 = vsel %vm805, %v6117, 0
        %v6179 = vsel %vm805, %v6118, 0
        %v6182 = vsel %vm805, %v6119, 0
        %6184 = vmatprep.subr.mxu0 0.0
        %6185 = vmatpush1.msra.mxu0 0.0
        %6186 = vmatprep.subr.mxu0 0.0
        %6187 = vmatpush1.msra.mxu0 0.0
        %6188 = vmatprep.subr.mxu0 0.0
        %6189 = vmatpush1.msra.mxu0 0.0
        %6190 = vmatprep.subr.mxu0 0.0
        %6191 = vmatpush1.msra.mxu0 0.0
        %6192 = vmatprep.subr.mxu0 0.0
        %6193 = vmatpush1.msra.mxu0 0.0
        %6194 = vmatprep.subr.mxu0 0.0
        %6195 = vmatpush1.msra.mxu0 0.0
        %6196 = vmatprep.subr.mxu0 0.0
        %6197 = vmatpush1.msra.mxu0 0.0
        %6198 = vmatprep.subr.mxu0 0.0
        %6199 = vmatpush1.msra.mxu0 0.0
        %6200 = vmatprep.subr.mxu0 0.0
        %6201 = vmatpush1.msra.mxu0 0.0
        %6202 = vmatprep.subr.mxu0 0.0
        %6203 = vmatpush1.msra.mxu0 0.0
        %6204 = vmatprep.subr.mxu0 0.0
        %6205 = vmatpush1.msra.mxu0 0.0
        %6206 = vmatprep.subr.mxu0 0.0
        %6207 = vmatpush1.msra.mxu0 0.0
        %6208 = vmatprep.subr.mxu0 %v6163
        %6209 = vmatpush1.msra.mxu0 %v6162
        %6210 = vmatprep.subr.mxu0 %v6161
        %6211 = vmatpush1.msra.mxu0 %v6160
        %6212 = vmatprep.subr.mxu0 %v6159
        %6213 = vmatpush1.msra.mxu0 %v6158
        %6214 = vmatprep.subr.mxu0 %v6157
        %6215 = vmatpush1.msra.mxu0 %v6156
        %6216 = vmatprep.subr.mxu0 0.0
        %6217 = vmatpush2.msra.mxu0 0.0
        %6218 = vmatprep.subr.mxu0 0.0
        %6219 = vmatpush2.msra.mxu0 0.0
        %6220 = vmatprep.subr.mxu0 0.0
        %6221 = vmatpush2.msra.mxu0 0.0
        %6222 = vmatprep.subr.mxu0 0.0
        %6223 = vmatpush2.msra.mxu0 0.0
        %6224 = vmatprep.subr.mxu0 0.0
        %6225 = vmatpush2.msra.mxu0 0.0
        %6226 = vmatprep.subr.mxu0 0.0
        %6227 = vmatpush2.msra.mxu0 0.0
        %6228 = vmatprep.subr.mxu0 0.0
        %6229 = vmatpush2.msra.mxu0 0.0
        %6230 = vmatprep.subr.mxu0 0.0
        %6231 = vmatpush2.msra.mxu0 0.0
        %6232 = vmatprep.subr.mxu0 0.0
        %6233 = vmatpush2.msra.mxu0 0.0
        %6234 = vmatprep.subr.mxu0 0.0
        %6235 = vmatpush2.msra.mxu0 0.0
        %6236 = vmatprep.subr.mxu0 0.0
        %6237 = vmatpush2.msra.mxu0 0.0
        %6238 = vmatprep.subr.mxu0 0.0
        %6239 = vmatpush2.msra.mxu0 0.0
        %6240 = vmatprep.subr.mxu0 0.0
        %6241 = vmatpush2.msra.mxu0 0.0
        %6242 = vmatprep.subr.mxu0 0.0
        %6243 = vmatpush2.msra.mxu0 0.0
        %6244 = vmatprep.subr.mxu0 0.0
        %6245 = vmatpush2.msra.mxu0 0.0
        %6246 = vmatprep.subr.mxu0 0.0
        %6247 = vmatpush2.msra.mxu0 0.0
        %6248 = vmatprep.mubr.f32.mxu0 0.0
        %6249 = vmatmul.mubr.f32.gmra.mxu0 %v6173
        %v6250 = vpop.f32.mrf.mxu0
        %v6251 = vadd.f32 0.0, %v6250
        %v6252 = vpop.f32.mrf.mxu0
        %v6253 = vadd.f32 0.0, %v6252
        %6254 = vmatprep.mubr.f32.mxu0 0.0
        %6255 = vmatmul.mubr.f32.gmra.mxu0 %v6176
        %v6256 = vpop.f32.mrf.mxu0
        %v6257 = vadd.f32 0.0, %v6256
        %v6258 = vpop.f32.mrf.mxu0
        %v6259 = vadd.f32 0.0, %v6258
        %6260 = vmatprep.mubr.f32.mxu0 0.0
        %6261 = vmatmul.mubr.f32.gmra.mxu0 %v6179
        %v6262 = vpop.f32.mrf.mxu0
        %v6263 = vadd.f32 0.0, %v6262
        %v6264 = vpop.f32.mrf.mxu0
        %v6265 = vadd.f32 0.0, %v6264
        %6266 = vmatprep.mubr.f32.mxu0 0.0
        %6267 = vmatmul.mubr.f32.gmra.mxu0 %v6182
        %v6268 = vpop.f32.mrf.mxu0
        %v6269 = vadd.f32 0.0, %v6268
        %v6270 = vpop.f32.mrf.mxu0
        %v6271 = vadd.f32 0.0, %v6270
        %6272 = vdwg.mxu0
        %v6273 = vadd.f32 %v6095, %v6251
        %v6274 = vadd.f32 %v6096, %v6253
        %v6275 = vadd.f32 %v6097, %v6257
        %v6276 = vadd.f32 %v6098, %v6259
        %v6277 = vadd.f32 %v6099, %v6263
        %v6278 = vadd.f32 %v6100, %v6265
        %v6279 = vadd.f32 %v6101, %v6269
        %v6280 = vadd.f32 %v6102, %v6271
        %s6281 = scalar_lea.vmem [#allocation6], 704
        %v6282 = vld [vmem:[%s6281] sm:$0xff]
        %v6283 = vld [vmem:[%s6281 + $0x8] sm:$0xff]
        %v6284 = vld [vmem:[%s6281 + $0x10] sm:$0xff]
        %v6285 = vld [vmem:[%s6281 + $0x18] sm:$0xff]
        %v6287 = vsel %vm805, %v6282, 0
        %v6290 = vsel %vm805, %v6283, 0
        %v6293 = vsel %vm805, %v6284, 0
        %v6296 = vsel %vm805, %v6285, 0
        %6298 = vmatprep.subr.mxu0 0.0
        %6299 = vmatpush1.msra.mxu0 0.0
        %6300 = vmatprep.subr.mxu0 0.0
        %6301 = vmatpush1.msra.mxu0 0.0
        %6302 = vmatprep.subr.mxu0 0.0
        %6303 = vmatpush1.msra.mxu0 0.0
        %6304 = vmatprep.subr.mxu0 0.0
        %6305 = vmatpush1.msra.mxu0 0.0
        %6306 = vmatprep.subr.mxu0 0.0
        %6307 = vmatpush1.msra.mxu0 0.0
        %6308 = vmatprep.subr.mxu0 0.0
        %6309 = vmatpush1.msra.mxu0 0.0
        %6310 = vmatprep.subr.mxu0 0.0
        %6311 = vmatpush1.msra.mxu0 0.0
        %6312 = vmatprep.subr.mxu0 0.0
        %6313 = vmatpush1.msra.mxu0 0.0
        %6314 = vmatprep.subr.mxu0 0.0
        %6315 = vmatpush1.msra.mxu0 0.0
        %6316 = vmatprep.subr.mxu0 0.0
        %6317 = vmatpush1.msra.mxu0 0.0
        %6318 = vmatprep.subr.mxu0 0.0
        %6319 = vmatpush1.msra.mxu0 0.0
        %6320 = vmatprep.subr.mxu0 0.0
        %6321 = vmatpush1.msra.mxu0 0.0
        %6322 = vmatprep.subr.mxu0 %v5596
        %6323 = vmatpush1.msra.mxu0 %v5595
        %6324 = vmatprep.subr.mxu0 %v5593
        %6325 = vmatpush1.msra.mxu0 %v5592
        %6326 = vmatprep.subr.mxu0 %v5590
        %6327 = vmatpush1.msra.mxu0 %v5589
        %6328 = vmatprep.subr.mxu0 %v5587
        %6329 = vmatpush1.msra.mxu0 %v5586
        %6330 = vmatprep.subr.mxu0 0.0
        %6331 = vmatpush2.msra.mxu0 0.0
        %6332 = vmatprep.subr.mxu0 0.0
        %6333 = vmatpush2.msra.mxu0 0.0
        %6334 = vmatprep.subr.mxu0 0.0
        %6335 = vmatpush2.msra.mxu0 0.0
        %6336 = vmatprep.subr.mxu0 0.0
        %6337 = vmatpush2.msra.mxu0 0.0
        %6338 = vmatprep.subr.mxu0 0.0
        %6339 = vmatpush2.msra.mxu0 0.0
        %6340 = vmatprep.subr.mxu0 0.0
        %6341 = vmatpush2.msra.mxu0 0.0
        %6342 = vmatprep.subr.mxu0 0.0
        %6343 = vmatpush2.msra.mxu0 0.0
        %6344 = vmatprep.subr.mxu0 0.0
        %6345 = vmatpush2.msra.mxu0 0.0
        %6346 = vmatprep.subr.mxu0 0.0
        %6347 = vmatpush2.msra.mxu0 0.0
        %6348 = vmatprep.subr.mxu0 0.0
        %6349 = vmatpush2.msra.mxu0 0.0
        %6350 = vmatprep.subr.mxu0 0.0
        %6351 = vmatpush2.msra.mxu0 0.0
        %6352 = vmatprep.subr.mxu0 0.0
        %6353 = vmatpush2.msra.mxu0 0.0
        %6354 = vmatprep.subr.mxu0 0.0
        %6355 = vmatpush2.msra.mxu0 0.0
        %6356 = vmatprep.subr.mxu0 0.0
        %6357 = vmatpush2.msra.mxu0 0.0
        %6358 = vmatprep.subr.mxu0 0.0
        %6359 = vmatpush2.msra.mxu0 0.0
        %6360 = vmatprep.subr.mxu0 0.0
        %6361 = vmatpush2.msra.mxu0 0.0
        %6362 = vmatprep.mubr.f32.mxu0 0.0
        %6363 = vmatmul.mubr.f32.gmra.mxu0 %v6287
        %v6364 = vpop.f32.mrf.mxu0
        %v6365 = vadd.f32 0.0, %v6364
        %v6366 = vpop.f32.mrf.mxu0
        %v6367 = vadd.f32 0.0, %v6366
        %6368 = vmatprep.mubr.f32.mxu0 0.0
        %6369 = vmatmul.mubr.f32.gmra.mxu0 %v6290
        %v6370 = vpop.f32.mrf.mxu0
        %v6371 = vadd.f32 0.0, %v6370
        %v6372 = vpop.f32.mrf.mxu0
        %v6373 = vadd.f32 0.0, %v6372
        %6374 = vmatprep.mubr.f32.mxu0 0.0
        %6375 = vmatmul.mubr.f32.gmra.mxu0 %v6293
        %v6376 = vpop.f32.mrf.mxu0
        %v6377 = vadd.f32 0.0, %v6376
        %v6378 = vpop.f32.mrf.mxu0
        %v6379 = vadd.f32 0.0, %v6378
        %6380 = vmatprep.mubr.f32.mxu0 0.0
        %6381 = vmatmul.mubr.f32.gmra.mxu0 %v6296
        %v6382 = vpop.f32.mrf.mxu0
        %v6383 = vadd.f32 0.0, %v6382
        %v6384 = vpop.f32.mrf.mxu0
        %v6385 = vadd.f32 0.0, %v6384
        %6386 = vdwg.mxu0
        %v6387 = vadd.f32 %v6273, %v6365
        %v6388 = vadd.f32 %v6274, %v6367
        %v6389 = vadd.f32 %v6275, %v6371
        %v6390 = vadd.f32 %v6276, %v6373
        %v6391 = vadd.f32 %v6277, %v6377
        %v6392 = vadd.f32 %v6278, %v6379
        %v6393 = vadd.f32 %v6279, %v6383
        %v6394 = vadd.f32 %v6280, %v6385
        %v6395 = vld [vmem:[#allocation2 + $0x8] sm:$0xff]
        %v6396 = vld [vmem:[#allocation2 + $0x10] sm:$0xff]
        %v6397 = vld [vmem:[#allocation2 + $0x18] sm:$0xff]
        %v6398 = vld [vmem:[#allocation2 + $0x28] sm:$0xff]
        %v6399 = vld [vmem:[#allocation2 + $0x30] sm:$0xff]
        %v6400 = vld [vmem:[#allocation2 + $0x38] sm:$0xff]
        %v6401 = vld [vmem:[#allocation2 + $0x48] sm:$0xff]
        %v6402 = vld [vmem:[#allocation2 + $0x50] sm:$0xff]
        %v6403 = vld [vmem:[#allocation2 + $0x58] sm:$0xff]
        %v6404 = vld [vmem:[#allocation2 + $0x68] sm:$0xff]
        %v6405 = vld [vmem:[#allocation2 + $0x70] sm:$0xff]
        %v6406 = vld [vmem:[#allocation2 + $0x78] sm:$0xff]
        %v6407 = vmul.f32 %v6395, %v1566
        %v6408 = vmul.f32 %v6396, %v1569
        %v6409 = vmul.f32 %v6397, %v1568
        %v6410 = vmul.f32 %v6398, %v1566
        %v6411 = vmul.f32 %v6399, %v1569
        %v6412 = vmul.f32 %v6400, %v1568
        %v6413 = vmul.f32 %v6401, %v1566
        %v6414 = vmul.f32 %v6402, %v1569
        %v6415 = vmul.f32 %v6403, %v1568
        %v6416 = vmul.f32 %v6404, %v1566
        %v6417 = vmul.f32 %v6405, %v1569
        %v6418 = vmul.f32 %v6406, %v1568
        %s6419 = scalar_lea.vmem [#allocation6], 736
        %v6420 = vld [vmem:[%s6419] sm:$0xff]
        %v6421 = vld [vmem:[%s6419 + $0x8] sm:$0xff]
        %v6422 = vld [vmem:[%s6419 + $0x10] sm:$0xff]
        %v6423 = vld [vmem:[%s6419 + $0x18] sm:$0xff]
        %6436 = vrot.lane.b32.xlu0 %v6407, 127
        %v6437 = vpop.permute.xlu0 %6436
        %6438 = vrot.lane.b32.xlu0 %v6408, 127
        %v6439 = vpop.permute.xlu0 %6438
        %6440 = vrot.lane.b32.xlu0 %v6409, 127
        %v6441 = vpop.permute.xlu0 %6440
        %6442 = vrot.lane.b32.xlu0 %v6410, 127
        %v6443 = vpop.permute.xlu0 %6442
        %6444 = vrot.lane.b32.xlu0 %v6411, 127
        %v6445 = vpop.permute.xlu0 %6444
        %6446 = vrot.lane.b32.xlu0 %v6412, 127
        %v6447 = vpop.permute.xlu0 %6446
        %6448 = vrot.lane.b32.xlu0 %v6413, 127
        %v6449 = vpop.permute.xlu0 %6448
        %6450 = vrot.lane.b32.xlu0 %v6414, 127
        %v6451 = vpop.permute.xlu0 %6450
        %6452 = vrot.lane.b32.xlu0 %v6415, 127
        %v6453 = vpop.permute.xlu0 %6452
        %6454 = vrot.lane.b32.xlu0 %v6416, 127
        %v6455 = vpop.permute.xlu0 %6454
        %6456 = vrot.lane.b32.xlu0 %v6417, 127
        %v6457 = vpop.permute.xlu0 %6456
        %6458 = vrot.lane.b32.xlu0 %v6418, 127
        %v6459 = vpop.permute.xlu0 %6458
        %v6460 = vsel %vm1255, %v6437, %v6439
        %v6461 = vsel %vm1255, %v6439, %v6441
        %v6462 = vsel %vm1255, %v6443, %v6445
        %v6463 = vsel %vm1255, %v6445, %v6447
        %v6464 = vsel %vm1255, %v6449, %v6451
        %v6465 = vsel %vm1255, %v6451, %v6453
        %v6466 = vsel %vm1255, %v6455, %v6457
        %v6467 = vsel %vm1255, %v6457, %v6459
        %v6477 = vsel %vm805, %v6420, 0
        %v6480 = vsel %vm805, %v6421, 0
        %v6483 = vsel %vm805, %v6422, 0
        %v6486 = vsel %vm805, %v6423, 0
        %6488 = vmatprep.subr.mxu0 0.0
        %6489 = vmatpush1.msra.mxu0 0.0
        %6490 = vmatprep.subr.mxu0 0.0
        %6491 = vmatpush1.msra.mxu0 0.0
        %6492 = vmatprep.subr.mxu0 0.0
        %6493 = vmatpush1.msra.mxu0 0.0
        %6494 = vmatprep.subr.mxu0 0.0
        %6495 = vmatpush1.msra.mxu0 0.0
        %6496 = vmatprep.subr.mxu0 0.0
        %6497 = vmatpush1.msra.mxu0 0.0
        %6498 = vmatprep.subr.mxu0 0.0
        %6499 = vmatpush1.msra.mxu0 0.0
        %6500 = vmatprep.subr.mxu0 0.0
        %6501 = vmatpush1.msra.mxu0 0.0
        %6502 = vmatprep.subr.mxu0 0.0
        %6503 = vmatpush1.msra.mxu0 0.0
        %6504 = vmatprep.subr.mxu0 0.0
        %6505 = vmatpush1.msra.mxu0 0.0
        %6506 = vmatprep.subr.mxu0 0.0
        %6507 = vmatpush1.msra.mxu0 0.0
        %6508 = vmatprep.subr.mxu0 0.0
        %6509 = vmatpush1.msra.mxu0 0.0
        %6510 = vmatprep.subr.mxu0 0.0
        %6511 = vmatpush1.msra.mxu0 0.0
        %6512 = vmatprep.subr.mxu0 %v6467
        %6513 = vmatpush1.msra.mxu0 %v6466
        %6514 = vmatprep.subr.mxu0 %v6465
        %6515 = vmatpush1.msra.mxu0 %v6464
        %6516 = vmatprep.subr.mxu0 %v6463
        %6517 = vmatpush1.msra.mxu0 %v6462
        %6518 = vmatprep.subr.mxu0 %v6461
        %6519 = vmatpush1.msra.mxu0 %v6460
        %6520 = vmatprep.subr.mxu0 0.0
        %6521 = vmatpush2.msra.mxu0 0.0
        %6522 = vmatprep.subr.mxu0 0.0
        %6523 = vmatpush2.msra.mxu0 0.0
        %6524 = vmatprep.subr.mxu0 0.0
        %6525 = vmatpush2.msra.mxu0 0.0
        %6526 = vmatprep.subr.mxu0 0.0
        %6527 = vmatpush2.msra.mxu0 0.0
        %6528 = vmatprep.subr.mxu0 0.0
        %6529 = vmatpush2.msra.mxu0 0.0
        %6530 = vmatprep.subr.mxu0 0.0
        %6531 = vmatpush2.msra.mxu0 0.0
        %6532 = vmatprep.subr.mxu0 0.0
        %6533 = vmatpush2.msra.mxu0 0.0
        %6534 = vmatprep.subr.mxu0 0.0
        %6535 = vmatpush2.msra.mxu0 0.0
        %6536 = vmatprep.subr.mxu0 0.0
        %6537 = vmatpush2.msra.mxu0 0.0
        %6538 = vmatprep.subr.mxu0 0.0
        %6539 = vmatpush2.msra.mxu0 0.0
        %6540 = vmatprep.subr.mxu0 0.0
        %6541 = vmatpush2.msra.mxu0 0.0
        %6542 = vmatprep.subr.mxu0 0.0
        %6543 = vmatpush2.msra.mxu0 0.0
        %6544 = vmatprep.subr.mxu0 0.0
        %6545 = vmatpush2.msra.mxu0 0.0
        %6546 = vmatprep.subr.mxu0 0.0
        %6547 = vmatpush2.msra.mxu0 0.0
        %6548 = vmatprep.subr.mxu0 0.0
        %6549 = vmatpush2.msra.mxu0 0.0
        %6550 = vmatprep.subr.mxu0 0.0
        %6551 = vmatpush2.msra.mxu0 0.0
        %6552 = vmatprep.mubr.f32.mxu0 0.0
        %6553 = vmatmul.mubr.f32.gmra.mxu0 %v6477
        %v6554 = vpop.f32.mrf.mxu0
        %v6555 = vadd.f32 0.0, %v6554
        %v6556 = vpop.f32.mrf.mxu0
        %v6557 = vadd.f32 0.0, %v6556
        %6558 = vmatprep.mubr.f32.mxu0 0.0
        %6559 = vmatmul.mubr.f32.gmra.mxu0 %v6480
        %v6560 = vpop.f32.mrf.mxu0
        %v6561 = vadd.f32 0.0, %v6560
        %v6562 = vpop.f32.mrf.mxu0
        %v6563 = vadd.f32 0.0, %v6562
        %6564 = vmatprep.mubr.f32.mxu0 0.0
        %6565 = vmatmul.mubr.f32.gmra.mxu0 %v6483
        %v6566 = vpop.f32.mrf.mxu0
        %v6567 = vadd.f32 0.0, %v6566
        %v6568 = vpop.f32.mrf.mxu0
        %v6569 = vadd.f32 0.0, %v6568
        %6570 = vmatprep.mubr.f32.mxu0 0.0
        %6571 = vmatmul.mubr.f32.gmra.mxu0 %v6486
        %v6572 = vpop.f32.mrf.mxu0
        %v6573 = vadd.f32 0.0, %v6572
        %v6574 = vpop.f32.mrf.mxu0
        %v6575 = vadd.f32 0.0, %v6574
        %6576 = vdwg.mxu0
        %v6577 = vadd.f32 %v6387, %v6555
        %v6578 = vadd.f32 %v6388, %v6557
        %v6579 = vadd.f32 %v6389, %v6561
        %v6580 = vadd.f32 %v6390, %v6563
        %v6581 = vadd.f32 %v6391, %v6567
        %v6582 = vadd.f32 %v6392, %v6569
        %v6583 = vadd.f32 %v6393, %v6573
        %v6584 = vadd.f32 %v6394, %v6575
        %v6585 = vmul.f32 %v6395, %v1752
        %v6586 = vmul.f32 %v6396, %v1755
        %v6587 = vmul.f32 %v6397, %v1754
        %v6588 = vmul.f32 %v6398, %v1752
        %v6589 = vmul.f32 %v6399, %v1755
        %v6590 = vmul.f32 %v6400, %v1754
        %v6591 = vmul.f32 %v6401, %v1752
        %v6592 = vmul.f32 %v6402, %v1755
        %v6593 = vmul.f32 %v6403, %v1754
        %v6594 = vmul.f32 %v6404, %v1752
        %v6595 = vmul.f32 %v6405, %v1755
        %v6596 = vmul.f32 %v6406, %v1754
        %s6597 = scalar_lea.vmem [#allocation6], 768
        %v6598 = vld [vmem:[%s6597] sm:$0xff]
        %v6599 = vld [vmem:[%s6597 + $0x8] sm:$0xff]
        %v6600 = vld [vmem:[%s6597 + $0x10] sm:$0xff]
        %v6601 = vld [vmem:[%s6597 + $0x18] sm:$0xff]
        %6614 = vrot.lane.b32.xlu0 %v6585, 113
        %v6615 = vpop.permute.xlu0 %6614
        %6616 = vrot.lane.b32.xlu0 %v6586, 113
        %v6617 = vpop.permute.xlu0 %6616
        %6618 = vrot.lane.b32.xlu0 %v6587, 113
        %v6619 = vpop.permute.xlu0 %6618
        %6620 = vrot.lane.b32.xlu0 %v6588, 113
        %v6621 = vpop.permute.xlu0 %6620
        %6622 = vrot.lane.b32.xlu0 %v6589, 113
        %v6623 = vpop.permute.xlu0 %6622
        %6624 = vrot.lane.b32.xlu0 %v6590, 113
        %v6625 = vpop.permute.xlu0 %6624
        %6626 = vrot.lane.b32.xlu0 %v6591, 113
        %v6627 = vpop.permute.xlu0 %6626
        %6628 = vrot.lane.b32.xlu0 %v6592, 113
        %v6629 = vpop.permute.xlu0 %6628
        %6630 = vrot.lane.b32.xlu0 %v6593, 113
        %v6631 = vpop.permute.xlu0 %6630
        %6632 = vrot.lane.b32.xlu0 %v6594, 113
        %v6633 = vpop.permute.xlu0 %6632
        %6634 = vrot.lane.b32.xlu0 %v6595, 113
        %v6635 = vpop.permute.xlu0 %6634
        %6636 = vrot.lane.b32.xlu0 %v6596, 113
        %v6637 = vpop.permute.xlu0 %6636
        %v6638 = vsel %vm1067, %v6615, %v6617
        %v6639 = vsel %vm1067, %v6617, %v6619
        %v6640 = vsel %vm1067, %v6621, %v6623
        %v6641 = vsel %vm1067, %v6623, %v6625
        %v6642 = vsel %vm1067, %v6627, %v6629
        %v6643 = vsel %vm1067, %v6629, %v6631
        %v6644 = vsel %vm1067, %v6633, %v6635
        %v6645 = vsel %vm1067, %v6635, %v6637
        %v6655 = vsel %vm805, %v6598, 0
        %v6658 = vsel %vm805, %v6599, 0
        %v6661 = vsel %vm805, %v6600, 0
        %v6664 = vsel %vm805, %v6601, 0
        %6666 = vmatprep.subr.mxu0 0.0
        %6667 = vmatpush1.msra.mxu0 0.0
        %6668 = vmatprep.subr.mxu0 0.0
        %6669 = vmatpush1.msra.mxu0 0.0
        %6670 = vmatprep.subr.mxu0 0.0
        %6671 = vmatpush1.msra.mxu0 0.0
        %6672 = vmatprep.subr.mxu0 0.0
        %6673 = vmatpush1.msra.mxu0 0.0
        %6674 = vmatprep.subr.mxu0 0.0
        %6675 = vmatpush1.msra.mxu0 0.0
        %6676 = vmatprep.subr.mxu0 0.0
        %6677 = vmatpush1.msra.mxu0 0.0
        %6678 = vmatprep.subr.mxu0 0.0
        %6679 = vmatpush1.msra.mxu0 0.0
        %6680 = vmatprep.subr.mxu0 0.0
        %6681 = vmatpush1.msra.mxu0 0.0
        %6682 = vmatprep.subr.mxu0 0.0
        %6683 = vmatpush1.msra.mxu0 0.0
        %6684 = vmatprep.subr.mxu0 0.0
        %6685 = vmatpush1.msra.mxu0 0.0
        %6686 = vmatprep.subr.mxu0 0.0
        %6687 = vmatpush1.msra.mxu0 0.0
        %6688 = vmatprep.subr.mxu0 0.0
        %6689 = vmatpush1.msra.mxu0 0.0
        %6690 = vmatprep.subr.mxu0 %v6645
        %6691 = vmatpush1.msra.mxu0 %v6644
        %6692 = vmatprep.subr.mxu0 %v6643
        %6693 = vmatpush1.msra.mxu0 %v6642
        %6694 = vmatprep.subr.mxu0 %v6641
        %6695 = vmatpush1.msra.mxu0 %v6640
        %6696 = vmatprep.subr.mxu0 %v6639
        %6697 = vmatpush1.msra.mxu0 %v6638
        %6698 = vmatprep.subr.mxu0 0.0
        %6699 = vmatpush2.msra.mxu0 0.0
        %6700 = vmatprep.subr.mxu0 0.0
        %6701 = vmatpush2.msra.mxu0 0.0
        %6702 = vmatprep.subr.mxu0 0.0
        %6703 = vmatpush2.msra.mxu0 0.0
        %6704 = vmatprep.subr.mxu0 0.0
        %6705 = vmatpush2.msra.mxu0 0.0
        %6706 = vmatprep.subr.mxu0 0.0
        %6707 = vmatpush2.msra.mxu0 0.0
        %6708 = vmatprep.subr.mxu0 0.0
        %6709 = vmatpush2.msra.mxu0 0.0
        %6710 = vmatprep.subr.mxu0 0.0
        %6711 = vmatpush2.msra.mxu0 0.0
        %6712 = vmatprep.subr.mxu0 0.0
        %6713 = vmatpush2.msra.mxu0 0.0
        %6714 = vmatprep.subr.mxu0 0.0
        %6715 = vmatpush2.msra.mxu0 0.0
        %6716 = vmatprep.subr.mxu0 0.0
        %6717 = vmatpush2.msra.mxu0 0.0
        %6718 = vmatprep.subr.mxu0 0.0
        %6719 = vmatpush2.msra.mxu0 0.0
        %6720 = vmatprep.subr.mxu0 0.0
        %6721 = vmatpush2.msra.mxu0 0.0
        %6722 = vmatprep.subr.mxu0 0.0
        %6723 = vmatpush2.msra.mxu0 0.0
        %6724 = vmatprep.subr.mxu0 0.0
        %6725 = vmatpush2.msra.mxu0 0.0
        %6726 = vmatprep.subr.mxu0 0.0
        %6727 = vmatpush2.msra.mxu0 0.0
        %6728 = vmatprep.subr.mxu0 0.0
        %6729 = vmatpush2.msra.mxu0 0.0
        %6730 = vmatprep.mubr.f32.mxu0 0.0
        %6731 = vmatmul.mubr.f32.gmra.mxu0 %v6655
        %v6732 = vpop.f32.mrf.mxu0
        %v6733 = vadd.f32 0.0, %v6732
        %v6734 = vpop.f32.mrf.mxu0
        %v6735 = vadd.f32 0.0, %v6734
        %6736 = vmatprep.mubr.f32.mxu0 0.0
        %6737 = vmatmul.mubr.f32.gmra.mxu0 %v6658
        %v6738 = vpop.f32.mrf.mxu0
        %v6739 = vadd.f32 0.0, %v6738
        %v6740 = vpop.f32.mrf.mxu0
        %v6741 = vadd.f32 0.0, %v6740
        %6742 = vmatprep.mubr.f32.mxu0 0.0
        %6743 = vmatmul.mubr.f32.gmra.mxu0 %v6661
        %v6744 = vpop.f32.mrf.mxu0
        %v6745 = vadd.f32 0.0, %v6744
        %v6746 = vpop.f32.mrf.mxu0
        %v6747 = vadd.f32 0.0, %v6746
        %6748 = vmatprep.mubr.f32.mxu0 0.0
        %6749 = vmatmul.mubr.f32.gmra.mxu0 %v6664
        %v6750 = vpop.f32.mrf.mxu0
        %v6751 = vadd.f32 0.0, %v6750
        %v6752 = vpop.f32.mrf.mxu0
        %v6753 = vadd.f32 0.0, %v6752
        %6754 = vdwg.mxu0
        %v6755 = vadd.f32 %v6577, %v6733
        %v6756 = vadd.f32 %v6578, %v6735
        %v6757 = vadd.f32 %v6579, %v6739
        %v6758 = vadd.f32 %v6580, %v6741
        %v6759 = vadd.f32 %v6581, %v6745
        %v6760 = vadd.f32 %v6582, %v6747
        %v6761 = vadd.f32 %v6583, %v6751
        %v6762 = vadd.f32 %v6584, %v6753
        %s6763 = scalar_lea.vmem [#allocation6], 800
        %v6764 = vld [vmem:[%s6763] sm:$0xff]
        %v6765 = vld [vmem:[%s6763 + $0x8] sm:$0xff]
        %v6766 = vld [vmem:[%s6763 + $0x10] sm:$0xff]
        %v6767 = vld [vmem:[%s6763 + $0x18] sm:$0xff]
        %6780 = vrot.lane.b32.xlu0 %v6395, 112
        %v6781 = vpop.permute.xlu0 %6780
        %6782 = vrot.lane.b32.xlu0 %v6396, 112
        %v6783 = vpop.permute.xlu0 %6782
        %6784 = vrot.lane.b32.xlu0 %v6397, 112
        %v6785 = vpop.permute.xlu0 %6784
        %6786 = vrot.lane.b32.xlu0 %v6398, 112
        %v6787 = vpop.permute.xlu0 %6786
        %6788 = vrot.lane.b32.xlu0 %v6399, 112
        %v6789 = vpop.permute.xlu0 %6788
        %6790 = vrot.lane.b32.xlu0 %v6400, 112
        %v6791 = vpop.permute.xlu0 %6790
        %6792 = vrot.lane.b32.xlu0 %v6401, 112
        %v6793 = vpop.permute.xlu0 %6792
        %6794 = vrot.lane.b32.xlu0 %v6402, 112
        %v6795 = vpop.permute.xlu0 %6794
        %6796 = vrot.lane.b32.xlu0 %v6403, 112
        %v6797 = vpop.permute.xlu0 %6796
        %6798 = vrot.lane.b32.xlu0 %v6404, 112
        %v6799 = vpop.permute.xlu0 %6798
        %6800 = vrot.lane.b32.xlu0 %v6405, 112
        %v6801 = vpop.permute.xlu0 %6800
        %6802 = vrot.lane.b32.xlu0 %v6406, 112
        %v6803 = vpop.permute.xlu0 %6802
        %v6804 = vsel %vm1978, %v6781, %v6783
        %v6805 = vsel %vm1978, %v6783, %v6785
        %v6806 = vsel %vm1978, %v6787, %v6789
        %v6807 = vsel %vm1978, %v6789, %v6791
        %v6808 = vsel %vm1978, %v6793, %v6795
        %v6809 = vsel %vm1978, %v6795, %v6797
        %v6810 = vsel %vm1978, %v6799, %v6801
        %v6811 = vsel %vm1978, %v6801, %v6803
        %v6821 = vsel %vm805, %v6764, 0
        %v6824 = vsel %vm805, %v6765, 0
        %v6827 = vsel %vm805, %v6766, 0
        %v6830 = vsel %vm805, %v6767, 0
        %6832 = vmatprep.subr.mxu0 0.0
        %6833 = vmatpush1.msra.mxu0 0.0
        %6834 = vmatprep.subr.mxu0 0.0
        %6835 = vmatpush1.msra.mxu0 0.0
        %6836 = vmatprep.subr.mxu0 0.0
        %6837 = vmatpush1.msra.mxu0 0.0
        %6838 = vmatprep.subr.mxu0 0.0
        %6839 = vmatpush1.msra.mxu0 0.0
        %6840 = vmatprep.subr.mxu0 0.0
        %6841 = vmatpush1.msra.mxu0 0.0
        %6842 = vmatprep.subr.mxu0 0.0
        %6843 = vmatpush1.msra.mxu0 0.0
        %6844 = vmatprep.subr.mxu0 0.0
        %6845 = vmatpush1.msra.mxu0 0.0
        %6846 = vmatprep.subr.mxu0 0.0
        %6847 = vmatpush1.msra.mxu0 0.0
        %6848 = vmatprep.subr.mxu0 0.0
        %6849 = vmatpush1.msra.mxu0 0.0
        %6850 = vmatprep.subr.mxu0 0.0
        %6851 = vmatpush1.msra.mxu0 0.0
        %6852 = vmatprep.subr.mxu0 0.0
        %6853 = vmatpush1.msra.mxu0 0.0
        %6854 = vmatprep.subr.mxu0 0.0
        %6855 = vmatpush1.msra.mxu0 0.0
        %6856 = vmatprep.subr.mxu0 %v6811
        %6857 = vmatpush1.msra.mxu0 %v6810
        %6858 = vmatprep.subr.mxu0 %v6809
        %6859 = vmatpush1.msra.mxu0 %v6808
        %6860 = vmatprep.subr.mxu0 %v6807
        %6861 = vmatpush1.msra.mxu0 %v6806
        %6862 = vmatprep.subr.mxu0 %v6805
        %6863 = vmatpush1.msra.mxu0 %v6804
        %6864 = vmatprep.subr.mxu0 0.0
        %6865 = vmatpush2.msra.mxu0 0.0
        %6866 = vmatprep.subr.mxu0 0.0
        %6867 = vmatpush2.msra.mxu0 0.0
        %6868 = vmatprep.subr.mxu0 0.0
        %6869 = vmatpush2.msra.mxu0 0.0
        %6870 = vmatprep.subr.mxu0 0.0
        %6871 = vmatpush2.msra.mxu0 0.0
        %6872 = vmatprep.subr.mxu0 0.0
        %6873 = vmatpush2.msra.mxu0 0.0
        %6874 = vmatprep.subr.mxu0 0.0
        %6875 = vmatpush2.msra.mxu0 0.0
        %6876 = vmatprep.subr.mxu0 0.0
        %6877 = vmatpush2.msra.mxu0 0.0
        %6878 = vmatprep.subr.mxu0 0.0
        %6879 = vmatpush2.msra.mxu0 0.0
        %6880 = vmatprep.subr.mxu0 0.0
        %6881 = vmatpush2.msra.mxu0 0.0
        %6882 = vmatprep.subr.mxu0 0.0
        %6883 = vmatpush2.msra.mxu0 0.0
        %6884 = vmatprep.subr.mxu0 0.0
        %6885 = vmatpush2.msra.mxu0 0.0
        %6886 = vmatprep.subr.mxu0 0.0
        %6887 = vmatpush2.msra.mxu0 0.0
        %6888 = vmatprep.subr.mxu0 0.0
        %6889 = vmatpush2.msra.mxu0 0.0
        %6890 = vmatprep.subr.mxu0 0.0
        %6891 = vmatpush2.msra.mxu0 0.0
        %6892 = vmatprep.subr.mxu0 0.0
        %6893 = vmatpush2.msra.mxu0 0.0
        %6894 = vmatprep.subr.mxu0 0.0
        %6895 = vmatpush2.msra.mxu0 0.0
        %6896 = vmatprep.mubr.f32.mxu0 0.0
        %6897 = vmatmul.mubr.f32.gmra.mxu0 %v6821
        %v6898 = vpop.f32.mrf.mxu0
        %v6899 = vadd.f32 0.0, %v6898
        %v6900 = vpop.f32.mrf.mxu0
        %v6901 = vadd.f32 0.0, %v6900
        %6902 = vmatprep.mubr.f32.mxu0 0.0
        %6903 = vmatmul.mubr.f32.gmra.mxu0 %v6824
        %v6904 = vpop.f32.mrf.mxu0
        %v6905 = vadd.f32 0.0, %v6904
        %v6906 = vpop.f32.mrf.mxu0
        %v6907 = vadd.f32 0.0, %v6906
        %6908 = vmatprep.mubr.f32.mxu0 0.0
        %6909 = vmatmul.mubr.f32.gmra.mxu0 %v6827
        %v6910 = vpop.f32.mrf.mxu0
        %v6911 = vadd.f32 0.0, %v6910
        %v6912 = vpop.f32.mrf.mxu0
        %v6913 = vadd.f32 0.0, %v6912
        %6914 = vmatprep.mubr.f32.mxu0 0.0
        %6915 = vmatmul.mubr.f32.gmra.mxu0 %v6830
        %v6916 = vpop.f32.mrf.mxu0
        %v6917 = vadd.f32 0.0, %v6916
        %v6918 = vpop.f32.mrf.mxu0
        %v6919 = vadd.f32 0.0, %v6918
        %6920 = vdwg.mxu0
        %v6921 = vadd.f32 %v6755, %v6899
        %v6922 = vadd.f32 %v6756, %v6901
        %v6923 = vadd.f32 %v6757, %v6905
        %v6924 = vadd.f32 %v6758, %v6907
        %v6925 = vadd.f32 %v6759, %v6911
        %v6926 = vadd.f32 %v6760, %v6913
        %v6927 = vadd.f32 %v6761, %v6917
        %v6928 = vadd.f32 %v6762, %v6919
        %v6929 = vmul.f32 %v6395, %v2105
        %v6930 = vmul.f32 %v6396, %v2108
        %v6931 = vmul.f32 %v6397, %v2107
        %v6932 = vmul.f32 %v6398, %v2105
        %v6933 = vmul.f32 %v6399, %v2108
        %v6934 = vmul.f32 %v6400, %v2107
        %v6935 = vmul.f32 %v6401, %v2105
        %v6936 = vmul.f32 %v6402, %v2108
        %v6937 = vmul.f32 %v6403, %v2107
        %v6938 = vmul.f32 %v6404, %v2105
        %v6939 = vmul.f32 %v6405, %v2108
        %v6940 = vmul.f32 %v6406, %v2107
        %s6941 = scalar_lea.vmem [#allocation6], 832
        %v6942 = vld [vmem:[%s6941] sm:$0xff]
        %v6943 = vld [vmem:[%s6941 + $0x8] sm:$0xff]
        %v6944 = vld [vmem:[%s6941 + $0x10] sm:$0xff]
        %v6945 = vld [vmem:[%s6941 + $0x18] sm:$0xff]
        %6958 = vrot.lane.b32.xlu0 %v6929, 111
        %v6959 = vpop.permute.xlu0 %6958
        %6960 = vrot.lane.b32.xlu0 %v6930, 111
        %v6961 = vpop.permute.xlu0 %6960
        %6962 = vrot.lane.b32.xlu0 %v6931, 111
        %v6963 = vpop.permute.xlu0 %6962
        %6964 = vrot.lane.b32.xlu0 %v6932, 111
        %v6965 = vpop.permute.xlu0 %6964
        %6966 = vrot.lane.b32.xlu0 %v6933, 111
        %v6967 = vpop.permute.xlu0 %6966
        %6968 = vrot.lane.b32.xlu0 %v6934, 111
        %v6969 = vpop.permute.xlu0 %6968
        %6970 = vrot.lane.b32.xlu0 %v6935, 111
        %v6971 = vpop.permute.xlu0 %6970
        %6972 = vrot.lane.b32.xlu0 %v6936, 111
        %v6973 = vpop.permute.xlu0 %6972
        %6974 = vrot.lane.b32.xlu0 %v6937, 111
        %v6975 = vpop.permute.xlu0 %6974
        %6976 = vrot.lane.b32.xlu0 %v6938, 111
        %v6977 = vpop.permute.xlu0 %6976
        %6978 = vrot.lane.b32.xlu0 %v6939, 111
        %v6979 = vpop.permute.xlu0 %6978
        %6980 = vrot.lane.b32.xlu0 %v6940, 111
        %v6981 = vpop.permute.xlu0 %6980
        %v6982 = vsel %vm726, %v6959, %v6961
        %v6983 = vsel %vm726, %v6961, %v6963
        %v6984 = vsel %vm726, %v6965, %v6967
        %v6985 = vsel %vm726, %v6967, %v6969
        %v6986 = vsel %vm726, %v6971, %v6973
        %v6987 = vsel %vm726, %v6973, %v6975
        %v6988 = vsel %vm726, %v6977, %v6979
        %v6989 = vsel %vm726, %v6979, %v6981
        %v6999 = vsel %vm805, %v6942, 0
        %v7002 = vsel %vm805, %v6943, 0
        %v7005 = vsel %vm805, %v6944, 0
        %v7008 = vsel %vm805, %v6945, 0
        %7010 = vmatprep.subr.mxu0 0.0
        %7011 = vmatpush1.msra.mxu0 0.0
        %7012 = vmatprep.subr.mxu0 0.0
        %7013 = vmatpush1.msra.mxu0 0.0
        %7014 = vmatprep.subr.mxu0 0.0
        %7015 = vmatpush1.msra.mxu0 0.0
        %7016 = vmatprep.subr.mxu0 0.0
        %7017 = vmatpush1.msra.mxu0 0.0
        %7018 = vmatprep.subr.mxu0 0.0
        %7019 = vmatpush1.msra.mxu0 0.0
        %7020 = vmatprep.subr.mxu0 0.0
        %7021 = vmatpush1.msra.mxu0 0.0
        %7022 = vmatprep.subr.mxu0 0.0
        %7023 = vmatpush1.msra.mxu0 0.0
        %7024 = vmatprep.subr.mxu0 0.0
        %7025 = vmatpush1.msra.mxu0 0.0
        %7026 = vmatprep.subr.mxu0 0.0
        %7027 = vmatpush1.msra.mxu0 0.0
        %7028 = vmatprep.subr.mxu0 0.0
        %7029 = vmatpush1.msra.mxu0 0.0
        %7030 = vmatprep.subr.mxu0 0.0
        %7031 = vmatpush1.msra.mxu0 0.0
        %7032 = vmatprep.subr.mxu0 0.0
        %7033 = vmatpush1.msra.mxu0 0.0
        %7034 = vmatprep.subr.mxu0 %v6989
        %7035 = vmatpush1.msra.mxu0 %v6988
        %7036 = vmatprep.subr.mxu0 %v6987
        %7037 = vmatpush1.msra.mxu0 %v6986
        %7038 = vmatprep.subr.mxu0 %v6985
        %7039 = vmatpush1.msra.mxu0 %v6984
        %7040 = vmatprep.subr.mxu0 %v6983
        %7041 = vmatpush1.msra.mxu0 %v6982
        %7042 = vmatprep.subr.mxu0 0.0
        %7043 = vmatpush2.msra.mxu0 0.0
        %7044 = vmatprep.subr.mxu0 0.0
        %7045 = vmatpush2.msra.mxu0 0.0
        %7046 = vmatprep.subr.mxu0 0.0
        %7047 = vmatpush2.msra.mxu0 0.0
        %7048 = vmatprep.subr.mxu0 0.0
        %7049 = vmatpush2.msra.mxu0 0.0
        %7050 = vmatprep.subr.mxu0 0.0
        %7051 = vmatpush2.msra.mxu0 0.0
        %7052 = vmatprep.subr.mxu0 0.0
        %7053 = vmatpush2.msra.mxu0 0.0
        %7054 = vmatprep.subr.mxu0 0.0
        %7055 = vmatpush2.msra.mxu0 0.0
        %7056 = vmatprep.subr.mxu0 0.0
        %7057 = vmatpush2.msra.mxu0 0.0
        %7058 = vmatprep.subr.mxu0 0.0
        %7059 = vmatpush2.msra.mxu0 0.0
        %7060 = vmatprep.subr.mxu0 0.0
        %7061 = vmatpush2.msra.mxu0 0.0
        %7062 = vmatprep.subr.mxu0 0.0
        %7063 = vmatpush2.msra.mxu0 0.0
        %7064 = vmatprep.subr.mxu0 0.0
        %7065 = vmatpush2.msra.mxu0 0.0
        %7066 = vmatprep.subr.mxu0 0.0
        %7067 = vmatpush2.msra.mxu0 0.0
        %7068 = vmatprep.subr.mxu0 0.0
        %7069 = vmatpush2.msra.mxu0 0.0
        %7070 = vmatprep.subr.mxu0 0.0
        %7071 = vmatpush2.msra.mxu0 0.0
        %7072 = vmatprep.subr.mxu0 0.0
        %7073 = vmatpush2.msra.mxu0 0.0
        %7074 = vmatprep.mubr.f32.mxu0 0.0
        %7075 = vmatmul.mubr.f32.gmra.mxu0 %v6999
        %v7076 = vpop.f32.mrf.mxu0
        %v7077 = vadd.f32 0.0, %v7076
        %v7078 = vpop.f32.mrf.mxu0
        %v7079 = vadd.f32 0.0, %v7078
        %7080 = vmatprep.mubr.f32.mxu0 0.0
        %7081 = vmatmul.mubr.f32.gmra.mxu0 %v7002
        %v7082 = vpop.f32.mrf.mxu0
        %v7083 = vadd.f32 0.0, %v7082
        %v7084 = vpop.f32.mrf.mxu0
        %v7085 = vadd.f32 0.0, %v7084
        %7086 = vmatprep.mubr.f32.mxu0 0.0
        %7087 = vmatmul.mubr.f32.gmra.mxu0 %v7005
        %v7088 = vpop.f32.mrf.mxu0
        %v7089 = vadd.f32 0.0, %v7088
        %v7090 = vpop.f32.mrf.mxu0
        %v7091 = vadd.f32 0.0, %v7090
        %7092 = vmatprep.mubr.f32.mxu0 0.0
        %7093 = vmatmul.mubr.f32.gmra.mxu0 %v7008
        %v7094 = vpop.f32.mrf.mxu0
        %v7095 = vadd.f32 0.0, %v7094
        %v7096 = vpop.f32.mrf.mxu0
        %v7097 = vadd.f32 0.0, %v7096
        %7098 = vdwg.mxu0
        %v7099 = vadd.f32 %v6921, %v7077
        %v7100 = vadd.f32 %v6922, %v7079
        %v7101 = vadd.f32 %v6923, %v7083
        %v7102 = vadd.f32 %v6924, %v7085
        %v7103 = vadd.f32 %v6925, %v7089
        %v7104 = vadd.f32 %v6926, %v7091
        %v7105 = vadd.f32 %v6927, %v7095
        %v7106 = vadd.f32 %v6928, %v7097
        %7108 = vset.pattern.permute.xlu0 0
        %7109 = vperm.xlu0 %7108, %v5568
        %v7110 = vpop.permute.xlu0 %7109
        %7113 = vset.pattern.permute.xlu0 0
        %7114 = vperm.xlu0 %7113, %v5569
        %v7115 = vpop.permute.xlu0 %7114
        %7118 = vset.pattern.permute.xlu0 0
        %7119 = vperm.xlu0 %7118, %v5570
        %v7120 = vpop.permute.xlu0 %7119
        %7123 = vset.pattern.permute.xlu0 0
        %7124 = vperm.xlu0 %7123, %v5571
        %v7125 = vpop.permute.xlu0 %7124
        %v7127 = vmul.f32 %v7099, %v7110
        %v7128 = vmul.f32 %v7100, %v7110
        %v7129 = vmul.f32 %v7101, %v7115
        %v7130 = vmul.f32 %v7102, %v7115
        %v7131 = vmul.f32 %v7103, %v7120
        %v7132 = vmul.f32 %v7104, %v7120
        %v7133 = vmul.f32 %v7105, %v7125
        %v7134 = vmul.f32 %v7106, %v7125
        %7136 = vset.pattern.permute.xlu0 0
        %7137 = vperm.xlu0 %7136, %v5573
        %v7138 = vpop.permute.xlu0 %7137
        %7141 = vset.pattern.permute.xlu0 0
        %7142 = vperm.xlu0 %7141, %v5574
        %v7143 = vpop.permute.xlu0 %7142
        %7146 = vset.pattern.permute.xlu0 0
        %7147 = vperm.xlu0 %7146, %v5575
        %v7148 = vpop.permute.xlu0 %7147
        %7151 = vset.pattern.permute.xlu0 0
        %7152 = vperm.xlu0 %7151, %v5576
        %v7153 = vpop.permute.xlu0 %7152
        %v7155 = vadd.f32 %v7127, %v7138
        %v7156 = vadd.f32 %v7128, %v7138
        %v7157 = vadd.f32 %v7129, %v7143
        %v7158 = vadd.f32 %v7130, %v7143
        %v7159 = vadd.f32 %v7131, %v7148
        %v7160 = vadd.f32 %v7132, %v7148
        %v7161 = vadd.f32 %v7133, %v7153
        %v7162 = vadd.f32 %v7134, %v7153
        %v7163 = vmax.f32 %v7155, 0.0
        %v7164 = vmax.f32 %v7156, 0.0
        %v7165 = vmax.f32 %v7157, 0.0
        %v7166 = vmax.f32 %v7158, 0.0
        %v7167 = vmax.f32 %v7159, 0.0
        %v7168 = vmax.f32 %v7160, 0.0
        %v7169 = vmax.f32 %v7161, 0.0
        %v7170 = vmax.f32 %v7162, 0.0
        %s7171 = scalar_lea.vmem %s5, 96
        %v7172 = vld [vmem:[%s7171] sm:$0xff]
        %v7173 = vld [vmem:[%s7171 + $0x8] sm:$0xff]
        %v7174 = vld [vmem:[%s7171 + $0x10] sm:$0xff]
        %v7175 = vld [vmem:[%s7171 + $0x18] sm:$0xff]
        %s7176 = scalar_lea.vmem %s6, 96
        %v7177 = vld [vmem:[%s7176] sm:$0xff]
        %v7178 = vld [vmem:[%s7176 + $0x8] sm:$0xff]
        %v7179 = vld [vmem:[%s7176 + $0x10] sm:$0xff]
        %v7180 = vld [vmem:[%s7176 + $0x18] sm:$0xff]
        %7181 = vst [vmem:[#allocation2 + $0x8] sm:$0xff] %v7163
        %7182 = vst [vmem:[#allocation2 + $0x10] sm:$0xff] %v7164
        %7183 = vst [vmem:[#allocation2 + $0x28] sm:$0xff] %v7165
        %7184 = vst [vmem:[#allocation2 + $0x30] sm:$0xff] %v7166
        %7185 = vst [vmem:[#allocation2 + $0x48] sm:$0xff] %v7167
        %7186 = vst [vmem:[#allocation2 + $0x50] sm:$0xff] %v7168
        %7187 = vst [vmem:[#allocation2 + $0x68] sm:$0xff] %v7169
        %7188 = vst [vmem:[#allocation2 + $0x70] sm:$0xff] %v7170
        %v7189 = vld [vmem:[#allocation2] sm:$0xff]
        %v7190 = vld [vmem:[#allocation2 + $0x8] sm:$0xff]
        %v7191 = vld [vmem:[#allocation2 + $0x10] sm:$0xff]
        %v7192 = vld [vmem:[#allocation2 + $0x20] sm:$0xff]
        %v7193 = vld [vmem:[#allocation2 + $0x28] sm:$0xff]
        %v7194 = vld [vmem:[#allocation2 + $0x30] sm:$0xff]
        %v7195 = vld [vmem:[#allocation2 + $0x40] sm:$0xff]
        %v7196 = vld [vmem:[#allocation2 + $0x48] sm:$0xff]
        %v7197 = vld [vmem:[#allocation2 + $0x50] sm:$0xff]
        %v7198 = vld [vmem:[#allocation2 + $0x60] sm:$0xff]
        %v7199 = vld [vmem:[#allocation2 + $0x68] sm:$0xff]
        %v7200 = vld [vmem:[#allocation2 + $0x70] sm:$0xff]
        %v7201 = vmul.f32 %v7189, %v723
        %v7202 = vmul.f32 %v7190, %v727
        %v7203 = vmul.f32 %v7191, %v725
        %v7204 = vmul.f32 %v7192, %v723
        %v7205 = vmul.f32 %v7193, %v727
        %v7206 = vmul.f32 %v7194, %v725
        %v7207 = vmul.f32 %v7195, %v723
        %v7208 = vmul.f32 %v7196, %v727
        %v7209 = vmul.f32 %v7197, %v725
        %v7210 = vmul.f32 %v7198, %v723
        %v7211 = vmul.f32 %v7199, %v727
        %v7212 = vmul.f32 %v7200, %v725
        %s7213 = scalar_lea.vmem [#allocation6], 864
        %v7214 = vld [vmem:[%s7213] sm:$0xff]
        %v7215 = vld [vmem:[%s7213 + $0x8] sm:$0xff]
        %v7216 = vld [vmem:[%s7213 + $0x10] sm:$0xff]
        %v7217 = vld [vmem:[%s7213 + $0x18] sm:$0xff]
        %s7218 = scalar_lea.vmem [#allocation6], 896
        %v7219 = vld [vmem:[%s7218] sm:$0xff]
        %v7220 = vld [vmem:[%s7218 + $0x8] sm:$0xff]
        %v7221 = vld [vmem:[%s7218 + $0x10] sm:$0xff]
        %v7222 = vld [vmem:[%s7218 + $0x18] sm:$0xff]
        %7235 = vrot.lane.b32.xlu0 %v7189, 16
        %v7236 = vpop.permute.xlu0 %7235
        %7237 = vrot.lane.b32.xlu0 %v7190, 16
        %v7238 = vpop.permute.xlu0 %7237
        %7239 = vrot.lane.b32.xlu0 %v7191, 16
        %v7240 = vpop.permute.xlu0 %7239
        %7241 = vrot.lane.b32.xlu0 %v7192, 16
        %v7242 = vpop.permute.xlu0 %7241
        %7243 = vrot.lane.b32.xlu0 %v7193, 16
        %v7244 = vpop.permute.xlu0 %7243
        %7245 = vrot.lane.b32.xlu0 %v7194, 16
        %v7246 = vpop.permute.xlu0 %7245
        %7247 = vrot.lane.b32.xlu0 %v7195, 16
        %v7248 = vpop.permute.xlu0 %7247
        %7249 = vrot.lane.b32.xlu0 %v7196, 16
        %v7250 = vpop.permute.xlu0 %7249
        %7251 = vrot.lane.b32.xlu0 %v7197, 16
        %v7252 = vpop.permute.xlu0 %7251
        %7253 = vrot.lane.b32.xlu0 %v7198, 16
        %v7254 = vpop.permute.xlu0 %7253
        %7255 = vrot.lane.b32.xlu0 %v7199, 16
        %v7256 = vpop.permute.xlu0 %7255
        %7257 = vrot.lane.b32.xlu0 %v7200, 16
        %v7258 = vpop.permute.xlu0 %7257
        %v7259 = vsel %vm788, %v7236, %v7238
        %v7260 = vsel %vm788, %v7238, %v7240
        %v7261 = vsel %vm788, %v7242, %v7244
        %v7262 = vsel %vm788, %v7244, %v7246
        %v7263 = vsel %vm788, %v7248, %v7250
        %v7264 = vsel %vm788, %v7250, %v7252
        %v7265 = vsel %vm788, %v7254, %v7256
        %v7266 = vsel %vm788, %v7256, %v7258
        %v7276 = vsel %vm805, %v7219, 0
        %v7279 = vsel %vm805, %v7220, 0
        %v7282 = vsel %vm805, %v7221, 0
        %v7285 = vsel %vm805, %v7222, 0
        %7287 = vmatprep.subr.mxu0 0.0
        %7288 = vmatpush1.msra.mxu0 0.0
        %7289 = vmatprep.subr.mxu0 0.0
        %7290 = vmatpush1.msra.mxu0 0.0
        %7291 = vmatprep.subr.mxu0 0.0
        %7292 = vmatpush1.msra.mxu0 0.0
        %7293 = vmatprep.subr.mxu0 0.0
        %7294 = vmatpush1.msra.mxu0 0.0
        %7295 = vmatprep.subr.mxu0 0.0
        %7296 = vmatpush1.msra.mxu0 0.0
        %7297 = vmatprep.subr.mxu0 0.0
        %7298 = vmatpush1.msra.mxu0 0.0
        %7299 = vmatprep.subr.mxu0 0.0
        %7300 = vmatpush1.msra.mxu0 0.0
        %7301 = vmatprep.subr.mxu0 0.0
        %7302 = vmatpush1.msra.mxu0 0.0
        %7303 = vmatprep.subr.mxu0 0.0
        %7304 = vmatpush1.msra.mxu0 0.0
        %7305 = vmatprep.subr.mxu0 0.0
        %7306 = vmatpush1.msra.mxu0 0.0
        %7307 = vmatprep.subr.mxu0 0.0
        %7308 = vmatpush1.msra.mxu0 0.0
        %7309 = vmatprep.subr.mxu0 0.0
        %7310 = vmatpush1.msra.mxu0 0.0
        %7311 = vmatprep.subr.mxu0 %v7266
        %7312 = vmatpush1.msra.mxu0 %v7265
        %7313 = vmatprep.subr.mxu0 %v7264
        %7314 = vmatpush1.msra.mxu0 %v7263
        %7315 = vmatprep.subr.mxu0 %v7262
        %7316 = vmatpush1.msra.mxu0 %v7261
        %7317 = vmatprep.subr.mxu0 %v7260
        %7318 = vmatpush1.msra.mxu0 %v7259
        %7319 = vmatprep.subr.mxu0 0.0
        %7320 = vmatpush2.msra.mxu0 0.0
        %7321 = vmatprep.subr.mxu0 0.0
        %7322 = vmatpush2.msra.mxu0 0.0
        %7323 = vmatprep.subr.mxu0 0.0
        %7324 = vmatpush2.msra.mxu0 0.0
        %7325 = vmatprep.subr.mxu0 0.0
        %7326 = vmatpush2.msra.mxu0 0.0
        %7327 = vmatprep.subr.mxu0 0.0
        %7328 = vmatpush2.msra.mxu0 0.0
        %7329 = vmatprep.subr.mxu0 0.0
        %7330 = vmatpush2.msra.mxu0 0.0
        %7331 = vmatprep.subr.mxu0 0.0
        %7332 = vmatpush2.msra.mxu0 0.0
        %7333 = vmatprep.subr.mxu0 0.0
        %7334 = vmatpush2.msra.mxu0 0.0
        %7335 = vmatprep.subr.mxu0 0.0
        %7336 = vmatpush2.msra.mxu0 0.0
        %7337 = vmatprep.subr.mxu0 0.0
        %7338 = vmatpush2.msra.mxu0 0.0
        %7339 = vmatprep.subr.mxu0 0.0
        %7340 = vmatpush2.msra.mxu0 0.0
        %7341 = vmatprep.subr.mxu0 0.0
        %7342 = vmatpush2.msra.mxu0 0.0
        %7343 = vmatprep.subr.mxu0 0.0
        %7344 = vmatpush2.msra.mxu0 0.0
        %7345 = vmatprep.subr.mxu0 0.0
        %7346 = vmatpush2.msra.mxu0 0.0
        %7347 = vmatprep.subr.mxu0 0.0
        %7348 = vmatpush2.msra.mxu0 0.0
        %7349 = vmatprep.subr.mxu0 0.0
        %7350 = vmatpush2.msra.mxu0 0.0
        %7351 = vmatprep.mubr.f32.mxu0 0.0
        %7352 = vmatmul.mubr.f32.gmra.mxu0 %v7276
        %v7353 = vpop.f32.mrf.mxu0
        %v7354 = vadd.f32 0.0, %v7353
        %v7355 = vpop.f32.mrf.mxu0
        %v7356 = vadd.f32 0.0, %v7355
        %7357 = vmatprep.mubr.f32.mxu0 0.0
        %7358 = vmatmul.mubr.f32.gmra.mxu0 %v7279
        %v7359 = vpop.f32.mrf.mxu0
        %v7360 = vadd.f32 0.0, %v7359
        %v7361 = vpop.f32.mrf.mxu0
        %v7362 = vadd.f32 0.0, %v7361
        %7363 = vmatprep.mubr.f32.mxu0 0.0
        %7364 = vmatmul.mubr.f32.gmra.mxu0 %v7282
        %v7365 = vpop.f32.mrf.mxu0
        %v7366 = vadd.f32 0.0, %v7365
        %v7367 = vpop.f32.mrf.mxu0
        %v7368 = vadd.f32 0.0, %v7367
        %7369 = vmatprep.mubr.f32.mxu0 0.0
        %7370 = vmatmul.mubr.f32.gmra.mxu0 %v7285
        %v7371 = vpop.f32.mrf.mxu0
        %v7372 = vadd.f32 0.0, %v7371
        %v7373 = vpop.f32.mrf.mxu0
        %v7374 = vadd.f32 0.0, %v7373
        %7375 = vdwg.mxu0
        %7388 = vrot.lane.b32.xlu0 %v7201, 17
        %v7389 = vpop.permute.xlu0 %7388
        %7390 = vrot.lane.b32.xlu0 %v7202, 17
        %v7391 = vpop.permute.xlu0 %7390
        %7392 = vrot.lane.b32.xlu0 %v7203, 17
        %v7393 = vpop.permute.xlu0 %7392
        %7394 = vrot.lane.b32.xlu0 %v7204, 17
        %v7395 = vpop.permute.xlu0 %7394
        %7396 = vrot.lane.b32.xlu0 %v7205, 17
        %v7397 = vpop.permute.xlu0 %7396
        %7398 = vrot.lane.b32.xlu0 %v7206, 17
        %v7399 = vpop.permute.xlu0 %7398
        %7400 = vrot.lane.b32.xlu0 %v7207, 17
        %v7401 = vpop.permute.xlu0 %7400
        %7402 = vrot.lane.b32.xlu0 %v7208, 17
        %v7403 = vpop.permute.xlu0 %7402
        %7404 = vrot.lane.b32.xlu0 %v7209, 17
        %v7405 = vpop.permute.xlu0 %7404
        %7406 = vrot.lane.b32.xlu0 %v7210, 17
        %v7407 = vpop.permute.xlu0 %7406
        %7408 = vrot.lane.b32.xlu0 %v7211, 17
        %v7409 = vpop.permute.xlu0 %7408
        %7410 = vrot.lane.b32.xlu0 %v7212, 17
        %v7411 = vpop.permute.xlu0 %7410
        %v7412 = vsel %vm943, %v7389, %v7391
        %v7413 = vsel %vm943, %v7391, %v7393
        %v7414 = vsel %vm943, %v7395, %v7397
        %v7415 = vsel %vm943, %v7397, %v7399
        %v7416 = vsel %vm943, %v7401, %v7403
        %v7417 = vsel %vm943, %v7403, %v7405
        %v7418 = vsel %vm943, %v7407, %v7409
        %v7419 = vsel %vm943, %v7409, %v7411
        %v7429 = vsel %vm805, %v7214, 0
        %v7432 = vsel %vm805, %v7215, 0
        %v7435 = vsel %vm805, %v7216, 0
        %v7438 = vsel %vm805, %v7217, 0
        %7440 = vmatprep.subr.mxu0 0.0
        %7441 = vmatpush1.msra.mxu0 0.0
        %7442 = vmatprep.subr.mxu0 0.0
        %7443 = vmatpush1.msra.mxu0 0.0
        %7444 = vmatprep.subr.mxu0 0.0
        %7445 = vmatpush1.msra.mxu0 0.0
        %7446 = vmatprep.subr.mxu0 0.0
        %7447 = vmatpush1.msra.mxu0 0.0
        %7448 = vmatprep.subr.mxu0 0.0
        %7449 = vmatpush1.msra.mxu0 0.0
        %7450 = vmatprep.subr.mxu0 0.0
        %7451 = vmatpush1.msra.mxu0 0.0
        %7452 = vmatprep.subr.mxu0 0.0
        %7453 = vmatpush1.msra.mxu0 0.0
        %7454 = vmatprep.subr.mxu0 0.0
        %7455 = vmatpush1.msra.mxu0 0.0
        %7456 = vmatprep.subr.mxu0 0.0
        %7457 = vmatpush1.msra.mxu0 0.0
        %7458 = vmatprep.subr.mxu0 0.0
        %7459 = vmatpush1.msra.mxu0 0.0
        %7460 = vmatprep.subr.mxu0 0.0
        %7461 = vmatpush1.msra.mxu0 0.0
        %7462 = vmatprep.subr.mxu0 0.0
        %7463 = vmatpush1.msra.mxu0 0.0
        %7464 = vmatprep.subr.mxu0 %v7419
        %7465 = vmatpush1.msra.mxu0 %v7418
        %7466 = vmatprep.subr.mxu0 %v7417
        %7467 = vmatpush1.msra.mxu0 %v7416
        %7468 = vmatprep.subr.mxu0 %v7415
        %7469 = vmatpush1.msra.mxu0 %v7414
        %7470 = vmatprep.subr.mxu0 %v7413
        %7471 = vmatpush1.msra.mxu0 %v7412
        %7472 = vmatprep.subr.mxu0 0.0
        %7473 = vmatpush2.msra.mxu0 0.0
        %7474 = vmatprep.subr.mxu0 0.0
        %7475 = vmatpush2.msra.mxu0 0.0
        %7476 = vmatprep.subr.mxu0 0.0
        %7477 = vmatpush2.msra.mxu0 0.0
        %7478 = vmatprep.subr.mxu0 0.0
        %7479 = vmatpush2.msra.mxu0 0.0
        %7480 = vmatprep.subr.mxu0 0.0
        %7481 = vmatpush2.msra.mxu0 0.0
        %7482 = vmatprep.subr.mxu0 0.0
        %7483 = vmatpush2.msra.mxu0 0.0
        %7484 = vmatprep.subr.mxu0 0.0
        %7485 = vmatpush2.msra.mxu0 0.0
        %7486 = vmatprep.subr.mxu0 0.0
        %7487 = vmatpush2.msra.mxu0 0.0
        %7488 = vmatprep.subr.mxu0 0.0
        %7489 = vmatpush2.msra.mxu0 0.0
        %7490 = vmatprep.subr.mxu0 0.0
        %7491 = vmatpush2.msra.mxu0 0.0
        %7492 = vmatprep.subr.mxu0 0.0
        %7493 = vmatpush2.msra.mxu0 0.0
        %7494 = vmatprep.subr.mxu0 0.0
        %7495 = vmatpush2.msra.mxu0 0.0
        %7496 = vmatprep.subr.mxu0 0.0
        %7497 = vmatpush2.msra.mxu0 0.0
        %7498 = vmatprep.subr.mxu0 0.0
        %7499 = vmatpush2.msra.mxu0 0.0
        %7500 = vmatprep.subr.mxu0 0.0
        %7501 = vmatpush2.msra.mxu0 0.0
        %7502 = vmatprep.subr.mxu0 0.0
        %7503 = vmatpush2.msra.mxu0 0.0
        %7504 = vmatprep.mubr.f32.mxu0 0.0
        %7505 = vmatmul.mubr.f32.gmra.mxu0 %v7429
        %v7506 = vpop.f32.mrf.mxu0
        %v7507 = vadd.f32 %v7354, %v7506
        %v7508 = vpop.f32.mrf.mxu0
        %v7509 = vadd.f32 %v7356, %v7508
        %7510 = vmatprep.mubr.f32.mxu0 0.0
        %7511 = vmatmul.mubr.f32.gmra.mxu0 %v7432
        %v7512 = vpop.f32.mrf.mxu0
        %v7513 = vadd.f32 %v7360, %v7512
        %v7514 = vpop.f32.mrf.mxu0
        %v7515 = vadd.f32 %v7362, %v7514
        %7516 = vmatprep.mubr.f32.mxu0 0.0
        %7517 = vmatmul.mubr.f32.gmra.mxu0 %v7435
        %v7518 = vpop.f32.mrf.mxu0
        %v7519 = vadd.f32 %v7366, %v7518
        %v7520 = vpop.f32.mrf.mxu0
        %v7521 = vadd.f32 %v7368, %v7520
        %7522 = vmatprep.mubr.f32.mxu0 0.0
        %7523 = vmatmul.mubr.f32.gmra.mxu0 %v7438
        %v7524 = vpop.f32.mrf.mxu0
        %v7525 = vadd.f32 %v7372, %v7524
        %v7526 = vpop.f32.mrf.mxu0
        %v7527 = vadd.f32 %v7374, %v7526
        %7528 = vdwg.mxu0
        %v7529 = vmul.f32 %v7189, %v1064
        %v7530 = vmul.f32 %v7190, %v1068
        %v7531 = vmul.f32 %v7191, %v1066
        %v7532 = vmul.f32 %v7192, %v1064
        %v7533 = vmul.f32 %v7193, %v1068
        %v7534 = vmul.f32 %v7194, %v1066
        %v7535 = vmul.f32 %v7195, %v1064
        %v7536 = vmul.f32 %v7196, %v1068
        %v7537 = vmul.f32 %v7197, %v1066
        %v7538 = vmul.f32 %v7198, %v1064
        %v7539 = vmul.f32 %v7199, %v1068
        %v7540 = vmul.f32 %v7200, %v1066
        %s7541 = scalar_lea.vmem [#allocation6], 928
        %v7542 = vld [vmem:[%s7541] sm:$0xff]
        %v7543 = vld [vmem:[%s7541 + $0x8] sm:$0xff]
        %v7544 = vld [vmem:[%s7541 + $0x10] sm:$0xff]
        %v7545 = vld [vmem:[%s7541 + $0x18] sm:$0xff]
        %7558 = vrot.lane.b32.xlu0 %v7529, 15
        %v7559 = vpop.permute.xlu0 %7558
        %7560 = vrot.lane.b32.xlu0 %v7530, 15
        %v7561 = vpop.permute.xlu0 %7560
        %7562 = vrot.lane.b32.xlu0 %v7531, 15
        %v7563 = vpop.permute.xlu0 %7562
        %7564 = vrot.lane.b32.xlu0 %v7532, 15
        %v7565 = vpop.permute.xlu0 %7564
        %7566 = vrot.lane.b32.xlu0 %v7533, 15
        %v7567 = vpop.permute.xlu0 %7566
        %7568 = vrot.lane.b32.xlu0 %v7534, 15
        %v7569 = vpop.permute.xlu0 %7568
        %7570 = vrot.lane.b32.xlu0 %v7535, 15
        %v7571 = vpop.permute.xlu0 %7570
        %7572 = vrot.lane.b32.xlu0 %v7536, 15
        %v7573 = vpop.permute.xlu0 %7572
        %7574 = vrot.lane.b32.xlu0 %v7537, 15
        %v7575 = vpop.permute.xlu0 %7574
        %7576 = vrot.lane.b32.xlu0 %v7538, 15
        %v7577 = vpop.permute.xlu0 %7576
        %7578 = vrot.lane.b32.xlu0 %v7539, 15
        %v7579 = vpop.permute.xlu0 %7578
        %7580 = vrot.lane.b32.xlu0 %v7540, 15
        %v7581 = vpop.permute.xlu0 %7580
        %v7582 = vsel %vm1125, %v7559, %v7561
        %v7583 = vsel %vm1125, %v7561, %v7563
        %v7584 = vsel %vm1125, %v7565, %v7567
        %v7585 = vsel %vm1125, %v7567, %v7569
        %v7586 = vsel %vm1125, %v7571, %v7573
        %v7587 = vsel %vm1125, %v7573, %v7575
        %v7588 = vsel %vm1125, %v7577, %v7579
        %v7589 = vsel %vm1125, %v7579, %v7581
        %v7599 = vsel %vm805, %v7542, 0
        %v7602 = vsel %vm805, %v7543, 0
        %v7605 = vsel %vm805, %v7544, 0
        %v7608 = vsel %vm805, %v7545, 0
        %7610 = vmatprep.subr.mxu0 0.0
        %7611 = vmatpush1.msra.mxu0 0.0
        %7612 = vmatprep.subr.mxu0 0.0
        %7613 = vmatpush1.msra.mxu0 0.0
        %7614 = vmatprep.subr.mxu0 0.0
        %7615 = vmatpush1.msra.mxu0 0.0
        %7616 = vmatprep.subr.mxu0 0.0
        %7617 = vmatpush1.msra.mxu0 0.0
        %7618 = vmatprep.subr.mxu0 0.0
        %7619 = vmatpush1.msra.mxu0 0.0
        %7620 = vmatprep.subr.mxu0 0.0
        %7621 = vmatpush1.msra.mxu0 0.0
        %7622 = vmatprep.subr.mxu0 0.0
        %7623 = vmatpush1.msra.mxu0 0.0
        %7624 = vmatprep.subr.mxu0 0.0
        %7625 = vmatpush1.msra.mxu0 0.0
        %7626 = vmatprep.subr.mxu0 0.0
        %7627 = vmatpush1.msra.mxu0 0.0
        %7628 = vmatprep.subr.mxu0 0.0
        %7629 = vmatpush1.msra.mxu0 0.0
        %7630 = vmatprep.subr.mxu0 0.0
        %7631 = vmatpush1.msra.mxu0 0.0
        %7632 = vmatprep.subr.mxu0 0.0
        %7633 = vmatpush1.msra.mxu0 0.0
        %7634 = vmatprep.subr.mxu0 %v7589
        %7635 = vmatpush1.msra.mxu0 %v7588
        %7636 = vmatprep.subr.mxu0 %v7587
        %7637 = vmatpush1.msra.mxu0 %v7586
        %7638 = vmatprep.subr.mxu0 %v7585
        %7639 = vmatpush1.msra.mxu0 %v7584
        %7640 = vmatprep.subr.mxu0 %v7583
        %7641 = vmatpush1.msra.mxu0 %v7582
        %7642 = vmatprep.subr.mxu0 0.0
        %7643 = vmatpush2.msra.mxu0 0.0
        %7644 = vmatprep.subr.mxu0 0.0
        %7645 = vmatpush2.msra.mxu0 0.0
        %7646 = vmatprep.subr.mxu0 0.0
        %7647 = vmatpush2.msra.mxu0 0.0
        %7648 = vmatprep.subr.mxu0 0.0
        %7649 = vmatpush2.msra.mxu0 0.0
        %7650 = vmatprep.subr.mxu0 0.0
        %7651 = vmatpush2.msra.mxu0 0.0
        %7652 = vmatprep.subr.mxu0 0.0
        %7653 = vmatpush2.msra.mxu0 0.0
        %7654 = vmatprep.subr.mxu0 0.0
        %7655 = vmatpush2.msra.mxu0 0.0
        %7656 = vmatprep.subr.mxu0 0.0
        %7657 = vmatpush2.msra.mxu0 0.0
        %7658 = vmatprep.subr.mxu0 0.0
        %7659 = vmatpush2.msra.mxu0 0.0
        %7660 = vmatprep.subr.mxu0 0.0
        %7661 = vmatpush2.msra.mxu0 0.0
        %7662 = vmatprep.subr.mxu0 0.0
        %7663 = vmatpush2.msra.mxu0 0.0
        %7664 = vmatprep.subr.mxu0 0.0
        %7665 = vmatpush2.msra.mxu0 0.0
        %7666 = vmatprep.subr.mxu0 0.0
        %7667 = vmatpush2.msra.mxu0 0.0
        %7668 = vmatprep.subr.mxu0 0.0
        %7669 = vmatpush2.msra.mxu0 0.0
        %7670 = vmatprep.subr.mxu0 0.0
        %7671 = vmatpush2.msra.mxu0 0.0
        %7672 = vmatprep.subr.mxu0 0.0
        %7673 = vmatpush2.msra.mxu0 0.0
        %7674 = vmatprep.mubr.f32.mxu0 0.0
        %7675 = vmatmul.mubr.f32.gmra.mxu0 %v7599
        %v7676 = vpop.f32.mrf.mxu0
        %v7677 = vadd.f32 0.0, %v7676
        %v7678 = vpop.f32.mrf.mxu0
        %v7679 = vadd.f32 0.0, %v7678
        %7680 = vmatprep.mubr.f32.mxu0 0.0
        %7681 = vmatmul.mubr.f32.gmra.mxu0 %v7602
        %v7682 = vpop.f32.mrf.mxu0
        %v7683 = vadd.f32 0.0, %v7682
        %v7684 = vpop.f32.mrf.mxu0
        %v7685 = vadd.f32 0.0, %v7684
        %7686 = vmatprep.mubr.f32.mxu0 0.0
        %7687 = vmatmul.mubr.f32.gmra.mxu0 %v7605
        %v7688 = vpop.f32.mrf.mxu0
        %v7689 = vadd.f32 0.0, %v7688
        %v7690 = vpop.f32.mrf.mxu0
        %v7691 = vadd.f32 0.0, %v7690
        %7692 = vmatprep.mubr.f32.mxu0 0.0
        %7693 = vmatmul.mubr.f32.gmra.mxu0 %v7608
        %v7694 = vpop.f32.mrf.mxu0
        %v7695 = vadd.f32 0.0, %v7694
        %v7696 = vpop.f32.mrf.mxu0
        %v7697 = vadd.f32 0.0, %v7696
        %7698 = vdwg.mxu0
        %v7699 = vadd.f32 %v7507, %v7677
        %v7700 = vadd.f32 %v7509, %v7679
        %v7701 = vadd.f32 %v7513, %v7683
        %v7702 = vadd.f32 %v7515, %v7685
        %v7703 = vadd.f32 %v7519, %v7689
        %v7704 = vadd.f32 %v7521, %v7691
        %v7705 = vadd.f32 %v7525, %v7695
        %v7706 = vadd.f32 %v7527, %v7697
        %v7707 = vmul.f32 %v7189, %v1252
        %v7708 = vmul.f32 %v7190, %v1256
        %v7709 = vmul.f32 %v7191, %v1254
        %v7710 = vmul.f32 %v7192, %v1252
        %v7711 = vmul.f32 %v7193, %v1256
        %v7712 = vmul.f32 %v7194, %v1254
        %v7713 = vmul.f32 %v7195, %v1252
        %v7714 = vmul.f32 %v7196, %v1256
        %v7715 = vmul.f32 %v7197, %v1254
        %v7716 = vmul.f32 %v7198, %v1252
        %v7717 = vmul.f32 %v7199, %v1256
        %v7718 = vmul.f32 %v7200, %v1254
        %s7719 = scalar_lea.vmem [#allocation6], 960
        %v7720 = vld [vmem:[%s7719] sm:$0xff]
        %v7721 = vld [vmem:[%s7719 + $0x8] sm:$0xff]
        %v7722 = vld [vmem:[%s7719 + $0x10] sm:$0xff]
        %v7723 = vld [vmem:[%s7719 + $0x18] sm:$0xff]
        %7736 = vrot.lane.b32.xlu0 %v7707, 1
        %v7737 = vpop.permute.xlu0 %7736
        %7738 = vrot.lane.b32.xlu0 %v7708, 1
        %v7739 = vpop.permute.xlu0 %7738
        %7740 = vrot.lane.b32.xlu0 %v7709, 1
        %v7741 = vpop.permute.xlu0 %7740
        %7742 = vrot.lane.b32.xlu0 %v7710, 1
        %v7743 = vpop.permute.xlu0 %7742
        %7744 = vrot.lane.b32.xlu0 %v7711, 1
        %v7745 = vpop.permute.xlu0 %7744
        %7746 = vrot.lane.b32.xlu0 %v7712, 1
        %v7747 = vpop.permute.xlu0 %7746
        %7748 = vrot.lane.b32.xlu0 %v7713, 1
        %v7749 = vpop.permute.xlu0 %7748
        %7750 = vrot.lane.b32.xlu0 %v7714, 1
        %v7751 = vpop.permute.xlu0 %7750
        %7752 = vrot.lane.b32.xlu0 %v7715, 1
        %v7753 = vpop.permute.xlu0 %7752
        %7754 = vrot.lane.b32.xlu0 %v7716, 1
        %v7755 = vpop.permute.xlu0 %7754
        %7756 = vrot.lane.b32.xlu0 %v7717, 1
        %v7757 = vpop.permute.xlu0 %7756
        %7758 = vrot.lane.b32.xlu0 %v7718, 1
        %v7759 = vpop.permute.xlu0 %7758
        %v7760 = vsel %vm1313, %v7737, %v7739
        %v7761 = vsel %vm1313, %v7739, %v7741
        %v7762 = vsel %vm1313, %v7743, %v7745
        %v7763 = vsel %vm1313, %v7745, %v7747
        %v7764 = vsel %vm1313, %v7749, %v7751
        %v7765 = vsel %vm1313, %v7751, %v7753
        %v7766 = vsel %vm1313, %v7755, %v7757
        %v7767 = vsel %vm1313, %v7757, %v7759
        %v7777 = vsel %vm805, %v7720, 0
        %v7780 = vsel %vm805, %v7721, 0
        %v7783 = vsel %vm805, %v7722, 0
        %v7786 = vsel %vm805, %v7723, 0
        %7788 = vmatprep.subr.mxu0 0.0
        %7789 = vmatpush1.msra.mxu0 0.0
        %7790 = vmatprep.subr.mxu0 0.0
        %7791 = vmatpush1.msra.mxu0 0.0
        %7792 = vmatprep.subr.mxu0 0.0
        %7793 = vmatpush1.msra.mxu0 0.0
        %7794 = vmatprep.subr.mxu0 0.0
        %7795 = vmatpush1.msra.mxu0 0.0
        %7796 = vmatprep.subr.mxu0 0.0
        %7797 = vmatpush1.msra.mxu0 0.0
        %7798 = vmatprep.subr.mxu0 0.0
        %7799 = vmatpush1.msra.mxu0 0.0
        %7800 = vmatprep.subr.mxu0 0.0
        %7801 = vmatpush1.msra.mxu0 0.0
        %7802 = vmatprep.subr.mxu0 0.0
        %7803 = vmatpush1.msra.mxu0 0.0
        %7804 = vmatprep.subr.mxu0 0.0
        %7805 = vmatpush1.msra.mxu0 0.0
        %7806 = vmatprep.subr.mxu0 0.0
        %7807 = vmatpush1.msra.mxu0 0.0
        %7808 = vmatprep.subr.mxu0 0.0
        %7809 = vmatpush1.msra.mxu0 0.0
        %7810 = vmatprep.subr.mxu0 0.0
        %7811 = vmatpush1.msra.mxu0 0.0
        %7812 = vmatprep.subr.mxu0 %v7767
        %7813 = vmatpush1.msra.mxu0 %v7766
        %7814 = vmatprep.subr.mxu0 %v7765
        %7815 = vmatpush1.msra.mxu0 %v7764
        %7816 = vmatprep.subr.mxu0 %v7763
        %7817 = vmatpush1.msra.mxu0 %v7762
        %7818 = vmatprep.subr.mxu0 %v7761
        %7819 = vmatpush1.msra.mxu0 %v7760
        %7820 = vmatprep.subr.mxu0 0.0
        %7821 = vmatpush2.msra.mxu0 0.0
        %7822 = vmatprep.subr.mxu0 0.0
        %7823 = vmatpush2.msra.mxu0 0.0
        %7824 = vmatprep.subr.mxu0 0.0
        %7825 = vmatpush2.msra.mxu0 0.0
        %7826 = vmatprep.subr.mxu0 0.0
        %7827 = vmatpush2.msra.mxu0 0.0
        %7828 = vmatprep.subr.mxu0 0.0
        %7829 = vmatpush2.msra.mxu0 0.0
        %7830 = vmatprep.subr.mxu0 0.0
        %7831 = vmatpush2.msra.mxu0 0.0
        %7832 = vmatprep.subr.mxu0 0.0
        %7833 = vmatpush2.msra.mxu0 0.0
        %7834 = vmatprep.subr.mxu0 0.0
        %7835 = vmatpush2.msra.mxu0 0.0
        %7836 = vmatprep.subr.mxu0 0.0
        %7837 = vmatpush2.msra.mxu0 0.0
        %7838 = vmatprep.subr.mxu0 0.0
        %7839 = vmatpush2.msra.mxu0 0.0
        %7840 = vmatprep.subr.mxu0 0.0
        %7841 = vmatpush2.msra.mxu0 0.0
        %7842 = vmatprep.subr.mxu0 0.0
        %7843 = vmatpush2.msra.mxu0 0.0
        %7844 = vmatprep.subr.mxu0 0.0
        %7845 = vmatpush2.msra.mxu0 0.0
        %7846 = vmatprep.subr.mxu0 0.0
        %7847 = vmatpush2.msra.mxu0 0.0
        %7848 = vmatprep.subr.mxu0 0.0
        %7849 = vmatpush2.msra.mxu0 0.0
        %7850 = vmatprep.subr.mxu0 0.0
        %7851 = vmatpush2.msra.mxu0 0.0
        %7852 = vmatprep.mubr.f32.mxu0 0.0
        %7853 = vmatmul.mubr.f32.gmra.mxu0 %v7777
        %v7854 = vpop.f32.mrf.mxu0
        %v7855 = vadd.f32 0.0, %v7854
        %v7856 = vpop.f32.mrf.mxu0
        %v7857 = vadd.f32 0.0, %v7856
        %7858 = vmatprep.mubr.f32.mxu0 0.0
        %7859 = vmatmul.mubr.f32.gmra.mxu0 %v7780
        %v7860 = vpop.f32.mrf.mxu0
        %v7861 = vadd.f32 0.0, %v7860
        %v7862 = vpop.f32.mrf.mxu0
        %v7863 = vadd.f32 0.0, %v7862
        %7864 = vmatprep.mubr.f32.mxu0 0.0
        %7865 = vmatmul.mubr.f32.gmra.mxu0 %v7783
        %v7866 = vpop.f32.mrf.mxu0
        %v7867 = vadd.f32 0.0, %v7866
        %v7868 = vpop.f32.mrf.mxu0
        %v7869 = vadd.f32 0.0, %v7868
        %7870 = vmatprep.mubr.f32.mxu0 0.0
        %7871 = vmatmul.mubr.f32.gmra.mxu0 %v7786
        %v7872 = vpop.f32.mrf.mxu0
        %v7873 = vadd.f32 0.0, %v7872
        %v7874 = vpop.f32.mrf.mxu0
        %v7875 = vadd.f32 0.0, %v7874
        %7876 = vdwg.mxu0
        %v7877 = vadd.f32 %v7699, %v7855
        %v7878 = vadd.f32 %v7700, %v7857
        %v7879 = vadd.f32 %v7701, %v7861
        %v7880 = vadd.f32 %v7702, %v7863
        %v7881 = vadd.f32 %v7703, %v7867
        %v7882 = vadd.f32 %v7704, %v7869
        %v7883 = vadd.f32 %v7705, %v7873
        %v7884 = vadd.f32 %v7706, %v7875
        %s7885 = scalar_lea.vmem [#allocation6], 992
        %v7886 = vld [vmem:[%s7885] sm:$0xff]
        %v7887 = vld [vmem:[%s7885 + $0x8] sm:$0xff]
        %v7888 = vld [vmem:[%s7885 + $0x10] sm:$0xff]
        %v7889 = vld [vmem:[%s7885 + $0x18] sm:$0xff]
        %v7891 = vsel %vm805, %v7886, 0
        %v7894 = vsel %vm805, %v7887, 0
        %v7897 = vsel %vm805, %v7888, 0
        %v7900 = vsel %vm805, %v7889, 0
        %7902 = vmatprep.subr.mxu0 0.0
        %7903 = vmatpush1.msra.mxu0 0.0
        %7904 = vmatprep.subr.mxu0 0.0
        %7905 = vmatpush1.msra.mxu0 0.0
        %7906 = vmatprep.subr.mxu0 0.0
        %7907 = vmatpush1.msra.mxu0 0.0
        %7908 = vmatprep.subr.mxu0 0.0
        %7909 = vmatpush1.msra.mxu0 0.0
        %7910 = vmatprep.subr.mxu0 0.0
        %7911 = vmatpush1.msra.mxu0 0.0
        %7912 = vmatprep.subr.mxu0 0.0
        %7913 = vmatpush1.msra.mxu0 0.0
        %7914 = vmatprep.subr.mxu0 0.0
        %7915 = vmatpush1.msra.mxu0 0.0
        %7916 = vmatprep.subr.mxu0 0.0
        %7917 = vmatpush1.msra.mxu0 0.0
        %7918 = vmatprep.subr.mxu0 0.0
        %7919 = vmatpush1.msra.mxu0 0.0
        %7920 = vmatprep.subr.mxu0 0.0
        %7921 = vmatpush1.msra.mxu0 0.0
        %7922 = vmatprep.subr.mxu0 0.0
        %7923 = vmatpush1.msra.mxu0 0.0
        %7924 = vmatprep.subr.mxu0 0.0
        %7925 = vmatpush1.msra.mxu0 0.0
        %7926 = vmatprep.subr.mxu0 %v7200
        %7927 = vmatpush1.msra.mxu0 %v7199
        %7928 = vmatprep.subr.mxu0 %v7197
        %7929 = vmatpush1.msra.mxu0 %v7196
        %7930 = vmatprep.subr.mxu0 %v7194
        %7931 = vmatpush1.msra.mxu0 %v7193
        %7932 = vmatprep.subr.mxu0 %v7191
        %7933 = vmatpush1.msra.mxu0 %v7190
        %7934 = vmatprep.subr.mxu0 0.0
        %7935 = vmatpush2.msra.mxu0 0.0
        %7936 = vmatprep.subr.mxu0 0.0
        %7937 = vmatpush2.msra.mxu0 0.0
        %7938 = vmatprep.subr.mxu0 0.0
        %7939 = vmatpush2.msra.mxu0 0.0
        %7940 = vmatprep.subr.mxu0 0.0
        %7941 = vmatpush2.msra.mxu0 0.0
        %7942 = vmatprep.subr.mxu0 0.0
        %7943 = vmatpush2.msra.mxu0 0.0
        %7944 = vmatprep.subr.mxu0 0.0
        %7945 = vmatpush2.msra.mxu0 0.0
        %7946 = vmatprep.subr.mxu0 0.0
        %7947 = vmatpush2.msra.mxu0 0.0
        %7948 = vmatprep.subr.mxu0 0.0
        %7949 = vmatpush2.msra.mxu0 0.0
        %7950 = vmatprep.subr.mxu0 0.0
        %7951 = vmatpush2.msra.mxu0 0.0
        %7952 = vmatprep.subr.mxu0 0.0
        %7953 = vmatpush2.msra.mxu0 0.0
        %7954 = vmatprep.subr.mxu0 0.0
        %7955 = vmatpush2.msra.mxu0 0.0
        %7956 = vmatprep.subr.mxu0 0.0
        %7957 = vmatpush2.msra.mxu0 0.0
        %7958 = vmatprep.subr.mxu0 0.0
        %7959 = vmatpush2.msra.mxu0 0.0
        %7960 = vmatprep.subr.mxu0 0.0
        %7961 = vmatpush2.msra.mxu0 0.0
        %7962 = vmatprep.subr.mxu0 0.0
        %7963 = vmatpush2.msra.mxu0 0.0
        %7964 = vmatprep.subr.mxu0 0.0
        %7965 = vmatpush2.msra.mxu0 0.0
        %7966 = vmatprep.mubr.f32.mxu0 0.0
        %7967 = vmatmul.mubr.f32.gmra.mxu0 %v7891
        %v7968 = vpop.f32.mrf.mxu0
        %v7969 = vadd.f32 0.0, %v7968
        %v7970 = vpop.f32.mrf.mxu0
        %v7971 = vadd.f32 0.0, %v7970
        %7972 = vmatprep.mubr.f32.mxu0 0.0
        %7973 = vmatmul.mubr.f32.gmra.mxu0 %v7894
        %v7974 = vpop.f32.mrf.mxu0
        %v7975 = vadd.f32 0.0, %v7974
        %v7976 = vpop.f32.mrf.mxu0
        %v7977 = vadd.f32 0.0, %v7976
        %7978 = vmatprep.mubr.f32.mxu0 0.0
        %7979 = vmatmul.mubr.f32.gmra.mxu0 %v7897
        %v7980 = vpop.f32.mrf.mxu0
        %v7981 = vadd.f32 0.0, %v7980
        %v7982 = vpop.f32.mrf.mxu0
        %v7983 = vadd.f32 0.0, %v7982
        %7984 = vmatprep.mubr.f32.mxu0 0.0
        %7985 = vmatmul.mubr.f32.gmra.mxu0 %v7900
        %v7986 = vpop.f32.mrf.mxu0
        %v7987 = vadd.f32 0.0, %v7986
        %v7988 = vpop.f32.mrf.mxu0
        %v7989 = vadd.f32 0.0, %v7988
        %7990 = vdwg.mxu0
        %v7991 = vadd.f32 %v7877, %v7969
        %v7992 = vadd.f32 %v7878, %v7971
        %v7993 = vadd.f32 %v7879, %v7975
        %v7994 = vadd.f32 %v7880, %v7977
        %v7995 = vadd.f32 %v7881, %v7981
        %v7996 = vadd.f32 %v7882, %v7983
        %v7997 = vadd.f32 %v7883, %v7987
        %v7998 = vadd.f32 %v7884, %v7989
        %v7999 = vld [vmem:[#allocation2 + $0x8] sm:$0xff]
        %v8000 = vld [vmem:[#allocation2 + $0x10] sm:$0xff]
        %v8001 = vld [vmem:[#allocation2 + $0x18] sm:$0xff]
        %v8002 = vld [vmem:[#allocation2 + $0x28] sm:$0xff]
        %v8003 = vld [vmem:[#allocation2 + $0x30] sm:$0xff]
        %v8004 = vld [vmem:[#allocation2 + $0x38] sm:$0xff]
        %v8005 = vld [vmem:[#allocation2 + $0x48] sm:$0xff]
        %v8006 = vld [vmem:[#allocation2 + $0x50] sm:$0xff]
        %v8007 = vld [vmem:[#allocation2 + $0x58] sm:$0xff]
        %v8008 = vld [vmem:[#allocation2 + $0x68] sm:$0xff]
        %v8009 = vld [vmem:[#allocation2 + $0x70] sm:$0xff]
        %v8010 = vld [vmem:[#allocation2 + $0x78] sm:$0xff]
        %v8011 = vmul.f32 %v7999, %v1566
        %v8012 = vmul.f32 %v8000, %v1569
        %v8013 = vmul.f32 %v8001, %v1568
        %v8014 = vmul.f32 %v8002, %v1566
        %v8015 = vmul.f32 %v8003, %v1569
        %v8016 = vmul.f32 %v8004, %v1568
        %v8017 = vmul.f32 %v8005, %v1566
        %v8018 = vmul.f32 %v8006, %v1569
        %v8019 = vmul.f32 %v8007, %v1568
        %v8020 = vmul.f32 %v8008, %v1566
        %v8021 = vmul.f32 %v8009, %v1569
        %v8022 = vmul.f32 %v8010, %v1568
        %s8023 = scalar_lea.vmem [#allocation6], 1024
        %v8024 = vld [vmem:[%s8023] sm:$0xff]
        %v8025 = vld [vmem:[%s8023 + $0x8] sm:$0xff]
        %v8026 = vld [vmem:[%s8023 + $0x10] sm:$0xff]
        %v8027 = vld [vmem:[%s8023 + $0x18] sm:$0xff]
        %8040 = vrot.lane.b32.xlu0 %v8011, 127
        %v8041 = vpop.permute.xlu0 %8040
        %8042 = vrot.lane.b32.xlu0 %v8012, 127
        %v8043 = vpop.permute.xlu0 %8042
        %8044 = vrot.lane.b32.xlu0 %v8013, 127
        %v8045 = vpop.permute.xlu0 %8044
        %8046 = vrot.lane.b32.xlu0 %v8014, 127
        %v8047 = vpop.permute.xlu0 %8046
        %8048 = vrot.lane.b32.xlu0 %v8015, 127
        %v8049 = vpop.permute.xlu0 %8048
        %8050 = vrot.lane.b32.xlu0 %v8016, 127
        %v8051 = vpop.permute.xlu0 %8050
        %8052 = vrot.lane.b32.xlu0 %v8017, 127
        %v8053 = vpop.permute.xlu0 %8052
        %8054 = vrot.lane.b32.xlu0 %v8018, 127
        %v8055 = vpop.permute.xlu0 %8054
        %8056 = vrot.lane.b32.xlu0 %v8019, 127
        %v8057 = vpop.permute.xlu0 %8056
        %8058 = vrot.lane.b32.xlu0 %v8020, 127
        %v8059 = vpop.permute.xlu0 %8058
        %8060 = vrot.lane.b32.xlu0 %v8021, 127
        %v8061 = vpop.permute.xlu0 %8060
        %8062 = vrot.lane.b32.xlu0 %v8022, 127
        %v8063 = vpop.permute.xlu0 %8062
        %v8064 = vsel %vm1255, %v8041, %v8043
        %v8065 = vsel %vm1255, %v8043, %v8045
        %v8066 = vsel %vm1255, %v8047, %v8049
        %v8067 = vsel %vm1255, %v8049, %v8051
        %v8068 = vsel %vm1255, %v8053, %v8055
        %v8069 = vsel %vm1255, %v8055, %v8057
        %v8070 = vsel %vm1255, %v8059, %v8061
        %v8071 = vsel %vm1255, %v8061, %v8063
        %v8081 = vsel %vm805, %v8024, 0
        %v8084 = vsel %vm805, %v8025, 0
        %v8087 = vsel %vm805, %v8026, 0
        %v8090 = vsel %vm805, %v8027, 0
        %8092 = vmatprep.subr.mxu0 0.0
        %8093 = vmatpush1.msra.mxu0 0.0
        %8094 = vmatprep.subr.mxu0 0.0
        %8095 = vmatpush1.msra.mxu0 0.0
        %8096 = vmatprep.subr.mxu0 0.0
        %8097 = vmatpush1.msra.mxu0 0.0
        %8098 = vmatprep.subr.mxu0 0.0
        %8099 = vmatpush1.msra.mxu0 0.0
        %8100 = vmatprep.subr.mxu0 0.0
        %8101 = vmatpush1.msra.mxu0 0.0
        %8102 = vmatprep.subr.mxu0 0.0
        %8103 = vmatpush1.msra.mxu0 0.0
        %8104 = vmatprep.subr.mxu0 0.0
        %8105 = vmatpush1.msra.mxu0 0.0
        %8106 = vmatprep.subr.mxu0 0.0
        %8107 = vmatpush1.msra.mxu0 0.0
        %8108 = vmatprep.subr.mxu0 0.0
        %8109 = vmatpush1.msra.mxu0 0.0
        %8110 = vmatprep.subr.mxu0 0.0
        %8111 = vmatpush1.msra.mxu0 0.0
        %8112 = vmatprep.subr.mxu0 0.0
        %8113 = vmatpush1.msra.mxu0 0.0
        %8114 = vmatprep.subr.mxu0 0.0
        %8115 = vmatpush1.msra.mxu0 0.0
        %8116 = vmatprep.subr.mxu0 %v8071
        %8117 = vmatpush1.msra.mxu0 %v8070
        %8118 = vmatprep.subr.mxu0 %v8069
        %8119 = vmatpush1.msra.mxu0 %v8068
        %8120 = vmatprep.subr.mxu0 %v8067
        %8121 = vmatpush1.msra.mxu0 %v8066
        %8122 = vmatprep.subr.mxu0 %v8065
        %8123 = vmatpush1.msra.mxu0 %v8064
        %8124 = vmatprep.subr.mxu0 0.0
        %8125 = vmatpush2.msra.mxu0 0.0
        %8126 = vmatprep.subr.mxu0 0.0
        %8127 = vmatpush2.msra.mxu0 0.0
        %8128 = vmatprep.subr.mxu0 0.0
        %8129 = vmatpush2.msra.mxu0 0.0
        %8130 = vmatprep.subr.mxu0 0.0
        %8131 = vmatpush2.msra.mxu0 0.0
        %8132 = vmatprep.subr.mxu0 0.0
        %8133 = vmatpush2.msra.mxu0 0.0
        %8134 = vmatprep.subr.mxu0 0.0
        %8135 = vmatpush2.msra.mxu0 0.0
        %8136 = vmatprep.subr.mxu0 0.0
        %8137 = vmatpush2.msra.mxu0 0.0
        %8138 = vmatprep.subr.mxu0 0.0
        %8139 = vmatpush2.msra.mxu0 0.0
        %8140 = vmatprep.subr.mxu0 0.0
        %8141 = vmatpush2.msra.mxu0 0.0
        %8142 = vmatprep.subr.mxu0 0.0
        %8143 = vmatpush2.msra.mxu0 0.0
        %8144 = vmatprep.subr.mxu0 0.0
        %8145 = vmatpush2.msra.mxu0 0.0
        %8146 = vmatprep.subr.mxu0 0.0
        %8147 = vmatpush2.msra.mxu0 0.0
        %8148 = vmatprep.subr.mxu0 0.0
        %8149 = vmatpush2.msra.mxu0 0.0
        %8150 = vmatprep.subr.mxu0 0.0
        %8151 = vmatpush2.msra.mxu0 0.0
        %8152 = vmatprep.subr.mxu0 0.0
        %8153 = vmatpush2.msra.mxu0 0.0
        %8154 = vmatprep.subr.mxu0 0.0
        %8155 = vmatpush2.msra.mxu0 0.0
        %8156 = vmatprep.mubr.f32.mxu0 0.0
        %8157 = vmatmul.mubr.f32.gmra.mxu0 %v8081
        %v8158 = vpop.f32.mrf.mxu0
        %v8159 = vadd.f32 0.0, %v8158
        %v8160 = vpop.f32.mrf.mxu0
        %v8161 = vadd.f32 0.0, %v8160
        %8162 = vmatprep.mubr.f32.mxu0 0.0
        %8163 = vmatmul.mubr.f32.gmra.mxu0 %v8084
        %v8164 = vpop.f32.mrf.mxu0
        %v8165 = vadd.f32 0.0, %v8164
        %v8166 = vpop.f32.mrf.mxu0
        %v8167 = vadd.f32 0.0, %v8166
        %8168 = vmatprep.mubr.f32.mxu0 0.0
        %8169 = vmatmul.mubr.f32.gmra.mxu0 %v8087
        %v8170 = vpop.f32.mrf.mxu0
        %v8171 = vadd.f32 0.0, %v8170
        %v8172 = vpop.f32.mrf.mxu0
        %v8173 = vadd.f32 0.0, %v8172
        %8174 = vmatprep.mubr.f32.mxu0 0.0
        %8175 = vmatmul.mubr.f32.gmra.mxu0 %v8090
        %v8176 = vpop.f32.mrf.mxu0
        %v8177 = vadd.f32 0.0, %v8176
        %v8178 = vpop.f32.mrf.mxu0
        %v8179 = vadd.f32 0.0, %v8178
        %8180 = vdwg.mxu0
        %v8181 = vadd.f32 %v7991, %v8159
        %v8182 = vadd.f32 %v7992, %v8161
        %v8183 = vadd.f32 %v7993, %v8165
        %v8184 = vadd.f32 %v7994, %v8167
        %v8185 = vadd.f32 %v7995, %v8171
        %v8186 = vadd.f32 %v7996, %v8173
        %v8187 = vadd.f32 %v7997, %v8177
        %v8188 = vadd.f32 %v7998, %v8179
        %v8189 = vmul.f32 %v7999, %v1752
        %v8190 = vmul.f32 %v8000, %v1755
        %v8191 = vmul.f32 %v8001, %v1754
        %v8192 = vmul.f32 %v8002, %v1752
        %v8193 = vmul.f32 %v8003, %v1755
        %v8194 = vmul.f32 %v8004, %v1754
        %v8195 = vmul.f32 %v8005, %v1752
        %v8196 = vmul.f32 %v8006, %v1755
        %v8197 = vmul.f32 %v8007, %v1754
        %v8198 = vmul.f32 %v8008, %v1752
        %v8199 = vmul.f32 %v8009, %v1755
        %v8200 = vmul.f32 %v8010, %v1754
        %s8201 = scalar_lea.vmem [#allocation6], 1056
        %v8202 = vld [vmem:[%s8201] sm:$0xff]
        %v8203 = vld [vmem:[%s8201 + $0x8] sm:$0xff]
        %v8204 = vld [vmem:[%s8201 + $0x10] sm:$0xff]
        %v8205 = vld [vmem:[%s8201 + $0x18] sm:$0xff]
        %8218 = vrot.lane.b32.xlu0 %v8189, 113
        %v8219 = vpop.permute.xlu0 %8218
        %8220 = vrot.lane.b32.xlu0 %v8190, 113
        %v8221 = vpop.permute.xlu0 %8220
        %8222 = vrot.lane.b32.xlu0 %v8191, 113
        %v8223 = vpop.permute.xlu0 %8222
        %8224 = vrot.lane.b32.xlu0 %v8192, 113
        %v8225 = vpop.permute.xlu0 %8224
        %8226 = vrot.lane.b32.xlu0 %v8193, 113
        %v8227 = vpop.permute.xlu0 %8226
        %8228 = vrot.lane.b32.xlu0 %v8194, 113
        %v8229 = vpop.permute.xlu0 %8228
        %8230 = vrot.lane.b32.xlu0 %v8195, 113
        %v8231 = vpop.permute.xlu0 %8230
        %8232 = vrot.lane.b32.xlu0 %v8196, 113
        %v8233 = vpop.permute.xlu0 %8232
        %8234 = vrot.lane.b32.xlu0 %v8197, 113
        %v8235 = vpop.permute.xlu0 %8234
        %8236 = vrot.lane.b32.xlu0 %v8198, 113
        %v8237 = vpop.permute.xlu0 %8236
        %8238 = vrot.lane.b32.xlu0 %v8199, 113
        %v8239 = vpop.permute.xlu0 %8238
        %8240 = vrot.lane.b32.xlu0 %v8200, 113
        %v8241 = vpop.permute.xlu0 %8240
        %v8242 = vsel %vm1067, %v8219, %v8221
        %v8243 = vsel %vm1067, %v8221, %v8223
        %v8244 = vsel %vm1067, %v8225, %v8227
        %v8245 = vsel %vm1067, %v8227, %v8229
        %v8246 = vsel %vm1067, %v8231, %v8233
        %v8247 = vsel %vm1067, %v8233, %v8235
        %v8248 = vsel %vm1067, %v8237, %v8239
        %v8249 = vsel %vm1067, %v8239, %v8241
        %v8259 = vsel %vm805, %v8202, 0
        %v8262 = vsel %vm805, %v8203, 0
        %v8265 = vsel %vm805, %v8204, 0
        %v8268 = vsel %vm805, %v8205, 0
        %8270 = vmatprep.subr.mxu0 0.0
        %8271 = vmatpush1.msra.mxu0 0.0
        %8272 = vmatprep.subr.mxu0 0.0
        %8273 = vmatpush1.msra.mxu0 0.0
        %8274 = vmatprep.subr.mxu0 0.0
        %8275 = vmatpush1.msra.mxu0 0.0
        %8276 = vmatprep.subr.mxu0 0.0
        %8277 = vmatpush1.msra.mxu0 0.0
        %8278 = vmatprep.subr.mxu0 0.0
        %8279 = vmatpush1.msra.mxu0 0.0
        %8280 = vmatprep.subr.mxu0 0.0
        %8281 = vmatpush1.msra.mxu0 0.0
        %8282 = vmatprep.subr.mxu0 0.0
        %8283 = vmatpush1.msra.mxu0 0.0
        %8284 = vmatprep.subr.mxu0 0.0
        %8285 = vmatpush1.msra.mxu0 0.0
        %8286 = vmatprep.subr.mxu0 0.0
        %8287 = vmatpush1.msra.mxu0 0.0
        %8288 = vmatprep.subr.mxu0 0.0
        %8289 = vmatpush1.msra.mxu0 0.0
        %8290 = vmatprep.subr.mxu0 0.0
        %8291 = vmatpush1.msra.mxu0 0.0
        %8292 = vmatprep.subr.mxu0 0.0
        %8293 = vmatpush1.msra.mxu0 0.0
        %8294 = vmatprep.subr.mxu0 %v8249
        %8295 = vmatpush1.msra.mxu0 %v8248
        %8296 = vmatprep.subr.mxu0 %v8247
        %8297 = vmatpush1.msra.mxu0 %v8246
        %8298 = vmatprep.subr.mxu0 %v8245
        %8299 = vmatpush1.msra.mxu0 %v8244
        %8300 = vmatprep.subr.mxu0 %v8243
        %8301 = vmatpush1.msra.mxu0 %v8242
        %8302 = vmatprep.subr.mxu0 0.0
        %8303 = vmatpush2.msra.mxu0 0.0
        %8304 = vmatprep.subr.mxu0 0.0
        %8305 = vmatpush2.msra.mxu0 0.0
        %8306 = vmatprep.subr.mxu0 0.0
        %8307 = vmatpush2.msra.mxu0 0.0
        %8308 = vmatprep.subr.mxu0 0.0
        %8309 = vmatpush2.msra.mxu0 0.0
        %8310 = vmatprep.subr.mxu0 0.0
        %8311 = vmatpush2.msra.mxu0 0.0
        %8312 = vmatprep.subr.mxu0 0.0
        %8313 = vmatpush2.msra.mxu0 0.0
        %8314 = vmatprep.subr.mxu0 0.0
        %8315 = vmatpush2.msra.mxu0 0.0
        %8316 = vmatprep.subr.mxu0 0.0
        %8317 = vmatpush2.msra.mxu0 0.0
        %8318 = vmatprep.subr.mxu0 0.0
        %8319 = vmatpush2.msra.mxu0 0.0
        %8320 = vmatprep.subr.mxu0 0.0
        %8321 = vmatpush2.msra.mxu0 0.0
        %8322 = vmatprep.subr.mxu0 0.0
        %8323 = vmatpush2.msra.mxu0 0.0
        %8324 = vmatprep.subr.mxu0 0.0
        %8325 = vmatpush2.msra.mxu0 0.0
        %8326 = vmatprep.subr.mxu0 0.0
        %8327 = vmatpush2.msra.mxu0 0.0
        %8328 = vmatprep.subr.mxu0 0.0
        %8329 = vmatpush2.msra.mxu0 0.0
        %8330 = vmatprep.subr.mxu0 0.0
        %8331 = vmatpush2.msra.mxu0 0.0
        %8332 = vmatprep.subr.mxu0 0.0
        %8333 = vmatpush2.msra.mxu0 0.0
        %8334 = vmatprep.mubr.f32.mxu0 0.0
        %8335 = vmatmul.mubr.f32.gmra.mxu0 %v8259
        %v8336 = vpop.f32.mrf.mxu0
        %v8337 = vadd.f32 0.0, %v8336
        %v8338 = vpop.f32.mrf.mxu0
        %v8339 = vadd.f32 0.0, %v8338
        %8340 = vmatprep.mubr.f32.mxu0 0.0
        %8341 = vmatmul.mubr.f32.gmra.mxu0 %v8262
        %v8342 = vpop.f32.mrf.mxu0
        %v8343 = vadd.f32 0.0, %v8342
        %v8344 = vpop.f32.mrf.mxu0
        %v8345 = vadd.f32 0.0, %v8344
        %8346 = vmatprep.mubr.f32.mxu0 0.0
        %8347 = vmatmul.mubr.f32.gmra.mxu0 %v8265
        %v8348 = vpop.f32.mrf.mxu0
        %v8349 = vadd.f32 0.0, %v8348
        %v8350 = vpop.f32.mrf.mxu0
        %v8351 = vadd.f32 0.0, %v8350
        %8352 = vmatprep.mubr.f32.mxu0 0.0
        %8353 = vmatmul.mubr.f32.gmra.mxu0 %v8268
        %v8354 = vpop.f32.mrf.mxu0
        %v8355 = vadd.f32 0.0, %v8354
        %v8356 = vpop.f32.mrf.mxu0
        %v8357 = vadd.f32 0.0, %v8356
        %8358 = vdwg.mxu0
        %v8359 = vadd.f32 %v8181, %v8337
        %v8360 = vadd.f32 %v8182, %v8339
        %v8361 = vadd.f32 %v8183, %v8343
        %v8362 = vadd.f32 %v8184, %v8345
        %v8363 = vadd.f32 %v8185, %v8349
        %v8364 = vadd.f32 %v8186, %v8351
        %v8365 = vadd.f32 %v8187, %v8355
        %v8366 = vadd.f32 %v8188, %v8357
        %s8367 = scalar_lea.vmem [#allocation6], 1088
        %v8368 = vld [vmem:[%s8367] sm:$0xff]
        %v8369 = vld [vmem:[%s8367 + $0x8] sm:$0xff]
        %v8370 = vld [vmem:[%s8367 + $0x10] sm:$0xff]
        %v8371 = vld [vmem:[%s8367 + $0x18] sm:$0xff]
        %8384 = vrot.lane.b32.xlu0 %v7999, 112
        %v8385 = vpop.permute.xlu0 %8384
        %8386 = vrot.lane.b32.xlu0 %v8000, 112
        %v8387 = vpop.permute.xlu0 %8386
        %8388 = vrot.lane.b32.xlu0 %v8001, 112
        %v8389 = vpop.permute.xlu0 %8388
        %8390 = vrot.lane.b32.xlu0 %v8002, 112
        %v8391 = vpop.permute.xlu0 %8390
        %8392 = vrot.lane.b32.xlu0 %v8003, 112
        %v8393 = vpop.permute.xlu0 %8392
        %8394 = vrot.lane.b32.xlu0 %v8004, 112
        %v8395 = vpop.permute.xlu0 %8394
        %8396 = vrot.lane.b32.xlu0 %v8005, 112
        %v8397 = vpop.permute.xlu0 %8396
        %8398 = vrot.lane.b32.xlu0 %v8006, 112
        %v8399 = vpop.permute.xlu0 %8398
        %8400 = vrot.lane.b32.xlu0 %v8007, 112
        %v8401 = vpop.permute.xlu0 %8400
        %8402 = vrot.lane.b32.xlu0 %v8008, 112
        %v8403 = vpop.permute.xlu0 %8402
        %8404 = vrot.lane.b32.xlu0 %v8009, 112
        %v8405 = vpop.permute.xlu0 %8404
        %8406 = vrot.lane.b32.xlu0 %v8010, 112
        %v8407 = vpop.permute.xlu0 %8406
        %v8408 = vsel %vm1978, %v8385, %v8387
        %v8409 = vsel %vm1978, %v8387, %v8389
        %v8410 = vsel %vm1978, %v8391, %v8393
        %v8411 = vsel %vm1978, %v8393, %v8395
        %v8412 = vsel %vm1978, %v8397, %v8399
        %v8413 = vsel %vm1978, %v8399, %v8401
        %v8414 = vsel %vm1978, %v8403, %v8405
        %v8415 = vsel %vm1978, %v8405, %v8407
        %v8425 = vsel %vm805, %v8368, 0
        %v8428 = vsel %vm805, %v8369, 0
        %v8431 = vsel %vm805, %v8370, 0
        %v8434 = vsel %vm805, %v8371, 0
        %8436 = vmatprep.subr.mxu0 0.0
        %8437 = vmatpush1.msra.mxu0 0.0
        %8438 = vmatprep.subr.mxu0 0.0
        %8439 = vmatpush1.msra.mxu0 0.0
        %8440 = vmatprep.subr.mxu0 0.0
        %8441 = vmatpush1.msra.mxu0 0.0
        %8442 = vmatprep.subr.mxu0 0.0
        %8443 = vmatpush1.msra.mxu0 0.0
        %8444 = vmatprep.subr.mxu0 0.0
        %8445 = vmatpush1.msra.mxu0 0.0
        %8446 = vmatprep.subr.mxu0 0.0
        %8447 = vmatpush1.msra.mxu0 0.0
        %8448 = vmatprep.subr.mxu0 0.0
        %8449 = vmatpush1.msra.mxu0 0.0
        %8450 = vmatprep.subr.mxu0 0.0
        %8451 = vmatpush1.msra.mxu0 0.0
        %8452 = vmatprep.subr.mxu0 0.0
        %8453 = vmatpush1.msra.mxu0 0.0
        %8454 = vmatprep.subr.mxu0 0.0
        %8455 = vmatpush1.msra.mxu0 0.0
        %8456 = vmatprep.subr.mxu0 0.0
        %8457 = vmatpush1.msra.mxu0 0.0
        %8458 = vmatprep.subr.mxu0 0.0
        %8459 = vmatpush1.msra.mxu0 0.0
        %8460 = vmatprep.subr.mxu0 %v8415
        %8461 = vmatpush1.msra.mxu0 %v8414
        %8462 = vmatprep.subr.mxu0 %v8413
        %8463 = vmatpush1.msra.mxu0 %v8412
        %8464 = vmatprep.subr.mxu0 %v8411
        %8465 = vmatpush1.msra.mxu0 %v8410
        %8466 = vmatprep.subr.mxu0 %v8409
        %8467 = vmatpush1.msra.mxu0 %v8408
        %8468 = vmatprep.subr.mxu0 0.0
        %8469 = vmatpush2.msra.mxu0 0.0
        %8470 = vmatprep.subr.mxu0 0.0
        %8471 = vmatpush2.msra.mxu0 0.0
        %8472 = vmatprep.subr.mxu0 0.0
        %8473 = vmatpush2.msra.mxu0 0.0
        %8474 = vmatprep.subr.mxu0 0.0
        %8475 = vmatpush2.msra.mxu0 0.0
        %8476 = vmatprep.subr.mxu0 0.0
        %8477 = vmatpush2.msra.mxu0 0.0
        %8478 = vmatprep.subr.mxu0 0.0
        %8479 = vmatpush2.msra.mxu0 0.0
        %8480 = vmatprep.subr.mxu0 0.0
        %8481 = vmatpush2.msra.mxu0 0.0
        %8482 = vmatprep.subr.mxu0 0.0
        %8483 = vmatpush2.msra.mxu0 0.0
        %8484 = vmatprep.subr.mxu0 0.0
        %8485 = vmatpush2.msra.mxu0 0.0
        %8486 = vmatprep.subr.mxu0 0.0
        %8487 = vmatpush2.msra.mxu0 0.0
        %8488 = vmatprep.subr.mxu0 0.0
        %8489 = vmatpush2.msra.mxu0 0.0
        %8490 = vmatprep.subr.mxu0 0.0
        %8491 = vmatpush2.msra.mxu0 0.0
        %8492 = vmatprep.subr.mxu0 0.0
        %8493 = vmatpush2.msra.mxu0 0.0
        %8494 = vmatprep.subr.mxu0 0.0
        %8495 = vmatpush2.msra.mxu0 0.0
        %8496 = vmatprep.subr.mxu0 0.0
        %8497 = vmatpush2.msra.mxu0 0.0
        %8498 = vmatprep.subr.mxu0 0.0
        %8499 = vmatpush2.msra.mxu0 0.0
        %8500 = vmatprep.mubr.f32.mxu0 0.0
        %8501 = vmatmul.mubr.f32.gmra.mxu0 %v8425
        %v8502 = vpop.f32.mrf.mxu0
        %v8503 = vadd.f32 0.0, %v8502
        %v8504 = vpop.f32.mrf.mxu0
        %v8505 = vadd.f32 0.0, %v8504
        %8506 = vmatprep.mubr.f32.mxu0 0.0
        %8507 = vmatmul.mubr.f32.gmra.mxu0 %v8428
        %v8508 = vpop.f32.mrf.mxu0
        %v8509 = vadd.f32 0.0, %v8508
        %v8510 = vpop.f32.mrf.mxu0
        %v8511 = vadd.f32 0.0, %v8510
        %8512 = vmatprep.mubr.f32.mxu0 0.0
        %8513 = vmatmul.mubr.f32.gmra.mxu0 %v8431
        %v8514 = vpop.f32.mrf.mxu0
        %v8515 = vadd.f32 0.0, %v8514
        %v8516 = vpop.f32.mrf.mxu0
        %v8517 = vadd.f32 0.0, %v8516
        %8518 = vmatprep.mubr.f32.mxu0 0.0
        %8519 = vmatmul.mubr.f32.gmra.mxu0 %v8434
        %v8520 = vpop.f32.mrf.mxu0
        %v8521 = vadd.f32 0.0, %v8520
        %v8522 = vpop.f32.mrf.mxu0
        %v8523 = vadd.f32 0.0, %v8522
        %8524 = vdwg.mxu0
        %v8525 = vadd.f32 %v8359, %v8503
        %v8526 = vadd.f32 %v8360, %v8505
        %v8527 = vadd.f32 %v8361, %v8509
        %v8528 = vadd.f32 %v8362, %v8511
        %v8529 = vadd.f32 %v8363, %v8515
        %v8530 = vadd.f32 %v8364, %v8517
        %v8531 = vadd.f32 %v8365, %v8521
        %v8532 = vadd.f32 %v8366, %v8523
        %v8533 = vmul.f32 %v7999, %v2105
        %v8534 = vmul.f32 %v8000, %v2108
        %v8535 = vmul.f32 %v8001, %v2107
        %v8536 = vmul.f32 %v8002, %v2105
        %v8537 = vmul.f32 %v8003, %v2108
        %v8538 = vmul.f32 %v8004, %v2107
        %v8539 = vmul.f32 %v8005, %v2105
        %v8540 = vmul.f32 %v8006, %v2108
        %v8541 = vmul.f32 %v8007, %v2107
        %v8542 = vmul.f32 %v8008, %v2105
        %v8543 = vmul.f32 %v8009, %v2108
        %v8544 = vmul.f32 %v8010, %v2107
        %s8545 = scalar_lea.vmem [#allocation6], 1120
        %v8546 = vld [vmem:[%s8545] sm:$0xff]
        %v8547 = vld [vmem:[%s8545 + $0x8] sm:$0xff]
        %v8548 = vld [vmem:[%s8545 + $0x10] sm:$0xff]
        %v8549 = vld [vmem:[%s8545 + $0x18] sm:$0xff]
        %8562 = vrot.lane.b32.xlu0 %v8533, 111
        %v8563 = vpop.permute.xlu0 %8562
        %8564 = vrot.lane.b32.xlu0 %v8534, 111
        %v8565 = vpop.permute.xlu0 %8564
        %8566 = vrot.lane.b32.xlu0 %v8535, 111
        %v8567 = vpop.permute.xlu0 %8566
        %8568 = vrot.lane.b32.xlu0 %v8536, 111
        %v8569 = vpop.permute.xlu0 %8568
        %8570 = vrot.lane.b32.xlu0 %v8537, 111
        %v8571 = vpop.permute.xlu0 %8570
        %8572 = vrot.lane.b32.xlu0 %v8538, 111
        %v8573 = vpop.permute.xlu0 %8572
        %8574 = vrot.lane.b32.xlu0 %v8539, 111
        %v8575 = vpop.permute.xlu0 %8574
        %8576 = vrot.lane.b32.xlu0 %v8540, 111
        %v8577 = vpop.permute.xlu0 %8576
        %8578 = vrot.lane.b32.xlu0 %v8541, 111
        %v8579 = vpop.permute.xlu0 %8578
        %8580 = vrot.lane.b32.xlu0 %v8542, 111
        %v8581 = vpop.permute.xlu0 %8580
        %8582 = vrot.lane.b32.xlu0 %v8543, 111
        %v8583 = vpop.permute.xlu0 %8582
        %8584 = vrot.lane.b32.xlu0 %v8544, 111
        %v8585 = vpop.permute.xlu0 %8584
        %v8586 = vsel %vm726, %v8563, %v8565
        %v8587 = vsel %vm726, %v8565, %v8567
        %v8588 = vsel %vm726, %v8569, %v8571
        %v8589 = vsel %vm726, %v8571, %v8573
        %v8590 = vsel %vm726, %v8575, %v8577
        %v8591 = vsel %vm726, %v8577, %v8579
        %v8592 = vsel %vm726, %v8581, %v8583
        %v8593 = vsel %vm726, %v8583, %v8585
        %v8603 = vsel %vm805, %v8546, 0
        %v8606 = vsel %vm805, %v8547, 0
        %v8609 = vsel %vm805, %v8548, 0
        %v8612 = vsel %vm805, %v8549, 0
        %8614 = vmatprep.subr.mxu0 0.0
        %8615 = vmatpush1.msra.mxu0 0.0
        %8616 = vmatprep.subr.mxu0 0.0
        %8617 = vmatpush1.msra.mxu0 0.0
        %8618 = vmatprep.subr.mxu0 0.0
        %8619 = vmatpush1.msra.mxu0 0.0
        %8620 = vmatprep.subr.mxu0 0.0
        %8621 = vmatpush1.msra.mxu0 0.0
        %8622 = vmatprep.subr.mxu0 0.0
        %8623 = vmatpush1.msra.mxu0 0.0
        %8624 = vmatprep.subr.mxu0 0.0
        %8625 = vmatpush1.msra.mxu0 0.0
        %8626 = vmatprep.subr.mxu0 0.0
        %8627 = vmatpush1.msra.mxu0 0.0
        %8628 = vmatprep.subr.mxu0 0.0
        %8629 = vmatpush1.msra.mxu0 0.0
        %8630 = vmatprep.subr.mxu0 0.0
        %8631 = vmatpush1.msra.mxu0 0.0
        %8632 = vmatprep.subr.mxu0 0.0
        %8633 = vmatpush1.msra.mxu0 0.0
        %8634 = vmatprep.subr.mxu0 0.0
        %8635 = vmatpush1.msra.mxu0 0.0
        %8636 = vmatprep.subr.mxu0 0.0
        %8637 = vmatpush1.msra.mxu0 0.0
        %8638 = vmatprep.subr.mxu0 %v8593
        %8639 = vmatpush1.msra.mxu0 %v8592
        %8640 = vmatprep.subr.mxu0 %v8591
        %8641 = vmatpush1.msra.mxu0 %v8590
        %8642 = vmatprep.subr.mxu0 %v8589
        %8643 = vmatpush1.msra.mxu0 %v8588
        %8644 = vmatprep.subr.mxu0 %v8587
        %8645 = vmatpush1.msra.mxu0 %v8586
        %8646 = vmatprep.subr.mxu0 0.0
        %8647 = vmatpush2.msra.mxu0 0.0
        %8648 = vmatprep.subr.mxu0 0.0
        %8649 = vmatpush2.msra.mxu0 0.0
        %8650 = vmatprep.subr.mxu0 0.0
        %8651 = vmatpush2.msra.mxu0 0.0
        %8652 = vmatprep.subr.mxu0 0.0
        %8653 = vmatpush2.msra.mxu0 0.0
        %8654 = vmatprep.subr.mxu0 0.0
        %8655 = vmatpush2.msra.mxu0 0.0
        %8656 = vmatprep.subr.mxu0 0.0
        %8657 = vmatpush2.msra.mxu0 0.0
        %8658 = vmatprep.subr.mxu0 0.0
        %8659 = vmatpush2.msra.mxu0 0.0
        %8660 = vmatprep.subr.mxu0 0.0
        %8661 = vmatpush2.msra.mxu0 0.0
        %8662 = vmatprep.subr.mxu0 0.0
        %8663 = vmatpush2.msra.mxu0 0.0
        %8664 = vmatprep.subr.mxu0 0.0
        %8665 = vmatpush2.msra.mxu0 0.0
        %8666 = vmatprep.subr.mxu0 0.0
        %8667 = vmatpush2.msra.mxu0 0.0
        %8668 = vmatprep.subr.mxu0 0.0
        %8669 = vmatpush2.msra.mxu0 0.0
        %8670 = vmatprep.subr.mxu0 0.0
        %8671 = vmatpush2.msra.mxu0 0.0
        %8672 = vmatprep.subr.mxu0 0.0
        %8673 = vmatpush2.msra.mxu0 0.0
        %8674 = vmatprep.subr.mxu0 0.0
        %8675 = vmatpush2.msra.mxu0 0.0
        %8676 = vmatprep.subr.mxu0 0.0
        %8677 = vmatpush2.msra.mxu0 0.0
        %8678 = vmatprep.mubr.f32.mxu0 0.0
        %8679 = vmatmul.mubr.f32.gmra.mxu0 %v8603
        %v8680 = vpop.f32.mrf.mxu0
        %v8681 = vadd.f32 0.0, %v8680
        %v8682 = vpop.f32.mrf.mxu0
        %v8683 = vadd.f32 0.0, %v8682
        %8684 = vmatprep.mubr.f32.mxu0 0.0
        %8685 = vmatmul.mubr.f32.gmra.mxu0 %v8606
        %v8686 = vpop.f32.mrf.mxu0
        %v8687 = vadd.f32 0.0, %v8686
        %v8688 = vpop.f32.mrf.mxu0
        %v8689 = vadd.f32 0.0, %v8688
        %8690 = vmatprep.mubr.f32.mxu0 0.0
        %8691 = vmatmul.mubr.f32.gmra.mxu0 %v8609
        %v8692 = vpop.f32.mrf.mxu0
        %v8693 = vadd.f32 0.0, %v8692
        %v8694 = vpop.f32.mrf.mxu0
        %v8695 = vadd.f32 0.0, %v8694
        %8696 = vmatprep.mubr.f32.mxu0 0.0
        %8697 = vmatmul.mubr.f32.gmra.mxu0 %v8612
        %v8698 = vpop.f32.mrf.mxu0
        %v8699 = vadd.f32 0.0, %v8698
        %v8700 = vpop.f32.mrf.mxu0
        %v8701 = vadd.f32 0.0, %v8700
        %8702 = vdwg.mxu0
        %v8703 = vadd.f32 %v8525, %v8681
        %v8704 = vadd.f32 %v8526, %v8683
        %v8705 = vadd.f32 %v8527, %v8687
        %v8706 = vadd.f32 %v8528, %v8689
        %v8707 = vadd.f32 %v8529, %v8693
        %v8708 = vadd.f32 %v8530, %v8695
        %v8709 = vadd.f32 %v8531, %v8699
        %v8710 = vadd.f32 %v8532, %v8701
        %8712 = vset.pattern.permute.xlu0 0
        %8713 = vperm.xlu0 %8712, %v7172
        %v8714 = vpop.permute.xlu0 %8713
        %8717 = vset.pattern.permute.xlu0 0
        %8718 = vperm.xlu0 %8717, %v7173
        %v8719 = vpop.permute.xlu0 %8718
        %8722 = vset.pattern.permute.xlu0 0
        %8723 = vperm.xlu0 %8722, %v7174
        %v8724 = vpop.permute.xlu0 %8723
        %8727 = vset.pattern.permute.xlu0 0
        %8728 = vperm.xlu0 %8727, %v7175
        %v8729 = vpop.permute.xlu0 %8728
        %v8731 = vmul.f32 %v8703, %v8714
        %v8732 = vmul.f32 %v8704, %v8714
        %v8733 = vmul.f32 %v8705, %v8719
        %v8734 = vmul.f32 %v8706, %v8719
        %v8735 = vmul.f32 %v8707, %v8724
        %v8736 = vmul.f32 %v8708, %v8724
        %v8737 = vmul.f32 %v8709, %v8729
        %v8738 = vmul.f32 %v8710, %v8729
        %8740 = vset.pattern.permute.xlu0 0
        %8741 = vperm.xlu0 %8740, %v7177
        %v8742 = vpop.permute.xlu0 %8741
        %8745 = vset.pattern.permute.xlu0 0
        %8746 = vperm.xlu0 %8745, %v7178
        %v8747 = vpop.permute.xlu0 %8746
        %8750 = vset.pattern.permute.xlu0 0
        %8751 = vperm.xlu0 %8750, %v7179
        %v8752 = vpop.permute.xlu0 %8751
        %8755 = vset.pattern.permute.xlu0 0
        %8756 = vperm.xlu0 %8755, %v7180
        %v8757 = vpop.permute.xlu0 %8756
        %v8759 = vadd.f32 %v8731, %v8742
        %v8760 = vadd.f32 %v8732, %v8742
        %v8761 = vadd.f32 %v8733, %v8747
        %v8762 = vadd.f32 %v8734, %v8747
        %v8763 = vadd.f32 %v8735, %v8752
        %v8764 = vadd.f32 %v8736, %v8752
        %v8765 = vadd.f32 %v8737, %v8757
        %v8766 = vadd.f32 %v8738, %v8757
        %v8767 = vadd.f32 %v8759, %v5559
        %v8768 = vadd.f32 %v8760, %v5560
        %v8769 = vadd.f32 %v8761, %v5561
        %v8770 = vadd.f32 %v8762, %v5562
        %v8771 = vadd.f32 %v8763, %v5563
        %v8772 = vadd.f32 %v8764, %v5564
        %v8773 = vadd.f32 %v8765, %v5565
        %v8774 = vadd.f32 %v8766, %v5566
        %v8775 = vmax.f32 %v8767, 0.0
        %v8776 = vmax.f32 %v8768, 0.0
        %v8777 = vmax.f32 %v8769, 0.0
        %v8778 = vmax.f32 %v8770, 0.0
        %v8779 = vmax.f32 %v8771, 0.0
        %v8780 = vmax.f32 %v8772, 0.0
        %v8781 = vmax.f32 %v8773, 0.0
        %v8782 = vmax.f32 %v8774, 0.0
        %v8783 = vld [vmem:[%s7] sm:$0xf]
        %v8785 = vsel %vm805, %v8783, 0
        %8787 = vmatprep.subr.mxu0 0.0
        %8788 = vmatpush1.msra.mxu0 0.0
        %8789 = vmatprep.subr.mxu0 0.0
        %8790 = vmatpush1.msra.mxu0 0.0
        %8791 = vmatprep.subr.mxu0 0.0
        %8792 = vmatpush1.msra.mxu0 0.0
        %8793 = vmatprep.subr.mxu0 0.0
        %8794 = vmatpush1.msra.mxu0 0.0
        %8795 = vmatprep.subr.mxu0 0.0
        %8796 = vmatpush1.msra.mxu0 0.0
        %8797 = vmatprep.subr.mxu0 0.0
        %8798 = vmatpush1.msra.mxu0 0.0
        %8799 = vmatprep.subr.mxu0 0.0
        %8800 = vmatpush1.msra.mxu0 0.0
        %8801 = vmatprep.subr.mxu0 0.0
        %8802 = vmatpush1.msra.mxu0 0.0
        %8803 = vmatprep.subr.mxu0 0.0
        %8804 = vmatpush1.msra.mxu0 0.0
        %8805 = vmatprep.subr.mxu0 0.0
        %8806 = vmatpush1.msra.mxu0 0.0
        %8807 = vmatprep.subr.mxu0 0.0
        %8808 = vmatpush1.msra.mxu0 0.0
        %8809 = vmatprep.subr.mxu0 0.0
        %8810 = vmatpush1.msra.mxu0 0.0
        %8811 = vmatprep.subr.mxu0 %v8782
        %8812 = vmatpush1.msra.mxu0 %v8781
        %8813 = vmatprep.subr.mxu0 %v8780
        %8814 = vmatpush1.msra.mxu0 %v8779
        %8815 = vmatprep.subr.mxu0 %v8778
        %8816 = vmatpush1.msra.mxu0 %v8777
        %8817 = vmatprep.subr.mxu0 %v8776
        %8818 = vmatpush1.msra.mxu0 %v8775
        %8819 = vmatprep.subr.mxu0 0.0
        %8820 = vmatpush2.msra.mxu0 0.0
        %8821 = vmatprep.subr.mxu0 0.0
        %8822 = vmatpush2.msra.mxu0 0.0
        %8823 = vmatprep.subr.mxu0 0.0
        %8824 = vmatpush2.msra.mxu0 0.0
        %8825 = vmatprep.subr.mxu0 0.0
        %8826 = vmatpush2.msra.mxu0 0.0
        %8827 = vmatprep.subr.mxu0 0.0
        %8828 = vmatpush2.msra.mxu0 0.0
        %8829 = vmatprep.subr.mxu0 0.0
        %8830 = vmatpush2.msra.mxu0 0.0
        %8831 = vmatprep.subr.mxu0 0.0
        %8832 = vmatpush2.msra.mxu0 0.0
        %8833 = vmatprep.subr.mxu0 0.0
        %8834 = vmatpush2.msra.mxu0 0.0
        %8835 = vmatprep.subr.mxu0 0.0
        %8836 = vmatpush2.msra.mxu0 0.0
        %8837 = vmatprep.subr.mxu0 0.0
        %8838 = vmatpush2.msra.mxu0 0.0
        %8839 = vmatprep.subr.mxu0 0.0
        %8840 = vmatpush2.msra.mxu0 0.0
        %8841 = vmatprep.subr.mxu0 0.0
        %8842 = vmatpush2.msra.mxu0 0.0
        %8843 = vmatprep.subr.mxu0 0.0
        %8844 = vmatpush2.msra.mxu0 0.0
        %8845 = vmatprep.subr.mxu0 0.0
        %8846 = vmatpush2.msra.mxu0 0.0
        %8847 = vmatprep.subr.mxu0 0.0
        %8848 = vmatpush2.msra.mxu0 0.0
        %8849 = vmatprep.subr.mxu0 0.0
        %8850 = vmatpush2.msra.mxu0 0.0
        %8851 = vmatprep.mubr.f32.mxu0 0.0
        %8852 = vmatmul.mubr.f32.gmra.mxu0 %v8785
        %v8853 = vpop.f32.mrf.mxu0
        %v8854 = vadd.f32 0.0, %v8853
        %v8855 = vpop.f32.mrf.mxu0
        %v8856 = vadd.f32 0.0, %v8855
        %8857 = vdwg.mxu0
        %v8858 = vld [vmem:[%s8] sm:$0xf]
        %8860 = vset.pattern.permute.xlu0 0
        %8861 = vperm.xlu0 %8860, %v8858
        %v8862 = vpop.permute.xlu0 %8861
        %v8864 = vmul.f32 %v8854, %v8862
        %v8865 = vmul.f32 %v8856, %v8862
        %v8866 = vld [vmem:[%s9] sm:$0xf]
        %8868 = vset.pattern.permute.xlu0 0
        %8869 = vperm.xlu0 %8868, %v8866
        %v8870 = vpop.permute.xlu0 %8869
        %v8872 = vadd.f32 %v8864, %v8870
        %v8873 = vadd.f32 %v8865, %v8870
        %v8874 = vmax.f32 %v8872, 0.0
        %v8875 = vmax.f32 %v8873, 0.0
        %v8876 = vld [vmem:[%s13] sm:$0xff]
        %v8877 = vld [vmem:[%s13 + $0x8] sm:$0xff]
        %v8878 = vld [vmem:[%s13 + $0x10] sm:$0xff]
        %v8879 = vld [vmem:[%s13 + $0x18] sm:$0xff]
        %v8880 = vld [vmem:[%s13 + $0x20] sm:$0xff]
        %v8881 = vld [vmem:[%s13 + $0x28] sm:$0xff]
        %v8882 = vld [vmem:[%s13 + $0x30] sm:$0xff]
        %v8883 = vld [vmem:[%s13 + $0x38] sm:$0xff]
        %v8884 = vld [vmem:[%s13 + $0x40] sm:$0xff]
        %v8885 = vld [vmem:[%s13 + $0x48] sm:$0xff]
        %v8886 = vld [vmem:[%s13 + $0x50] sm:$0xff]
        %v8887 = vld [vmem:[%s13 + $0x58] sm:$0xff]
        %v8888 = vld [vmem:[%s13 + $0x60] sm:$0xff]
        %v8889 = vld [vmem:[%s13 + $0x68] sm:$0xff]
        %v8890 = vld [vmem:[%s13 + $0x70] sm:$0xff]
        %v8891 = vld [vmem:[%s13 + $0x78] sm:$0xff]
        %v8892 = vld [vmem:[%s13 + $0x80] sm:$0xff]
        %v8893 = vld [vmem:[%s13 + $0x88] sm:$0xff]
        %v8894 = vld [vmem:[%s13 + $0x90] sm:$0xff]
        %v8895 = vld [vmem:[%s13 + $0x98] sm:$0xff]
        %v8896 = vld [vmem:[%s13 + $0xa0] sm:$0xff]
        %v8897 = vld [vmem:[%s13 + $0xa8] sm:$0xff]
        %v8898 = vld [vmem:[%s13 + $0xb0] sm:$0xff]
        %v8899 = vld [vmem:[%s13 + $0xb8] sm:$0xff]
        %v8900 = vld [vmem:[%s13 + $0xc0] sm:$0xff]
        %v8901 = vld [vmem:[%s13 + $0xc8] sm:$0xff]
        %v8902 = vld [vmem:[%s13 + $0xd0] sm:$0xff]
        %v8903 = vld [vmem:[%s13 + $0xd8] sm:$0xff]
        %v8904 = vld [vmem:[%s13 + $0xe0] sm:$0xff]
        %v8905 = vld [vmem:[%s13 + $0xe8] sm:$0xff]
        %v8906 = vld [vmem:[%s13 + $0xf0] sm:$0xff]
        %v8907 = vld [vmem:[%s13 + $0xf8] sm:$0xff]
        %v8908 = vld [vmem:[%s13 + $0x100] sm:$0xff]
        %v8909 = vld [vmem:[%s13 + $0x108] sm:$0xff]
        %v8910 = vld [vmem:[%s13 + $0x110] sm:$0xff]
        %v8911 = vld [vmem:[%s13 + $0x118] sm:$0xff]
        %v8912 = vld [vmem:[%s13 + $0x120] sm:$0xff]
        %v8913 = vld [vmem:[%s13 + $0x128] sm:$0xff]
        %v8914 = vld [vmem:[%s13 + $0x130] sm:$0xff]
        %v8915 = vld [vmem:[%s13 + $0x138] sm:$0xff]
        %v8916 = vld [vmem:[%s13 + $0x140] sm:$0xff]
        %v8917 = vld [vmem:[%s13 + $0x148] sm:$0xff]
        %v8918 = vld [vmem:[%s13 + $0x150] sm:$0xff]
        %v8919 = vld [vmem:[%s13 + $0x158] sm:$0xff]
        %v8920 = vld [vmem:[%s13 + $0x160] sm:$0xff]
        %v8921 = vld [vmem:[%s13 + $0x168] sm:$0xff]
        %v8922 = vld [vmem:[%s13 + $0x170] sm:$0xff]
        %v8923 = vld [vmem:[%s13 + $0x178] sm:$0xff]
        %v8924 = vld [vmem:[%s13 + $0x180] sm:$0xff]
        %v8925 = vld [vmem:[%s13 + $0x188] sm:$0xff]
        %v8926 = vld [vmem:[%s13 + $0x190] sm:$0xff]
        %v8927 = vld [vmem:[%s13 + $0x198] sm:$0xff]
        %v8928 = vld [vmem:[%s13 + $0x1a0] sm:$0xff]
        %v8929 = vld [vmem:[%s13 + $0x1a8] sm:$0xff]
        %v8930 = vld [vmem:[%s13 + $0x1b0] sm:$0xff]
        %v8931 = vld [vmem:[%s13 + $0x1b8] sm:$0xff]
        %v8932 = vld [vmem:[%s13 + $0x1c0] sm:$0xff]
        %v8933 = vld [vmem:[%s13 + $0x1c8] sm:$0xff]
        %v8934 = vld [vmem:[%s13 + $0x1d0] sm:$0xff]
        %v8935 = vld [vmem:[%s13 + $0x1d8] sm:$0xff]
        %v8936 = vld [vmem:[%s13 + $0x1e0] sm:$0xff]
        %v8937 = vld [vmem:[%s13 + $0x1e8] sm:$0xff]
        %v8938 = vld [vmem:[%s13 + $0x1f0] sm:$0xff]
        %v8939 = vld [vmem:[%s13 + $0x1f8] sm:$0xff]
        %8940 = vmatprep.subr.mxu0 %v8907
        %8941 = vmatpush1.msra.mxu0 %v8906
        %8942 = vmatprep.subr.mxu0 %v8905
        %8943 = vmatpush1.msra.mxu0 %v8904
        %8944 = vmatprep.subr.mxu0 %v8903
        %8945 = vmatpush1.msra.mxu0 %v8902
        %8946 = vmatprep.subr.mxu0 %v8901
        %8947 = vmatpush1.msra.mxu0 %v8900
        %8948 = vmatprep.subr.mxu0 %v8899
        %8949 = vmatpush1.msra.mxu0 %v8898
        %8950 = vmatprep.subr.mxu0 %v8897
        %8951 = vmatpush1.msra.mxu0 %v8896
        %8952 = vmatprep.subr.mxu0 %v8895
        %8953 = vmatpush1.msra.mxu0 %v8894
        %8954 = vmatprep.subr.mxu0 %v8893
        %8955 = vmatpush1.msra.mxu0 %v8892
        %8956 = vmatprep.subr.mxu0 %v8891
        %8957 = vmatpush1.msra.mxu0 %v8890
        %8958 = vmatprep.subr.mxu0 %v8889
        %8959 = vmatpush1.msra.mxu0 %v8888
        %8960 = vmatprep.subr.mxu0 %v8887
        %8961 = vmatpush1.msra.mxu0 %v8886
        %8962 = vmatprep.subr.mxu0 %v8885
        %8963 = vmatpush1.msra.mxu0 %v8884
        %8964 = vmatprep.subr.mxu0 %v8883
        %8965 = vmatpush1.msra.mxu0 %v8882
        %8966 = vmatprep.subr.mxu0 %v8881
        %8967 = vmatpush1.msra.mxu0 %v8880
        %8968 = vmatprep.subr.mxu0 %v8879
        %8969 = vmatpush1.msra.mxu0 %v8878
        %8970 = vmatprep.subr.mxu0 %v8877
        %8971 = vmatpush1.msra.mxu0 %v8876
        %8972 = vmatprep.subr.mxu0 %v8939
        %8973 = vmatpush2.msra.mxu0 %v8938
        %8974 = vmatprep.subr.mxu0 %v8937
        %8975 = vmatpush2.msra.mxu0 %v8936
        %8976 = vmatprep.subr.mxu0 %v8935
        %8977 = vmatpush2.msra.mxu0 %v8934
        %8978 = vmatprep.subr.mxu0 %v8933
        %8979 = vmatpush2.msra.mxu0 %v8932
        %8980 = vmatprep.subr.mxu0 %v8931
        %8981 = vmatpush2.msra.mxu0 %v8930
        %8982 = vmatprep.subr.mxu0 %v8929
        %8983 = vmatpush2.msra.mxu0 %v8928
        %8984 = vmatprep.subr.mxu0 %v8927
        %8985 = vmatpush2.msra.mxu0 %v8926
        %8986 = vmatprep.subr.mxu0 %v8925
        %8987 = vmatpush2.msra.mxu0 %v8924
        %8988 = vmatprep.subr.mxu0 %v8923
        %8989 = vmatpush2.msra.mxu0 %v8922
        %8990 = vmatprep.subr.mxu0 %v8921
        %8991 = vmatpush2.msra.mxu0 %v8920
        %8992 = vmatprep.subr.mxu0 %v8919
        %8993 = vmatpush2.msra.mxu0 %v8918
        %8994 = vmatprep.subr.mxu0 %v8917
        %8995 = vmatpush2.msra.mxu0 %v8916
        %8996 = vmatprep.subr.mxu0 %v8915
        %8997 = vmatpush2.msra.mxu0 %v8914
        %8998 = vmatprep.subr.mxu0 %v8913
        %8999 = vmatpush2.msra.mxu0 %v8912
        %9000 = vmatprep.subr.mxu0 %v8911
        %9001 = vmatpush2.msra.mxu0 %v8910
        %9002 = vmatprep.subr.mxu0 %v8909
        %9003 = vmatpush2.msra.mxu0 %v8908
        %9004 = vmatprep.mubr.f32.mxu0 %v8875
        %9005 = vmatmul.mubr.f32.gmra.mxu0 %v8874
        %v9006 = vpop.f32.mrf.mxu0
        %v9007 = vadd.f32 0.0, %v9006
        %v9008 = vpop.f32.mrf.mxu0
        %v9009 = vadd.f32 0.0, %v9008
        %9010 = vdwg.mxu0
        %v9011 = vld [vmem:[%s14] sm:$0x1]
        %v9012 = vadd.f32 %v9011, %v9007
        %v9015 = vunpack.c.l.s4 1966171168
        %v9016 = vunpack.c.0.s8 %v9015
        %v9017 = vlaneseq
        %v9018 = vshrl.u32 %v9017, 7
        %v9019 = vsub.s32 %v9016, %v9018
        %v9020 = vrot.slane %v9007, %v9019
        %v9021 = vcombine.high %v9020, %v9020
        %v9023 = vunpack.c.l.s4 1966171168
        %v9024 = vunpack.c.0.s8 %v9023
        %v9025 = vlaneseq
        %v9026 = vshrl.u32 %v9025, 7
        %v9027 = vsub.s32 %v9024, %v9026
        %v9028 = vrot.slane %v9021, %v9027
        %9029 = vrot.lane.b32.xlu0 %v9028, 64
        %v9030 = vpop.permute.xlu0 %9029
        %v9032 = vadd.f32 %v9012, %v9030
        %v9035 = vunpack.c.l.s4 1966171168
        %v9036 = vunpack.c.0.s8 %v9035
        %v9037 = vlaneseq
        %v9038 = vshrl.u32 %v9037, 7
        %v9039 = vsub.s32 %v9036, %v9038
        %v9040 = vrot.slane %v9009, %v9039
        %v9042 = vunpack.c.l.s4 1966171168
        %v9043 = vunpack.c.0.s8 %v9042
        %v9044 = vlaneseq
        %v9045 = vshrl.u32 %v9044, 7
        %v9046 = vsub.s32 %v9043, %v9045
        %v9047 = vrot.slane %v9040, %v9046
        %v9048 = vcombine.high %v9047, %v9047
        %v9050 = vadd.f32 %v9032, %v9048
        %v9051 = vcombine.high %v9040, %v9040
        %v9053 = vunpack.c.l.s4 1966171168
        %v9054 = vunpack.c.0.s8 %v9053
        %v9055 = vlaneseq
        %v9056 = vshrl.u32 %v9055, 7
        %v9057 = vsub.s32 %v9054, %v9056
        %v9058 = vrot.slane %v9051, %v9057
        %v9059 = vcombine.high %v9058, %v9058
        %9060 = vrot.lane.b32.xlu0 %v9059, 64
        %v9061 = vpop.permute.xlu0 %9060
        %v9063 = vadd.f32 %v9050, %v9061
        %v9064 = vmax.f32 %v9063, 0.0
        %v9065 = vld [vmem:[%s15] sm:$0x1]
        %v9066 = vmul.f32 %v9064, %v9065
        %vm9067 = vcmask 516096
        %v9068 = vsel %vm9067, %v9066, 0.0
        %9069 = vadd.xlane.f32.xlu0 %v9068
        %v9070 = vpop.xlane.xlu0 %9069
        %v9071 = vld [vmem:[#allocation3] sm:$0x1]
        %v9072 = vadd.f32 %v9070, %v9071
        %v9073 = vtanh.pop %v9072
        %9075 = vset.pattern.permute.xlu0 0
        %9076 = vperm.xlu0 %9075, %v9073
        %v9077 = vpop.permute.xlu0 %9076
        %9079 = vst [vmem:[%s611] sm:$0x1] %v9077
        %v9080 = vld [vmem:[%s10] sm:$0xf]
        %v9082 = vsel %vm805, %v9080, 0
        %9084 = vmatprep.subr.mxu0 0.0
        %9085 = vmatpush1.msra.mxu0 0.0
        %9086 = vmatprep.subr.mxu0 0.0
        %9087 = vmatpush1.msra.mxu0 0.0
        %9088 = vmatprep.subr.mxu0 0.0
        %9089 = vmatpush1.msra.mxu0 0.0
        %9090 = vmatprep.subr.mxu0 0.0
        %9091 = vmatpush1.msra.mxu0 0.0
        %9092 = vmatprep.subr.mxu0 0.0
        %9093 = vmatpush1.msra.mxu0 0.0
        %9094 = vmatprep.subr.mxu0 0.0
        %9095 = vmatpush1.msra.mxu0 0.0
        %9096 = vmatprep.subr.mxu0 0.0
        %9097 = vmatpush1.msra.mxu0 0.0
        %9098 = vmatprep.subr.mxu0 0.0
        %9099 = vmatpush1.msra.mxu0 0.0
        %9100 = vmatprep.subr.mxu0 0.0
        %9101 = vmatpush1.msra.mxu0 0.0
        %9102 = vmatprep.subr.mxu0 0.0
        %9103 = vmatpush1.msra.mxu0 0.0
        %9104 = vmatprep.subr.mxu0 0.0
        %9105 = vmatpush1.msra.mxu0 0.0
        %9106 = vmatprep.subr.mxu0 0.0
        %9107 = vmatpush1.msra.mxu0 0.0
        %9108 = vmatprep.subr.mxu0 %v8782
        %9109 = vmatpush1.msra.mxu0 %v8781
        %9110 = vmatprep.subr.mxu0 %v8780
        %9111 = vmatpush1.msra.mxu0 %v8779
        %9112 = vmatprep.subr.mxu0 %v8778
        %9113 = vmatpush1.msra.mxu0 %v8777
        %9114 = vmatprep.subr.mxu0 %v8776
        %9115 = vmatpush1.msra.mxu0 %v8775
        %9116 = vmatprep.subr.mxu0 0.0
        %9117 = vmatpush2.msra.mxu0 0.0
        %9118 = vmatprep.subr.mxu0 0.0
        %9119 = vmatpush2.msra.mxu0 0.0
        %9120 = vmatprep.subr.mxu0 0.0
        %9121 = vmatpush2.msra.mxu0 0.0
        %9122 = vmatprep.subr.mxu0 0.0
        %9123 = vmatpush2.msra.mxu0 0.0
        %9124 = vmatprep.subr.mxu0 0.0
        %9125 = vmatpush2.msra.mxu0 0.0
        %9126 = vmatprep.subr.mxu0 0.0
        %9127 = vmatpush2.msra.mxu0 0.0
        %9128 = vmatprep.subr.mxu0 0.0
        %9129 = vmatpush2.msra.mxu0 0.0
        %9130 = vmatprep.subr.mxu0 0.0
        %9131 = vmatpush2.msra.mxu0 0.0
        %9132 = vmatprep.subr.mxu0 0.0
        %9133 = vmatpush2.msra.mxu0 0.0
        %9134 = vmatprep.subr.mxu0 0.0
        %9135 = vmatpush2.msra.mxu0 0.0
        %9136 = vmatprep.subr.mxu0 0.0
        %9137 = vmatpush2.msra.mxu0 0.0
        %9138 = vmatprep.subr.mxu0 0.0
        %9139 = vmatpush2.msra.mxu0 0.0
        %9140 = vmatprep.subr.mxu0 0.0
        %9141 = vmatpush2.msra.mxu0 0.0
        %9142 = vmatprep.subr.mxu0 0.0
        %9143 = vmatpush2.msra.mxu0 0.0
        %9144 = vmatprep.subr.mxu0 0.0
        %9145 = vmatpush2.msra.mxu0 0.0
        %9146 = vmatprep.subr.mxu0 0.0
        %9147 = vmatpush2.msra.mxu0 0.0
        %9148 = vmatprep.mubr.f32.mxu0 0.0
        %9149 = vmatmul.mubr.f32.gmra.mxu0 %v9082
        %v9150 = vpop.f32.mrf.mxu0
        %v9151 = vadd.f32 0.0, %v9150
        %v9152 = vpop.f32.mrf.mxu0
        %v9153 = vadd.f32 0.0, %v9152
        %9154 = vdwg.mxu0
        %v9155 = vld [vmem:[%s11] sm:$0xf]
        %9157 = vset.pattern.permute.xlu0 0
        %9158 = vperm.xlu0 %9157, %v9155
        %v9159 = vpop.permute.xlu0 %9158
        %v9161 = vmul.f32 %v9151, %v9159
        %v9162 = vmul.f32 %v9153, %v9159
        %v9163 = vld [vmem:[%s12] sm:$0xf]
        %9165 = vset.pattern.permute.xlu0 0
        %9166 = vperm.xlu0 %9165, %v9163
        %v9167 = vpop.permute.xlu0 %9166
        %v9169 = vadd.f32 %v9161, %v9167
        %v9170 = vadd.f32 %v9162, %v9167
        %v9171 = vmax.f32 %v9169, 0.0
        %v9172 = vmax.f32 %v9170, 0.0
        %v9175 = vcombine.low %v9171, %v9172
        %9177 = vst [vmem:[%s616] sm:$0xff] %v9175
        %p9178 = scmp.lt.s32.totalorder %s34, 1
        %s9179 = scalar_select %p9178, %s34, 1
        %s9180 = scalar_lea.vmem %s17, %s9179
        %p9181 = scmp.lt.s32.totalorder %s34, 1
        %s9182 = scalar_select %p9181, %s34, 1
        %s9183 = smul.addr %s9182, 2
        %s9184 = smul.addr %s9183, 4
        %s9185 = scalar_lea.vmem %s18, %s9184
        // Predicated region
        $region97: #{forward_pallas.1} parent=87 // pred_check
          %p9186 = pneg %p414
        $region98: #{forward_pallas.1} parent=87 // pred_check_branch
          %9188 = sbr.rel (%p9186) target = $region100
        $region99: #{forward_pallas.1} parent=87 // pred_region
          _
        $region100: #{forward_pallas.1} parent=87 // pred_fallthru
          _
        // Predicated region
        $region101: #{forward_pallas.1} parent=87 // pred_check
          %p9189 = pneg %p440
        $region102: #{forward_pallas.1} parent=87 // pred_check_branch
          %9191 = sbr.rel (%p9189) target = $region104
        $region103: #{forward_pallas.1} parent=87 // pred_region
          _
        $region104: #{forward_pallas.1} parent=87 // pred_fallthru
          _
      $region88: #{forward_pallas.1} parent=5 // pred_fallthru
        _
      %p9192 = scmp.le.s32.totalorder 2, %s29
      // Predicated region
      $region105: #{forward_pallas.1} parent=5 // pred_check
        %p9193 = pneg %p9192
      $region106: #{forward_pallas.1} parent=5 // pred_check_branch
        %9195 = sbr.rel (%p9193) target = $region108
      $region107: #{forward_pallas.1} parent=5 // pred_region
        %s9196 = ssub.s32 %s29, 2
        // Predicated region
        $region109: #{forward_pallas.1} parent=107 // pred_check
          %p9197 = pneg %p420
        $region110: #{forward_pallas.1} parent=107 // pred_check_branch
          %9199 = sbr.rel (%p9197) target = $region112
        $region111: #{forward_pallas.1} parent=107 // pred_region
          %p9200 = scmp.lt.s32.totalorder %s35, 1
          %s9201 = scalar_select %p9200, %s35, 1
          %s9202 = scalar_lea.vmem %s17, %s9201
        $region112: #{forward_pallas.1} parent=107 // pred_fallthru
          _
        // Predicated region
        $region113: #{forward_pallas.1} parent=107 // pred_check
          %p9203 = pneg %p446
        $region114: #{forward_pallas.1} parent=107 // pred_check_branch
          %9205 = sbr.rel (%p9203) target = $region116
        $region115: #{forward_pallas.1} parent=107 // pred_region
          %p9206 = scmp.lt.s32.totalorder %s35, 1
          %s9207 = scalar_select %p9206, %s35, 1
          %s9208 = smul.addr %s9207, 2
          %s9209 = smul.addr %s9208, 4
          %s9210 = scalar_lea.vmem %s18, %s9209
        $region116: #{forward_pallas.1} parent=107 // pred_fallthru
          _
      $region108: #{forward_pallas.1} parent=5 // pred_fallthru
        _
    $region6: #{forward_pallas.1} parent=1 // loop_footer
      %s33 = sadd.s32 1, %s29
    $region7: #{forward_pallas.1} parent=1 // loop_footer_branch
      %28 = sbr.rel target = $region3
    $region8: #{forward_pallas.1} parent=1 // loop_exit
      _
    %9211 = vsyncpa [#allocation5], 1
    %s9212 = scalar_lea.sflag [#allocation5], 1
    %9213 = vsyncpa %s9212, 1
    %9214 = vsyncpa [#allocation7], 1

</llo_original>
